<compile_context>
chip_gen: v7x
topology: tpu7x:2x2x1
jax: 0.10.0
libtpu: 0.0.40
codegen_flags: <defaults>
</compile_context>

<pallas_src>
import numpy as np
import jax
import jax.numpy as jnp
from jax.experimental import pallas as pl
from jax.experimental.pallas import tpu as pltpu

# ----------------------------- configuration --------------------------------
# Mirrors SDFNetwork(d_in=3, d_out=1, d_hidden=64, n_layers=5, skip_in=(4,),
#                    bias=0.5, scale=1.0, geometric_init=True, weight_norm=True,
#                    inside_outside=False, use_normal_pred=True, xyz_encoder=None)
D_IN, D_OUT, D_HIDDEN, N_LAYERS = 3, 1, 64, 5
SKIP_IN = (4,)
BIAS_INIT = 0.5
SCALE = 1.0
USE_NORMAL_PRED = True

DIMS = [D_IN] + [D_HIDDEN] * N_LAYERS + [D_OUT + (3 if USE_NORMAL_PRED else 0)]
NUM_LAYERS = len(DIMS)            # 7
NUM_LINEAR = NUM_LAYERS - 1       # 6 linear layers
OUT_DIM_FINAL = DIMS[-1]          # 4
SKIP_LAYER = SKIP_IN[0]           # 4
D_SKIP = D_HIDDEN - D_IN          # 61 hidden lanes feeding the skip layer

# Lane packing: P points share each kernel row (block-diagonal weights).
P = 4                             # 4*64 = 256 lanes fills v6e/v7x MXU; dense on v5e too
D_IN_PAD = 8                      # per-point padded input lanes (xyz + 5 zeros)
BLK_OUT = 32                      # per-point padded output lanes (4 real); 4*32 = 128 -> lane-dense
TILE_N = 1024                     # points per grid step (sweep 1024-2048)
ROWS = TILE_N // P                # kernel rows per grid step (256)

N_POINTS = 2500                   # test batch: >=2 grid steps + ragged tail (exercises padding)


# ----------------------------- math helpers ---------------------------------
def _softplus_beta100(x):
    # torch.nn.Softplus(beta=100, threshold=20):
    #   y = (1/beta) * log(1 + exp(beta*x))   if beta*x <= 20
    #   y = x                                 otherwise
    bx = 100.0 * x
    safe = jnp.minimum(bx, 20.0)
    return jnp.where(bx > 20.0, x, jnp.log1p(jnp.exp(safe)) * (1.0 / 100.0))


# ----------------------------- Pallas kernel --------------------------------
def sdf_kernel(x_ref, wsmall_ref, wmid_ref, wf_ref, bh_ref, bf_ref, smat_ref, o_ref):
    """Shapes (all f32):
      x_ref     : (ROWS, P*8)        packed inputs; lanes p*8+{0,1,2} real, rest 0
      wsmall_ref: (2, P*8, P*64)     [block-diag W0, block-diag W4_raw/sqrt(2)]
      wmid_ref  : (4, P*64, P*64)    block-diag [W1, W2, W3, W4_hidden/sqrt(2)]
      wf_ref    : (P*64, P*32)       block-diag final layer (4 real cols per block)
      bh_ref    : (5, 1, P*64)       biases b0..b4, replicated per block
      bf_ref    : (1, P*32)          final bias, replicated per block
      smat_ref  : (P*32, P*32)       block-diag "sum of normal squares" matrix
      o_ref     : (ROWS, P*32)       per block: [sdf, normal(3), 0...]
    """
    x_scaled = x_ref[...] * SCALE                      # padded lanes stay exactly 0

    # Layer 0
    h = _softplus_beta100(
        jnp.dot(x_scaled, wsmall_ref[0], preferred_element_type=jnp.float32)
        + bh_ref[0])
    # Layers 1..3
    for l in range(1, 4):
        h = _softplus_beta100(
            jnp.dot(h, wmid_ref[l - 1], preferred_element_type=jnp.float32)
            + bh_ref[l])

    # Layer 4 (skip): cat([h, inputs], 1)/sqrt(2) @ W4 + b4, rewritten as two
    # dots with 1/sqrt(2) folded into the stored weights.  Zero rows in the
    # stored weights kill the padded/junk lanes (softplus(0) at lanes 61..63).
    # Raw inputs are re-read from the VMEM tile (no long-lived copy).
    pre = (jnp.dot(h, wmid_ref[3], preferred_element_type=jnp.float32)
           + jnp.dot(x_ref[...] * SCALE, wsmall_ref[1],
                     preferred_element_type=jnp.float32)
           + bh_ref[4])
    h = _softplus_beta100(pre)

    # Final linear layer (no activation); lane-dense packed output.
    y = jnp.dot(h, wf_ref[...], preferred_element_type=jnp.float32) + bf_ref[...]

    # Head: within each 32-lane block, lane 0 -> sdf/scale, lanes 1..3 ->
    # normalized normal, rest passthrough (zeros).  The per-point sum of the
    # three squared normal components is computed with one tiny block-diagonal
    # matmul, so nothing moves across lanes on the VPU.
    col = jax.lax.broadcasted_iota(jnp.int32, y.shape, 1)
    cib = jnp.bitwise_and(col, BLK_OUT - 1)            # column within the 32-lane block
    is_sdf = cib == 0
    is_norm = jnp.logical_and(cib >= 1, cib < 4)
    sq = jnp.where(is_norm, y * y, 0.0)
    nsq = jnp.dot(sq, smat_ref[...], preferred_element_type=jnp.float32)
    inv_norm = jax.lax.rsqrt(nsq + 1e-12)
    out = jnp.where(is_sdf, y * (1.0 / SCALE),
                    jnp.where(is_norm, y * inv_norm, y))
    o_ref[...] = out.astype(o_ref.dtype)


# ----------------------------- wrapper ---------------------------------------
@jax.jit
def sdf_forward(x, packed):
    wsmall, wmid, wf, bh, bf, smat = packed
    n = x.shape[0]
    n_tiles = pl.cdiv(n, TILE_N)
    n_pad = n_tiles * TILE_N
    rows = n_tiles * ROWS

    # Pad to a tile multiple and 8 feature lanes, then lane-pack P sub-tiles:
    # packed row (t*ROWS + r), lanes [p*8:(p+1)*8] <- point (t*TILE_N + p*ROWS + r).
    xin = jnp.zeros((n_pad, D_IN_PAD), jnp.float32).at[:n, :D_IN].set(
        x.astype(jnp.float32))
    xp = xin.reshape(n_tiles, P, ROWS, D_IN_PAD).transpose(0, 2, 1, 3).reshape(
        rows, P * D_IN_PAD)

    # Advisory cost hint for the XLA scheduler around the custom call.
    flops = rows * 2 * (
        (P * D_IN_PAD) * (P * D_HIDDEN)          # layer 0
        + 3 * (P * D_HIDDEN) * (P * D_HIDDEN)    # layers 1-3
        + (P * D_HIDDEN) * (P * D_HIDDEN)        # skip, hidden half
        + (P * D_IN_PAD) * (P * D_HIDDEN)        # skip, raw-input half
        + (P * D_HIDDEN) * (P * BLK_OUT)         # final layer
        + (P * BLK_OUT) * (P * BLK_OUT))         # normal-head reduction
    transcendentals = rows * (5 * P * D_HIDDEN * 2 + P * BLK_OUT)
    param_bytes = sum(int(np.prod(a.shape)) * 4
                      for a in (wsmall, wmid, wf, bh, bf, smat))
    bytes_accessed = (xp.size + rows * P * BLK_OUT) * 4 + param_bytes

    out = pl.pallas_call(
        sdf_kernel,
        out_shape=jax.ShapeDtypeStruct((rows, P * BLK_OUT), jnp.float32),
        grid=(n_tiles,),
        in_specs=[
            pl.BlockSpec((ROWS, P * D_IN_PAD), lambda i: (i, 0)),
            # Parameters (~1.3 MB total): whole-array resident in VMEM.
            pl.BlockSpec(memory_space=pltpu.MemorySpace.VMEM),
            pl.BlockSpec(memory_space=pltpu.MemorySpace.VMEM),
            pl.BlockSpec(memory_space=pltpu.MemorySpace.VMEM),
            pl.BlockSpec(memory_space=pltpu.MemorySpace.VMEM),
            pl.BlockSpec(memory_space=pltpu.MemorySpace.VMEM),
            pl.BlockSpec(memory_space=pltpu.MemorySpace.VMEM),
        ],
        out_specs=pl.BlockSpec((ROWS, P * BLK_OUT), lambda i: (i, 0)),
        compiler_params=pltpu.CompilerParams(
            dimension_semantics=("parallel",)),
        cost_estimate=pl.CostEstimate(flops=flops,
                                      transcendentals=transcendentals,
                                      bytes_accessed=bytes_accessed),
    )(xp, wsmall, wmid, wf, bh, bf, smat)

    # Un-pack the P point sub-tiles and slice the 4 real output columns.
    outu = out.reshape(n_tiles, ROWS, P, BLK_OUT).transpose(0, 2, 1, 3).reshape(
        n_pad, BLK_OUT)
    return outu[:n, :OUT_DIM_FINAL]


# ----------------------------- reference (pure JAX, f32) ---------------------
def sdf_forward_ref(x, layers):
    inputs = x * SCALE
    h = inputs
    for l, (w, b) in enumerate(layers):
        if l in SKIP_IN:
            h = jnp.concatenate([h, inputs], axis=1) / np.sqrt(2.0)
        h = jnp.dot(h, w, preferred_element_type=jnp.float32,
                    precision=jax.lax.Precision.HIGHEST) + b
        if l < NUM_LAYERS - 2:
            h = _softplus_beta100(h)
    sdf = h[:, :1] / SCALE
    if USE_NORMAL_PRED:
        nvec = h[:, 1:4]
        nrm = jnp.sqrt(jnp.sum(nvec * nvec, axis=-1, keepdims=True))
        return jnp.concatenate([sdf, nvec / nrm, h[:, 4:]], axis=-1)
    return jnp.concatenate([sdf, h[:, 1:]], axis=-1)


# ----------------------------- parameter init + packing ----------------------
def init_layer_params(key):
    """Per-layer (W (in,out), b (out,)) f32, matching SDFNetwork geometric init
    (no xyz_encoder, inside_outside=False). weight_norm at init is identity."""
    layers = []
    for l in range(NUM_LINEAR):
        in_dim = DIMS[l]
        out_dim = DIMS[l + 1] - DIMS[0] if (l + 1) in SKIP_IN else DIMS[l + 1]
        key, wk = jax.random.split(key)
        if l == NUM_LAYERS - 2:
            # normal_(mean=sqrt(pi)/sqrt(dims[l]), std=1e-4), bias = -BIAS_INIT
            w = (np.sqrt(np.pi) / np.sqrt(DIMS[l])
                 + 1e-4 * jax.random.normal(wk, (out_dim, in_dim), jnp.float32))
            b = jnp.full((out_dim,), -BIAS_INIT, jnp.float32)
        else:
            # normal_(0, sqrt(2)/sqrt(out_dim)), bias = 0
            w = jax.random.normal(wk, (out_dim, in_dim), jnp.float32) * (
                np.sqrt(2.0) / np.sqrt(out_dim))
            b = jnp.zeros((out_dim,), jnp.float32)
        layers.append((jnp.asarray(w).T, b))   # store as (in_dim, out_dim)
    return layers


def pack_params(layers):
    """Pack per-layer params into block-diagonal padded kernel tensors (f32)."""
    inv_s2 = 1.0 / np.sqrt(2.0)
    wsmall = np.zeros((2, P * D_IN_PAD, P * D_HIDDEN), np.float32)   # (2, 32, 256)
    wmid = np.zeros((4, P * D_HIDDEN, P * D_HIDDEN), np.float32)     # (4, 256, 256)
    wf = np.zeros((P * D_HIDDEN, P * BLK_OUT), np.float32)           # (256, 128)
    bh = np.zeros((5, 1, P * D_HIDDEN), np.float32)
    bf = np.zeros((1, P * BLK_OUT), np.float32)

    w = [np.asarray(wb) for wb, _ in layers]
    b = [np.asarray(bb) for _, bb in layers]

    for p in range(P):
        ri, rh, ro = p * D_IN_PAD, p * D_HIDDEN, p * BLK_OUT
        # layer 0: (3, 64)
        wsmall[0, ri:ri + D_IN, rh:rh + D_HIDDEN] = w[0]
        # layers 1..3: (64,64), (64,64), (64,61)
        for l in (1, 2, 3):
            wmid[l - 1, rh:rh + w[l].shape[0], rh:rh + w[l].shape[1]] = w[l]
        # skip layer 4: rows 0..60 act on hidden h, rows 61..63 act on the raw
        # (scaled) inputs; fold the 1/sqrt(2) of the concat into both halves.
        wmid[3, rh:rh + D_SKIP, rh:rh + D_HIDDEN] = w[4][:D_SKIP] * inv_s2
        wsmall[1, ri:ri + D_IN, rh:rh + D_HIDDEN] = w[4][D_SKIP:] * inv_s2
        # final layer (64, 4) -> first 4 cols of the 32-lane output block
        wf[rh:rh + D_HIDDEN, ro:ro + OUT_DIM_FINAL] = w[5]
        # biases (layer 3's 61-wide bias is zero-padded to 64)
        for l in range(5):
            bh[l, 0, rh:rh + b[l].shape[0]] = b[l]
        bf[0, ro:ro + OUT_DIM_FINAL] = b[5]

    # Hidden lanes D_SKIP..63 carry softplus(0) junk after layer 3; they are
    # neutralized only because the matching rows of the skip-hidden weight are
    # zero.  Guard that invariant explicitly.
    for p in range(P):
        rh = p * D_HIDDEN
        assert np.all(wmid[3, rh + D_SKIP:rh + D_HIDDEN, :] == 0.0)

    # Normal-head reduction matrix: S[i, j] = 1 iff i, j are in the same
    # 32-lane block and both are normal lanes (1..3 within the block).
    idx = np.arange(P * BLK_OUT)
    same_block = (idx[:, None] // BLK_OUT) == (idx[None, :] // BLK_OUT)
    is_n = (idx % BLK_OUT >= 1) & (idx % BLK_OUT < 4)
    smat = (same_block & is_n[:, None] & is_n[None, :]).astype(np.float32)

    return tuple(jnp.asarray(a, jnp.float32)
                 for a in (wsmall, wmid, wf, bh, bf, smat))


# ----------------------------- main -------------------------------------------
if __name__ == "__main__":
    key = jax.random.PRNGKey(0)
    key, xk, pk = jax.random.split(key, 3)

    x = jax.random.normal(xk, (N_POINTS, D_IN), jnp.float32)
    layers = init_layer_params(pk)
    packed = pack_params(layers)

    out = jax.block_until_ready(sdf_forward(x, packed))
    ref = jax.block_until_ready(sdf_forward_ref(x, layers))

    assert out.shape == (N_POINTS, OUT_DIM_FINAL), out.shape
    np.testing.assert_allclose(np.asarray(out), np.asarray(ref),
                               rtol=1e-2, atol=1e-2)
    print("KERNEL_OK")
</pallas_src>

<mosaic_0001>
module attributes {stable_mosaic.version = 11 : i64} {
  func.func @sdf_kernel(%arg0: i32, %arg1: memref<256x32xf32, #tpu.memory_space<vmem>>, %arg2: memref<2x32x256xf32, #tpu.memory_space<vmem>>, %arg3: memref<4x256x256xf32, #tpu.memory_space<vmem>>, %arg4: memref<256x128xf32, #tpu.memory_space<vmem>>, %arg5: memref<5x1x256xf32, #tpu.memory_space<vmem>>, %arg6: memref<1x128xf32, #tpu.memory_space<vmem>>, %arg7: memref<128x128xf32, #tpu.memory_space<vmem>>, %arg8: memref<256x128xf32, #tpu.memory_space<vmem>>) attributes {dimension_semantics = [#tpu.dimension_semantics<parallel>], iteration_bounds = array<i64: 3>, scalar_prefetch = 0 : i64, scratch_operands = 0 : i64, tpu.core_type = #tpu.core_type<tc>, window_params = [{transform_indices = @transform_0, window_bounds = array<i64: 256, 32>}, {pipeline_mode = #tpu.pipeline_mode<synchronous>, transform_indices = @transform_1, window_bounds = array<i64: 2, 32, 256>}, {pipeline_mode = #tpu.pipeline_mode<synchronous>, transform_indices = @transform_2, window_bounds = array<i64: 4, 256, 256>}, {pipeline_mode = #tpu.pipeline_mode<synchronous>, transform_indices = @transform_3, window_bounds = array<i64: 256, 128>}, {pipeline_mode = #tpu.pipeline_mode<synchronous>, transform_indices = @transform_4, window_bounds = array<i64: 5, 1, 256>}, {pipeline_mode = #tpu.pipeline_mode<synchronous>, transform_indices = @transform_5, window_bounds = array<i64: 1, 128>}, {pipeline_mode = #tpu.pipeline_mode<synchronous>, transform_indices = @transform_6, window_bounds = array<i64: 128, 128>}, {transform_indices = @transform_7, window_bounds = array<i64: 256, 128>}]} {
    %c0 = arith.constant 0 : index
    %c0_0 = arith.constant 0 : index
    %0 = vector.load %arg1[%c0, %c0_0] : memref<256x32xf32, #tpu.memory_space<vmem>>, vector<256x32xf32>
    %cst = arith.constant 1.000000e+00 : f32
    %1 = vector.broadcast %cst : f32 to vector<256x32xf32>
    %2 = arith.mulf %0, %1 : vector<256x32xf32>
    %c0_1 = arith.constant 0 : index
    %c0_2 = arith.constant 0 : index
    %c0_3 = arith.constant 0 : index
    %3 = vector.load %arg2[%c0_1, %c0_2, %c0_3] : memref<2x32x256xf32, #tpu.memory_space<vmem>>, vector<1x32x256xf32>
    %4 = vector.shape_cast %3 : vector<1x32x256xf32> to vector<32x256xf32>
    %cst_4 = arith.constant dense<0.000000e+00> : vector<256x256xf32>
    %5 = tpu.matmul %2, %4, %cst_4 {dimension_numbers = #tpu.dot_dimension_numbers<[1], [0], [0], [1], [0, 0, 1, 1], [], []>} : vector<256x32xf32>, vector<32x256xf32>, vector<256x256xf32> -> vector<256x256xf32>
    %c0_5 = arith.constant 0 : index
    %c0_6 = arith.constant 0 : index
    %c0_7 = arith.constant 0 : index
    %6 = vector.load %arg5[%c0_5, %c0_6, %c0_7] : memref<5x1x256xf32, #tpu.memory_space<vmem>>, vector<1x1x256xf32>
    %7 = vector.shape_cast %6 : vector<1x1x256xf32> to vector<1x256xf32>
    %8 = vector.broadcast %7 : vector<1x256xf32> to vector<256x256xf32>
    %9 = arith.addf %5, %8 : vector<256x256xf32>
    %cst_8 = arith.constant 1.000000e+02 : f32
    %10 = vector.broadcast %cst_8 : f32 to vector<256x256xf32>
    %11 = arith.mulf %10, %9 : vector<256x256xf32>
    %cst_9 = arith.constant 2.000000e+01 : f32
    %12 = vector.broadcast %cst_9 : f32 to vector<256x256xf32>
    %13 = arith.minimumf %11, %12 : vector<256x256xf32>
    %cst_10 = arith.constant 2.000000e+01 : f32
    %14 = vector.broadcast %cst_10 : f32 to vector<256x256xf32>
    %15 = arith.cmpf ogt, %11, %14 : vector<256x256xf32>
    %16 = math.exp %13 : vector<256x256xf32>
    %17 = math.log1p %16 : vector<256x256xf32>
    %cst_11 = arith.constant 0.00999999977 : f32
    %18 = vector.broadcast %cst_11 : f32 to vector<256x256xf32>
    %19 = arith.mulf %17, %18 : vector<256x256xf32>
    %20 = arith.select %15, %9, %19 : vector<256x256xi1>, vector<256x256xf32>
    %c0_12 = arith.constant 0 : index
    %c0_13 = arith.constant 0 : index
    %c0_14 = arith.constant 0 : index
    %21 = vector.load %arg3[%c0_12, %c0_13, %c0_14] : memref<4x256x256xf32, #tpu.memory_space<vmem>>, vector<1x256x256xf32>
    %22 = vector.shape_cast %21 : vector<1x256x256xf32> to vector<256x256xf32>
    %cst_15 = arith.constant dense<0.000000e+00> : vector<256x256xf32>
    %23 = tpu.matmul %20, %22, %cst_15 {dimension_numbers = #tpu.dot_dimension_numbers<[1], [0], [0], [1], [0, 0, 1, 1], [], []>} : vector<256x256xf32>, vector<256x256xf32>, vector<256x256xf32> -> vector<256x256xf32>
    %c1 = arith.constant 1 : index
    %c0_16 = arith.constant 0 : index
    %c0_17 = arith.constant 0 : index
    %24 = vector.load %arg5[%c1, %c0_16, %c0_17] : memref<5x1x256xf32, #tpu.memory_space<vmem>>, vector<1x1x256xf32>
    %25 = vector.shape_cast %24 : vector<1x1x256xf32> to vector<1x256xf32>
    %26 = vector.broadcast %25 : vector<1x256xf32> to vector<256x256xf32>
    %27 = arith.addf %23, %26 : vector<256x256xf32>
    %cst_18 = arith.constant 1.000000e+02 : f32
    %28 = vector.broadcast %cst_18 : f32 to vector<256x256xf32>
    %29 = arith.mulf %28, %27 : vector<256x256xf32>
    %cst_19 = arith.constant 2.000000e+01 : f32
    %30 = vector.broadcast %cst_19 : f32 to vector<256x256xf32>
    %31 = arith.minimumf %29, %30 : vector<256x256xf32>
    %cst_20 = arith.constant 2.000000e+01 : f32
    %32 = vector.broadcast %cst_20 : f32 to vector<256x256xf32>
    %33 = arith.cmpf ogt, %29, %32 : vector<256x256xf32>
    %34 = math.exp %31 : vector<256x256xf32>
    %35 = math.log1p %34 : vector<256x256xf32>
    %cst_21 = arith.constant 0.00999999977 : f32
    %36 = vector.broadcast %cst_21 : f32 to vector<256x256xf32>
    %37 = arith.mulf %35, %36 : vector<256x256xf32>
    %38 = arith.select %33, %27, %37 : vector<256x256xi1>, vector<256x256xf32>
    %c1_22 = arith.constant 1 : index
    %c0_23 = arith.constant 0 : index
    %c0_24 = arith.constant 0 : index
    %39 = vector.load %arg3[%c1_22, %c0_23, %c0_24] : memref<4x256x256xf32, #tpu.memory_space<vmem>>, vector<1x256x256xf32>
    %40 = vector.shape_cast %39 : vector<1x256x256xf32> to vector<256x256xf32>
    %cst_25 = arith.constant dense<0.000000e+00> : vector<256x256xf32>
    %41 = tpu.matmul %38, %40, %cst_25 {dimension_numbers = #tpu.dot_dimension_numbers<[1], [0], [0], [1], [0, 0, 1, 1], [], []>} : vector<256x256xf32>, vector<256x256xf32>, vector<256x256xf32> -> vector<256x256xf32>
    %c2 = arith.constant 2 : index
    %c0_26 = arith.constant 0 : index
    %c0_27 = arith.constant 0 : index
    %42 = vector.load %arg5[%c2, %c0_26, %c0_27] : memref<5x1x256xf32, #tpu.memory_space<vmem>>, vector<1x1x256xf32>
    %43 = vector.shape_cast %42 : vector<1x1x256xf32> to vector<1x256xf32>
    %44 = vector.broadcast %43 : vector<1x256xf32> to vector<256x256xf32>
    %45 = arith.addf %41, %44 : vector<256x256xf32>
    %cst_28 = arith.constant 1.000000e+02 : f32
    %46 = vector.broadcast %cst_28 : f32 to vector<256x256xf32>
    %47 = arith.mulf %46, %45 : vector<256x256xf32>
    %cst_29 = arith.constant 2.000000e+01 : f32
    %48 = vector.broadcast %cst_29 : f32 to vector<256x256xf32>
    %49 = arith.minimumf %47, %48 : vector<256x256xf32>
    %cst_30 = arith.constant 2.000000e+01 : f32
    %50 = vector.broadcast %cst_30 : f32 to vector<256x256xf32>
    %51 = arith.cmpf ogt, %47, %50 : vector<256x256xf32>
    %52 = math.exp %49 : vector<256x256xf32>
    %53 = math.log1p %52 : vector<256x256xf32>
    %cst_31 = arith.constant 0.00999999977 : f32
    %54 = vector.broadcast %cst_31 : f32 to vector<256x256xf32>
    %55 = arith.mulf %53, %54 : vector<256x256xf32>
    %56 = arith.select %51, %45, %55 : vector<256x256xi1>, vector<256x256xf32>
    %c2_32 = arith.constant 2 : index
    %c0_33 = arith.constant 0 : index
    %c0_34 = arith.constant 0 : index
    %57 = vector.load %arg3[%c2_32, %c0_33, %c0_34] : memref<4x256x256xf32, #tpu.memory_space<vmem>>, vector<1x256x256xf32>
    %58 = vector.shape_cast %57 : vector<1x256x256xf32> to vector<256x256xf32>
    %cst_35 = arith.constant dense<0.000000e+00> : vector<256x256xf32>
    %59 = tpu.matmul %56, %58, %cst_35 {dimension_numbers = #tpu.dot_dimension_numbers<[1], [0], [0], [1], [0, 0, 1, 1], [], []>} : vector<256x256xf32>, vector<256x256xf32>, vector<256x256xf32> -> vector<256x256xf32>
    %c3 = arith.constant 3 : index
    %c0_36 = arith.constant 0 : index
    %c0_37 = arith.constant 0 : index
    %60 = vector.load %arg5[%c3, %c0_36, %c0_37] : memref<5x1x256xf32, #tpu.memory_space<vmem>>, vector<1x1x256xf32>
    %61 = vector.shape_cast %60 : vector<1x1x256xf32> to vector<1x256xf32>
    %62 = vector.broadcast %61 : vector<1x256xf32> to vector<256x256xf32>
    %63 = arith.addf %59, %62 : vector<256x256xf32>
    %cst_38 = arith.constant 1.000000e+02 : f32
    %64 = vector.broadcast %cst_38 : f32 to vector<256x256xf32>
    %65 = arith.mulf %64, %63 : vector<256x256xf32>
    %cst_39 = arith.constant 2.000000e+01 : f32
    %66 = vector.broadcast %cst_39 : f32 to vector<256x256xf32>
    %67 = arith.minimumf %65, %66 : vector<256x256xf32>
    %cst_40 = arith.constant 2.000000e+01 : f32
    %68 = vector.broadcast %cst_40 : f32 to vector<256x256xf32>
    %69 = arith.cmpf ogt, %65, %68 : vector<256x256xf32>
    %70 = math.exp %67 : vector<256x256xf32>
    %71 = math.log1p %70 : vector<256x256xf32>
    %cst_41 = arith.constant 0.00999999977 : f32
    %72 = vector.broadcast %cst_41 : f32 to vector<256x256xf32>
    %73 = arith.mulf %71, %72 : vector<256x256xf32>
    %74 = arith.select %69, %63, %73 : vector<256x256xi1>, vector<256x256xf32>
    %c3_42 = arith.constant 3 : index
    %c0_43 = arith.constant 0 : index
    %c0_44 = arith.constant 0 : index
    %75 = vector.load %arg3[%c3_42, %c0_43, %c0_44] : memref<4x256x256xf32, #tpu.memory_space<vmem>>, vector<1x256x256xf32>
    %76 = vector.shape_cast %75 : vector<1x256x256xf32> to vector<256x256xf32>
    %cst_45 = arith.constant dense<0.000000e+00> : vector<256x256xf32>
    %77 = tpu.matmul %74, %76, %cst_45 {dimension_numbers = #tpu.dot_dimension_numbers<[1], [0], [0], [1], [0, 0, 1, 1], [], []>} : vector<256x256xf32>, vector<256x256xf32>, vector<256x256xf32> -> vector<256x256xf32>
    %c0_46 = arith.constant 0 : index
    %c0_47 = arith.constant 0 : index
    %78 = vector.load %arg1[%c0_46, %c0_47] : memref<256x32xf32, #tpu.memory_space<vmem>>, vector<256x32xf32>
    %cst_48 = arith.constant 1.000000e+00 : f32
    %79 = vector.broadcast %cst_48 : f32 to vector<256x32xf32>
    %80 = arith.mulf %78, %79 : vector<256x32xf32>
    %c1_49 = arith.constant 1 : index
    %c0_50 = arith.constant 0 : index
    %c0_51 = arith.constant 0 : index
    %81 = vector.load %arg2[%c1_49, %c0_50, %c0_51] : memref<2x32x256xf32, #tpu.memory_space<vmem>>, vector<1x32x256xf32>
    %82 = vector.shape_cast %81 : vector<1x32x256xf32> to vector<32x256xf32>
    %cst_52 = arith.constant dense<0.000000e+00> : vector<256x256xf32>
    %83 = tpu.matmul %80, %82, %cst_52 {dimension_numbers = #tpu.dot_dimension_numbers<[1], [0], [0], [1], [0, 0, 1, 1], [], []>} : vector<256x32xf32>, vector<32x256xf32>, vector<256x256xf32> -> vector<256x256xf32>
    %84 = arith.addf %77, %83 : vector<256x256xf32>
    %c4 = arith.constant 4 : index
    %c0_53 = arith.constant 0 : index
    %c0_54 = arith.constant 0 : index
    %85 = vector.load %arg5[%c4, %c0_53, %c0_54] : memref<5x1x256xf32, #tpu.memory_space<vmem>>, vector<1x1x256xf32>
    %86 = vector.shape_cast %85 : vector<1x1x256xf32> to vector<1x256xf32>
    %87 = vector.broadcast %86 : vector<1x256xf32> to vector<256x256xf32>
    %88 = arith.addf %84, %87 : vector<256x256xf32>
    %cst_55 = arith.constant 1.000000e+02 : f32
    %89 = vector.broadcast %cst_55 : f32 to vector<256x256xf32>
    %90 = arith.mulf %89, %88 : vector<256x256xf32>
    %cst_56 = arith.constant 2.000000e+01 : f32
    %91 = vector.broadcast %cst_56 : f32 to vector<256x256xf32>
    %92 = arith.minimumf %90, %91 : vector<256x256xf32>
    %cst_57 = arith.constant 2.000000e+01 : f32
    %93 = vector.broadcast %cst_57 : f32 to vector<256x256xf32>
    %94 = arith.cmpf ogt, %90, %93 : vector<256x256xf32>
    %95 = math.exp %92 : vector<256x256xf32>
    %96 = math.log1p %95 : vector<256x256xf32>
    %cst_58 = arith.constant 0.00999999977 : f32
    %97 = vector.broadcast %cst_58 : f32 to vector<256x256xf32>
    %98 = arith.mulf %96, %97 : vector<256x256xf32>
    %99 = arith.select %94, %88, %98 : vector<256x256xi1>, vector<256x256xf32>
    %c0_59 = arith.constant 0 : index
    %c0_60 = arith.constant 0 : index
    %100 = vector.load %arg4[%c0_59, %c0_60] : memref<256x128xf32, #tpu.memory_space<vmem>>, vector<256x128xf32>
    %cst_61 = arith.constant dense<0.000000e+00> : vector<256x128xf32>
    %101 = tpu.matmul %99, %100, %cst_61 {dimension_numbers = #tpu.dot_dimension_numbers<[1], [0], [0], [1], [0, 0, 1, 1], [], []>} : vector<256x256xf32>, vector<256x128xf32>, vector<256x128xf32> -> vector<256x128xf32>
    %c0_62 = arith.constant 0 : index
    %c0_63 = arith.constant 0 : index
    %102 = vector.load %arg6[%c0_62, %c0_63] : memref<1x128xf32, #tpu.memory_space<vmem>>, vector<1x128xf32>
    %103 = vector.broadcast %102 : vector<1x128xf32> to vector<256x128xf32>
    %104 = arith.addf %101, %103 : vector<256x128xf32>
    %105 = tpu.iota {dimensions = array<i32: 1>} : vector<256x128xi32>
    %c31_i32 = arith.constant 31 : i32
    %106 = vector.broadcast %c31_i32 : i32 to vector<256x128xi32>
    %107 = arith.andi %105, %106 : vector<256x128xi32>
    %c0_i32 = arith.constant 0 : i32
    %108 = vector.broadcast %c0_i32 : i32 to vector<256x128xi32>
    %109 = arith.cmpi eq, %107, %108 : vector<256x128xi32>
    %c1_i32 = arith.constant 1 : i32
    %110 = vector.broadcast %c1_i32 : i32 to vector<256x128xi32>
    %111 = arith.cmpi sge, %107, %110 : vector<256x128xi32>
    %c4_i32 = arith.constant 4 : i32
    %112 = vector.broadcast %c4_i32 : i32 to vector<256x128xi32>
    %113 = arith.cmpi slt, %107, %112 : vector<256x128xi32>
    %114 = arith.andi %111, %113 : vector<256x128xi1>
    %115 = arith.mulf %104, %104 : vector<256x128xf32>
    %cst_64 = arith.constant 0.000000e+00 : f32
    %116 = vector.broadcast %cst_64 : f32 to vector<256x128xf32>
    %117 = arith.select %114, %115, %116 : vector<256x128xi1>, vector<256x128xf32>
    %c0_65 = arith.constant 0 : index
    %c0_66 = arith.constant 0 : index
    %118 = vector.load %arg7[%c0_65, %c0_66] : memref<128x128xf32, #tpu.memory_space<vmem>>, vector<128x128xf32>
    %cst_67 = arith.constant dense<0.000000e+00> : vector<256x128xf32>
    %119 = tpu.matmul %117, %118, %cst_67 {dimension_numbers = #tpu.dot_dimension_numbers<[1], [0], [0], [1], [0, 0, 1, 1], [], []>} : vector<256x128xf32>, vector<128x128xf32>, vector<256x128xf32> -> vector<256x128xf32>
    %cst_68 = arith.constant 9.99999996E-13 : f32
    %120 = vector.broadcast %cst_68 : f32 to vector<256x128xf32>
    %121 = arith.addf %119, %120 : vector<256x128xf32>
    %122 = math.rsqrt %121 : vector<256x128xf32>
    %cst_69 = arith.constant 1.000000e+00 : f32
    %123 = vector.broadcast %cst_69 : f32 to vector<256x128xf32>
    %124 = arith.mulf %104, %123 : vector<256x128xf32>
    %125 = arith.mulf %104, %122 : vector<256x128xf32>
    %126 = arith.select %114, %125, %104 : vector<256x128xi1>, vector<256x128xf32>
    %127 = arith.select %109, %124, %126 : vector<256x128xi1>, vector<256x128xf32>
    %c0_70 = arith.constant 0 : index
    %c0_71 = arith.constant 0 : index
    %128 = vector.load %arg8[%c0_70, %c0_71] : memref<256x128xf32, #tpu.memory_space<vmem>>, vector<256x128xf32>
    tpu.vector_store %arg8[%c0_70, %c0_71], %127 {strides = array<i32>} : memref<256x128xf32, #tpu.memory_space<vmem>>, vector<256x128xf32>,
    return
  }
  func.func @transform_0(%arg0: i32) -> (i32, i32) {
    %c0_i32 = arith.constant 0 : i32
    %c0_i32_0 = arith.constant 0 : i32
    return %arg0, %c0_i32 : i32, i32
  }
  func.func @transform_1(%arg0: i32) -> (i32, i32, i32) {
    %c0_i32 = arith.constant 0 : i32
    %c0_i32_0 = arith.constant 0 : i32
    %c0_i32_1 = arith.constant 0 : i32
    %c0_i32_2 = arith.constant 0 : i32
    return %c0_i32, %c0_i32_0, %c0_i32_1 : i32, i32, i32
  }
  func.func @transform_2(%arg0: i32) -> (i32, i32, i32) {
    %c0_i32 = arith.constant 0 : i32
    %c0_i32_0 = arith.constant 0 : i32
    %c0_i32_1 = arith.constant 0 : i32
    %c0_i32_2 = arith.constant 0 : i32
    return %c0_i32, %c0_i32_0, %c0_i32_1 : i32, i32, i32
  }
  func.func @transform_3(%arg0: i32) -> (i32, i32) {
    %c0_i32 = arith.constant 0 : i32
    %c0_i32_0 = arith.constant 0 : i32
    %c0_i32_1 = arith.constant 0 : i32
    return %c0_i32, %c0_i32_0 : i32, i32
  }
  func.func @transform_4(%arg0: i32) -> (i32, i32, i32) {
    %c0_i32 = arith.constant 0 : i32
    %c0_i32_0 = arith.constant 0 : i32
    %c0_i32_1 = arith.constant 0 : i32
    %c0_i32_2 = arith.constant 0 : i32
    return %c0_i32, %c0_i32_0, %c0_i32_1 : i32, i32, i32
  }
  func.func @transform_5(%arg0: i32) -> (i32, i32) {
    %c0_i32 = arith.constant 0 : i32
    %c0_i32_0 = arith.constant 0 : i32
    %c0_i32_1 = arith.constant 0 : i32
    return %c0_i32, %c0_i32_0 : i32, i32
  }
  func.func @transform_6(%arg0: i32) -> (i32, i32) {
    %c0_i32 = arith.constant 0 : i32
    %c0_i32_0 = arith.constant 0 : i32
    %c0_i32_1 = arith.constant 0 : i32
    return %c0_i32, %c0_i32_0 : i32, i32
  }
  func.func @transform_7(%arg0: i32) -> (i32, i32) {
    %c0_i32 = arith.constant 0 : i32
    %c0_i32_0 = arith.constant 0 : i32
    return %arg0, %c0_i32 : i32, i32
  }
}

</mosaic_0001>

<llo_original>
// kernel: sdf_forward.1
$region0: #{sdf_forward.1}
  #allocation0 [shape = 'u32[]', space=smem, size = 0x4, offset = 0x4, fixed_abs, tag = 'smem constant byte address 0x4 - core index']
  #allocation1 [shape = 'u32[144,128]{1,0:T(1,128)}', space=vmem, size = 0x12000, scoped, tag = 'internal scratch']
  %s0 = inlined_call_operand.vmem [shape: f32[768,32], index: 0, kind: input, shape index: {}]
  %s1 = inlined_call_operand.hbm [shape: f32[2,32,256], index: 1, kind: input, shape index: {}]
  %s2 = inlined_call_operand.vmem [shape: f32[4,256,256], index: 2, kind: input, shape index: {}]
  %s3 = inlined_call_operand.hbm [shape: f32[256,128], index: 3, kind: input, shape index: {}]
  %s4 = inlined_call_operand.vmem [shape: f32[5,1,256], index: 4, kind: input, shape index: {}]
  %s5 = inlined_call_operand.vmem [shape: f32[1,128], index: 5, kind: input, shape index: {}]
  %s6 = inlined_call_operand.hbm [shape: f32[128,128], index: 6, kind: input, shape index: {}]
  %s7 = inlined_call_operand.vmem [shape: f32[768,128], index: 7, kind: output, shape index: {}]
  %s8 = sld [smem:[#allocation0]]
  $region73: #{sdf_forward.1} parent=0
    _
  %s10 = ssub.s32 1, %s8
  %s11 = scalar_select 0, %s10, %s8
  $region1: #{sdf_forward.1} parent=0
    #allocation2 [shape = 'u8[65536]{0}', space=vmem, size = 0x10000, scoped, tag = 'input window, operand 1, single buffered']
    #allocation3 [shape = 's32[2]{0}', space=sflag, size = 0x8, scoped, tag = 'scoped memory for sdf_forward.1']
    #allocation4 [shape = 'u8[131072]{0}', space=vmem, size = 0x20000, scoped, tag = 'input window, operand 3, single buffered']
    #allocation5 [shape = 's32[1]{0}', space=sflag, size = 0x4, scoped, tag = 'scoped memory for sdf_forward.1']
    #allocation6 [shape = 'u8[65536]{0}', space=vmem, size = 0x10000, scoped, tag = 'input window, operand 6, single buffered']
    %12 = vsyncpa [#allocation3], 0
    %13 = vsyncpa [#allocation5], 0
    loop: start=0, step=1, limit=5
    $region2: #{sdf_forward.1} parent=1 // loop_pre_header
      _
    $region3: #{sdf_forward.1} parent=1 // loop_header
      %s15 = sphi 0, %s19
      %p16 = scmp.ge.s32.totalorder %s15, 5
      %s25 = sphi 0, %s27
      %s28 = sphi 0, %s25
      %s29 = sphi 0, %s28
      %s45 = sphi 0, %s29
      %s49 = sphi 0, %s49
      %s51 = sphi 0, %s49
      %s52 = sphi 0, %s51
      %s66 = sphi 0, %s52
      %s70 = sphi 0, %s70
      %s72 = sphi 0, %s70
      %s73 = sphi 0, %s72
      %s87 = sphi 0, %s73
      %s91 = sphi 0, %s91
      %s93 = sphi 0, %s91
      %s94 = sphi 0, %s93
      %s108 = sphi 0, %s94
      %s112 = sphi 0, %s112
      %s114 = sphi 0, %s112
      %s115 = sphi 0, %s114
      %s129 = sphi 0, %s115
      %s133 = sphi 0, %s133
      %s135 = sphi 0, %s133
      %s136 = sphi 0, %s135
      %s150 = sphi 0, %s136
      %s154 = sphi 0, %s154
      %s156 = sphi 0, %s154
      %s157 = sphi 0, %s156
      %s171 = sphi 0, %s157
      %s177 = sphi 0, %s179
      %s180 = sphi 0, %s177
      %s181 = sphi 0, %s180
      %s197 = sphi 0, %s181
    $region4: #{sdf_forward.1} parent=1 // loop_header_branch
      %18 = sbr.rel (%p16) target = $region8
    $region5: #{sdf_forward.1} parent=1 // loop_body
      %s20 = ssub.s32 %s15, 1
      %s21 = ssub.s32 %s15, 2
      %s22 = sadd.s32 %s15, 1
      %s23 = ssub.s32 %s15, %s22
      %p24 = scmp.eq.s32.totalorder %s23, 0
      %s26 = sadd.s32 %s25, 1
      %s27 = scalar_select %p24, %s25, %s26
      %p30 = pneg %p24
      %p31 = scmp.eq.s32.totalorder %s15, 2
      %p32 = por %p30, %p31
      %p33 = scmp.ne.s32.totalorder %s25, %s28
      %p34 = scmp.eq.s32.totalorder %s15, 0
      %p35 = por %p33, %p34
      %p36 = scmp.ne.s32.totalorder %s25, %s28
      %p37 = scmp.eq.s32.totalorder %s20, 2
      %p38 = por %p36, %p37
      %p39 = scmp.ne.s32.totalorder %s28, %s29
      %p40 = scmp.eq.s32.totalorder %s20, 0
      %p41 = por %p39, %p40
      %p42 = scmp.ne.s32.totalorder %s28, %s29
      %p43 = scmp.eq.s32.totalorder %s21, 2
      %p44 = por %p42, %p43
      %p46 = scmp.ne.s32.totalorder %s29, %s45
      %p47 = scmp.eq.s32.totalorder %s21, 0
      %p48 = por %p46, %p47
      %s50 = sadd.s32 %s49, 1
      %p53 = scmp.eq.s32.totalorder %s15, 2
      %p54 = scmp.ne.s32.totalorder %s49, %s51
      %p55 = scmp.eq.s32.totalorder %s15, 0
      %p56 = por %p54, %p55
      %p57 = scmp.ne.s32.totalorder %s49, %s51
      %p58 = scmp.eq.s32.totalorder %s20, 2
      %p59 = por %p57, %p58
      %p60 = scmp.ne.s32.totalorder %s51, %s52
      %p61 = scmp.eq.s32.totalorder %s20, 0
      %p62 = por %p60, %p61
      %p63 = scmp.ne.s32.totalorder %s51, %s52
      %p64 = scmp.eq.s32.totalorder %s21, 2
      %p65 = por %p63, %p64
      %p67 = scmp.ne.s32.totalorder %s52, %s66
      %p68 = scmp.eq.s32.totalorder %s21, 0
      %p69 = por %p67, %p68
      %s71 = sadd.s32 %s70, 1
      %p74 = scmp.eq.s32.totalorder %s15, 2
      %p75 = scmp.ne.s32.totalorder %s70, %s72
      %p76 = scmp.eq.s32.totalorder %s15, 0
      %p77 = por %p75, %p76
      %p78 = scmp.ne.s32.totalorder %s70, %s72
      %p79 = scmp.eq.s32.totalorder %s20, 2
      %p80 = por %p78, %p79
      %p81 = scmp.ne.s32.totalorder %s72, %s73
      %p82 = scmp.eq.s32.totalorder %s20, 0
      %p83 = por %p81, %p82
      %p84 = scmp.ne.s32.totalorder %s72, %s73
      %p85 = scmp.eq.s32.totalorder %s21, 2
      %p86 = por %p84, %p85
      %p88 = scmp.ne.s32.totalorder %s73, %s87
      %p89 = scmp.eq.s32.totalorder %s21, 0
      %p90 = por %p88, %p89
      %s92 = sadd.s32 %s91, 1
      %p95 = scmp.eq.s32.totalorder %s15, 2
      %p96 = scmp.ne.s32.totalorder %s91, %s93
      %p97 = scmp.eq.s32.totalorder %s15, 0
      %p98 = por %p96, %p97
      %p99 = scmp.ne.s32.totalorder %s91, %s93
      %p100 = scmp.eq.s32.totalorder %s20, 2
      %p101 = por %p99, %p100
      %p102 = scmp.ne.s32.totalorder %s93, %s94
      %p103 = scmp.eq.s32.totalorder %s20, 0
      %p104 = por %p102, %p103
      %p105 = scmp.ne.s32.totalorder %s93, %s94
      %p106 = scmp.eq.s32.totalorder %s21, 2
      %p107 = por %p105, %p106
      %p109 = scmp.ne.s32.totalorder %s94, %s108
      %p110 = scmp.eq.s32.totalorder %s21, 0
      %p111 = por %p109, %p110
      %s113 = sadd.s32 %s112, 1
      %p116 = scmp.eq.s32.totalorder %s15, 2
      %p117 = scmp.ne.s32.totalorder %s112, %s114
      %p118 = scmp.eq.s32.totalorder %s15, 0
      %p119 = por %p117, %p118
      %p120 = scmp.ne.s32.totalorder %s112, %s114
      %p121 = scmp.eq.s32.totalorder %s20, 2
      %p122 = por %p120, %p121
      %p123 = scmp.ne.s32.totalorder %s114, %s115
      %p124 = scmp.eq.s32.totalorder %s20, 0
      %p125 = por %p123, %p124
      %p126 = scmp.ne.s32.totalorder %s114, %s115
      %p127 = scmp.eq.s32.totalorder %s21, 2
      %p128 = por %p126, %p127
      %p130 = scmp.ne.s32.totalorder %s115, %s129
      %p131 = scmp.eq.s32.totalorder %s21, 0
      %p132 = por %p130, %p131
      %s134 = sadd.s32 %s133, 1
      %p137 = scmp.eq.s32.totalorder %s15, 2
      %p138 = scmp.ne.s32.totalorder %s133, %s135
      %p139 = scmp.eq.s32.totalorder %s15, 0
      %p140 = por %p138, %p139
      %p141 = scmp.ne.s32.totalorder %s133, %s135
      %p142 = scmp.eq.s32.totalorder %s20, 2
      %p143 = por %p141, %p142
      %p144 = scmp.ne.s32.totalorder %s135, %s136
      %p145 = scmp.eq.s32.totalorder %s20, 0
      %p146 = por %p144, %p145
      %p147 = scmp.ne.s32.totalorder %s135, %s136
      %p148 = scmp.eq.s32.totalorder %s21, 2
      %p149 = por %p147, %p148
      %p151 = scmp.ne.s32.totalorder %s136, %s150
      %p152 = scmp.eq.s32.totalorder %s21, 0
      %p153 = por %p151, %p152
      %s155 = sadd.s32 %s154, 1
      %p158 = scmp.eq.s32.totalorder %s15, 2
      %p159 = scmp.ne.s32.totalorder %s154, %s156
      %p160 = scmp.eq.s32.totalorder %s15, 0
      %p161 = por %p159, %p160
      %p162 = scmp.ne.s32.totalorder %s154, %s156
      %p163 = scmp.eq.s32.totalorder %s20, 2
      %p164 = por %p162, %p163
      %p165 = scmp.ne.s32.totalorder %s156, %s157
      %p166 = scmp.eq.s32.totalorder %s20, 0
      %p167 = por %p165, %p166
      %p168 = scmp.ne.s32.totalorder %s156, %s157
      %p169 = scmp.eq.s32.totalorder %s21, 2
      %p170 = por %p168, %p169
      %p172 = scmp.ne.s32.totalorder %s157, %s171
      %p173 = scmp.eq.s32.totalorder %s21, 0
      %p174 = por %p172, %p173
      %s175 = ssub.s32 %s15, %s22
      %p176 = scmp.eq.s32.totalorder %s175, 0
      %s178 = sadd.s32 %s177, 1
      %s179 = scalar_select %p176, %s177, %s178
      %p182 = pneg %p176
      %p183 = scmp.eq.s32.totalorder %s15, 2
      %p184 = por %p182, %p183
      %p185 = scmp.ne.s32.totalorder %s177, %s180
      %p186 = scmp.eq.s32.totalorder %s15, 0
      %p187 = por %p185, %p186
      %p188 = scmp.ne.s32.totalorder %s177, %s180
      %p189 = scmp.eq.s32.totalorder %s20, 2
      %p190 = por %p188, %p189
      %p191 = scmp.ne.s32.totalorder %s180, %s181
      %p192 = scmp.eq.s32.totalorder %s20, 0
      %p193 = por %p191, %p192
      %p194 = scmp.ne.s32.totalorder %s180, %s181
      %p195 = scmp.eq.s32.totalorder %s21, 2
      %p196 = por %p194, %p195
      %p198 = scmp.ne.s32.totalorder %s181, %s197
      %p199 = scmp.eq.s32.totalorder %s21, 0
      %p200 = por %p198, %p199
      %p201 = scmp.le.s32.totalorder 1, %s15
      %p202 = scmp.lt.s32.totalorder %s15, 4
      %p203 = pnand %p201, %p202
      %p204 = pneg %p203
      // Predicated region
      $region9: #{sdf_forward.1} parent=5 // pred_check
        _
      $region10: #{sdf_forward.1} parent=5 // pred_check_branch
        %206 = sbr.rel (%p203) target = $region12
      $region11: #{sdf_forward.1} parent=5 // pred_region
        %s207 = ssub.s32 %s15, 1
        // Predicated region
        $region13: #{sdf_forward.1} parent=11 // pred_check
          %p208 = pneg %p62
        $region14: #{sdf_forward.1} parent=11 // pred_check_branch
          %210 = sbr.rel (%p208) target = $region16
        $region15: #{sdf_forward.1} parent=11 // pred_region
          %s212 = ssub.s32 2048, 2048
          %213 = vsyncadd [#allocation3], %s212
          %s214 = sshll.u32 [#allocation2], 4
          %s215 = int_to_ptr.vmem [resolvable:$true] %s214
          %220 = dma.hbm_to_vmem [thread:$0]  %s1, 2048, %s215, [#allocation3], 256, 256, 16
        $region16: #{sdf_forward.1} parent=11 // pred_fallthru
          _
        // Predicated region
        $region17: #{sdf_forward.1} parent=11 // pred_check
          %p221 = pneg %p83
        $region18: #{sdf_forward.1} parent=11 // pred_check_branch
          %223 = sbr.rel (%p221) target = $region20
        $region19: #{sdf_forward.1} parent=11 // pred_region
          _
        $region20: #{sdf_forward.1} parent=11 // pred_fallthru
          _
        // Predicated region
        $region21: #{sdf_forward.1} parent=11 // pred_check
          %p224 = pneg %p104
        $region22: #{sdf_forward.1} parent=11 // pred_check_branch
          %226 = sbr.rel (%p224) target = $region24
        $region23: #{sdf_forward.1} parent=11 // pred_region
          %s228 = ssub.s32 4096, 4096
          %229 = vsyncadd [#allocation5], %s228
          %s230 = sshll.u32 [#allocation4], 4
          %s231 = int_to_ptr.vmem [resolvable:$true] %s230
          %236 = dma.hbm_to_vmem [thread:$0]  %s3, 4096, %s231, [#allocation5], 128, 128, 8
        $region24: #{sdf_forward.1} parent=11 // pred_fallthru
          _
        // Predicated region
        $region25: #{sdf_forward.1} parent=11 // pred_check
          %p237 = pneg %p125
        $region26: #{sdf_forward.1} parent=11 // pred_check_branch
          %239 = sbr.rel (%p237) target = $region28
        $region27: #{sdf_forward.1} parent=11 // pred_region
          _
        $region28: #{sdf_forward.1} parent=11 // pred_fallthru
          _
        // Predicated region
        $region29: #{sdf_forward.1} parent=11 // pred_check
          %p240 = pneg %p146
        $region30: #{sdf_forward.1} parent=11 // pred_check_branch
          %242 = sbr.rel (%p240) target = $region32
        $region31: #{sdf_forward.1} parent=11 // pred_region
          _
        $region32: #{sdf_forward.1} parent=11 // pred_fallthru
          _
        // Predicated region
        $region33: #{sdf_forward.1} parent=11 // pred_check
          %p243 = pneg %p167
        $region34: #{sdf_forward.1} parent=11 // pred_check_branch
          %245 = sbr.rel (%p243) target = $region36
        $region35: #{sdf_forward.1} parent=11 // pred_region
          %s247 = ssub.s32 2048, 2048
          %248 = vsyncadd [#allocation5], %s247
          %s249 = sshll.u32 [#allocation6], 4
          %s250 = int_to_ptr.vmem [resolvable:$true] %s249
          %255 = dma.hbm_to_vmem [thread:$0]  %s6, 2048, %s250, [#allocation5], 128, 128, 8
        $region36: #{sdf_forward.1} parent=11 // pred_fallthru
          _
      $region12: #{sdf_forward.1} parent=5 // pred_fallthru
        _
      %p256 = scmp.lt.s32.totalorder %s15, 3
      // Predicated region
      $region37: #{sdf_forward.1} parent=5 // pred_check
        %p257 = pneg %p256
      $region38: #{sdf_forward.1} parent=5 // pred_check_branch
        %259 = sbr.rel (%p257) target = $region40
      $region39: #{sdf_forward.1} parent=5 // pred_region
        // Predicated region
        $region41: #{sdf_forward.1} parent=39 // pred_check
          %p260 = pneg %p35
        $region42: #{sdf_forward.1} parent=39 // pred_check_branch
          %262 = sbr.rel (%p260) target = $region44
        $region43: #{sdf_forward.1} parent=39 // pred_region
          %s263 = smul.u32 32, %s15
          %p264 = scmp.lt.s32.totalorder %s263, 95
          %s265 = scalar_select %p264, %s263, 95
          %s266 = smul.addr %s265, 8
          %s267 = scalar_lea.vmem %s0, %s266
          %s268 = smul.u32 32, %s15
        $region44: #{sdf_forward.1} parent=39 // pred_fallthru
          _
      $region40: #{sdf_forward.1} parent=5 // pred_fallthru
        _
      %p269 = scmp.le.s32.totalorder 1, %s15
      %p270 = scmp.lt.s32.totalorder %s15, 4
      %p271 = pnand %p269, %p270
      %p272 = pneg %p271
      // Predicated region
      $region45: #{sdf_forward.1} parent=5 // pred_check
        _
      $region46: #{sdf_forward.1} parent=5 // pred_check_branch
        %274 = sbr.rel (%p271) target = $region48
      $region47: #{sdf_forward.1} parent=5 // pred_region
        %s275 = ssub.s32 %s15, 1
        // Predicated region
        $region49: #{sdf_forward.1} parent=47 // pred_check
          %p276 = pneg %p62
        $region50: #{sdf_forward.1} parent=47 // pred_check_branch
          %278 = sbr.rel (%p276) target = $region52
        $region51: #{sdf_forward.1} parent=47 // pred_region
          %279 = dma.done [#allocation3], 2048
        $region52: #{sdf_forward.1} parent=47 // pred_fallthru
          _
        // Predicated region
        $region53: #{sdf_forward.1} parent=47 // pred_check
          %p280 = pneg %p104
        $region54: #{sdf_forward.1} parent=47 // pred_check_branch
          %282 = sbr.rel (%p280) target = $region56
        $region55: #{sdf_forward.1} parent=47 // pred_region
          %283 = dma.done [#allocation5], 4096
        $region56: #{sdf_forward.1} parent=47 // pred_fallthru
          _
        // Predicated region
        $region57: #{sdf_forward.1} parent=47 // pred_check
          %p284 = pneg %p167
        $region58: #{sdf_forward.1} parent=47 // pred_check_branch
          %286 = sbr.rel (%p284) target = $region60
        $region59: #{sdf_forward.1} parent=47 // pred_region
          %287 = dma.done [#allocation5], 2048
        $region60: #{sdf_forward.1} parent=47 // pred_fallthru
          _
        %s288 = smul.u32 32, %s20
        %p289 = scmp.lt.s32.totalorder %s288, 95
        %s290 = scalar_select %p289, %s288, 95
        %s291 = smul.addr %s290, 8
        %s292 = scalar_lea.vmem %s0, %s291
        %p293 = pneg %p41
        %p294 = pneg %p38
        %p295 = pneg %p62
        %p296 = pneg %p59
        %p297 = pneg %p83
        %p298 = pneg %p80
        %p299 = pneg %p104
        %p300 = pneg %p101
        %p301 = pneg %p125
        %p302 = pneg %p122
        %p303 = pneg %p146
        %p304 = pneg %p143
        %p305 = pneg %p167
        %p306 = pneg %p164
        %p307 = pneg %p193
        %p308 = pneg %p190
        %s309 = smul.u32 32, %s20
        %p310 = scmp.lt.s32.totalorder %s309, 95
        %s311 = scalar_select %p310, %s309, 95
        %s312 = smul.addr %s311, 8
        %s313 = scalar_lea.vmem %s7, %s312
        %s314 = smul.u32 32, %s20
        %p315 = scmp.lt.s32.totalorder %s314, 95
        %s316 = scalar_select %p315, %s314, 95
        %s317 = smul.addr %s316, 8
        %s318 = scalar_lea.vmem %s0, %s317
        %s319 = smul.u32 32, %s20
        %s320 = smul.u32 32, %s20
        %p321 = scmp.lt.s32.totalorder %s320, 95
        %s322 = scalar_select %p321, %s320, 95
        %s323 = smul.addr %s322, 8
        %s324 = scalar_lea.vmem %s7, %s323
        %s325 = smul.u32 32, %s20
        %v326 = vld [vmem:[%s318] sm:$0xff]
        %v327 = vld [vmem:[%s318 + $0x8] sm:$0xff]
        %v328 = vld [vmem:[%s318 + $0x10] sm:$0xff]
        %v329 = vld [vmem:[%s318 + $0x18] sm:$0xff]
        %v330 = vld [vmem:[%s318 + $0x20] sm:$0xff]
        %v331 = vld [vmem:[%s318 + $0x28] sm:$0xff]
        %v332 = vld [vmem:[%s318 + $0x30] sm:$0xff]
        %v333 = vld [vmem:[%s318 + $0x38] sm:$0xff]
        %v334 = vld [vmem:[%s318 + $0x40] sm:$0xff]
        %v335 = vld [vmem:[%s318 + $0x48] sm:$0xff]
        %v336 = vld [vmem:[%s318 + $0x50] sm:$0xff]
        %v337 = vld [vmem:[%s318 + $0x58] sm:$0xff]
        %v338 = vld [vmem:[%s318 + $0x60] sm:$0xff]
        %v339 = vld [vmem:[%s318 + $0x68] sm:$0xff]
        %v340 = vld [vmem:[%s318 + $0x70] sm:$0xff]
        %v341 = vld [vmem:[%s318 + $0x78] sm:$0xff]
        %v342 = vld [vmem:[%s318 + $0x80] sm:$0xff]
        %v343 = vld [vmem:[%s318 + $0x88] sm:$0xff]
        %v344 = vld [vmem:[%s318 + $0x90] sm:$0xff]
        %v345 = vld [vmem:[%s318 + $0x98] sm:$0xff]
        %v346 = vld [vmem:[%s318 + $0xa0] sm:$0xff]
        %v347 = vld [vmem:[%s318 + $0xa8] sm:$0xff]
        %v348 = vld [vmem:[%s318 + $0xb0] sm:$0xff]
        %v349 = vld [vmem:[%s318 + $0xb8] sm:$0xff]
        %v350 = vld [vmem:[%s318 + $0xc0] sm:$0xff]
        %v351 = vld [vmem:[%s318 + $0xc8] sm:$0xff]
        %v352 = vld [vmem:[%s318 + $0xd0] sm:$0xff]
        %v353 = vld [vmem:[%s318 + $0xd8] sm:$0xff]
        %v354 = vld [vmem:[%s318 + $0xe0] sm:$0xff]
        %v355 = vld [vmem:[%s318 + $0xe8] sm:$0xff]
        %v356 = vld [vmem:[%s318 + $0xf0] sm:$0xff]
        %v357 = vld [vmem:[%s318 + $0xf8] sm:$0xff]
        %v358 = vld [vmem:[#allocation2] sm:$0xff]
        %v359 = vld [vmem:[#allocation2 + $0x8] sm:$0xff]
        %v360 = vld [vmem:[#allocation2 + $0x10] sm:$0xff]
        %v361 = vld [vmem:[#allocation2 + $0x18] sm:$0xff]
        %v362 = vld [vmem:[#allocation2 + $0x20] sm:$0xff]
        %v363 = vld [vmem:[#allocation2 + $0x28] sm:$0xff]
        %v364 = vld [vmem:[#allocation2 + $0x30] sm:$0xff]
        %v365 = vld [vmem:[#allocation2 + $0x38] sm:$0xff]
        %v366 = vld [vmem:[%s4] sm:$0x3]
        %v368 = vlaneseq
        %v369 = vshrl.u32 %v368, 7
        %v370 = vsub.s32 0, %v369
        %v371 = vrot.slane %v366, %v370
        %v372 = vlaneseq
        %v373 = vshrl.u32 %v372, 7
        %v374 = vsub.s32 1, %v373
        %v375 = vrot.slane %v366, %v374
        %vm378 = vcmask 261120
        %v380 = vsel %vm378, %v326, 0
        %v383 = vsel %vm378, %v327, 0
        %v386 = vsel %vm378, %v328, 0
        %v389 = vsel %vm378, %v329, 0
        %v392 = vsel %vm378, %v330, 0
        %v395 = vsel %vm378, %v331, 0
        %v398 = vsel %vm378, %v332, 0
        %v401 = vsel %vm378, %v333, 0
        %v404 = vsel %vm378, %v334, 0
        %v407 = vsel %vm378, %v335, 0
        %v410 = vsel %vm378, %v336, 0
        %v413 = vsel %vm378, %v337, 0
        %v416 = vsel %vm378, %v338, 0
        %v419 = vsel %vm378, %v339, 0
        %v422 = vsel %vm378, %v340, 0
        %v425 = vsel %vm378, %v341, 0
        %v428 = vsel %vm378, %v342, 0
        %v431 = vsel %vm378, %v343, 0
        %v434 = vsel %vm378, %v344, 0
        %v437 = vsel %vm378, %v345, 0
        %v440 = vsel %vm378, %v346, 0
        %v443 = vsel %vm378, %v347, 0
        %v446 = vsel %vm378, %v348, 0
        %v449 = vsel %vm378, %v349, 0
        %v452 = vsel %vm378, %v350, 0
        %v455 = vsel %vm378, %v351, 0
        %v458 = vsel %vm378, %v352, 0
        %v461 = vsel %vm378, %v353, 0
        %v464 = vsel %vm378, %v354, 0
        %v467 = vsel %vm378, %v355, 0
        %v470 = vsel %vm378, %v356, 0
        %v473 = vsel %vm378, %v357, 0
        %475 = vmatprep.subr.mxu0 %v359
        %476 = vmatpush1.msra.mxu0 %v358
        %477 = vmatprep.subr.mxu0 %v361
        %478 = vmatpush1.msra.mxu0 %v360
        %479 = vmatprep.subr.mxu0 %v363
        %480 = vmatpush1.msra.mxu0 %v362
        %481 = vmatprep.subr.mxu0 %v365
        %482 = vmatpush1.msra.mxu0 %v364
        %483 = vmatprep.subr.mxu0 0.0
        %484 = vmatpush1.msra.mxu0 0.0
        %485 = vmatprep.subr.mxu0 0.0
        %486 = vmatpush1.msra.mxu0 0.0
        %487 = vmatprep.subr.mxu0 0.0
        %488 = vmatpush1.msra.mxu0 0.0
        %489 = vmatprep.subr.mxu0 0.0
        %490 = vmatpush1.msra.mxu0 0.0
        %491 = vmatprep.subr.mxu0 0.0
        %492 = vmatpush1.msra.mxu0 0.0
        %493 = vmatprep.subr.mxu0 0.0
        %494 = vmatpush1.msra.mxu0 0.0
        %495 = vmatprep.subr.mxu0 0.0
        %496 = vmatpush1.msra.mxu0 0.0
        %497 = vmatprep.subr.mxu0 0.0
        %498 = vmatpush1.msra.mxu0 0.0
        %499 = vmatprep.subr.mxu0 0.0
        %500 = vmatpush1.msra.mxu0 0.0
        %501 = vmatprep.subr.mxu0 0.0
        %502 = vmatpush1.msra.mxu0 0.0
        %503 = vmatprep.subr.mxu0 0.0
        %504 = vmatpush1.msra.mxu0 0.0
        %505 = vmatprep.subr.mxu0 0.0
        %506 = vmatpush1.msra.mxu0 0.0
        %507 = vmatprep.subr.mxu0 0.0
        %508 = vmatpush1.msra.mxu0 0.0
        %509 = vmatprep.subr.mxu0 0.0
        %510 = vmatpush1.msra.mxu0 0.0
        %511 = vmatprep.subr.mxu0 0.0
        %512 = vmatpush1.msra.mxu0 0.0
        %513 = vmatprep.subr.mxu0 0.0
        %514 = vmatpush1.msra.mxu0 0.0
        %515 = vmatprep.subr.mxu0 0.0
        %516 = vmatpush1.msra.mxu0 0.0
        %517 = vmatprep.subr.mxu0 0.0
        %518 = vmatpush1.msra.mxu0 0.0
        %519 = vmatprep.subr.mxu0 0.0
        %520 = vmatpush1.msra.mxu0 0.0
        %521 = vmatprep.subr.mxu0 0.0
        %522 = vmatpush1.msra.mxu0 0.0
        %523 = vmatprep.subr.mxu0 0.0
        %524 = vmatpush1.msra.mxu0 0.0
        %525 = vmatprep.subr.mxu0 0.0
        %526 = vmatpush1.msra.mxu0 0.0
        %527 = vmatprep.subr.mxu0 0.0
        %528 = vmatpush1.msra.mxu0 0.0
        %529 = vmatprep.subr.mxu0 0.0
        %530 = vmatpush1.msra.mxu0 0.0
        %531 = vmatprep.subr.mxu0 0.0
        %532 = vmatpush1.msra.mxu0 0.0
        %533 = vmatprep.subr.mxu0 0.0
        %534 = vmatpush1.msra.mxu0 0.0
        %535 = vmatprep.subr.mxu0 0.0
        %536 = vmatpush1.msra.mxu0 0.0
        %537 = vmatprep.subr.mxu0 0.0
        %538 = vmatpush1.msra.mxu0 0.0
        %539 = vmatprep.mubr.f32.mxu0 0.0
        %540 = vmatmul.mubr.f32.gmra.mrb[0].mxu0 %v380
        %v541 = vpop.f32.mrb[0].mxu0
        %v542 = vadd.f32 %v371, %v541
        %v543 = vpop.f32.mrb[0].mxu0
        %v544 = vadd.f32 %v375, %v543
        %545 = vmatprep.mubr.f32.mxu0 0.0
        %546 = vmatmul.mubr.f32.gmra.mrb[0].mxu0 %v383
        %v547 = vpop.f32.mrb[0].mxu0
        %v548 = vadd.f32 %v371, %v547
        %v549 = vpop.f32.mrb[0].mxu0
        %v550 = vadd.f32 %v375, %v549
        %551 = vmatprep.mubr.f32.mxu0 0.0
        %552 = vmatmul.mubr.f32.gmra.mrb[0].mxu0 %v386
        %v553 = vpop.f32.mrb[0].mxu0
        %v554 = vadd.f32 %v371, %v553
        %v555 = vpop.f32.mrb[0].mxu0
        %v556 = vadd.f32 %v375, %v555
        %557 = vmatprep.mubr.f32.mxu0 0.0
        %558 = vmatmul.mubr.f32.gmra.mrb[0].mxu0 %v389
        %v559 = vpop.f32.mrb[0].mxu0
        %v560 = vadd.f32 %v371, %v559
        %v561 = vpop.f32.mrb[0].mxu0
        %v562 = vadd.f32 %v375, %v561
        %563 = vmatprep.mubr.f32.mxu0 0.0
        %564 = vmatmul.mubr.f32.gmra.mrb[0].mxu0 %v392
        %v565 = vpop.f32.mrb[0].mxu0
        %v566 = vadd.f32 %v371, %v565
        %v567 = vpop.f32.mrb[0].mxu0
        %v568 = vadd.f32 %v375, %v567
        %569 = vmatprep.mubr.f32.mxu0 0.0
        %570 = vmatmul.mubr.f32.gmra.mrb[0].mxu0 %v395
        %v571 = vpop.f32.mrb[0].mxu0
        %v572 = vadd.f32 %v371, %v571
        %v573 = vpop.f32.mrb[0].mxu0
        %v574 = vadd.f32 %v375, %v573
        %575 = vmatprep.mubr.f32.mxu0 0.0
        %576 = vmatmul.mubr.f32.gmra.mrb[0].mxu0 %v398
        %v577 = vpop.f32.mrb[0].mxu0
        %v578 = vadd.f32 %v371, %v577
        %v579 = vpop.f32.mrb[0].mxu0
        %v580 = vadd.f32 %v375, %v579
        %581 = vmatprep.mubr.f32.mxu0 0.0
        %582 = vmatmul.mubr.f32.gmra.mrb[0].mxu0 %v401
        %v583 = vpop.f32.mrb[0].mxu0
        %v584 = vadd.f32 %v371, %v583
        %v585 = vpop.f32.mrb[0].mxu0
        %v586 = vadd.f32 %v375, %v585
        %587 = vmatprep.mubr.f32.mxu0 0.0
        %588 = vmatmul.mubr.f32.gmra.mrb[0].mxu0 %v404
        %v589 = vpop.f32.mrb[0].mxu0
        %v590 = vadd.f32 %v371, %v589
        %v591 = vpop.f32.mrb[0].mxu0
        %v592 = vadd.f32 %v375, %v591
        %593 = vmatprep.mubr.f32.mxu0 0.0
        %594 = vmatmul.mubr.f32.gmra.mrb[0].mxu0 %v407
        %v595 = vpop.f32.mrb[0].mxu0
        %v596 = vadd.f32 %v371, %v595
        %v597 = vpop.f32.mrb[0].mxu0
        %v598 = vadd.f32 %v375, %v597
        %599 = vmatprep.mubr.f32.mxu0 0.0
        %600 = vmatmul.mubr.f32.gmra.mrb[0].mxu0 %v410
        %v601 = vpop.f32.mrb[0].mxu0
        %v602 = vadd.f32 %v371, %v601
        %v603 = vpop.f32.mrb[0].mxu0
        %v604 = vadd.f32 %v375, %v603
        %605 = vmatprep.mubr.f32.mxu0 0.0
        %606 = vmatmul.mubr.f32.gmra.mrb[0].mxu0 %v413
        %v607 = vpop.f32.mrb[0].mxu0
        %v608 = vadd.f32 %v371, %v607
        %v609 = vpop.f32.mrb[0].mxu0
        %v610 = vadd.f32 %v375, %v609
        %611 = vmatprep.mubr.f32.mxu0 0.0
        %612 = vmatmul.mubr.f32.gmra.mrb[0].mxu0 %v416
        %v613 = vpop.f32.mrb[0].mxu0
        %v614 = vadd.f32 %v371, %v613
        %v615 = vpop.f32.mrb[0].mxu0
        %v616 = vadd.f32 %v375, %v615
        %617 = vmatprep.mubr.f32.mxu0 0.0
        %618 = vmatmul.mubr.f32.gmra.mrb[0].mxu0 %v419
        %v619 = vpop.f32.mrb[0].mxu0
        %v620 = vadd.f32 %v371, %v619
        %v621 = vpop.f32.mrb[0].mxu0
        %v622 = vadd.f32 %v375, %v621
        %623 = vmatprep.mubr.f32.mxu0 0.0
        %624 = vmatmul.mubr.f32.gmra.mrb[0].mxu0 %v422
        %v625 = vpop.f32.mrb[0].mxu0
        %v626 = vadd.f32 %v371, %v625
        %v627 = vpop.f32.mrb[0].mxu0
        %v628 = vadd.f32 %v375, %v627
        %629 = vmatprep.mubr.f32.mxu0 0.0
        %630 = vmatmul.mubr.f32.gmra.mrb[0].mxu0 %v425
        %v631 = vpop.f32.mrb[0].mxu0
        %v632 = vadd.f32 %v371, %v631
        %v633 = vpop.f32.mrb[0].mxu0
        %v634 = vadd.f32 %v375, %v633
        %635 = vmatprep.mubr.f32.mxu0 0.0
        %636 = vmatmul.mubr.f32.gmra.mrb[0].mxu0 %v428
        %v637 = vpop.f32.mrb[0].mxu0
        %v638 = vadd.f32 %v371, %v637
        %v639 = vpop.f32.mrb[0].mxu0
        %v640 = vadd.f32 %v375, %v639
        %641 = vmatprep.mubr.f32.mxu0 0.0
        %642 = vmatmul.mubr.f32.gmra.mrb[0].mxu0 %v431
        %v643 = vpop.f32.mrb[0].mxu0
        %v644 = vadd.f32 %v371, %v643
        %v645 = vpop.f32.mrb[0].mxu0
        %v646 = vadd.f32 %v375, %v645
        %647 = vmatprep.mubr.f32.mxu0 0.0
        %648 = vmatmul.mubr.f32.gmra.mrb[0].mxu0 %v434
        %v649 = vpop.f32.mrb[0].mxu0
        %v650 = vadd.f32 %v371, %v649
        %v651 = vpop.f32.mrb[0].mxu0
        %v652 = vadd.f32 %v375, %v651
        %653 = vmatprep.mubr.f32.mxu0 0.0
        %654 = vmatmul.mubr.f32.gmra.mrb[0].mxu0 %v437
        %v655 = vpop.f32.mrb[0].mxu0
        %v656 = vadd.f32 %v371, %v655
        %v657 = vpop.f32.mrb[0].mxu0
        %v658 = vadd.f32 %v375, %v657
        %659 = vmatprep.mubr.f32.mxu0 0.0
        %660 = vmatmul.mubr.f32.gmra.mrb[0].mxu0 %v440
        %v661 = vpop.f32.mrb[0].mxu0
        %v662 = vadd.f32 %v371, %v661
        %v663 = vpop.f32.mrb[0].mxu0
        %v664 = vadd.f32 %v375, %v663
        %665 = vmatprep.mubr.f32.mxu0 0.0
        %666 = vmatmul.mubr.f32.gmra.mrb[0].mxu0 %v443
        %v667 = vpop.f32.mrb[0].mxu0
        %v668 = vadd.f32 %v371, %v667
        %v669 = vpop.f32.mrb[0].mxu0
        %v670 = vadd.f32 %v375, %v669
        %671 = vmatprep.mubr.f32.mxu0 0.0
        %672 = vmatmul.mubr.f32.gmra.mrb[0].mxu0 %v446
        %v673 = vpop.f32.mrb[0].mxu0
        %v674 = vadd.f32 %v371, %v673
        %v675 = vpop.f32.mrb[0].mxu0
        %v676 = vadd.f32 %v375, %v675
        %677 = vmatprep.mubr.f32.mxu0 0.0
        %678 = vmatmul.mubr.f32.gmra.mrb[0].mxu0 %v449
        %v679 = vpop.f32.mrb[0].mxu0
        %v680 = vadd.f32 %v371, %v679
        %v681 = vpop.f32.mrb[0].mxu0
        %v682 = vadd.f32 %v375, %v681
        %683 = vmatprep.mubr.f32.mxu0 0.0
        %684 = vmatmul.mubr.f32.gmra.mrb[0].mxu0 %v452
        %v685 = vpop.f32.mrb[0].mxu0
        %v686 = vadd.f32 %v371, %v685
        %v687 = vpop.f32.mrb[0].mxu0
        %v688 = vadd.f32 %v375, %v687
        %689 = vmatprep.mubr.f32.mxu0 0.0
        %690 = vmatmul.mubr.f32.gmra.mrb[0].mxu0 %v455
        %v691 = vpop.f32.mrb[0].mxu0
        %v692 = vadd.f32 %v371, %v691
        %v693 = vpop.f32.mrb[0].mxu0
        %v694 = vadd.f32 %v375, %v693
        %695 = vmatprep.mubr.f32.mxu0 0.0
        %696 = vmatmul.mubr.f32.gmra.mrb[0].mxu0 %v458
        %v697 = vpop.f32.mrb[0].mxu0
        %v698 = vadd.f32 %v371, %v697
        %v699 = vpop.f32.mrb[0].mxu0
        %v700 = vadd.f32 %v375, %v699
        %701 = vmatprep.mubr.f32.mxu0 0.0
        %702 = vmatmul.mubr.f32.gmra.mrb[0].mxu0 %v461
        %v703 = vpop.f32.mrb[0].mxu0
        %v704 = vadd.f32 %v371, %v703
        %v705 = vpop.f32.mrb[0].mxu0
        %v706 = vadd.f32 %v375, %v705
        %707 = vmatprep.mubr.f32.mxu0 0.0
        %708 = vmatmul.mubr.f32.gmra.mrb[0].mxu0 %v464
        %v709 = vpop.f32.mrb[0].mxu0
        %v710 = vadd.f32 %v371, %v709
        %v711 = vpop.f32.mrb[0].mxu0
        %v712 = vadd.f32 %v375, %v711
        %713 = vmatprep.mubr.f32.mxu0 0.0
        %714 = vmatmul.mubr.f32.gmra.mrb[0].mxu0 %v467
        %v715 = vpop.f32.mrb[0].mxu0
        %v716 = vadd.f32 %v371, %v715
        %v717 = vpop.f32.mrb[0].mxu0
        %v718 = vadd.f32 %v375, %v717
        %719 = vmatprep.mubr.f32.mxu0 0.0
        %720 = vmatmul.mubr.f32.gmra.mrb[0].mxu0 %v470
        %v721 = vpop.f32.mrb[0].mxu0
        %v722 = vadd.f32 %v371, %v721
        %v723 = vpop.f32.mrb[0].mxu0
        %v724 = vadd.f32 %v375, %v723
        %725 = vmatprep.mubr.f32.mxu0 0.0
        %726 = vmatmul.mubr.f32.gmra.mrb[0].mxu0 %v473
        %v727 = vpop.f32.mrb[0].mxu0
        %v728 = vadd.f32 %v371, %v727
        %v729 = vpop.f32.mrb[0].mxu0
        %v730 = vadd.f32 %v375, %v729
        %731 = vdwg.mxu0
        %v732 = vmul.f32 %v542, 100.0
        %v733 = vmul.f32 %v544, 100.0
        %v734 = vmul.f32 %v548, 100.0
        %v735 = vmul.f32 %v550, 100.0
        %v736 = vmul.f32 %v554, 100.0
        %v737 = vmul.f32 %v556, 100.0
        %v738 = vmul.f32 %v560, 100.0
        %v739 = vmul.f32 %v562, 100.0
        %v740 = vmul.f32 %v566, 100.0
        %v741 = vmul.f32 %v568, 100.0
        %v742 = vmul.f32 %v572, 100.0
        %v743 = vmul.f32 %v574, 100.0
        %v744 = vmul.f32 %v578, 100.0
        %v745 = vmul.f32 %v580, 100.0
        %v746 = vmul.f32 %v584, 100.0
        %v747 = vmul.f32 %v586, 100.0
        %v748 = vmul.f32 %v590, 100.0
        %v749 = vmul.f32 %v592, 100.0
        %v750 = vmul.f32 %v596, 100.0
        %v751 = vmul.f32 %v598, 100.0
        %v752 = vmul.f32 %v602, 100.0
        %v753 = vmul.f32 %v604, 100.0
        %v754 = vmul.f32 %v608, 100.0
        %v755 = vmul.f32 %v610, 100.0
        %v756 = vmul.f32 %v614, 100.0
        %v757 = vmul.f32 %v616, 100.0
        %v758 = vmul.f32 %v620, 100.0
        %v759 = vmul.f32 %v622, 100.0
        %v760 = vmul.f32 %v626, 100.0
        %v761 = vmul.f32 %v628, 100.0
        %v762 = vmul.f32 %v632, 100.0
        %v763 = vmul.f32 %v634, 100.0
        %v764 = vmul.f32 %v638, 100.0
        %v765 = vmul.f32 %v640, 100.0
        %v766 = vmul.f32 %v644, 100.0
        %v767 = vmul.f32 %v646, 100.0
        %v768 = vmul.f32 %v650, 100.0
        %v769 = vmul.f32 %v652, 100.0
        %v770 = vmul.f32 %v656, 100.0
        %v771 = vmul.f32 %v658, 100.0
        %v772 = vmul.f32 %v662, 100.0
        %v773 = vmul.f32 %v664, 100.0
        %v774 = vmul.f32 %v668, 100.0
        %v775 = vmul.f32 %v670, 100.0
        %v776 = vmul.f32 %v674, 100.0
        %v777 = vmul.f32 %v676, 100.0
        %v778 = vmul.f32 %v680, 100.0
        %v779 = vmul.f32 %v682, 100.0
        %v780 = vmul.f32 %v686, 100.0
        %v781 = vmul.f32 %v688, 100.0
        %v782 = vmul.f32 %v692, 100.0
        %v783 = vmul.f32 %v694, 100.0
        %v784 = vmul.f32 %v698, 100.0
        %v785 = vmul.f32 %v700, 100.0
        %v786 = vmul.f32 %v704, 100.0
        %v787 = vmul.f32 %v706, 100.0
        %v788 = vmul.f32 %v710, 100.0
        %v789 = vmul.f32 %v712, 100.0
        %v790 = vmul.f32 %v716, 100.0
        %v791 = vmul.f32 %v718, 100.0
        %v792 = vmul.f32 %v722, 100.0
        %v793 = vmul.f32 %v724, 100.0
        %v794 = vmul.f32 %v728, 100.0
        %v795 = vmul.f32 %v730, 100.0
        %v796 = vmin.f32 %v732, 20.0
        %v797 = vmin.f32 %v733, 20.0
        %v798 = vmin.f32 %v734, 20.0
        %v799 = vmin.f32 %v735, 20.0
        %v800 = vmin.f32 %v736, 20.0
        %v801 = vmin.f32 %v737, 20.0
        %v802 = vmin.f32 %v738, 20.0
        %v803 = vmin.f32 %v739, 20.0
        %v804 = vmin.f32 %v740, 20.0
        %v805 = vmin.f32 %v741, 20.0
        %v806 = vmin.f32 %v742, 20.0
        %v807 = vmin.f32 %v743, 20.0
        %v808 = vmin.f32 %v744, 20.0
        %v809 = vmin.f32 %v745, 20.0
        %v810 = vmin.f32 %v746, 20.0
        %v811 = vmin.f32 %v747, 20.0
        %v812 = vmin.f32 %v748, 20.0
        %v813 = vmin.f32 %v749, 20.0
        %v814 = vmin.f32 %v750, 20.0
        %v815 = vmin.f32 %v751, 20.0
        %v816 = vmin.f32 %v752, 20.0
        %v817 = vmin.f32 %v753, 20.0
        %v818 = vmin.f32 %v754, 20.0
        %v819 = vmin.f32 %v755, 20.0
        %v820 = vmin.f32 %v756, 20.0
        %v821 = vmin.f32 %v757, 20.0
        %v822 = vmin.f32 %v758, 20.0
        %v823 = vmin.f32 %v759, 20.0
        %v824 = vmin.f32 %v760, 20.0
        %v825 = vmin.f32 %v761, 20.0
        %v826 = vmin.f32 %v762, 20.0
        %v827 = vmin.f32 %v763, 20.0
        %v828 = vmin.f32 %v764, 20.0
        %v829 = vmin.f32 %v765, 20.0
        %v830 = vmin.f32 %v766, 20.0
        %v831 = vmin.f32 %v767, 20.0
        %v832 = vmin.f32 %v768, 20.0
        %v833 = vmin.f32 %v769, 20.0
        %v834 = vmin.f32 %v770, 20.0
        %v835 = vmin.f32 %v771, 20.0
        %v836 = vmin.f32 %v772, 20.0
        %v837 = vmin.f32 %v773, 20.0
        %v838 = vmin.f32 %v774, 20.0
        %v839 = vmin.f32 %v775, 20.0
        %v840 = vmin.f32 %v776, 20.0
        %v841 = vmin.f32 %v777, 20.0
        %v842 = vmin.f32 %v778, 20.0
        %v843 = vmin.f32 %v779, 20.0
        %v844 = vmin.f32 %v780, 20.0
        %v845 = vmin.f32 %v781, 20.0
        %v846 = vmin.f32 %v782, 20.0
        %v847 = vmin.f32 %v783, 20.0
        %v848 = vmin.f32 %v784, 20.0
        %v849 = vmin.f32 %v785, 20.0
        %v850 = vmin.f32 %v786, 20.0
        %v851 = vmin.f32 %v787, 20.0
        %v852 = vmin.f32 %v788, 20.0
        %v853 = vmin.f32 %v789, 20.0
        %v854 = vmin.f32 %v790, 20.0
        %v855 = vmin.f32 %v791, 20.0
        %v856 = vmin.f32 %v792, 20.0
        %v857 = vmin.f32 %v793, 20.0
        %v858 = vmin.f32 %v794, 20.0
        %v859 = vmin.f32 %v795, 20.0
        %vm860 = vcmp.gt.f32.partialorder %v732, 20.0
        %vm861 = vcmp.gt.f32.partialorder %v733, 20.0
        %vm862 = vcmp.gt.f32.partialorder %v734, 20.0
        %vm863 = vcmp.gt.f32.partialorder %v735, 20.0
        %vm864 = vcmp.gt.f32.partialorder %v736, 20.0
        %vm865 = vcmp.gt.f32.partialorder %v737, 20.0
        %vm866 = vcmp.gt.f32.partialorder %v738, 20.0
        %vm867 = vcmp.gt.f32.partialorder %v739, 20.0
        %vm868 = vcmp.gt.f32.partialorder %v740, 20.0
        %vm869 = vcmp.gt.f32.partialorder %v741, 20.0
        %vm870 = vcmp.gt.f32.partialorder %v742, 20.0
        %vm871 = vcmp.gt.f32.partialorder %v743, 20.0
        %vm872 = vcmp.gt.f32.partialorder %v744, 20.0
        %vm873 = vcmp.gt.f32.partialorder %v745, 20.0
        %vm874 = vcmp.gt.f32.partialorder %v746, 20.0
        %vm875 = vcmp.gt.f32.partialorder %v747, 20.0
        %vm876 = vcmp.gt.f32.partialorder %v748, 20.0
        %vm877 = vcmp.gt.f32.partialorder %v749, 20.0
        %vm878 = vcmp.gt.f32.partialorder %v750, 20.0
        %vm879 = vcmp.gt.f32.partialorder %v751, 20.0
        %vm880 = vcmp.gt.f32.partialorder %v752, 20.0
        %vm881 = vcmp.gt.f32.partialorder %v753, 20.0
        %vm882 = vcmp.gt.f32.partialorder %v754, 20.0
        %vm883 = vcmp.gt.f32.partialorder %v755, 20.0
        %vm884 = vcmp.gt.f32.partialorder %v756, 20.0
        %vm885 = vcmp.gt.f32.partialorder %v757, 20.0
        %vm886 = vcmp.gt.f32.partialorder %v758, 20.0
        %vm887 = vcmp.gt.f32.partialorder %v759, 20.0
        %vm888 = vcmp.gt.f32.partialorder %v760, 20.0
        %vm889 = vcmp.gt.f32.partialorder %v761, 20.0
        %vm890 = vcmp.gt.f32.partialorder %v762, 20.0
        %vm891 = vcmp.gt.f32.partialorder %v763, 20.0
        %vm892 = vcmp.gt.f32.partialorder %v764, 20.0
        %vm893 = vcmp.gt.f32.partialorder %v765, 20.0
        %vm894 = vcmp.gt.f32.partialorder %v766, 20.0
        %vm895 = vcmp.gt.f32.partialorder %v767, 20.0
        %vm896 = vcmp.gt.f32.partialorder %v768, 20.0
        %vm897 = vcmp.gt.f32.partialorder %v769, 20.0
        %vm898 = vcmp.gt.f32.partialorder %v770, 20.0
        %vm899 = vcmp.gt.f32.partialorder %v771, 20.0
        %vm900 = vcmp.gt.f32.partialorder %v772, 20.0
        %vm901 = vcmp.gt.f32.partialorder %v773, 20.0
        %vm902 = vcmp.gt.f32.partialorder %v774, 20.0
        %vm903 = vcmp.gt.f32.partialorder %v775, 20.0
        %vm904 = vcmp.gt.f32.partialorder %v776, 20.0
        %vm905 = vcmp.gt.f32.partialorder %v777, 20.0
        %vm906 = vcmp.gt.f32.partialorder %v778, 20.0
        %vm907 = vcmp.gt.f32.partialorder %v779, 20.0
        %vm908 = vcmp.gt.f32.partialorder %v780, 20.0
        %vm909 = vcmp.gt.f32.partialorder %v781, 20.0
        %vm910 = vcmp.gt.f32.partialorder %v782, 20.0
        %vm911 = vcmp.gt.f32.partialorder %v783, 20.0
        %vm912 = vcmp.gt.f32.partialorder %v784, 20.0
        %vm913 = vcmp.gt.f32.partialorder %v785, 20.0
        %vm914 = vcmp.gt.f32.partialorder %v786, 20.0
        %vm915 = vcmp.gt.f32.partialorder %v787, 20.0
        %vm916 = vcmp.gt.f32.partialorder %v788, 20.0
        %vm917 = vcmp.gt.f32.partialorder %v789, 20.0
        %vm918 = vcmp.gt.f32.partialorder %v790, 20.0
        %vm919 = vcmp.gt.f32.partialorder %v791, 20.0
        %vm920 = vcmp.gt.f32.partialorder %v792, 20.0
        %vm921 = vcmp.gt.f32.partialorder %v793, 20.0
        %vm922 = vcmp.gt.f32.partialorder %v794, 20.0
        %vm923 = vcmp.gt.f32.partialorder %v795, 20.0
        %v924 = vmul.f32 %v796, 1.442695
        %v925 = vpow.pop %v924
        %v926 = vmul.f32 %v797, 1.442695
        %v927 = vpow.pop %v926
        %v928 = vmul.f32 %v798, 1.442695
        %v929 = vpow.pop %v928
        %v930 = vmul.f32 %v799, 1.442695
        %v931 = vpow.pop %v930
        %v932 = vmul.f32 %v800, 1.442695
        %v933 = vpow.pop %v932
        %v934 = vmul.f32 %v801, 1.442695
        %v935 = vpow.pop %v934
        %v936 = vmul.f32 %v802, 1.442695
        %v937 = vpow.pop %v936
        %v938 = vmul.f32 %v803, 1.442695
        %v939 = vpow.pop %v938
        %v940 = vmul.f32 %v804, 1.442695
        %v941 = vpow.pop %v940
        %v942 = vmul.f32 %v805, 1.442695
        %v943 = vpow.pop %v942
        %v944 = vmul.f32 %v806, 1.442695
        %v945 = vpow.pop %v944
        %v946 = vmul.f32 %v807, 1.442695
        %v947 = vpow.pop %v946
        %v948 = vmul.f32 %v808, 1.442695
        %v949 = vpow.pop %v948
        %v950 = vmul.f32 %v809, 1.442695
        %v951 = vpow.pop %v950
        %v952 = vmul.f32 %v810, 1.442695
        %v953 = vpow.pop %v952
        %v954 = vmul.f32 %v811, 1.442695
        %v955 = vpow.pop %v954
        %v956 = vmul.f32 %v812, 1.442695
        %v957 = vpow.pop %v956
        %v958 = vmul.f32 %v813, 1.442695
        %v959 = vpow.pop %v958
        %v960 = vmul.f32 %v814, 1.442695
        %v961 = vpow.pop %v960
        %v962 = vmul.f32 %v815, 1.442695
        %v963 = vpow.pop %v962
        %v964 = vmul.f32 %v816, 1.442695
        %v965 = vpow.pop %v964
        %v966 = vmul.f32 %v817, 1.442695
        %v967 = vpow.pop %v966
        %v968 = vmul.f32 %v818, 1.442695
        %v969 = vpow.pop %v968
        %v970 = vmul.f32 %v819, 1.442695
        %v971 = vpow.pop %v970
        %v972 = vmul.f32 %v820, 1.442695
        %v973 = vpow.pop %v972
        %v974 = vmul.f32 %v821, 1.442695
        %v975 = vpow.pop %v974
        %v976 = vmul.f32 %v822, 1.442695
        %v977 = vpow.pop %v976
        %v978 = vmul.f32 %v823, 1.442695
        %v979 = vpow.pop %v978
        %v980 = vmul.f32 %v824, 1.442695
        %v981 = vpow.pop %v980
        %v982 = vmul.f32 %v825, 1.442695
        %v983 = vpow.pop %v982
        %v984 = vmul.f32 %v826, 1.442695
        %v985 = vpow.pop %v984
        %v986 = vmul.f32 %v827, 1.442695
        %v987 = vpow.pop %v986
        %v988 = vmul.f32 %v828, 1.442695
        %v989 = vpow.pop %v988
        %v990 = vmul.f32 %v829, 1.442695
        %v991 = vpow.pop %v990
        %v992 = vmul.f32 %v830, 1.442695
        %v993 = vpow.pop %v992
        %v994 = vmul.f32 %v831, 1.442695
        %v995 = vpow.pop %v994
        %v996 = vmul.f32 %v832, 1.442695
        %v997 = vpow.pop %v996
        %v998 = vmul.f32 %v833, 1.442695
        %v999 = vpow.pop %v998
        %v1000 = vmul.f32 %v834, 1.442695
        %v1001 = vpow.pop %v1000
        %v1002 = vmul.f32 %v835, 1.442695
        %v1003 = vpow.pop %v1002
        %v1004 = vmul.f32 %v836, 1.442695
        %v1005 = vpow.pop %v1004
        %v1006 = vmul.f32 %v837, 1.442695
        %v1007 = vpow.pop %v1006
        %v1008 = vmul.f32 %v838, 1.442695
        %v1009 = vpow.pop %v1008
        %v1010 = vmul.f32 %v839, 1.442695
        %v1011 = vpow.pop %v1010
        %v1012 = vmul.f32 %v840, 1.442695
        %v1013 = vpow.pop %v1012
        %v1014 = vmul.f32 %v841, 1.442695
        %v1015 = vpow.pop %v1014
        %v1016 = vmul.f32 %v842, 1.442695
        %v1017 = vpow.pop %v1016
        %v1018 = vmul.f32 %v843, 1.442695
        %v1019 = vpow.pop %v1018
        %v1020 = vmul.f32 %v844, 1.442695
        %v1021 = vpow.pop %v1020
        %v1022 = vmul.f32 %v845, 1.442695
        %v1023 = vpow.pop %v1022
        %v1024 = vmul.f32 %v846, 1.442695
        %v1025 = vpow.pop %v1024
        %v1026 = vmul.f32 %v847, 1.442695
        %v1027 = vpow.pop %v1026
        %v1028 = vmul.f32 %v848, 1.442695
        %v1029 = vpow.pop %v1028
        %v1030 = vmul.f32 %v849, 1.442695
        %v1031 = vpow.pop %v1030
        %v1032 = vmul.f32 %v850, 1.442695
        %v1033 = vpow.pop %v1032
        %v1034 = vmul.f32 %v851, 1.442695
        %v1035 = vpow.pop %v1034
        %v1036 = vmul.f32 %v852, 1.442695
        %v1037 = vpow.pop %v1036
        %v1038 = vmul.f32 %v853, 1.442695
        %v1039 = vpow.pop %v1038
        %v1040 = vmul.f32 %v854, 1.442695
        %v1041 = vpow.pop %v1040
        %v1042 = vmul.f32 %v855, 1.442695
        %v1043 = vpow.pop %v1042
        %v1044 = vmul.f32 %v856, 1.442695
        %v1045 = vpow.pop %v1044
        %v1046 = vmul.f32 %v857, 1.442695
        %v1047 = vpow.pop %v1046
        %v1048 = vmul.f32 %v858, 1.442695
        %v1049 = vpow.pop %v1048
        %v1050 = vmul.f32 %v859, 1.442695
        %v1051 = vpow.pop %v1050
        %v1052 = vadd.f32 %v925, 1.0
        %v1053 = vlog2.pop %v1052
        %v1054 = vmul.f32 %v1053, 0.6931472
        %v1055 = vmul.f32 -0.5, %v925
        %v1056 = vadd.f32 %v1055, 1.0
        %v1057 = vmul.f32 %v1056, %v925
        %v1058 = vand.u32 2147483647, %v925
        %vm1059 = vcmp.lt.f32.partialorder %v1058, 0.0004427343
        %v1060 = vsel %vm1059, %v1057, %v1054
        %v1061 = vadd.f32 %v927, 1.0
        %v1062 = vlog2.pop %v1061
        %v1063 = vmul.f32 %v1062, 0.6931472
        %v1064 = vmul.f32 -0.5, %v927
        %v1065 = vadd.f32 %v1064, 1.0
        %v1066 = vmul.f32 %v1065, %v927
        %v1067 = vand.u32 2147483647, %v927
        %vm1068 = vcmp.lt.f32.partialorder %v1067, 0.0004427343
        %v1069 = vsel %vm1068, %v1066, %v1063
        %v1070 = vadd.f32 %v929, 1.0
        %v1071 = vlog2.pop %v1070
        %v1072 = vmul.f32 %v1071, 0.6931472
        %v1073 = vmul.f32 -0.5, %v929
        %v1074 = vadd.f32 %v1073, 1.0
        %v1075 = vmul.f32 %v1074, %v929
        %v1076 = vand.u32 2147483647, %v929
        %vm1077 = vcmp.lt.f32.partialorder %v1076, 0.0004427343
        %v1078 = vsel %vm1077, %v1075, %v1072
        %v1079 = vadd.f32 %v931, 1.0
        %v1080 = vlog2.pop %v1079
        %v1081 = vmul.f32 %v1080, 0.6931472
        %v1082 = vmul.f32 -0.5, %v931
        %v1083 = vadd.f32 %v1082, 1.0
        %v1084 = vmul.f32 %v1083, %v931
        %v1085 = vand.u32 2147483647, %v931
        %vm1086 = vcmp.lt.f32.partialorder %v1085, 0.0004427343
        %v1087 = vsel %vm1086, %v1084, %v1081
        %v1088 = vadd.f32 %v933, 1.0
        %v1089 = vlog2.pop %v1088
        %v1090 = vmul.f32 %v1089, 0.6931472
        %v1091 = vmul.f32 -0.5, %v933
        %v1092 = vadd.f32 %v1091, 1.0
        %v1093 = vmul.f32 %v1092, %v933
        %v1094 = vand.u32 2147483647, %v933
        %vm1095 = vcmp.lt.f32.partialorder %v1094, 0.0004427343
        %v1096 = vsel %vm1095, %v1093, %v1090
        %v1097 = vadd.f32 %v935, 1.0
        %v1098 = vlog2.pop %v1097
        %v1099 = vmul.f32 %v1098, 0.6931472
        %v1100 = vmul.f32 -0.5, %v935
        %v1101 = vadd.f32 %v1100, 1.0
        %v1102 = vmul.f32 %v1101, %v935
        %v1103 = vand.u32 2147483647, %v935
        %vm1104 = vcmp.lt.f32.partialorder %v1103, 0.0004427343
        %v1105 = vsel %vm1104, %v1102, %v1099
        %v1106 = vadd.f32 %v937, 1.0
        %v1107 = vlog2.pop %v1106
        %v1108 = vmul.f32 %v1107, 0.6931472
        %v1109 = vmul.f32 -0.5, %v937
        %v1110 = vadd.f32 %v1109, 1.0
        %v1111 = vmul.f32 %v1110, %v937
        %v1112 = vand.u32 2147483647, %v937
        %vm1113 = vcmp.lt.f32.partialorder %v1112, 0.0004427343
        %v1114 = vsel %vm1113, %v1111, %v1108
        %v1115 = vadd.f32 %v939, 1.0
        %v1116 = vlog2.pop %v1115
        %v1117 = vmul.f32 %v1116, 0.6931472
        %v1118 = vmul.f32 -0.5, %v939
        %v1119 = vadd.f32 %v1118, 1.0
        %v1120 = vmul.f32 %v1119, %v939
        %v1121 = vand.u32 2147483647, %v939
        %vm1122 = vcmp.lt.f32.partialorder %v1121, 0.0004427343
        %v1123 = vsel %vm1122, %v1120, %v1117
        %v1124 = vadd.f32 %v941, 1.0
        %v1125 = vlog2.pop %v1124
        %v1126 = vmul.f32 %v1125, 0.6931472
        %v1127 = vmul.f32 -0.5, %v941
        %v1128 = vadd.f32 %v1127, 1.0
        %v1129 = vmul.f32 %v1128, %v941
        %v1130 = vand.u32 2147483647, %v941
        %vm1131 = vcmp.lt.f32.partialorder %v1130, 0.0004427343
        %v1132 = vsel %vm1131, %v1129, %v1126
        %v1133 = vadd.f32 %v943, 1.0
        %v1134 = vlog2.pop %v1133
        %v1135 = vmul.f32 %v1134, 0.6931472
        %v1136 = vmul.f32 -0.5, %v943
        %v1137 = vadd.f32 %v1136, 1.0
        %v1138 = vmul.f32 %v1137, %v943
        %v1139 = vand.u32 2147483647, %v943
        %vm1140 = vcmp.lt.f32.partialorder %v1139, 0.0004427343
        %v1141 = vsel %vm1140, %v1138, %v1135
        %v1142 = vadd.f32 %v945, 1.0
        %v1143 = vlog2.pop %v1142
        %v1144 = vmul.f32 %v1143, 0.6931472
        %v1145 = vmul.f32 -0.5, %v945
        %v1146 = vadd.f32 %v1145, 1.0
        %v1147 = vmul.f32 %v1146, %v945
        %v1148 = vand.u32 2147483647, %v945
        %vm1149 = vcmp.lt.f32.partialorder %v1148, 0.0004427343
        %v1150 = vsel %vm1149, %v1147, %v1144
        %v1151 = vadd.f32 %v947, 1.0
        %v1152 = vlog2.pop %v1151
        %v1153 = vmul.f32 %v1152, 0.6931472
        %v1154 = vmul.f32 -0.5, %v947
        %v1155 = vadd.f32 %v1154, 1.0
        %v1156 = vmul.f32 %v1155, %v947
        %v1157 = vand.u32 2147483647, %v947
        %vm1158 = vcmp.lt.f32.partialorder %v1157, 0.0004427343
        %v1159 = vsel %vm1158, %v1156, %v1153
        %v1160 = vadd.f32 %v949, 1.0
        %v1161 = vlog2.pop %v1160
        %v1162 = vmul.f32 %v1161, 0.6931472
        %v1163 = vmul.f32 -0.5, %v949
        %v1164 = vadd.f32 %v1163, 1.0
        %v1165 = vmul.f32 %v1164, %v949
        %v1166 = vand.u32 2147483647, %v949
        %vm1167 = vcmp.lt.f32.partialorder %v1166, 0.0004427343
        %v1168 = vsel %vm1167, %v1165, %v1162
        %v1169 = vadd.f32 %v951, 1.0
        %v1170 = vlog2.pop %v1169
        %v1171 = vmul.f32 %v1170, 0.6931472
        %v1172 = vmul.f32 -0.5, %v951
        %v1173 = vadd.f32 %v1172, 1.0
        %v1174 = vmul.f32 %v1173, %v951
        %v1175 = vand.u32 2147483647, %v951
        %vm1176 = vcmp.lt.f32.partialorder %v1175, 0.0004427343
        %v1177 = vsel %vm1176, %v1174, %v1171
        %v1178 = vadd.f32 %v953, 1.0
        %v1179 = vlog2.pop %v1178
        %v1180 = vmul.f32 %v1179, 0.6931472
        %v1181 = vmul.f32 -0.5, %v953
        %v1182 = vadd.f32 %v1181, 1.0
        %v1183 = vmul.f32 %v1182, %v953
        %v1184 = vand.u32 2147483647, %v953
        %vm1185 = vcmp.lt.f32.partialorder %v1184, 0.0004427343
        %v1186 = vsel %vm1185, %v1183, %v1180
        %v1187 = vadd.f32 %v955, 1.0
        %v1188 = vlog2.pop %v1187
        %v1189 = vmul.f32 %v1188, 0.6931472
        %v1190 = vmul.f32 -0.5, %v955
        %v1191 = vadd.f32 %v1190, 1.0
        %v1192 = vmul.f32 %v1191, %v955
        %v1193 = vand.u32 2147483647, %v955
        %vm1194 = vcmp.lt.f32.partialorder %v1193, 0.0004427343
        %v1195 = vsel %vm1194, %v1192, %v1189
        %v1196 = vadd.f32 %v957, 1.0
        %v1197 = vlog2.pop %v1196
        %v1198 = vmul.f32 %v1197, 0.6931472
        %v1199 = vmul.f32 -0.5, %v957
        %v1200 = vadd.f32 %v1199, 1.0
        %v1201 = vmul.f32 %v1200, %v957
        %v1202 = vand.u32 2147483647, %v957
        %vm1203 = vcmp.lt.f32.partialorder %v1202, 0.0004427343
        %v1204 = vsel %vm1203, %v1201, %v1198
        %v1205 = vadd.f32 %v959, 1.0
        %v1206 = vlog2.pop %v1205
        %v1207 = vmul.f32 %v1206, 0.6931472
        %v1208 = vmul.f32 -0.5, %v959
        %v1209 = vadd.f32 %v1208, 1.0
        %v1210 = vmul.f32 %v1209, %v959
        %v1211 = vand.u32 2147483647, %v959
        %vm1212 = vcmp.lt.f32.partialorder %v1211, 0.0004427343
        %v1213 = vsel %vm1212, %v1210, %v1207
        %v1214 = vadd.f32 %v961, 1.0
        %v1215 = vlog2.pop %v1214
        %v1216 = vmul.f32 %v1215, 0.6931472
        %v1217 = vmul.f32 -0.5, %v961
        %v1218 = vadd.f32 %v1217, 1.0
        %v1219 = vmul.f32 %v1218, %v961
        %v1220 = vand.u32 2147483647, %v961
        %vm1221 = vcmp.lt.f32.partialorder %v1220, 0.0004427343
        %v1222 = vsel %vm1221, %v1219, %v1216
        %v1223 = vadd.f32 %v963, 1.0
        %v1224 = vlog2.pop %v1223
        %v1225 = vmul.f32 %v1224, 0.6931472
        %v1226 = vmul.f32 -0.5, %v963
        %v1227 = vadd.f32 %v1226, 1.0
        %v1228 = vmul.f32 %v1227, %v963
        %v1229 = vand.u32 2147483647, %v963
        %vm1230 = vcmp.lt.f32.partialorder %v1229, 0.0004427343
        %v1231 = vsel %vm1230, %v1228, %v1225
        %v1232 = vadd.f32 %v965, 1.0
        %v1233 = vlog2.pop %v1232
        %v1234 = vmul.f32 %v1233, 0.6931472
        %v1235 = vmul.f32 -0.5, %v965
        %v1236 = vadd.f32 %v1235, 1.0
        %v1237 = vmul.f32 %v1236, %v965
        %v1238 = vand.u32 2147483647, %v965
        %vm1239 = vcmp.lt.f32.partialorder %v1238, 0.0004427343
        %v1240 = vsel %vm1239, %v1237, %v1234
        %v1241 = vadd.f32 %v967, 1.0
        %v1242 = vlog2.pop %v1241
        %v1243 = vmul.f32 %v1242, 0.6931472
        %v1244 = vmul.f32 -0.5, %v967
        %v1245 = vadd.f32 %v1244, 1.0
        %v1246 = vmul.f32 %v1245, %v967
        %v1247 = vand.u32 2147483647, %v967
        %vm1248 = vcmp.lt.f32.partialorder %v1247, 0.0004427343
        %v1249 = vsel %vm1248, %v1246, %v1243
        %v1250 = vadd.f32 %v969, 1.0
        %v1251 = vlog2.pop %v1250
        %v1252 = vmul.f32 %v1251, 0.6931472
        %v1253 = vmul.f32 -0.5, %v969
        %v1254 = vadd.f32 %v1253, 1.0
        %v1255 = vmul.f32 %v1254, %v969
        %v1256 = vand.u32 2147483647, %v969
        %vm1257 = vcmp.lt.f32.partialorder %v1256, 0.0004427343
        %v1258 = vsel %vm1257, %v1255, %v1252
        %v1259 = vadd.f32 %v971, 1.0
        %v1260 = vlog2.pop %v1259
        %v1261 = vmul.f32 %v1260, 0.6931472
        %v1262 = vmul.f32 -0.5, %v971
        %v1263 = vadd.f32 %v1262, 1.0
        %v1264 = vmul.f32 %v1263, %v971
        %v1265 = vand.u32 2147483647, %v971
        %vm1266 = vcmp.lt.f32.partialorder %v1265, 0.0004427343
        %v1267 = vsel %vm1266, %v1264, %v1261
        %v1268 = vadd.f32 %v973, 1.0
        %v1269 = vlog2.pop %v1268
        %v1270 = vmul.f32 %v1269, 0.6931472
        %v1271 = vmul.f32 -0.5, %v973
        %v1272 = vadd.f32 %v1271, 1.0
        %v1273 = vmul.f32 %v1272, %v973
        %v1274 = vand.u32 2147483647, %v973
        %vm1275 = vcmp.lt.f32.partialorder %v1274, 0.0004427343
        %v1276 = vsel %vm1275, %v1273, %v1270
        %v1277 = vadd.f32 %v975, 1.0
        %v1278 = vlog2.pop %v1277
        %v1279 = vmul.f32 %v1278, 0.6931472
        %v1280 = vmul.f32 -0.5, %v975
        %v1281 = vadd.f32 %v1280, 1.0
        %v1282 = vmul.f32 %v1281, %v975
        %v1283 = vand.u32 2147483647, %v975
        %vm1284 = vcmp.lt.f32.partialorder %v1283, 0.0004427343
        %v1285 = vsel %vm1284, %v1282, %v1279
        %v1286 = vadd.f32 %v977, 1.0
        %v1287 = vlog2.pop %v1286
        %v1288 = vmul.f32 %v1287, 0.6931472
        %v1289 = vmul.f32 -0.5, %v977
        %v1290 = vadd.f32 %v1289, 1.0
        %v1291 = vmul.f32 %v1290, %v977
        %v1292 = vand.u32 2147483647, %v977
        %vm1293 = vcmp.lt.f32.partialorder %v1292, 0.0004427343
        %v1294 = vsel %vm1293, %v1291, %v1288
        %v1295 = vadd.f32 %v979, 1.0
        %v1296 = vlog2.pop %v1295
        %v1297 = vmul.f32 %v1296, 0.6931472
        %v1298 = vmul.f32 -0.5, %v979
        %v1299 = vadd.f32 %v1298, 1.0
        %v1300 = vmul.f32 %v1299, %v979
        %v1301 = vand.u32 2147483647, %v979
        %vm1302 = vcmp.lt.f32.partialorder %v1301, 0.0004427343
        %v1303 = vsel %vm1302, %v1300, %v1297
        %v1304 = vadd.f32 %v981, 1.0
        %v1305 = vlog2.pop %v1304
        %v1306 = vmul.f32 %v1305, 0.6931472
        %v1307 = vmul.f32 -0.5, %v981
        %v1308 = vadd.f32 %v1307, 1.0
        %v1309 = vmul.f32 %v1308, %v981
        %v1310 = vand.u32 2147483647, %v981
        %vm1311 = vcmp.lt.f32.partialorder %v1310, 0.0004427343
        %v1312 = vsel %vm1311, %v1309, %v1306
        %v1313 = vadd.f32 %v983, 1.0
        %v1314 = vlog2.pop %v1313
        %v1315 = vmul.f32 %v1314, 0.6931472
        %v1316 = vmul.f32 -0.5, %v983
        %v1317 = vadd.f32 %v1316, 1.0
        %v1318 = vmul.f32 %v1317, %v983
        %v1319 = vand.u32 2147483647, %v983
        %vm1320 = vcmp.lt.f32.partialorder %v1319, 0.0004427343
        %v1321 = vsel %vm1320, %v1318, %v1315
        %v1322 = vadd.f32 %v985, 1.0
        %v1323 = vlog2.pop %v1322
        %v1324 = vmul.f32 %v1323, 0.6931472
        %v1325 = vmul.f32 -0.5, %v985
        %v1326 = vadd.f32 %v1325, 1.0
        %v1327 = vmul.f32 %v1326, %v985
        %v1328 = vand.u32 2147483647, %v985
        %vm1329 = vcmp.lt.f32.partialorder %v1328, 0.0004427343
        %v1330 = vsel %vm1329, %v1327, %v1324
        %v1331 = vadd.f32 %v987, 1.0
        %v1332 = vlog2.pop %v1331
        %v1333 = vmul.f32 %v1332, 0.6931472
        %v1334 = vmul.f32 -0.5, %v987
        %v1335 = vadd.f32 %v1334, 1.0
        %v1336 = vmul.f32 %v1335, %v987
        %v1337 = vand.u32 2147483647, %v987
        %vm1338 = vcmp.lt.f32.partialorder %v1337, 0.0004427343
        %v1339 = vsel %vm1338, %v1336, %v1333
        %v1340 = vadd.f32 %v989, 1.0
        %v1341 = vlog2.pop %v1340
        %v1342 = vmul.f32 %v1341, 0.6931472
        %v1343 = vmul.f32 -0.5, %v989
        %v1344 = vadd.f32 %v1343, 1.0
        %v1345 = vmul.f32 %v1344, %v989
        %v1346 = vand.u32 2147483647, %v989
        %vm1347 = vcmp.lt.f32.partialorder %v1346, 0.0004427343
        %v1348 = vsel %vm1347, %v1345, %v1342
        %v1349 = vadd.f32 %v991, 1.0
        %v1350 = vlog2.pop %v1349
        %v1351 = vmul.f32 %v1350, 0.6931472
        %v1352 = vmul.f32 -0.5, %v991
        %v1353 = vadd.f32 %v1352, 1.0
        %v1354 = vmul.f32 %v1353, %v991
        %v1355 = vand.u32 2147483647, %v991
        %vm1356 = vcmp.lt.f32.partialorder %v1355, 0.0004427343
        %v1357 = vsel %vm1356, %v1354, %v1351
        %v1358 = vadd.f32 %v993, 1.0
        %v1359 = vlog2.pop %v1358
        %v1360 = vmul.f32 %v1359, 0.6931472
        %v1361 = vmul.f32 -0.5, %v993
        %v1362 = vadd.f32 %v1361, 1.0
        %v1363 = vmul.f32 %v1362, %v993
        %v1364 = vand.u32 2147483647, %v993
        %vm1365 = vcmp.lt.f32.partialorder %v1364, 0.0004427343
        %v1366 = vsel %vm1365, %v1363, %v1360
        %v1367 = vadd.f32 %v995, 1.0
        %v1368 = vlog2.pop %v1367
        %v1369 = vmul.f32 %v1368, 0.6931472
        %v1370 = vmul.f32 -0.5, %v995
        %v1371 = vadd.f32 %v1370, 1.0
        %v1372 = vmul.f32 %v1371, %v995
        %v1373 = vand.u32 2147483647, %v995
        %vm1374 = vcmp.lt.f32.partialorder %v1373, 0.0004427343
        %v1375 = vsel %vm1374, %v1372, %v1369
        %v1376 = vadd.f32 %v997, 1.0
        %v1377 = vlog2.pop %v1376
        %v1378 = vmul.f32 %v1377, 0.6931472
        %v1379 = vmul.f32 -0.5, %v997
        %v1380 = vadd.f32 %v1379, 1.0
        %v1381 = vmul.f32 %v1380, %v997
        %v1382 = vand.u32 2147483647, %v997
        %vm1383 = vcmp.lt.f32.partialorder %v1382, 0.0004427343
        %v1384 = vsel %vm1383, %v1381, %v1378
        %v1385 = vadd.f32 %v999, 1.0
        %v1386 = vlog2.pop %v1385
        %v1387 = vmul.f32 %v1386, 0.6931472
        %v1388 = vmul.f32 -0.5, %v999
        %v1389 = vadd.f32 %v1388, 1.0
        %v1390 = vmul.f32 %v1389, %v999
        %v1391 = vand.u32 2147483647, %v999
        %vm1392 = vcmp.lt.f32.partialorder %v1391, 0.0004427343
        %v1393 = vsel %vm1392, %v1390, %v1387
        %v1394 = vadd.f32 %v1001, 1.0
        %v1395 = vlog2.pop %v1394
        %v1396 = vmul.f32 %v1395, 0.6931472
        %v1397 = vmul.f32 -0.5, %v1001
        %v1398 = vadd.f32 %v1397, 1.0
        %v1399 = vmul.f32 %v1398, %v1001
        %v1400 = vand.u32 2147483647, %v1001
        %vm1401 = vcmp.lt.f32.partialorder %v1400, 0.0004427343
        %v1402 = vsel %vm1401, %v1399, %v1396
        %v1403 = vadd.f32 %v1003, 1.0
        %v1404 = vlog2.pop %v1403
        %v1405 = vmul.f32 %v1404, 0.6931472
        %v1406 = vmul.f32 -0.5, %v1003
        %v1407 = vadd.f32 %v1406, 1.0
        %v1408 = vmul.f32 %v1407, %v1003
        %v1409 = vand.u32 2147483647, %v1003
        %vm1410 = vcmp.lt.f32.partialorder %v1409, 0.0004427343
        %v1411 = vsel %vm1410, %v1408, %v1405
        %v1412 = vadd.f32 %v1005, 1.0
        %v1413 = vlog2.pop %v1412
        %v1414 = vmul.f32 %v1413, 0.6931472
        %v1415 = vmul.f32 -0.5, %v1005
        %v1416 = vadd.f32 %v1415, 1.0
        %v1417 = vmul.f32 %v1416, %v1005
        %v1418 = vand.u32 2147483647, %v1005
        %vm1419 = vcmp.lt.f32.partialorder %v1418, 0.0004427343
        %v1420 = vsel %vm1419, %v1417, %v1414
        %v1421 = vadd.f32 %v1007, 1.0
        %v1422 = vlog2.pop %v1421
        %v1423 = vmul.f32 %v1422, 0.6931472
        %v1424 = vmul.f32 -0.5, %v1007
        %v1425 = vadd.f32 %v1424, 1.0
        %v1426 = vmul.f32 %v1425, %v1007
        %v1427 = vand.u32 2147483647, %v1007
        %vm1428 = vcmp.lt.f32.partialorder %v1427, 0.0004427343
        %v1429 = vsel %vm1428, %v1426, %v1423
        %v1430 = vadd.f32 %v1009, 1.0
        %v1431 = vlog2.pop %v1430
        %v1432 = vmul.f32 %v1431, 0.6931472
        %v1433 = vmul.f32 -0.5, %v1009
        %v1434 = vadd.f32 %v1433, 1.0
        %v1435 = vmul.f32 %v1434, %v1009
        %v1436 = vand.u32 2147483647, %v1009
        %vm1437 = vcmp.lt.f32.partialorder %v1436, 0.0004427343
        %v1438 = vsel %vm1437, %v1435, %v1432
        %v1439 = vadd.f32 %v1011, 1.0
        %v1440 = vlog2.pop %v1439
        %v1441 = vmul.f32 %v1440, 0.6931472
        %v1442 = vmul.f32 -0.5, %v1011
        %v1443 = vadd.f32 %v1442, 1.0
        %v1444 = vmul.f32 %v1443, %v1011
        %v1445 = vand.u32 2147483647, %v1011
        %vm1446 = vcmp.lt.f32.partialorder %v1445, 0.0004427343
        %v1447 = vsel %vm1446, %v1444, %v1441
        %v1448 = vadd.f32 %v1013, 1.0
        %v1449 = vlog2.pop %v1448
        %v1450 = vmul.f32 %v1449, 0.6931472
        %v1451 = vmul.f32 -0.5, %v1013
        %v1452 = vadd.f32 %v1451, 1.0
        %v1453 = vmul.f32 %v1452, %v1013
        %v1454 = vand.u32 2147483647, %v1013
        %vm1455 = vcmp.lt.f32.partialorder %v1454, 0.0004427343
        %v1456 = vsel %vm1455, %v1453, %v1450
        %v1457 = vadd.f32 %v1015, 1.0
        %v1458 = vlog2.pop %v1457
        %v1459 = vmul.f32 %v1458, 0.6931472
        %v1460 = vmul.f32 -0.5, %v1015
        %v1461 = vadd.f32 %v1460, 1.0
        %v1462 = vmul.f32 %v1461, %v1015
        %v1463 = vand.u32 2147483647, %v1015
        %vm1464 = vcmp.lt.f32.partialorder %v1463, 0.0004427343
        %v1465 = vsel %vm1464, %v1462, %v1459
        %v1466 = vadd.f32 %v1017, 1.0
        %v1467 = vlog2.pop %v1466
        %v1468 = vmul.f32 %v1467, 0.6931472
        %v1469 = vmul.f32 -0.5, %v1017
        %v1470 = vadd.f32 %v1469, 1.0
        %v1471 = vmul.f32 %v1470, %v1017
        %v1472 = vand.u32 2147483647, %v1017
        %vm1473 = vcmp.lt.f32.partialorder %v1472, 0.0004427343
        %v1474 = vsel %vm1473, %v1471, %v1468
        %v1475 = vadd.f32 %v1019, 1.0
        %v1476 = vlog2.pop %v1475
        %v1477 = vmul.f32 %v1476, 0.6931472
        %v1478 = vmul.f32 -0.5, %v1019
        %v1479 = vadd.f32 %v1478, 1.0
        %v1480 = vmul.f32 %v1479, %v1019
        %v1481 = vand.u32 2147483647, %v1019
        %vm1482 = vcmp.lt.f32.partialorder %v1481, 0.0004427343
        %v1483 = vsel %vm1482, %v1480, %v1477
        %v1484 = vadd.f32 %v1021, 1.0
        %v1485 = vlog2.pop %v1484
        %v1486 = vmul.f32 %v1485, 0.6931472
        %v1487 = vmul.f32 -0.5, %v1021
        %v1488 = vadd.f32 %v1487, 1.0
        %v1489 = vmul.f32 %v1488, %v1021
        %v1490 = vand.u32 2147483647, %v1021
        %vm1491 = vcmp.lt.f32.partialorder %v1490, 0.0004427343
        %v1492 = vsel %vm1491, %v1489, %v1486
        %v1493 = vadd.f32 %v1023, 1.0
        %v1494 = vlog2.pop %v1493
        %v1495 = vmul.f32 %v1494, 0.6931472
        %v1496 = vmul.f32 -0.5, %v1023
        %v1497 = vadd.f32 %v1496, 1.0
        %v1498 = vmul.f32 %v1497, %v1023
        %v1499 = vand.u32 2147483647, %v1023
        %vm1500 = vcmp.lt.f32.partialorder %v1499, 0.0004427343
        %v1501 = vsel %vm1500, %v1498, %v1495
        %v1502 = vadd.f32 %v1025, 1.0
        %v1503 = vlog2.pop %v1502
        %v1504 = vmul.f32 %v1503, 0.6931472
        %v1505 = vmul.f32 -0.5, %v1025
        %v1506 = vadd.f32 %v1505, 1.0
        %v1507 = vmul.f32 %v1506, %v1025
        %v1508 = vand.u32 2147483647, %v1025
        %vm1509 = vcmp.lt.f32.partialorder %v1508, 0.0004427343
        %v1510 = vsel %vm1509, %v1507, %v1504
        %v1511 = vadd.f32 %v1027, 1.0
        %v1512 = vlog2.pop %v1511
        %v1513 = vmul.f32 %v1512, 0.6931472
        %v1514 = vmul.f32 -0.5, %v1027
        %v1515 = vadd.f32 %v1514, 1.0
        %v1516 = vmul.f32 %v1515, %v1027
        %v1517 = vand.u32 2147483647, %v1027
        %vm1518 = vcmp.lt.f32.partialorder %v1517, 0.0004427343
        %v1519 = vsel %vm1518, %v1516, %v1513
        %v1520 = vadd.f32 %v1029, 1.0
        %v1521 = vlog2.pop %v1520
        %v1522 = vmul.f32 %v1521, 0.6931472
        %v1523 = vmul.f32 -0.5, %v1029
        %v1524 = vadd.f32 %v1523, 1.0
        %v1525 = vmul.f32 %v1524, %v1029
        %v1526 = vand.u32 2147483647, %v1029
        %vm1527 = vcmp.lt.f32.partialorder %v1526, 0.0004427343
        %v1528 = vsel %vm1527, %v1525, %v1522
        %v1529 = vadd.f32 %v1031, 1.0
        %v1530 = vlog2.pop %v1529
        %v1531 = vmul.f32 %v1530, 0.6931472
        %v1532 = vmul.f32 -0.5, %v1031
        %v1533 = vadd.f32 %v1532, 1.0
        %v1534 = vmul.f32 %v1533, %v1031
        %v1535 = vand.u32 2147483647, %v1031
        %vm1536 = vcmp.lt.f32.partialorder %v1535, 0.0004427343
        %v1537 = vsel %vm1536, %v1534, %v1531
        %v1538 = vadd.f32 %v1033, 1.0
        %v1539 = vlog2.pop %v1538
        %v1540 = vmul.f32 %v1539, 0.6931472
        %v1541 = vmul.f32 -0.5, %v1033
        %v1542 = vadd.f32 %v1541, 1.0
        %v1543 = vmul.f32 %v1542, %v1033
        %v1544 = vand.u32 2147483647, %v1033
        %vm1545 = vcmp.lt.f32.partialorder %v1544, 0.0004427343
        %v1546 = vsel %vm1545, %v1543, %v1540
        %v1547 = vadd.f32 %v1035, 1.0
        %v1548 = vlog2.pop %v1547
        %v1549 = vmul.f32 %v1548, 0.6931472
        %v1550 = vmul.f32 -0.5, %v1035
        %v1551 = vadd.f32 %v1550, 1.0
        %v1552 = vmul.f32 %v1551, %v1035
        %v1553 = vand.u32 2147483647, %v1035
        %vm1554 = vcmp.lt.f32.partialorder %v1553, 0.0004427343
        %v1555 = vsel %vm1554, %v1552, %v1549
        %v1556 = vadd.f32 %v1037, 1.0
        %v1557 = vlog2.pop %v1556
        %v1558 = vmul.f32 %v1557, 0.6931472
        %v1559 = vmul.f32 -0.5, %v1037
        %v1560 = vadd.f32 %v1559, 1.0
        %v1561 = vmul.f32 %v1560, %v1037
        %v1562 = vand.u32 2147483647, %v1037
        %vm1563 = vcmp.lt.f32.partialorder %v1562, 0.0004427343
        %v1564 = vsel %vm1563, %v1561, %v1558
        %v1565 = vadd.f32 %v1039, 1.0
        %v1566 = vlog2.pop %v1565
        %v1567 = vmul.f32 %v1566, 0.6931472
        %v1568 = vmul.f32 -0.5, %v1039
        %v1569 = vadd.f32 %v1568, 1.0
        %v1570 = vmul.f32 %v1569, %v1039
        %v1571 = vand.u32 2147483647, %v1039
        %vm1572 = vcmp.lt.f32.partialorder %v1571, 0.0004427343
        %v1573 = vsel %vm1572, %v1570, %v1567
        %v1574 = vadd.f32 %v1041, 1.0
        %v1575 = vlog2.pop %v1574
        %v1576 = vmul.f32 %v1575, 0.6931472
        %v1577 = vmul.f32 -0.5, %v1041
        %v1578 = vadd.f32 %v1577, 1.0
        %v1579 = vmul.f32 %v1578, %v1041
        %v1580 = vand.u32 2147483647, %v1041
        %vm1581 = vcmp.lt.f32.partialorder %v1580, 0.0004427343
        %v1582 = vsel %vm1581, %v1579, %v1576
        %v1583 = vadd.f32 %v1043, 1.0
        %v1584 = vlog2.pop %v1583
        %v1585 = vmul.f32 %v1584, 0.6931472
        %v1586 = vmul.f32 -0.5, %v1043
        %v1587 = vadd.f32 %v1586, 1.0
        %v1588 = vmul.f32 %v1587, %v1043
        %v1589 = vand.u32 2147483647, %v1043
        %vm1590 = vcmp.lt.f32.partialorder %v1589, 0.0004427343
        %v1591 = vsel %vm1590, %v1588, %v1585
        %v1592 = vadd.f32 %v1045, 1.0
        %v1593 = vlog2.pop %v1592
        %v1594 = vmul.f32 %v1593, 0.6931472
        %v1595 = vmul.f32 -0.5, %v1045
        %v1596 = vadd.f32 %v1595, 1.0
        %v1597 = vmul.f32 %v1596, %v1045
        %v1598 = vand.u32 2147483647, %v1045
        %vm1599 = vcmp.lt.f32.partialorder %v1598, 0.0004427343
        %v1600 = vsel %vm1599, %v1597, %v1594
        %v1601 = vadd.f32 %v1047, 1.0
        %v1602 = vlog2.pop %v1601
        %v1603 = vmul.f32 %v1602, 0.6931472
        %v1604 = vmul.f32 -0.5, %v1047
        %v1605 = vadd.f32 %v1604, 1.0
        %v1606 = vmul.f32 %v1605, %v1047
        %v1607 = vand.u32 2147483647, %v1047
        %vm1608 = vcmp.lt.f32.partialorder %v1607, 0.0004427343
        %v1609 = vsel %vm1608, %v1606, %v1603
        %v1610 = vadd.f32 %v1049, 1.0
        %v1611 = vlog2.pop %v1610
        %v1612 = vmul.f32 %v1611, 0.6931472
        %v1613 = vmul.f32 -0.5, %v1049
        %v1614 = vadd.f32 %v1613, 1.0
        %v1615 = vmul.f32 %v1614, %v1049
        %v1616 = vand.u32 2147483647, %v1049
        %vm1617 = vcmp.lt.f32.partialorder %v1616, 0.0004427343
        %v1618 = vsel %vm1617, %v1615, %v1612
        %v1619 = vadd.f32 %v1051, 1.0
        %v1620 = vlog2.pop %v1619
        %v1621 = vmul.f32 %v1620, 0.6931472
        %v1622 = vmul.f32 -0.5, %v1051
        %v1623 = vadd.f32 %v1622, 1.0
        %v1624 = vmul.f32 %v1623, %v1051
        %v1625 = vand.u32 2147483647, %v1051
        %vm1626 = vcmp.lt.f32.partialorder %v1625, 0.0004427343
        %v1627 = vsel %vm1626, %v1624, %v1621
        %v1628 = vmul.f32 %v1060, 0.01
        %v1629 = vmul.f32 %v1069, 0.01
        %v1630 = vmul.f32 %v1078, 0.01
        %v1631 = vmul.f32 %v1087, 0.01
        %v1632 = vmul.f32 %v1096, 0.01
        %v1633 = vmul.f32 %v1105, 0.01
        %v1634 = vmul.f32 %v1114, 0.01
        %v1635 = vmul.f32 %v1123, 0.01
        %v1636 = vmul.f32 %v1132, 0.01
        %v1637 = vmul.f32 %v1141, 0.01
        %v1638 = vmul.f32 %v1150, 0.01
        %v1639 = vmul.f32 %v1159, 0.01
        %v1640 = vmul.f32 %v1168, 0.01
        %v1641 = vmul.f32 %v1177, 0.01
        %v1642 = vmul.f32 %v1186, 0.01
        %v1643 = vmul.f32 %v1195, 0.01
        %v1644 = vmul.f32 %v1204, 0.01
        %v1645 = vmul.f32 %v1213, 0.01
        %v1646 = vmul.f32 %v1222, 0.01
        %v1647 = vmul.f32 %v1231, 0.01
        %v1648 = vmul.f32 %v1240, 0.01
        %v1649 = vmul.f32 %v1249, 0.01
        %v1650 = vmul.f32 %v1258, 0.01
        %v1651 = vmul.f32 %v1267, 0.01
        %v1652 = vmul.f32 %v1276, 0.01
        %v1653 = vmul.f32 %v1285, 0.01
        %v1654 = vmul.f32 %v1294, 0.01
        %v1655 = vmul.f32 %v1303, 0.01
        %v1656 = vmul.f32 %v1312, 0.01
        %v1657 = vmul.f32 %v1321, 0.01
        %v1658 = vmul.f32 %v1330, 0.01
        %v1659 = vmul.f32 %v1339, 0.01
        %v1660 = vmul.f32 %v1348, 0.01
        %v1661 = vmul.f32 %v1357, 0.01
        %v1662 = vmul.f32 %v1366, 0.01
        %v1663 = vmul.f32 %v1375, 0.01
        %v1664 = vmul.f32 %v1384, 0.01
        %v1665 = vmul.f32 %v1393, 0.01
        %v1666 = vmul.f32 %v1402, 0.01
        %v1667 = vmul.f32 %v1411, 0.01
        %v1668 = vmul.f32 %v1420, 0.01
        %v1669 = vmul.f32 %v1429, 0.01
        %v1670 = vmul.f32 %v1438, 0.01
        %v1671 = vmul.f32 %v1447, 0.01
        %v1672 = vmul.f32 %v1456, 0.01
        %v1673 = vmul.f32 %v1465, 0.01
        %v1674 = vmul.f32 %v1474, 0.01
        %v1675 = vmul.f32 %v1483, 0.01
        %v1676 = vmul.f32 %v1492, 0.01
        %v1677 = vmul.f32 %v1501, 0.01
        %v1678 = vmul.f32 %v1510, 0.01
        %v1679 = vmul.f32 %v1519, 0.01
        %v1680 = vmul.f32 %v1528, 0.01
        %v1681 = vmul.f32 %v1537, 0.01
        %v1682 = vmul.f32 %v1546, 0.01
        %v1683 = vmul.f32 %v1555, 0.01
        %v1684 = vmul.f32 %v1564, 0.01
        %v1685 = vmul.f32 %v1573, 0.01
        %v1686 = vmul.f32 %v1582, 0.01
        %v1687 = vmul.f32 %v1591, 0.01
        %v1688 = vmul.f32 %v1600, 0.01
        %v1689 = vmul.f32 %v1609, 0.01
        %v1690 = vmul.f32 %v1618, 0.01
        %v1691 = vmul.f32 %v1627, 0.01
        %v1692 = vsel %vm860, %v542, %v1628
        %v1693 = vsel %vm861, %v544, %v1629
        %v1694 = vsel %vm862, %v548, %v1630
        %v1695 = vsel %vm863, %v550, %v1631
        %v1696 = vsel %vm864, %v554, %v1632
        %v1697 = vsel %vm865, %v556, %v1633
        %v1698 = vsel %vm866, %v560, %v1634
        %v1699 = vsel %vm867, %v562, %v1635
        %v1700 = vsel %vm868, %v566, %v1636
        %v1701 = vsel %vm869, %v568, %v1637
        %v1702 = vsel %vm870, %v572, %v1638
        %v1703 = vsel %vm871, %v574, %v1639
        %v1704 = vsel %vm872, %v578, %v1640
        %v1705 = vsel %vm873, %v580, %v1641
        %v1706 = vsel %vm874, %v584, %v1642
        %v1707 = vsel %vm875, %v586, %v1643
        %v1708 = vsel %vm876, %v590, %v1644
        %v1709 = vsel %vm877, %v592, %v1645
        %v1710 = vsel %vm878, %v596, %v1646
        %v1711 = vsel %vm879, %v598, %v1647
        %v1712 = vsel %vm880, %v602, %v1648
        %v1713 = vsel %vm881, %v604, %v1649
        %v1714 = vsel %vm882, %v608, %v1650
        %v1715 = vsel %vm883, %v610, %v1651
        %v1716 = vsel %vm884, %v614, %v1652
        %v1717 = vsel %vm885, %v616, %v1653
        %v1718 = vsel %vm886, %v620, %v1654
        %v1719 = vsel %vm887, %v622, %v1655
        %v1720 = vsel %vm888, %v626, %v1656
        %v1721 = vsel %vm889, %v628, %v1657
        %v1722 = vsel %vm890, %v632, %v1658
        %v1723 = vsel %vm891, %v634, %v1659
        %v1724 = vsel %vm892, %v638, %v1660
        %v1725 = vsel %vm893, %v640, %v1661
        %v1726 = vsel %vm894, %v644, %v1662
        %v1727 = vsel %vm895, %v646, %v1663
        %v1728 = vsel %vm896, %v650, %v1664
        %v1729 = vsel %vm897, %v652, %v1665
        %v1730 = vsel %vm898, %v656, %v1666
        %v1731 = vsel %vm899, %v658, %v1667
        %v1732 = vsel %vm900, %v662, %v1668
        %v1733 = vsel %vm901, %v664, %v1669
        %v1734 = vsel %vm902, %v668, %v1670
        %v1735 = vsel %vm903, %v670, %v1671
        %v1736 = vsel %vm904, %v674, %v1672
        %v1737 = vsel %vm905, %v676, %v1673
        %v1738 = vsel %vm906, %v680, %v1674
        %v1739 = vsel %vm907, %v682, %v1675
        %v1740 = vsel %vm908, %v686, %v1676
        %v1741 = vsel %vm909, %v688, %v1677
        %v1742 = vsel %vm910, %v692, %v1678
        %v1743 = vsel %vm911, %v694, %v1679
        %v1744 = vsel %vm912, %v698, %v1680
        %v1745 = vsel %vm913, %v700, %v1681
        %v1746 = vsel %vm914, %v704, %v1682
        %v1747 = vsel %vm915, %v706, %v1683
        %v1748 = vsel %vm916, %v710, %v1684
        %v1749 = vsel %vm917, %v712, %v1685
        %v1750 = vsel %vm918, %v716, %v1686
        %v1751 = vsel %vm919, %v718, %v1687
        %v1752 = vsel %vm920, %v722, %v1688
        %v1753 = vsel %vm921, %v724, %v1689
        %v1754 = vsel %vm922, %v728, %v1690
        %v1755 = vsel %vm923, %v730, %v1691
        %v1756 = vld [vmem:[%s2] sm:$0xff]
        %v1757 = vld [vmem:[%s2 + $0x8] sm:$0xff]
        %v1758 = vld [vmem:[%s2 + $0x10] sm:$0xff]
        %v1759 = vld [vmem:[%s2 + $0x18] sm:$0xff]
        %v1760 = vld [vmem:[%s2 + $0x20] sm:$0xff]
        %v1761 = vld [vmem:[%s2 + $0x28] sm:$0xff]
        %v1762 = vld [vmem:[%s2 + $0x30] sm:$0xff]
        %v1763 = vld [vmem:[%s2 + $0x38] sm:$0xff]
        %v1764 = vld [vmem:[%s2 + $0x40] sm:$0xff]
        %v1765 = vld [vmem:[%s2 + $0x48] sm:$0xff]
        %v1766 = vld [vmem:[%s2 + $0x50] sm:$0xff]
        %v1767 = vld [vmem:[%s2 + $0x58] sm:$0xff]
        %v1768 = vld [vmem:[%s2 + $0x60] sm:$0xff]
        %v1769 = vld [vmem:[%s2 + $0x68] sm:$0xff]
        %v1770 = vld [vmem:[%s2 + $0x70] sm:$0xff]
        %v1771 = vld [vmem:[%s2 + $0x78] sm:$0xff]
        %v1772 = vld [vmem:[%s2 + $0x80] sm:$0xff]
        %v1773 = vld [vmem:[%s2 + $0x88] sm:$0xff]
        %v1774 = vld [vmem:[%s2 + $0x90] sm:$0xff]
        %v1775 = vld [vmem:[%s2 + $0x98] sm:$0xff]
        %v1776 = vld [vmem:[%s2 + $0xa0] sm:$0xff]
        %v1777 = vld [vmem:[%s2 + $0xa8] sm:$0xff]
        %v1778 = vld [vmem:[%s2 + $0xb0] sm:$0xff]
        %v1779 = vld [vmem:[%s2 + $0xb8] sm:$0xff]
        %v1780 = vld [vmem:[%s2 + $0xc0] sm:$0xff]
        %v1781 = vld [vmem:[%s2 + $0xc8] sm:$0xff]
        %v1782 = vld [vmem:[%s2 + $0xd0] sm:$0xff]
        %v1783 = vld [vmem:[%s2 + $0xd8] sm:$0xff]
        %v1784 = vld [vmem:[%s2 + $0xe0] sm:$0xff]
        %v1785 = vld [vmem:[%s2 + $0xe8] sm:$0xff]
        %v1786 = vld [vmem:[%s2 + $0xf0] sm:$0xff]
        %v1787 = vld [vmem:[%s2 + $0xf8] sm:$0xff]
        %v1788 = vld [vmem:[%s2 + $0x100] sm:$0xff]
        %v1789 = vld [vmem:[%s2 + $0x108] sm:$0xff]
        %v1790 = vld [vmem:[%s2 + $0x110] sm:$0xff]
        %v1791 = vld [vmem:[%s2 + $0x118] sm:$0xff]
        %v1792 = vld [vmem:[%s2 + $0x120] sm:$0xff]
        %v1793 = vld [vmem:[%s2 + $0x128] sm:$0xff]
        %v1794 = vld [vmem:[%s2 + $0x130] sm:$0xff]
        %v1795 = vld [vmem:[%s2 + $0x138] sm:$0xff]
        %v1796 = vld [vmem:[%s2 + $0x140] sm:$0xff]
        %v1797 = vld [vmem:[%s2 + $0x148] sm:$0xff]
        %v1798 = vld [vmem:[%s2 + $0x150] sm:$0xff]
        %v1799 = vld [vmem:[%s2 + $0x158] sm:$0xff]
        %v1800 = vld [vmem:[%s2 + $0x160] sm:$0xff]
        %v1801 = vld [vmem:[%s2 + $0x168] sm:$0xff]
        %v1802 = vld [vmem:[%s2 + $0x170] sm:$0xff]
        %v1803 = vld [vmem:[%s2 + $0x178] sm:$0xff]
        %v1804 = vld [vmem:[%s2 + $0x180] sm:$0xff]
        %v1805 = vld [vmem:[%s2 + $0x188] sm:$0xff]
        %v1806 = vld [vmem:[%s2 + $0x190] sm:$0xff]
        %v1807 = vld [vmem:[%s2 + $0x198] sm:$0xff]
        %v1808 = vld [vmem:[%s2 + $0x1a0] sm:$0xff]
        %v1809 = vld [vmem:[%s2 + $0x1a8] sm:$0xff]
        %v1810 = vld [vmem:[%s2 + $0x1b0] sm:$0xff]
        %v1811 = vld [vmem:[%s2 + $0x1b8] sm:$0xff]
        %v1812 = vld [vmem:[%s2 + $0x1c0] sm:$0xff]
        %v1813 = vld [vmem:[%s2 + $0x1c8] sm:$0xff]
        %v1814 = vld [vmem:[%s2 + $0x1d0] sm:$0xff]
        %v1815 = vld [vmem:[%s2 + $0x1d8] sm:$0xff]
        %v1816 = vld [vmem:[%s2 + $0x1e0] sm:$0xff]
        %v1817 = vld [vmem:[%s2 + $0x1e8] sm:$0xff]
        %v1818 = vld [vmem:[%s2 + $0x1f0] sm:$0xff]
        %v1819 = vld [vmem:[%s2 + $0x1f8] sm:$0xff]
        %s1820 = scalar_lea.vmem %s4, 2
        %v1821 = vld [vmem:[%s1820] sm:$0x3]
        %v1823 = vlaneseq
        %v1824 = vshrl.u32 %v1823, 7
        %v1825 = vsub.s32 0, %v1824
        %v1826 = vrot.slane %v1821, %v1825
        %v1827 = vlaneseq
        %v1828 = vshrl.u32 %v1827, 7
        %v1829 = vsub.s32 1, %v1828
        %v1830 = vrot.slane %v1821, %v1829
        %1833 = vmatprep.subr.mxu0 %v1757
        %1834 = vmatpush1.msra.mxu0 %v1756
        %1835 = vmatprep.subr.mxu0 %v1759
        %1836 = vmatpush1.msra.mxu0 %v1758
        %1837 = vmatprep.subr.mxu0 %v1761
        %1838 = vmatpush1.msra.mxu0 %v1760
        %1839 = vmatprep.subr.mxu0 %v1763
        %1840 = vmatpush1.msra.mxu0 %v1762
        %1841 = vmatprep.subr.mxu0 %v1765
        %1842 = vmatpush1.msra.mxu0 %v1764
        %1843 = vmatprep.subr.mxu0 %v1767
        %1844 = vmatpush1.msra.mxu0 %v1766
        %1845 = vmatprep.subr.mxu0 %v1769
        %1846 = vmatpush1.msra.mxu0 %v1768
        %1847 = vmatprep.subr.mxu0 %v1771
        %1848 = vmatpush1.msra.mxu0 %v1770
        %1849 = vmatprep.subr.mxu0 %v1773
        %1850 = vmatpush1.msra.mxu0 %v1772
        %1851 = vmatprep.subr.mxu0 %v1775
        %1852 = vmatpush1.msra.mxu0 %v1774
        %1853 = vmatprep.subr.mxu0 %v1777
        %1854 = vmatpush1.msra.mxu0 %v1776
        %1855 = vmatprep.subr.mxu0 %v1779
        %1856 = vmatpush1.msra.mxu0 %v1778
        %1857 = vmatprep.subr.mxu0 %v1781
        %1858 = vmatpush1.msra.mxu0 %v1780
        %1859 = vmatprep.subr.mxu0 %v1783
        %1860 = vmatpush1.msra.mxu0 %v1782
        %1861 = vmatprep.subr.mxu0 %v1785
        %1862 = vmatpush1.msra.mxu0 %v1784
        %1863 = vmatprep.subr.mxu0 %v1787
        %1864 = vmatpush1.msra.mxu0 %v1786
        %1865 = vmatprep.subr.mxu0 %v1789
        %1866 = vmatpush1.msra.mxu0 %v1788
        %1867 = vmatprep.subr.mxu0 %v1791
        %1868 = vmatpush1.msra.mxu0 %v1790
        %1869 = vmatprep.subr.mxu0 %v1793
        %1870 = vmatpush1.msra.mxu0 %v1792
        %1871 = vmatprep.subr.mxu0 %v1795
        %1872 = vmatpush1.msra.mxu0 %v1794
        %1873 = vmatprep.subr.mxu0 %v1797
        %1874 = vmatpush1.msra.mxu0 %v1796
        %1875 = vmatprep.subr.mxu0 %v1799
        %1876 = vmatpush1.msra.mxu0 %v1798
        %1877 = vmatprep.subr.mxu0 %v1801
        %1878 = vmatpush1.msra.mxu0 %v1800
        %1879 = vmatprep.subr.mxu0 %v1803
        %1880 = vmatpush1.msra.mxu0 %v1802
        %1881 = vmatprep.subr.mxu0 %v1805
        %1882 = vmatpush1.msra.mxu0 %v1804
        %1883 = vmatprep.subr.mxu0 %v1807
        %1884 = vmatpush1.msra.mxu0 %v1806
        %1885 = vmatprep.subr.mxu0 %v1809
        %1886 = vmatpush1.msra.mxu0 %v1808
        %1887 = vmatprep.subr.mxu0 %v1811
        %1888 = vmatpush1.msra.mxu0 %v1810
        %1889 = vmatprep.subr.mxu0 %v1813
        %1890 = vmatpush1.msra.mxu0 %v1812
        %1891 = vmatprep.subr.mxu0 %v1815
        %1892 = vmatpush1.msra.mxu0 %v1814
        %1893 = vmatprep.subr.mxu0 %v1817
        %1894 = vmatpush1.msra.mxu0 %v1816
        %1895 = vmatprep.subr.mxu0 %v1819
        %1896 = vmatpush1.msra.mxu0 %v1818
        %1897 = vmatprep.mubr.f32.mxu0 %v1693
        %1898 = vmatmul.mubr.f32.gmra.mrb[0].mxu0 %v1692
        %v1899 = vpop.f32.mrb[0].mxu0
        %v1900 = vadd.f32 %v1826, %v1899
        %v1901 = vpop.f32.mrb[0].mxu0
        %v1902 = vadd.f32 %v1830, %v1901
        %1903 = vmatprep.mubr.f32.mxu0 %v1695
        %1904 = vmatmul.mubr.f32.gmra.mrb[0].mxu0 %v1694
        %v1905 = vpop.f32.mrb[0].mxu0
        %v1906 = vadd.f32 %v1826, %v1905
        %v1907 = vpop.f32.mrb[0].mxu0
        %v1908 = vadd.f32 %v1830, %v1907
        %1909 = vmatprep.mubr.f32.mxu0 %v1697
        %1910 = vmatmul.mubr.f32.gmra.mrb[0].mxu0 %v1696
        %v1911 = vpop.f32.mrb[0].mxu0
        %v1912 = vadd.f32 %v1826, %v1911
        %v1913 = vpop.f32.mrb[0].mxu0
        %v1914 = vadd.f32 %v1830, %v1913
        %1915 = vmatprep.mubr.f32.mxu0 %v1699
        %1916 = vmatmul.mubr.f32.gmra.mrb[0].mxu0 %v1698
        %v1917 = vpop.f32.mrb[0].mxu0
        %v1918 = vadd.f32 %v1826, %v1917
        %v1919 = vpop.f32.mrb[0].mxu0
        %v1920 = vadd.f32 %v1830, %v1919
        %1921 = vmatprep.mubr.f32.mxu0 %v1701
        %1922 = vmatmul.mubr.f32.gmra.mrb[0].mxu0 %v1700
        %v1923 = vpop.f32.mrb[0].mxu0
        %v1924 = vadd.f32 %v1826, %v1923
        %v1925 = vpop.f32.mrb[0].mxu0
        %v1926 = vadd.f32 %v1830, %v1925
        %1927 = vmatprep.mubr.f32.mxu0 %v1703
        %1928 = vmatmul.mubr.f32.gmra.mrb[0].mxu0 %v1702
        %v1929 = vpop.f32.mrb[0].mxu0
        %v1930 = vadd.f32 %v1826, %v1929
        %v1931 = vpop.f32.mrb[0].mxu0
        %v1932 = vadd.f32 %v1830, %v1931
        %1933 = vmatprep.mubr.f32.mxu0 %v1705
        %1934 = vmatmul.mubr.f32.gmra.mrb[0].mxu0 %v1704
        %v1935 = vpop.f32.mrb[0].mxu0
        %v1936 = vadd.f32 %v1826, %v1935
        %v1937 = vpop.f32.mrb[0].mxu0
        %v1938 = vadd.f32 %v1830, %v1937
        %1939 = vmatprep.mubr.f32.mxu0 %v1707
        %1940 = vmatmul.mubr.f32.gmra.mrb[0].mxu0 %v1706
        %v1941 = vpop.f32.mrb[0].mxu0
        %v1942 = vadd.f32 %v1826, %v1941
        %v1943 = vpop.f32.mrb[0].mxu0
        %v1944 = vadd.f32 %v1830, %v1943
        %1945 = vmatprep.mubr.f32.mxu0 %v1709
        %1946 = vmatmul.mubr.f32.gmra.mrb[0].mxu0 %v1708
        %v1947 = vpop.f32.mrb[0].mxu0
        %v1948 = vadd.f32 %v1826, %v1947
        %v1949 = vpop.f32.mrb[0].mxu0
        %v1950 = vadd.f32 %v1830, %v1949
        %1951 = vmatprep.mubr.f32.mxu0 %v1711
        %1952 = vmatmul.mubr.f32.gmra.mrb[0].mxu0 %v1710
        %v1953 = vpop.f32.mrb[0].mxu0
        %v1954 = vadd.f32 %v1826, %v1953
        %v1955 = vpop.f32.mrb[0].mxu0
        %v1956 = vadd.f32 %v1830, %v1955
        %1957 = vmatprep.mubr.f32.mxu0 %v1713
        %1958 = vmatmul.mubr.f32.gmra.mrb[0].mxu0 %v1712
        %v1959 = vpop.f32.mrb[0].mxu0
        %v1960 = vadd.f32 %v1826, %v1959
        %v1961 = vpop.f32.mrb[0].mxu0
        %v1962 = vadd.f32 %v1830, %v1961
        %1963 = vmatprep.mubr.f32.mxu0 %v1715
        %1964 = vmatmul.mubr.f32.gmra.mrb[0].mxu0 %v1714
        %v1965 = vpop.f32.mrb[0].mxu0
        %v1966 = vadd.f32 %v1826, %v1965
        %v1967 = vpop.f32.mrb[0].mxu0
        %v1968 = vadd.f32 %v1830, %v1967
        %1969 = vmatprep.mubr.f32.mxu0 %v1717
        %1970 = vmatmul.mubr.f32.gmra.mrb[0].mxu0 %v1716
        %v1971 = vpop.f32.mrb[0].mxu0
        %v1972 = vadd.f32 %v1826, %v1971
        %v1973 = vpop.f32.mrb[0].mxu0
        %v1974 = vadd.f32 %v1830, %v1973
        %1975 = vmatprep.mubr.f32.mxu0 %v1719
        %1976 = vmatmul.mubr.f32.gmra.mrb[0].mxu0 %v1718
        %v1977 = vpop.f32.mrb[0].mxu0
        %v1978 = vadd.f32 %v1826, %v1977
        %v1979 = vpop.f32.mrb[0].mxu0
        %v1980 = vadd.f32 %v1830, %v1979
        %1981 = vmatprep.mubr.f32.mxu0 %v1721
        %1982 = vmatmul.mubr.f32.gmra.mrb[0].mxu0 %v1720
        %v1983 = vpop.f32.mrb[0].mxu0
        %v1984 = vadd.f32 %v1826, %v1983
        %v1985 = vpop.f32.mrb[0].mxu0
        %v1986 = vadd.f32 %v1830, %v1985
        %1987 = vmatprep.mubr.f32.mxu0 %v1723
        %1988 = vmatmul.mubr.f32.gmra.mrb[0].mxu0 %v1722
        %v1989 = vpop.f32.mrb[0].mxu0
        %v1990 = vadd.f32 %v1826, %v1989
        %v1991 = vpop.f32.mrb[0].mxu0
        %v1992 = vadd.f32 %v1830, %v1991
        %1993 = vmatprep.mubr.f32.mxu0 %v1725
        %1994 = vmatmul.mubr.f32.gmra.mrb[0].mxu0 %v1724
        %v1995 = vpop.f32.mrb[0].mxu0
        %v1996 = vadd.f32 %v1826, %v1995
        %v1997 = vpop.f32.mrb[0].mxu0
        %v1998 = vadd.f32 %v1830, %v1997
        %1999 = vmatprep.mubr.f32.mxu0 %v1727
        %2000 = vmatmul.mubr.f32.gmra.mrb[0].mxu0 %v1726
        %v2001 = vpop.f32.mrb[0].mxu0
        %v2002 = vadd.f32 %v1826, %v2001
        %v2003 = vpop.f32.mrb[0].mxu0
        %v2004 = vadd.f32 %v1830, %v2003
        %2005 = vmatprep.mubr.f32.mxu0 %v1729
        %2006 = vmatmul.mubr.f32.gmra.mrb[0].mxu0 %v1728
        %v2007 = vpop.f32.mrb[0].mxu0
        %v2008 = vadd.f32 %v1826, %v2007
        %v2009 = vpop.f32.mrb[0].mxu0
        %v2010 = vadd.f32 %v1830, %v2009
        %2011 = vmatprep.mubr.f32.mxu0 %v1731
        %2012 = vmatmul.mubr.f32.gmra.mrb[0].mxu0 %v1730
        %v2013 = vpop.f32.mrb[0].mxu0
        %v2014 = vadd.f32 %v1826, %v2013
        %v2015 = vpop.f32.mrb[0].mxu0
        %v2016 = vadd.f32 %v1830, %v2015
        %2017 = vmatprep.mubr.f32.mxu0 %v1733
        %2018 = vmatmul.mubr.f32.gmra.mrb[0].mxu0 %v1732
        %v2019 = vpop.f32.mrb[0].mxu0
        %v2020 = vadd.f32 %v1826, %v2019
        %v2021 = vpop.f32.mrb[0].mxu0
        %v2022 = vadd.f32 %v1830, %v2021
        %2023 = vmatprep.mubr.f32.mxu0 %v1735
        %2024 = vmatmul.mubr.f32.gmra.mrb[0].mxu0 %v1734
        %v2025 = vpop.f32.mrb[0].mxu0
        %v2026 = vadd.f32 %v1826, %v2025
        %v2027 = vpop.f32.mrb[0].mxu0
        %v2028 = vadd.f32 %v1830, %v2027
        %2029 = vmatprep.mubr.f32.mxu0 %v1737
        %2030 = vmatmul.mubr.f32.gmra.mrb[0].mxu0 %v1736
        %v2031 = vpop.f32.mrb[0].mxu0
        %v2032 = vadd.f32 %v1826, %v2031
        %v2033 = vpop.f32.mrb[0].mxu0
        %v2034 = vadd.f32 %v1830, %v2033
        %2035 = vmatprep.mubr.f32.mxu0 %v1739
        %2036 = vmatmul.mubr.f32.gmra.mrb[0].mxu0 %v1738
        %v2037 = vpop.f32.mrb[0].mxu0
        %v2038 = vadd.f32 %v1826, %v2037
        %v2039 = vpop.f32.mrb[0].mxu0
        %v2040 = vadd.f32 %v1830, %v2039
        %2041 = vmatprep.mubr.f32.mxu0 %v1741
        %2042 = vmatmul.mubr.f32.gmra.mrb[0].mxu0 %v1740
        %v2043 = vpop.f32.mrb[0].mxu0
        %v2044 = vadd.f32 %v1826, %v2043
        %v2045 = vpop.f32.mrb[0].mxu0
        %v2046 = vadd.f32 %v1830, %v2045
        %2047 = vmatprep.mubr.f32.mxu0 %v1743
        %2048 = vmatmul.mubr.f32.gmra.mrb[0].mxu0 %v1742
        %v2049 = vpop.f32.mrb[0].mxu0
        %v2050 = vadd.f32 %v1826, %v2049
        %v2051 = vpop.f32.mrb[0].mxu0
        %v2052 = vadd.f32 %v1830, %v2051
        %2053 = vmatprep.mubr.f32.mxu0 %v1745
        %2054 = vmatmul.mubr.f32.gmra.mrb[0].mxu0 %v1744
        %v2055 = vpop.f32.mrb[0].mxu0
        %v2056 = vadd.f32 %v1826, %v2055
        %v2057 = vpop.f32.mrb[0].mxu0
        %v2058 = vadd.f32 %v1830, %v2057
        %2059 = vmatprep.mubr.f32.mxu0 %v1747
        %2060 = vmatmul.mubr.f32.gmra.mrb[0].mxu0 %v1746
        %v2061 = vpop.f32.mrb[0].mxu0
        %v2062 = vadd.f32 %v1826, %v2061
        %v2063 = vpop.f32.mrb[0].mxu0
        %v2064 = vadd.f32 %v1830, %v2063
        %2065 = vmatprep.mubr.f32.mxu0 %v1749
        %2066 = vmatmul.mubr.f32.gmra.mrb[0].mxu0 %v1748
        %v2067 = vpop.f32.mrb[0].mxu0
        %v2068 = vadd.f32 %v1826, %v2067
        %v2069 = vpop.f32.mrb[0].mxu0
        %v2070 = vadd.f32 %v1830, %v2069
        %2071 = vmatprep.mubr.f32.mxu0 %v1751
        %2072 = vmatmul.mubr.f32.gmra.mrb[0].mxu0 %v1750
        %v2073 = vpop.f32.mrb[0].mxu0
        %v2074 = vadd.f32 %v1826, %v2073
        %v2075 = vpop.f32.mrb[0].mxu0
        %v2076 = vadd.f32 %v1830, %v2075
        %2077 = vmatprep.mubr.f32.mxu0 %v1753
        %2078 = vmatmul.mubr.f32.gmra.mrb[0].mxu0 %v1752
        %v2079 = vpop.f32.mrb[0].mxu0
        %v2080 = vadd.f32 %v1826, %v2079
        %v2081 = vpop.f32.mrb[0].mxu0
        %v2082 = vadd.f32 %v1830, %v2081
        %2083 = vmatprep.mubr.f32.mxu0 %v1755
        %2084 = vmatmul.mubr.f32.gmra.mrb[0].mxu0 %v1754
        %v2085 = vpop.f32.mrb[0].mxu0
        %v2086 = vadd.f32 %v1826, %v2085
        %v2087 = vpop.f32.mrb[0].mxu0
        %v2088 = vadd.f32 %v1830, %v2087
        %2089 = vdwg.mxu0
        %v2090 = vmul.f32 %v1900, 100.0
        %v2091 = vmul.f32 %v1902, 100.0
        %v2092 = vmul.f32 %v1906, 100.0
        %v2093 = vmul.f32 %v1908, 100.0
        %v2094 = vmul.f32 %v1912, 100.0
        %v2095 = vmul.f32 %v1914, 100.0
        %v2096 = vmul.f32 %v1918, 100.0
        %v2097 = vmul.f32 %v1920, 100.0
        %v2098 = vmul.f32 %v1924, 100.0
        %v2099 = vmul.f32 %v1926, 100.0
        %v2100 = vmul.f32 %v1930, 100.0
        %v2101 = vmul.f32 %v1932, 100.0
        %v2102 = vmul.f32 %v1936, 100.0
        %v2103 = vmul.f32 %v1938, 100.0
        %v2104 = vmul.f32 %v1942, 100.0
        %v2105 = vmul.f32 %v1944, 100.0
        %v2106 = vmul.f32 %v1948, 100.0
        %v2107 = vmul.f32 %v1950, 100.0
        %v2108 = vmul.f32 %v1954, 100.0
        %v2109 = vmul.f32 %v1956, 100.0
        %v2110 = vmul.f32 %v1960, 100.0
        %v2111 = vmul.f32 %v1962, 100.0
        %v2112 = vmul.f32 %v1966, 100.0
        %v2113 = vmul.f32 %v1968, 100.0
        %v2114 = vmul.f32 %v1972, 100.0
        %v2115 = vmul.f32 %v1974, 100.0
        %v2116 = vmul.f32 %v1978, 100.0
        %v2117 = vmul.f32 %v1980, 100.0
        %v2118 = vmul.f32 %v1984, 100.0
        %v2119 = vmul.f32 %v1986, 100.0
        %v2120 = vmul.f32 %v1990, 100.0
        %v2121 = vmul.f32 %v1992, 100.0
        %v2122 = vmul.f32 %v1996, 100.0
        %v2123 = vmul.f32 %v1998, 100.0
        %v2124 = vmul.f32 %v2002, 100.0
        %v2125 = vmul.f32 %v2004, 100.0
        %v2126 = vmul.f32 %v2008, 100.0
        %v2127 = vmul.f32 %v2010, 100.0
        %v2128 = vmul.f32 %v2014, 100.0
        %v2129 = vmul.f32 %v2016, 100.0
        %v2130 = vmul.f32 %v2020, 100.0
        %v2131 = vmul.f32 %v2022, 100.0
        %v2132 = vmul.f32 %v2026, 100.0
        %v2133 = vmul.f32 %v2028, 100.0
        %v2134 = vmul.f32 %v2032, 100.0
        %v2135 = vmul.f32 %v2034, 100.0
        %v2136 = vmul.f32 %v2038, 100.0
        %v2137 = vmul.f32 %v2040, 100.0
        %v2138 = vmul.f32 %v2044, 100.0
        %v2139 = vmul.f32 %v2046, 100.0
        %v2140 = vmul.f32 %v2050, 100.0
        %v2141 = vmul.f32 %v2052, 100.0
        %v2142 = vmul.f32 %v2056, 100.0
        %v2143 = vmul.f32 %v2058, 100.0
        %v2144 = vmul.f32 %v2062, 100.0
        %v2145 = vmul.f32 %v2064, 100.0
        %v2146 = vmul.f32 %v2068, 100.0
        %v2147 = vmul.f32 %v2070, 100.0
        %v2148 = vmul.f32 %v2074, 100.0
        %v2149 = vmul.f32 %v2076, 100.0
        %v2150 = vmul.f32 %v2080, 100.0
        %v2151 = vmul.f32 %v2082, 100.0
        %v2152 = vmul.f32 %v2086, 100.0
        %v2153 = vmul.f32 %v2088, 100.0
        %v2154 = vmin.f32 %v2090, 20.0
        %v2155 = vmin.f32 %v2091, 20.0
        %v2156 = vmin.f32 %v2092, 20.0
        %v2157 = vmin.f32 %v2093, 20.0
        %v2158 = vmin.f32 %v2094, 20.0
        %v2159 = vmin.f32 %v2095, 20.0
        %v2160 = vmin.f32 %v2096, 20.0
        %v2161 = vmin.f32 %v2097, 20.0
        %v2162 = vmin.f32 %v2098, 20.0
        %v2163 = vmin.f32 %v2099, 20.0
        %v2164 = vmin.f32 %v2100, 20.0
        %v2165 = vmin.f32 %v2101, 20.0
        %v2166 = vmin.f32 %v2102, 20.0
        %v2167 = vmin.f32 %v2103, 20.0
        %v2168 = vmin.f32 %v2104, 20.0
        %v2169 = vmin.f32 %v2105, 20.0
        %v2170 = vmin.f32 %v2106, 20.0
        %v2171 = vmin.f32 %v2107, 20.0
        %v2172 = vmin.f32 %v2108, 20.0
        %v2173 = vmin.f32 %v2109, 20.0
        %v2174 = vmin.f32 %v2110, 20.0
        %v2175 = vmin.f32 %v2111, 20.0
        %v2176 = vmin.f32 %v2112, 20.0
        %v2177 = vmin.f32 %v2113, 20.0
        %v2178 = vmin.f32 %v2114, 20.0
        %v2179 = vmin.f32 %v2115, 20.0
        %v2180 = vmin.f32 %v2116, 20.0
        %v2181 = vmin.f32 %v2117, 20.0
        %v2182 = vmin.f32 %v2118, 20.0
        %v2183 = vmin.f32 %v2119, 20.0
        %v2184 = vmin.f32 %v2120, 20.0
        %v2185 = vmin.f32 %v2121, 20.0
        %v2186 = vmin.f32 %v2122, 20.0
        %v2187 = vmin.f32 %v2123, 20.0
        %v2188 = vmin.f32 %v2124, 20.0
        %v2189 = vmin.f32 %v2125, 20.0
        %v2190 = vmin.f32 %v2126, 20.0
        %v2191 = vmin.f32 %v2127, 20.0
        %v2192 = vmin.f32 %v2128, 20.0
        %v2193 = vmin.f32 %v2129, 20.0
        %v2194 = vmin.f32 %v2130, 20.0
        %v2195 = vmin.f32 %v2131, 20.0
        %v2196 = vmin.f32 %v2132, 20.0
        %v2197 = vmin.f32 %v2133, 20.0
        %v2198 = vmin.f32 %v2134, 20.0
        %v2199 = vmin.f32 %v2135, 20.0
        %v2200 = vmin.f32 %v2136, 20.0
        %v2201 = vmin.f32 %v2137, 20.0
        %v2202 = vmin.f32 %v2138, 20.0
        %v2203 = vmin.f32 %v2139, 20.0
        %v2204 = vmin.f32 %v2140, 20.0
        %v2205 = vmin.f32 %v2141, 20.0
        %v2206 = vmin.f32 %v2142, 20.0
        %v2207 = vmin.f32 %v2143, 20.0
        %v2208 = vmin.f32 %v2144, 20.0
        %v2209 = vmin.f32 %v2145, 20.0
        %v2210 = vmin.f32 %v2146, 20.0
        %v2211 = vmin.f32 %v2147, 20.0
        %v2212 = vmin.f32 %v2148, 20.0
        %v2213 = vmin.f32 %v2149, 20.0
        %v2214 = vmin.f32 %v2150, 20.0
        %v2215 = vmin.f32 %v2151, 20.0
        %v2216 = vmin.f32 %v2152, 20.0
        %v2217 = vmin.f32 %v2153, 20.0
        %vm2218 = vcmp.gt.f32.partialorder %v2090, 20.0
        %vm2219 = vcmp.gt.f32.partialorder %v2091, 20.0
        %vm2220 = vcmp.gt.f32.partialorder %v2092, 20.0
        %vm2221 = vcmp.gt.f32.partialorder %v2093, 20.0
        %vm2222 = vcmp.gt.f32.partialorder %v2094, 20.0
        %vm2223 = vcmp.gt.f32.partialorder %v2095, 20.0
        %vm2224 = vcmp.gt.f32.partialorder %v2096, 20.0
        %vm2225 = vcmp.gt.f32.partialorder %v2097, 20.0
        %vm2226 = vcmp.gt.f32.partialorder %v2098, 20.0
        %vm2227 = vcmp.gt.f32.partialorder %v2099, 20.0
        %vm2228 = vcmp.gt.f32.partialorder %v2100, 20.0
        %vm2229 = vcmp.gt.f32.partialorder %v2101, 20.0
        %vm2230 = vcmp.gt.f32.partialorder %v2102, 20.0
        %vm2231 = vcmp.gt.f32.partialorder %v2103, 20.0
        %vm2232 = vcmp.gt.f32.partialorder %v2104, 20.0
        %vm2233 = vcmp.gt.f32.partialorder %v2105, 20.0
        %vm2234 = vcmp.gt.f32.partialorder %v2106, 20.0
        %vm2235 = vcmp.gt.f32.partialorder %v2107, 20.0
        %vm2236 = vcmp.gt.f32.partialorder %v2108, 20.0
        %vm2237 = vcmp.gt.f32.partialorder %v2109, 20.0
        %vm2238 = vcmp.gt.f32.partialorder %v2110, 20.0
        %vm2239 = vcmp.gt.f32.partialorder %v2111, 20.0
        %vm2240 = vcmp.gt.f32.partialorder %v2112, 20.0
        %vm2241 = vcmp.gt.f32.partialorder %v2113, 20.0
        %vm2242 = vcmp.gt.f32.partialorder %v2114, 20.0
        %vm2243 = vcmp.gt.f32.partialorder %v2115, 20.0
        %vm2244 = vcmp.gt.f32.partialorder %v2116, 20.0
        %vm2245 = vcmp.gt.f32.partialorder %v2117, 20.0
        %vm2246 = vcmp.gt.f32.partialorder %v2118, 20.0
        %vm2247 = vcmp.gt.f32.partialorder %v2119, 20.0
        %vm2248 = vcmp.gt.f32.partialorder %v2120, 20.0
        %vm2249 = vcmp.gt.f32.partialorder %v2121, 20.0
        %vm2250 = vcmp.gt.f32.partialorder %v2122, 20.0
        %vm2251 = vcmp.gt.f32.partialorder %v2123, 20.0
        %vm2252 = vcmp.gt.f32.partialorder %v2124, 20.0
        %vm2253 = vcmp.gt.f32.partialorder %v2125, 20.0
        %vm2254 = vcmp.gt.f32.partialorder %v2126, 20.0
        %vm2255 = vcmp.gt.f32.partialorder %v2127, 20.0
        %vm2256 = vcmp.gt.f32.partialorder %v2128, 20.0
        %vm2257 = vcmp.gt.f32.partialorder %v2129, 20.0
        %vm2258 = vcmp.gt.f32.partialorder %v2130, 20.0
        %vm2259 = vcmp.gt.f32.partialorder %v2131, 20.0
        %vm2260 = vcmp.gt.f32.partialorder %v2132, 20.0
        %vm2261 = vcmp.gt.f32.partialorder %v2133, 20.0
        %vm2262 = vcmp.gt.f32.partialorder %v2134, 20.0
        %vm2263 = vcmp.gt.f32.partialorder %v2135, 20.0
        %vm2264 = vcmp.gt.f32.partialorder %v2136, 20.0
        %vm2265 = vcmp.gt.f32.partialorder %v2137, 20.0
        %vm2266 = vcmp.gt.f32.partialorder %v2138, 20.0
        %vm2267 = vcmp.gt.f32.partialorder %v2139, 20.0
        %vm2268 = vcmp.gt.f32.partialorder %v2140, 20.0
        %vm2269 = vcmp.gt.f32.partialorder %v2141, 20.0
        %vm2270 = vcmp.gt.f32.partialorder %v2142, 20.0
        %vm2271 = vcmp.gt.f32.partialorder %v2143, 20.0
        %vm2272 = vcmp.gt.f32.partialorder %v2144, 20.0
        %vm2273 = vcmp.gt.f32.partialorder %v2145, 20.0
        %vm2274 = vcmp.gt.f32.partialorder %v2146, 20.0
        %vm2275 = vcmp.gt.f32.partialorder %v2147, 20.0
        %vm2276 = vcmp.gt.f32.partialorder %v2148, 20.0
        %vm2277 = vcmp.gt.f32.partialorder %v2149, 20.0
        %vm2278 = vcmp.gt.f32.partialorder %v2150, 20.0
        %vm2279 = vcmp.gt.f32.partialorder %v2151, 20.0
        %vm2280 = vcmp.gt.f32.partialorder %v2152, 20.0
        %vm2281 = vcmp.gt.f32.partialorder %v2153, 20.0
        %v2282 = vmul.f32 %v2154, 1.442695
        %v2283 = vpow.pop %v2282
        %v2284 = vmul.f32 %v2155, 1.442695
        %v2285 = vpow.pop %v2284
        %v2286 = vmul.f32 %v2156, 1.442695
        %v2287 = vpow.pop %v2286
        %v2288 = vmul.f32 %v2157, 1.442695
        %v2289 = vpow.pop %v2288
        %v2290 = vmul.f32 %v2158, 1.442695
        %v2291 = vpow.pop %v2290
        %v2292 = vmul.f32 %v2159, 1.442695
        %v2293 = vpow.pop %v2292
        %v2294 = vmul.f32 %v2160, 1.442695
        %v2295 = vpow.pop %v2294
        %v2296 = vmul.f32 %v2161, 1.442695
        %v2297 = vpow.pop %v2296
        %v2298 = vmul.f32 %v2162, 1.442695
        %v2299 = vpow.pop %v2298
        %v2300 = vmul.f32 %v2163, 1.442695
        %v2301 = vpow.pop %v2300
        %v2302 = vmul.f32 %v2164, 1.442695
        %v2303 = vpow.pop %v2302
        %v2304 = vmul.f32 %v2165, 1.442695
        %v2305 = vpow.pop %v2304
        %v2306 = vmul.f32 %v2166, 1.442695
        %v2307 = vpow.pop %v2306
        %v2308 = vmul.f32 %v2167, 1.442695
        %v2309 = vpow.pop %v2308
        %v2310 = vmul.f32 %v2168, 1.442695
        %v2311 = vpow.pop %v2310
        %v2312 = vmul.f32 %v2169, 1.442695
        %v2313 = vpow.pop %v2312
        %v2314 = vmul.f32 %v2170, 1.442695
        %v2315 = vpow.pop %v2314
        %v2316 = vmul.f32 %v2171, 1.442695
        %v2317 = vpow.pop %v2316
        %v2318 = vmul.f32 %v2172, 1.442695
        %v2319 = vpow.pop %v2318
        %v2320 = vmul.f32 %v2173, 1.442695
        %v2321 = vpow.pop %v2320
        %v2322 = vmul.f32 %v2174, 1.442695
        %v2323 = vpow.pop %v2322
        %v2324 = vmul.f32 %v2175, 1.442695
        %v2325 = vpow.pop %v2324
        %v2326 = vmul.f32 %v2176, 1.442695
        %v2327 = vpow.pop %v2326
        %v2328 = vmul.f32 %v2177, 1.442695
        %v2329 = vpow.pop %v2328
        %v2330 = vmul.f32 %v2178, 1.442695
        %v2331 = vpow.pop %v2330
        %v2332 = vmul.f32 %v2179, 1.442695
        %v2333 = vpow.pop %v2332
        %v2334 = vmul.f32 %v2180, 1.442695
        %v2335 = vpow.pop %v2334
        %v2336 = vmul.f32 %v2181, 1.442695
        %v2337 = vpow.pop %v2336
        %v2338 = vmul.f32 %v2182, 1.442695
        %v2339 = vpow.pop %v2338
        %v2340 = vmul.f32 %v2183, 1.442695
        %v2341 = vpow.pop %v2340
        %v2342 = vmul.f32 %v2184, 1.442695
        %v2343 = vpow.pop %v2342
        %v2344 = vmul.f32 %v2185, 1.442695
        %v2345 = vpow.pop %v2344
        %v2346 = vmul.f32 %v2186, 1.442695
        %v2347 = vpow.pop %v2346
        %v2348 = vmul.f32 %v2187, 1.442695
        %v2349 = vpow.pop %v2348
        %v2350 = vmul.f32 %v2188, 1.442695
        %v2351 = vpow.pop %v2350
        %v2352 = vmul.f32 %v2189, 1.442695
        %v2353 = vpow.pop %v2352
        %v2354 = vmul.f32 %v2190, 1.442695
        %v2355 = vpow.pop %v2354
        %v2356 = vmul.f32 %v2191, 1.442695
        %v2357 = vpow.pop %v2356
        %v2358 = vmul.f32 %v2192, 1.442695
        %v2359 = vpow.pop %v2358
        %v2360 = vmul.f32 %v2193, 1.442695
        %v2361 = vpow.pop %v2360
        %v2362 = vmul.f32 %v2194, 1.442695
        %v2363 = vpow.pop %v2362
        %v2364 = vmul.f32 %v2195, 1.442695
        %v2365 = vpow.pop %v2364
        %v2366 = vmul.f32 %v2196, 1.442695
        %v2367 = vpow.pop %v2366
        %v2368 = vmul.f32 %v2197, 1.442695
        %v2369 = vpow.pop %v2368
        %v2370 = vmul.f32 %v2198, 1.442695
        %v2371 = vpow.pop %v2370
        %v2372 = vmul.f32 %v2199, 1.442695
        %v2373 = vpow.pop %v2372
        %v2374 = vmul.f32 %v2200, 1.442695
        %v2375 = vpow.pop %v2374
        %v2376 = vmul.f32 %v2201, 1.442695
        %v2377 = vpow.pop %v2376
        %v2378 = vmul.f32 %v2202, 1.442695
        %v2379 = vpow.pop %v2378
        %v2380 = vmul.f32 %v2203, 1.442695
        %v2381 = vpow.pop %v2380
        %v2382 = vmul.f32 %v2204, 1.442695
        %v2383 = vpow.pop %v2382
        %v2384 = vmul.f32 %v2205, 1.442695
        %v2385 = vpow.pop %v2384
        %v2386 = vmul.f32 %v2206, 1.442695
        %v2387 = vpow.pop %v2386
        %v2388 = vmul.f32 %v2207, 1.442695
        %v2389 = vpow.pop %v2388
        %v2390 = vmul.f32 %v2208, 1.442695
        %v2391 = vpow.pop %v2390
        %v2392 = vmul.f32 %v2209, 1.442695
        %v2393 = vpow.pop %v2392
        %v2394 = vmul.f32 %v2210, 1.442695
        %v2395 = vpow.pop %v2394
        %v2396 = vmul.f32 %v2211, 1.442695
        %v2397 = vpow.pop %v2396
        %v2398 = vmul.f32 %v2212, 1.442695
        %v2399 = vpow.pop %v2398
        %v2400 = vmul.f32 %v2213, 1.442695
        %v2401 = vpow.pop %v2400
        %v2402 = vmul.f32 %v2214, 1.442695
        %v2403 = vpow.pop %v2402
        %v2404 = vmul.f32 %v2215, 1.442695
        %v2405 = vpow.pop %v2404
        %v2406 = vmul.f32 %v2216, 1.442695
        %v2407 = vpow.pop %v2406
        %v2408 = vmul.f32 %v2217, 1.442695
        %v2409 = vpow.pop %v2408
        %v2410 = vadd.f32 %v2283, 1.0
        %v2411 = vlog2.pop %v2410
        %v2412 = vmul.f32 %v2411, 0.6931472
        %v2413 = vmul.f32 -0.5, %v2283
        %v2414 = vadd.f32 %v2413, 1.0
        %v2415 = vmul.f32 %v2414, %v2283
        %v2416 = vand.u32 2147483647, %v2283
        %vm2417 = vcmp.lt.f32.partialorder %v2416, 0.0004427343
        %v2418 = vsel %vm2417, %v2415, %v2412
        %v2419 = vadd.f32 %v2285, 1.0
        %v2420 = vlog2.pop %v2419
        %v2421 = vmul.f32 %v2420, 0.6931472
        %v2422 = vmul.f32 -0.5, %v2285
        %v2423 = vadd.f32 %v2422, 1.0
        %v2424 = vmul.f32 %v2423, %v2285
        %v2425 = vand.u32 2147483647, %v2285
        %vm2426 = vcmp.lt.f32.partialorder %v2425, 0.0004427343
        %v2427 = vsel %vm2426, %v2424, %v2421
        %v2428 = vadd.f32 %v2287, 1.0
        %v2429 = vlog2.pop %v2428
        %v2430 = vmul.f32 %v2429, 0.6931472
        %v2431 = vmul.f32 -0.5, %v2287
        %v2432 = vadd.f32 %v2431, 1.0
        %v2433 = vmul.f32 %v2432, %v2287
        %v2434 = vand.u32 2147483647, %v2287
        %vm2435 = vcmp.lt.f32.partialorder %v2434, 0.0004427343
        %v2436 = vsel %vm2435, %v2433, %v2430
        %v2437 = vadd.f32 %v2289, 1.0
        %v2438 = vlog2.pop %v2437
        %v2439 = vmul.f32 %v2438, 0.6931472
        %v2440 = vmul.f32 -0.5, %v2289
        %v2441 = vadd.f32 %v2440, 1.0
        %v2442 = vmul.f32 %v2441, %v2289
        %v2443 = vand.u32 2147483647, %v2289
        %vm2444 = vcmp.lt.f32.partialorder %v2443, 0.0004427343
        %v2445 = vsel %vm2444, %v2442, %v2439
        %v2446 = vadd.f32 %v2291, 1.0
        %v2447 = vlog2.pop %v2446
        %v2448 = vmul.f32 %v2447, 0.6931472
        %v2449 = vmul.f32 -0.5, %v2291
        %v2450 = vadd.f32 %v2449, 1.0
        %v2451 = vmul.f32 %v2450, %v2291
        %v2452 = vand.u32 2147483647, %v2291
        %vm2453 = vcmp.lt.f32.partialorder %v2452, 0.0004427343
        %v2454 = vsel %vm2453, %v2451, %v2448
        %v2455 = vadd.f32 %v2293, 1.0
        %v2456 = vlog2.pop %v2455
        %v2457 = vmul.f32 %v2456, 0.6931472
        %v2458 = vmul.f32 -0.5, %v2293
        %v2459 = vadd.f32 %v2458, 1.0
        %v2460 = vmul.f32 %v2459, %v2293
        %v2461 = vand.u32 2147483647, %v2293
        %vm2462 = vcmp.lt.f32.partialorder %v2461, 0.0004427343
        %v2463 = vsel %vm2462, %v2460, %v2457
        %v2464 = vadd.f32 %v2295, 1.0
        %v2465 = vlog2.pop %v2464
        %v2466 = vmul.f32 %v2465, 0.6931472
        %v2467 = vmul.f32 -0.5, %v2295
        %v2468 = vadd.f32 %v2467, 1.0
        %v2469 = vmul.f32 %v2468, %v2295
        %v2470 = vand.u32 2147483647, %v2295
        %vm2471 = vcmp.lt.f32.partialorder %v2470, 0.0004427343
        %v2472 = vsel %vm2471, %v2469, %v2466
        %v2473 = vadd.f32 %v2297, 1.0
        %v2474 = vlog2.pop %v2473
        %v2475 = vmul.f32 %v2474, 0.6931472
        %v2476 = vmul.f32 -0.5, %v2297
        %v2477 = vadd.f32 %v2476, 1.0
        %v2478 = vmul.f32 %v2477, %v2297
        %v2479 = vand.u32 2147483647, %v2297
        %vm2480 = vcmp.lt.f32.partialorder %v2479, 0.0004427343
        %v2481 = vsel %vm2480, %v2478, %v2475
        %v2482 = vadd.f32 %v2299, 1.0
        %v2483 = vlog2.pop %v2482
        %v2484 = vmul.f32 %v2483, 0.6931472
        %v2485 = vmul.f32 -0.5, %v2299
        %v2486 = vadd.f32 %v2485, 1.0
        %v2487 = vmul.f32 %v2486, %v2299
        %v2488 = vand.u32 2147483647, %v2299
        %vm2489 = vcmp.lt.f32.partialorder %v2488, 0.0004427343
        %v2490 = vsel %vm2489, %v2487, %v2484
        %v2491 = vadd.f32 %v2301, 1.0
        %v2492 = vlog2.pop %v2491
        %v2493 = vmul.f32 %v2492, 0.6931472
        %v2494 = vmul.f32 -0.5, %v2301
        %v2495 = vadd.f32 %v2494, 1.0
        %v2496 = vmul.f32 %v2495, %v2301
        %v2497 = vand.u32 2147483647, %v2301
        %vm2498 = vcmp.lt.f32.partialorder %v2497, 0.0004427343
        %v2499 = vsel %vm2498, %v2496, %v2493
        %v2500 = vadd.f32 %v2303, 1.0
        %v2501 = vlog2.pop %v2500
        %v2502 = vmul.f32 %v2501, 0.6931472
        %v2503 = vmul.f32 -0.5, %v2303
        %v2504 = vadd.f32 %v2503, 1.0
        %v2505 = vmul.f32 %v2504, %v2303
        %v2506 = vand.u32 2147483647, %v2303
        %vm2507 = vcmp.lt.f32.partialorder %v2506, 0.0004427343
        %v2508 = vsel %vm2507, %v2505, %v2502
        %v2509 = vadd.f32 %v2305, 1.0
        %v2510 = vlog2.pop %v2509
        %v2511 = vmul.f32 %v2510, 0.6931472
        %v2512 = vmul.f32 -0.5, %v2305
        %v2513 = vadd.f32 %v2512, 1.0
        %v2514 = vmul.f32 %v2513, %v2305
        %v2515 = vand.u32 2147483647, %v2305
        %vm2516 = vcmp.lt.f32.partialorder %v2515, 0.0004427343
        %v2517 = vsel %vm2516, %v2514, %v2511
        %v2518 = vadd.f32 %v2307, 1.0
        %v2519 = vlog2.pop %v2518
        %v2520 = vmul.f32 %v2519, 0.6931472
        %v2521 = vmul.f32 -0.5, %v2307
        %v2522 = vadd.f32 %v2521, 1.0
        %v2523 = vmul.f32 %v2522, %v2307
        %v2524 = vand.u32 2147483647, %v2307
        %vm2525 = vcmp.lt.f32.partialorder %v2524, 0.0004427343
        %v2526 = vsel %vm2525, %v2523, %v2520
        %v2527 = vadd.f32 %v2309, 1.0
        %v2528 = vlog2.pop %v2527
        %v2529 = vmul.f32 %v2528, 0.6931472
        %v2530 = vmul.f32 -0.5, %v2309
        %v2531 = vadd.f32 %v2530, 1.0
        %v2532 = vmul.f32 %v2531, %v2309
        %v2533 = vand.u32 2147483647, %v2309
        %vm2534 = vcmp.lt.f32.partialorder %v2533, 0.0004427343
        %v2535 = vsel %vm2534, %v2532, %v2529
        %v2536 = vadd.f32 %v2311, 1.0
        %v2537 = vlog2.pop %v2536
        %v2538 = vmul.f32 %v2537, 0.6931472
        %v2539 = vmul.f32 -0.5, %v2311
        %v2540 = vadd.f32 %v2539, 1.0
        %v2541 = vmul.f32 %v2540, %v2311
        %v2542 = vand.u32 2147483647, %v2311
        %vm2543 = vcmp.lt.f32.partialorder %v2542, 0.0004427343
        %v2544 = vsel %vm2543, %v2541, %v2538
        %v2545 = vadd.f32 %v2313, 1.0
        %v2546 = vlog2.pop %v2545
        %v2547 = vmul.f32 %v2546, 0.6931472
        %v2548 = vmul.f32 -0.5, %v2313
        %v2549 = vadd.f32 %v2548, 1.0
        %v2550 = vmul.f32 %v2549, %v2313
        %v2551 = vand.u32 2147483647, %v2313
        %vm2552 = vcmp.lt.f32.partialorder %v2551, 0.0004427343
        %v2553 = vsel %vm2552, %v2550, %v2547
        %v2554 = vadd.f32 %v2315, 1.0
        %v2555 = vlog2.pop %v2554
        %v2556 = vmul.f32 %v2555, 0.6931472
        %v2557 = vmul.f32 -0.5, %v2315
        %v2558 = vadd.f32 %v2557, 1.0
        %v2559 = vmul.f32 %v2558, %v2315
        %v2560 = vand.u32 2147483647, %v2315
        %vm2561 = vcmp.lt.f32.partialorder %v2560, 0.0004427343
        %v2562 = vsel %vm2561, %v2559, %v2556
        %v2563 = vadd.f32 %v2317, 1.0
        %v2564 = vlog2.pop %v2563
        %v2565 = vmul.f32 %v2564, 0.6931472
        %v2566 = vmul.f32 -0.5, %v2317
        %v2567 = vadd.f32 %v2566, 1.0
        %v2568 = vmul.f32 %v2567, %v2317
        %v2569 = vand.u32 2147483647, %v2317
        %vm2570 = vcmp.lt.f32.partialorder %v2569, 0.0004427343
        %v2571 = vsel %vm2570, %v2568, %v2565
        %v2572 = vadd.f32 %v2319, 1.0
        %v2573 = vlog2.pop %v2572
        %v2574 = vmul.f32 %v2573, 0.6931472
        %v2575 = vmul.f32 -0.5, %v2319
        %v2576 = vadd.f32 %v2575, 1.0
        %v2577 = vmul.f32 %v2576, %v2319
        %v2578 = vand.u32 2147483647, %v2319
        %vm2579 = vcmp.lt.f32.partialorder %v2578, 0.0004427343
        %v2580 = vsel %vm2579, %v2577, %v2574
        %v2581 = vadd.f32 %v2321, 1.0
        %v2582 = vlog2.pop %v2581
        %v2583 = vmul.f32 %v2582, 0.6931472
        %v2584 = vmul.f32 -0.5, %v2321
        %v2585 = vadd.f32 %v2584, 1.0
        %v2586 = vmul.f32 %v2585, %v2321
        %v2587 = vand.u32 2147483647, %v2321
        %vm2588 = vcmp.lt.f32.partialorder %v2587, 0.0004427343
        %v2589 = vsel %vm2588, %v2586, %v2583
        %v2590 = vadd.f32 %v2323, 1.0
        %v2591 = vlog2.pop %v2590
        %v2592 = vmul.f32 %v2591, 0.6931472
        %v2593 = vmul.f32 -0.5, %v2323
        %v2594 = vadd.f32 %v2593, 1.0
        %v2595 = vmul.f32 %v2594, %v2323
        %v2596 = vand.u32 2147483647, %v2323
        %vm2597 = vcmp.lt.f32.partialorder %v2596, 0.0004427343
        %v2598 = vsel %vm2597, %v2595, %v2592
        %v2599 = vadd.f32 %v2325, 1.0
        %v2600 = vlog2.pop %v2599
        %v2601 = vmul.f32 %v2600, 0.6931472
        %v2602 = vmul.f32 -0.5, %v2325
        %v2603 = vadd.f32 %v2602, 1.0
        %v2604 = vmul.f32 %v2603, %v2325
        %v2605 = vand.u32 2147483647, %v2325
        %vm2606 = vcmp.lt.f32.partialorder %v2605, 0.0004427343
        %v2607 = vsel %vm2606, %v2604, %v2601
        %v2608 = vadd.f32 %v2327, 1.0
        %v2609 = vlog2.pop %v2608
        %v2610 = vmul.f32 %v2609, 0.6931472
        %v2611 = vmul.f32 -0.5, %v2327
        %v2612 = vadd.f32 %v2611, 1.0
        %v2613 = vmul.f32 %v2612, %v2327
        %v2614 = vand.u32 2147483647, %v2327
        %vm2615 = vcmp.lt.f32.partialorder %v2614, 0.0004427343
        %v2616 = vsel %vm2615, %v2613, %v2610
        %v2617 = vadd.f32 %v2329, 1.0
        %v2618 = vlog2.pop %v2617
        %v2619 = vmul.f32 %v2618, 0.6931472
        %v2620 = vmul.f32 -0.5, %v2329
        %v2621 = vadd.f32 %v2620, 1.0
        %v2622 = vmul.f32 %v2621, %v2329
        %v2623 = vand.u32 2147483647, %v2329
        %vm2624 = vcmp.lt.f32.partialorder %v2623, 0.0004427343
        %v2625 = vsel %vm2624, %v2622, %v2619
        %v2626 = vadd.f32 %v2331, 1.0
        %v2627 = vlog2.pop %v2626
        %v2628 = vmul.f32 %v2627, 0.6931472
        %v2629 = vmul.f32 -0.5, %v2331
        %v2630 = vadd.f32 %v2629, 1.0
        %v2631 = vmul.f32 %v2630, %v2331
        %v2632 = vand.u32 2147483647, %v2331
        %vm2633 = vcmp.lt.f32.partialorder %v2632, 0.0004427343
        %v2634 = vsel %vm2633, %v2631, %v2628
        %v2635 = vadd.f32 %v2333, 1.0
        %v2636 = vlog2.pop %v2635
        %v2637 = vmul.f32 %v2636, 0.6931472
        %v2638 = vmul.f32 -0.5, %v2333
        %v2639 = vadd.f32 %v2638, 1.0
        %v2640 = vmul.f32 %v2639, %v2333
        %v2641 = vand.u32 2147483647, %v2333
        %vm2642 = vcmp.lt.f32.partialorder %v2641, 0.0004427343
        %v2643 = vsel %vm2642, %v2640, %v2637
        %v2644 = vadd.f32 %v2335, 1.0
        %v2645 = vlog2.pop %v2644
        %v2646 = vmul.f32 %v2645, 0.6931472
        %v2647 = vmul.f32 -0.5, %v2335
        %v2648 = vadd.f32 %v2647, 1.0
        %v2649 = vmul.f32 %v2648, %v2335
        %v2650 = vand.u32 2147483647, %v2335
        %vm2651 = vcmp.lt.f32.partialorder %v2650, 0.0004427343
        %v2652 = vsel %vm2651, %v2649, %v2646
        %v2653 = vadd.f32 %v2337, 1.0
        %v2654 = vlog2.pop %v2653
        %v2655 = vmul.f32 %v2654, 0.6931472
        %v2656 = vmul.f32 -0.5, %v2337
        %v2657 = vadd.f32 %v2656, 1.0
        %v2658 = vmul.f32 %v2657, %v2337
        %v2659 = vand.u32 2147483647, %v2337
        %vm2660 = vcmp.lt.f32.partialorder %v2659, 0.0004427343
        %v2661 = vsel %vm2660, %v2658, %v2655
        %v2662 = vadd.f32 %v2339, 1.0
        %v2663 = vlog2.pop %v2662
        %v2664 = vmul.f32 %v2663, 0.6931472
        %v2665 = vmul.f32 -0.5, %v2339
        %v2666 = vadd.f32 %v2665, 1.0
        %v2667 = vmul.f32 %v2666, %v2339
        %v2668 = vand.u32 2147483647, %v2339
        %vm2669 = vcmp.lt.f32.partialorder %v2668, 0.0004427343
        %v2670 = vsel %vm2669, %v2667, %v2664
        %v2671 = vadd.f32 %v2341, 1.0
        %v2672 = vlog2.pop %v2671
        %v2673 = vmul.f32 %v2672, 0.6931472
        %v2674 = vmul.f32 -0.5, %v2341
        %v2675 = vadd.f32 %v2674, 1.0
        %v2676 = vmul.f32 %v2675, %v2341
        %v2677 = vand.u32 2147483647, %v2341
        %vm2678 = vcmp.lt.f32.partialorder %v2677, 0.0004427343
        %v2679 = vsel %vm2678, %v2676, %v2673
        %v2680 = vadd.f32 %v2343, 1.0
        %v2681 = vlog2.pop %v2680
        %v2682 = vmul.f32 %v2681, 0.6931472
        %v2683 = vmul.f32 -0.5, %v2343
        %v2684 = vadd.f32 %v2683, 1.0
        %v2685 = vmul.f32 %v2684, %v2343
        %v2686 = vand.u32 2147483647, %v2343
        %vm2687 = vcmp.lt.f32.partialorder %v2686, 0.0004427343
        %v2688 = vsel %vm2687, %v2685, %v2682
        %v2689 = vadd.f32 %v2345, 1.0
        %v2690 = vlog2.pop %v2689
        %v2691 = vmul.f32 %v2690, 0.6931472
        %v2692 = vmul.f32 -0.5, %v2345
        %v2693 = vadd.f32 %v2692, 1.0
        %v2694 = vmul.f32 %v2693, %v2345
        %v2695 = vand.u32 2147483647, %v2345
        %vm2696 = vcmp.lt.f32.partialorder %v2695, 0.0004427343
        %v2697 = vsel %vm2696, %v2694, %v2691
        %v2698 = vadd.f32 %v2347, 1.0
        %v2699 = vlog2.pop %v2698
        %v2700 = vmul.f32 %v2699, 0.6931472
        %v2701 = vmul.f32 -0.5, %v2347
        %v2702 = vadd.f32 %v2701, 1.0
        %v2703 = vmul.f32 %v2702, %v2347
        %v2704 = vand.u32 2147483647, %v2347
        %vm2705 = vcmp.lt.f32.partialorder %v2704, 0.0004427343
        %v2706 = vsel %vm2705, %v2703, %v2700
        %v2707 = vadd.f32 %v2349, 1.0
        %v2708 = vlog2.pop %v2707
        %v2709 = vmul.f32 %v2708, 0.6931472
        %v2710 = vmul.f32 -0.5, %v2349
        %v2711 = vadd.f32 %v2710, 1.0
        %v2712 = vmul.f32 %v2711, %v2349
        %v2713 = vand.u32 2147483647, %v2349
        %vm2714 = vcmp.lt.f32.partialorder %v2713, 0.0004427343
        %v2715 = vsel %vm2714, %v2712, %v2709
        %v2716 = vadd.f32 %v2351, 1.0
        %v2717 = vlog2.pop %v2716
        %v2718 = vmul.f32 %v2717, 0.6931472
        %v2719 = vmul.f32 -0.5, %v2351
        %v2720 = vadd.f32 %v2719, 1.0
        %v2721 = vmul.f32 %v2720, %v2351
        %v2722 = vand.u32 2147483647, %v2351
        %vm2723 = vcmp.lt.f32.partialorder %v2722, 0.0004427343
        %v2724 = vsel %vm2723, %v2721, %v2718
        %v2725 = vadd.f32 %v2353, 1.0
        %v2726 = vlog2.pop %v2725
        %v2727 = vmul.f32 %v2726, 0.6931472
        %v2728 = vmul.f32 -0.5, %v2353
        %v2729 = vadd.f32 %v2728, 1.0
        %v2730 = vmul.f32 %v2729, %v2353
        %v2731 = vand.u32 2147483647, %v2353
        %vm2732 = vcmp.lt.f32.partialorder %v2731, 0.0004427343
        %v2733 = vsel %vm2732, %v2730, %v2727
        %v2734 = vadd.f32 %v2355, 1.0
        %v2735 = vlog2.pop %v2734
        %v2736 = vmul.f32 %v2735, 0.6931472
        %v2737 = vmul.f32 -0.5, %v2355
        %v2738 = vadd.f32 %v2737, 1.0
        %v2739 = vmul.f32 %v2738, %v2355
        %v2740 = vand.u32 2147483647, %v2355
        %vm2741 = vcmp.lt.f32.partialorder %v2740, 0.0004427343
        %v2742 = vsel %vm2741, %v2739, %v2736
        %v2743 = vadd.f32 %v2357, 1.0
        %v2744 = vlog2.pop %v2743
        %v2745 = vmul.f32 %v2744, 0.6931472
        %v2746 = vmul.f32 -0.5, %v2357
        %v2747 = vadd.f32 %v2746, 1.0
        %v2748 = vmul.f32 %v2747, %v2357
        %v2749 = vand.u32 2147483647, %v2357
        %vm2750 = vcmp.lt.f32.partialorder %v2749, 0.0004427343
        %v2751 = vsel %vm2750, %v2748, %v2745
        %v2752 = vadd.f32 %v2359, 1.0
        %v2753 = vlog2.pop %v2752
        %v2754 = vmul.f32 %v2753, 0.6931472
        %v2755 = vmul.f32 -0.5, %v2359
        %v2756 = vadd.f32 %v2755, 1.0
        %v2757 = vmul.f32 %v2756, %v2359
        %v2758 = vand.u32 2147483647, %v2359
        %vm2759 = vcmp.lt.f32.partialorder %v2758, 0.0004427343
        %v2760 = vsel %vm2759, %v2757, %v2754
        %v2761 = vadd.f32 %v2361, 1.0
        %v2762 = vlog2.pop %v2761
        %v2763 = vmul.f32 %v2762, 0.6931472
        %v2764 = vmul.f32 -0.5, %v2361
        %v2765 = vadd.f32 %v2764, 1.0
        %v2766 = vmul.f32 %v2765, %v2361
        %v2767 = vand.u32 2147483647, %v2361
        %vm2768 = vcmp.lt.f32.partialorder %v2767, 0.0004427343
        %v2769 = vsel %vm2768, %v2766, %v2763
        %v2770 = vadd.f32 %v2363, 1.0
        %v2771 = vlog2.pop %v2770
        %v2772 = vmul.f32 %v2771, 0.6931472
        %v2773 = vmul.f32 -0.5, %v2363
        %v2774 = vadd.f32 %v2773, 1.0
        %v2775 = vmul.f32 %v2774, %v2363
        %v2776 = vand.u32 2147483647, %v2363
        %vm2777 = vcmp.lt.f32.partialorder %v2776, 0.0004427343
        %v2778 = vsel %vm2777, %v2775, %v2772
        %v2779 = vadd.f32 %v2365, 1.0
        %v2780 = vlog2.pop %v2779
        %v2781 = vmul.f32 %v2780, 0.6931472
        %v2782 = vmul.f32 -0.5, %v2365
        %v2783 = vadd.f32 %v2782, 1.0
        %v2784 = vmul.f32 %v2783, %v2365
        %v2785 = vand.u32 2147483647, %v2365
        %vm2786 = vcmp.lt.f32.partialorder %v2785, 0.0004427343
        %v2787 = vsel %vm2786, %v2784, %v2781
        %v2788 = vadd.f32 %v2367, 1.0
        %v2789 = vlog2.pop %v2788
        %v2790 = vmul.f32 %v2789, 0.6931472
        %v2791 = vmul.f32 -0.5, %v2367
        %v2792 = vadd.f32 %v2791, 1.0
        %v2793 = vmul.f32 %v2792, %v2367
        %v2794 = vand.u32 2147483647, %v2367
        %vm2795 = vcmp.lt.f32.partialorder %v2794, 0.0004427343
        %v2796 = vsel %vm2795, %v2793, %v2790
        %v2797 = vadd.f32 %v2369, 1.0
        %v2798 = vlog2.pop %v2797
        %v2799 = vmul.f32 %v2798, 0.6931472
        %v2800 = vmul.f32 -0.5, %v2369
        %v2801 = vadd.f32 %v2800, 1.0
        %v2802 = vmul.f32 %v2801, %v2369
        %v2803 = vand.u32 2147483647, %v2369
        %vm2804 = vcmp.lt.f32.partialorder %v2803, 0.0004427343
        %v2805 = vsel %vm2804, %v2802, %v2799
        %v2806 = vadd.f32 %v2371, 1.0
        %v2807 = vlog2.pop %v2806
        %v2808 = vmul.f32 %v2807, 0.6931472
        %v2809 = vmul.f32 -0.5, %v2371
        %v2810 = vadd.f32 %v2809, 1.0
        %v2811 = vmul.f32 %v2810, %v2371
        %v2812 = vand.u32 2147483647, %v2371
        %vm2813 = vcmp.lt.f32.partialorder %v2812, 0.0004427343
        %v2814 = vsel %vm2813, %v2811, %v2808
        %v2815 = vadd.f32 %v2373, 1.0
        %v2816 = vlog2.pop %v2815
        %v2817 = vmul.f32 %v2816, 0.6931472
        %v2818 = vmul.f32 -0.5, %v2373
        %v2819 = vadd.f32 %v2818, 1.0
        %v2820 = vmul.f32 %v2819, %v2373
        %v2821 = vand.u32 2147483647, %v2373
        %vm2822 = vcmp.lt.f32.partialorder %v2821, 0.0004427343
        %v2823 = vsel %vm2822, %v2820, %v2817
        %v2824 = vadd.f32 %v2375, 1.0
        %v2825 = vlog2.pop %v2824
        %v2826 = vmul.f32 %v2825, 0.6931472
        %v2827 = vmul.f32 -0.5, %v2375
        %v2828 = vadd.f32 %v2827, 1.0
        %v2829 = vmul.f32 %v2828, %v2375
        %v2830 = vand.u32 2147483647, %v2375
        %vm2831 = vcmp.lt.f32.partialorder %v2830, 0.0004427343
        %v2832 = vsel %vm2831, %v2829, %v2826
        %v2833 = vadd.f32 %v2377, 1.0
        %v2834 = vlog2.pop %v2833
        %v2835 = vmul.f32 %v2834, 0.6931472
        %v2836 = vmul.f32 -0.5, %v2377
        %v2837 = vadd.f32 %v2836, 1.0
        %v2838 = vmul.f32 %v2837, %v2377
        %v2839 = vand.u32 2147483647, %v2377
        %vm2840 = vcmp.lt.f32.partialorder %v2839, 0.0004427343
        %v2841 = vsel %vm2840, %v2838, %v2835
        %v2842 = vadd.f32 %v2379, 1.0
        %v2843 = vlog2.pop %v2842
        %v2844 = vmul.f32 %v2843, 0.6931472
        %v2845 = vmul.f32 -0.5, %v2379
        %v2846 = vadd.f32 %v2845, 1.0
        %v2847 = vmul.f32 %v2846, %v2379
        %v2848 = vand.u32 2147483647, %v2379
        %vm2849 = vcmp.lt.f32.partialorder %v2848, 0.0004427343
        %v2850 = vsel %vm2849, %v2847, %v2844
        %v2851 = vadd.f32 %v2381, 1.0
        %v2852 = vlog2.pop %v2851
        %v2853 = vmul.f32 %v2852, 0.6931472
        %v2854 = vmul.f32 -0.5, %v2381
        %v2855 = vadd.f32 %v2854, 1.0
        %v2856 = vmul.f32 %v2855, %v2381
        %v2857 = vand.u32 2147483647, %v2381
        %vm2858 = vcmp.lt.f32.partialorder %v2857, 0.0004427343
        %v2859 = vsel %vm2858, %v2856, %v2853
        %v2860 = vadd.f32 %v2383, 1.0
        %v2861 = vlog2.pop %v2860
        %v2862 = vmul.f32 %v2861, 0.6931472
        %v2863 = vmul.f32 -0.5, %v2383
        %v2864 = vadd.f32 %v2863, 1.0
        %v2865 = vmul.f32 %v2864, %v2383
        %v2866 = vand.u32 2147483647, %v2383
        %vm2867 = vcmp.lt.f32.partialorder %v2866, 0.0004427343
        %v2868 = vsel %vm2867, %v2865, %v2862
        %v2869 = vadd.f32 %v2385, 1.0
        %v2870 = vlog2.pop %v2869
        %v2871 = vmul.f32 %v2870, 0.6931472
        %v2872 = vmul.f32 -0.5, %v2385
        %v2873 = vadd.f32 %v2872, 1.0
        %v2874 = vmul.f32 %v2873, %v2385
        %v2875 = vand.u32 2147483647, %v2385
        %vm2876 = vcmp.lt.f32.partialorder %v2875, 0.0004427343
        %v2877 = vsel %vm2876, %v2874, %v2871
        %v2878 = vadd.f32 %v2387, 1.0
        %v2879 = vlog2.pop %v2878
        %v2880 = vmul.f32 %v2879, 0.6931472
        %v2881 = vmul.f32 -0.5, %v2387
        %v2882 = vadd.f32 %v2881, 1.0
        %v2883 = vmul.f32 %v2882, %v2387
        %v2884 = vand.u32 2147483647, %v2387
        %vm2885 = vcmp.lt.f32.partialorder %v2884, 0.0004427343
        %v2886 = vsel %vm2885, %v2883, %v2880
        %v2887 = vadd.f32 %v2389, 1.0
        %v2888 = vlog2.pop %v2887
        %v2889 = vmul.f32 %v2888, 0.6931472
        %v2890 = vmul.f32 -0.5, %v2389
        %v2891 = vadd.f32 %v2890, 1.0
        %v2892 = vmul.f32 %v2891, %v2389
        %v2893 = vand.u32 2147483647, %v2389
        %vm2894 = vcmp.lt.f32.partialorder %v2893, 0.0004427343
        %v2895 = vsel %vm2894, %v2892, %v2889
        %v2896 = vadd.f32 %v2391, 1.0
        %v2897 = vlog2.pop %v2896
        %v2898 = vmul.f32 %v2897, 0.6931472
        %v2899 = vmul.f32 -0.5, %v2391
        %v2900 = vadd.f32 %v2899, 1.0
        %v2901 = vmul.f32 %v2900, %v2391
        %v2902 = vand.u32 2147483647, %v2391
        %vm2903 = vcmp.lt.f32.partialorder %v2902, 0.0004427343
        %v2904 = vsel %vm2903, %v2901, %v2898
        %v2905 = vadd.f32 %v2393, 1.0
        %v2906 = vlog2.pop %v2905
        %v2907 = vmul.f32 %v2906, 0.6931472
        %v2908 = vmul.f32 -0.5, %v2393
        %v2909 = vadd.f32 %v2908, 1.0
        %v2910 = vmul.f32 %v2909, %v2393
        %v2911 = vand.u32 2147483647, %v2393
        %vm2912 = vcmp.lt.f32.partialorder %v2911, 0.0004427343
        %v2913 = vsel %vm2912, %v2910, %v2907
        %v2914 = vadd.f32 %v2395, 1.0
        %v2915 = vlog2.pop %v2914
        %v2916 = vmul.f32 %v2915, 0.6931472
        %v2917 = vmul.f32 -0.5, %v2395
        %v2918 = vadd.f32 %v2917, 1.0
        %v2919 = vmul.f32 %v2918, %v2395
        %v2920 = vand.u32 2147483647, %v2395
        %vm2921 = vcmp.lt.f32.partialorder %v2920, 0.0004427343
        %v2922 = vsel %vm2921, %v2919, %v2916
        %v2923 = vadd.f32 %v2397, 1.0
        %v2924 = vlog2.pop %v2923
        %v2925 = vmul.f32 %v2924, 0.6931472
        %v2926 = vmul.f32 -0.5, %v2397
        %v2927 = vadd.f32 %v2926, 1.0
        %v2928 = vmul.f32 %v2927, %v2397
        %v2929 = vand.u32 2147483647, %v2397
        %vm2930 = vcmp.lt.f32.partialorder %v2929, 0.0004427343
        %v2931 = vsel %vm2930, %v2928, %v2925
        %v2932 = vadd.f32 %v2399, 1.0
        %v2933 = vlog2.pop %v2932
        %v2934 = vmul.f32 %v2933, 0.6931472
        %v2935 = vmul.f32 -0.5, %v2399
        %v2936 = vadd.f32 %v2935, 1.0
        %v2937 = vmul.f32 %v2936, %v2399
        %v2938 = vand.u32 2147483647, %v2399
        %vm2939 = vcmp.lt.f32.partialorder %v2938, 0.0004427343
        %v2940 = vsel %vm2939, %v2937, %v2934
        %v2941 = vadd.f32 %v2401, 1.0
        %v2942 = vlog2.pop %v2941
        %v2943 = vmul.f32 %v2942, 0.6931472
        %v2944 = vmul.f32 -0.5, %v2401
        %v2945 = vadd.f32 %v2944, 1.0
        %v2946 = vmul.f32 %v2945, %v2401
        %v2947 = vand.u32 2147483647, %v2401
        %vm2948 = vcmp.lt.f32.partialorder %v2947, 0.0004427343
        %v2949 = vsel %vm2948, %v2946, %v2943
        %v2950 = vadd.f32 %v2403, 1.0
        %v2951 = vlog2.pop %v2950
        %v2952 = vmul.f32 %v2951, 0.6931472
        %v2953 = vmul.f32 -0.5, %v2403
        %v2954 = vadd.f32 %v2953, 1.0
        %v2955 = vmul.f32 %v2954, %v2403
        %v2956 = vand.u32 2147483647, %v2403
        %vm2957 = vcmp.lt.f32.partialorder %v2956, 0.0004427343
        %v2958 = vsel %vm2957, %v2955, %v2952
        %v2959 = vadd.f32 %v2405, 1.0
        %v2960 = vlog2.pop %v2959
        %v2961 = vmul.f32 %v2960, 0.6931472
        %v2962 = vmul.f32 -0.5, %v2405
        %v2963 = vadd.f32 %v2962, 1.0
        %v2964 = vmul.f32 %v2963, %v2405
        %v2965 = vand.u32 2147483647, %v2405
        %vm2966 = vcmp.lt.f32.partialorder %v2965, 0.0004427343
        %v2967 = vsel %vm2966, %v2964, %v2961
        %v2968 = vadd.f32 %v2407, 1.0
        %v2969 = vlog2.pop %v2968
        %v2970 = vmul.f32 %v2969, 0.6931472
        %v2971 = vmul.f32 -0.5, %v2407
        %v2972 = vadd.f32 %v2971, 1.0
        %v2973 = vmul.f32 %v2972, %v2407
        %v2974 = vand.u32 2147483647, %v2407
        %vm2975 = vcmp.lt.f32.partialorder %v2974, 0.0004427343
        %v2976 = vsel %vm2975, %v2973, %v2970
        %v2977 = vadd.f32 %v2409, 1.0
        %v2978 = vlog2.pop %v2977
        %v2979 = vmul.f32 %v2978, 0.6931472
        %v2980 = vmul.f32 -0.5, %v2409
        %v2981 = vadd.f32 %v2980, 1.0
        %v2982 = vmul.f32 %v2981, %v2409
        %v2983 = vand.u32 2147483647, %v2409
        %vm2984 = vcmp.lt.f32.partialorder %v2983, 0.0004427343
        %v2985 = vsel %vm2984, %v2982, %v2979
        %v2986 = vmul.f32 %v2418, 0.01
        %v2987 = vmul.f32 %v2427, 0.01
        %v2988 = vmul.f32 %v2436, 0.01
        %v2989 = vmul.f32 %v2445, 0.01
        %v2990 = vmul.f32 %v2454, 0.01
        %v2991 = vmul.f32 %v2463, 0.01
        %v2992 = vmul.f32 %v2472, 0.01
        %v2993 = vmul.f32 %v2481, 0.01
        %v2994 = vmul.f32 %v2490, 0.01
        %v2995 = vmul.f32 %v2499, 0.01
        %v2996 = vmul.f32 %v2508, 0.01
        %v2997 = vmul.f32 %v2517, 0.01
        %v2998 = vmul.f32 %v2526, 0.01
        %v2999 = vmul.f32 %v2535, 0.01
        %v3000 = vmul.f32 %v2544, 0.01
        %v3001 = vmul.f32 %v2553, 0.01
        %v3002 = vmul.f32 %v2562, 0.01
        %v3003 = vmul.f32 %v2571, 0.01
        %v3004 = vmul.f32 %v2580, 0.01
        %v3005 = vmul.f32 %v2589, 0.01
        %v3006 = vmul.f32 %v2598, 0.01
        %v3007 = vmul.f32 %v2607, 0.01
        %v3008 = vmul.f32 %v2616, 0.01
        %v3009 = vmul.f32 %v2625, 0.01
        %v3010 = vmul.f32 %v2634, 0.01
        %v3011 = vmul.f32 %v2643, 0.01
        %v3012 = vmul.f32 %v2652, 0.01
        %v3013 = vmul.f32 %v2661, 0.01
        %v3014 = vmul.f32 %v2670, 0.01
        %v3015 = vmul.f32 %v2679, 0.01
        %v3016 = vmul.f32 %v2688, 0.01
        %v3017 = vmul.f32 %v2697, 0.01
        %v3018 = vmul.f32 %v2706, 0.01
        %v3019 = vmul.f32 %v2715, 0.01
        %v3020 = vmul.f32 %v2724, 0.01
        %v3021 = vmul.f32 %v2733, 0.01
        %v3022 = vmul.f32 %v2742, 0.01
        %v3023 = vmul.f32 %v2751, 0.01
        %v3024 = vmul.f32 %v2760, 0.01
        %v3025 = vmul.f32 %v2769, 0.01
        %v3026 = vmul.f32 %v2778, 0.01
        %v3027 = vmul.f32 %v2787, 0.01
        %v3028 = vmul.f32 %v2796, 0.01
        %v3029 = vmul.f32 %v2805, 0.01
        %v3030 = vmul.f32 %v2814, 0.01
        %v3031 = vmul.f32 %v2823, 0.01
        %v3032 = vmul.f32 %v2832, 0.01
        %v3033 = vmul.f32 %v2841, 0.01
        %v3034 = vmul.f32 %v2850, 0.01
        %v3035 = vmul.f32 %v2859, 0.01
        %v3036 = vmul.f32 %v2868, 0.01
        %v3037 = vmul.f32 %v2877, 0.01
        %v3038 = vmul.f32 %v2886, 0.01
        %v3039 = vmul.f32 %v2895, 0.01
        %v3040 = vmul.f32 %v2904, 0.01
        %v3041 = vmul.f32 %v2913, 0.01
        %v3042 = vmul.f32 %v2922, 0.01
        %v3043 = vmul.f32 %v2931, 0.01
        %v3044 = vmul.f32 %v2940, 0.01
        %v3045 = vmul.f32 %v2949, 0.01
        %v3046 = vmul.f32 %v2958, 0.01
        %v3047 = vmul.f32 %v2967, 0.01
        %v3048 = vmul.f32 %v2976, 0.01
        %v3049 = vmul.f32 %v2985, 0.01
        %v3050 = vsel %vm2218, %v1900, %v2986
        %v3051 = vsel %vm2219, %v1902, %v2987
        %v3052 = vsel %vm2220, %v1906, %v2988
        %v3053 = vsel %vm2221, %v1908, %v2989
        %v3054 = vsel %vm2222, %v1912, %v2990
        %v3055 = vsel %vm2223, %v1914, %v2991
        %v3056 = vsel %vm2224, %v1918, %v2992
        %v3057 = vsel %vm2225, %v1920, %v2993
        %v3058 = vsel %vm2226, %v1924, %v2994
        %v3059 = vsel %vm2227, %v1926, %v2995
        %v3060 = vsel %vm2228, %v1930, %v2996
        %v3061 = vsel %vm2229, %v1932, %v2997
        %v3062 = vsel %vm2230, %v1936, %v2998
        %v3063 = vsel %vm2231, %v1938, %v2999
        %v3064 = vsel %vm2232, %v1942, %v3000
        %v3065 = vsel %vm2233, %v1944, %v3001
        %v3066 = vsel %vm2234, %v1948, %v3002
        %v3067 = vsel %vm2235, %v1950, %v3003
        %v3068 = vsel %vm2236, %v1954, %v3004
        %v3069 = vsel %vm2237, %v1956, %v3005
        %v3070 = vsel %vm2238, %v1960, %v3006
        %v3071 = vsel %vm2239, %v1962, %v3007
        %v3072 = vsel %vm2240, %v1966, %v3008
        %v3073 = vsel %vm2241, %v1968, %v3009
        %v3074 = vsel %vm2242, %v1972, %v3010
        %v3075 = vsel %vm2243, %v1974, %v3011
        %v3076 = vsel %vm2244, %v1978, %v3012
        %v3077 = vsel %vm2245, %v1980, %v3013
        %v3078 = vsel %vm2246, %v1984, %v3014
        %v3079 = vsel %vm2247, %v1986, %v3015
        %v3080 = vsel %vm2248, %v1990, %v3016
        %v3081 = vsel %vm2249, %v1992, %v3017
        %v3082 = vsel %vm2250, %v1996, %v3018
        %v3083 = vsel %vm2251, %v1998, %v3019
        %v3084 = vsel %vm2252, %v2002, %v3020
        %v3085 = vsel %vm2253, %v2004, %v3021
        %v3086 = vsel %vm2254, %v2008, %v3022
        %v3087 = vsel %vm2255, %v2010, %v3023
        %v3088 = vsel %vm2256, %v2014, %v3024
        %v3089 = vsel %vm2257, %v2016, %v3025
        %v3090 = vsel %vm2258, %v2020, %v3026
        %v3091 = vsel %vm2259, %v2022, %v3027
        %v3092 = vsel %vm2260, %v2026, %v3028
        %v3093 = vsel %vm2261, %v2028, %v3029
        %v3094 = vsel %vm2262, %v2032, %v3030
        %v3095 = vsel %vm2263, %v2034, %v3031
        %v3096 = vsel %vm2264, %v2038, %v3032
        %v3097 = vsel %vm2265, %v2040, %v3033
        %v3098 = vsel %vm2266, %v2044, %v3034
        %v3099 = vsel %vm2267, %v2046, %v3035
        %v3100 = vsel %vm2268, %v2050, %v3036
        %v3101 = vsel %vm2269, %v2052, %v3037
        %v3102 = vsel %vm2270, %v2056, %v3038
        %v3103 = vsel %vm2271, %v2058, %v3039
        %v3104 = vsel %vm2272, %v2062, %v3040
        %v3105 = vsel %vm2273, %v2064, %v3041
        %v3106 = vsel %vm2274, %v2068, %v3042
        %v3107 = vsel %vm2275, %v2070, %v3043
        %v3108 = vsel %vm2276, %v2074, %v3044
        %v3109 = vsel %vm2277, %v2076, %v3045
        %v3110 = vsel %vm2278, %v2080, %v3046
        %v3111 = vsel %vm2279, %v2082, %v3047
        %v3112 = vsel %vm2280, %v2086, %v3048
        %v3113 = vsel %vm2281, %v2088, %v3049
        %s3114 = scalar_lea.vmem %s2, 512
        %v3115 = vld [vmem:[%s3114] sm:$0xff]
        %v3116 = vld [vmem:[%s3114 + $0x8] sm:$0xff]
        %v3117 = vld [vmem:[%s3114 + $0x10] sm:$0xff]
        %v3118 = vld [vmem:[%s3114 + $0x18] sm:$0xff]
        %v3119 = vld [vmem:[%s3114 + $0x20] sm:$0xff]
        %v3120 = vld [vmem:[%s3114 + $0x28] sm:$0xff]
        %v3121 = vld [vmem:[%s3114 + $0x30] sm:$0xff]
        %v3122 = vld [vmem:[%s3114 + $0x38] sm:$0xff]
        %v3123 = vld [vmem:[%s3114 + $0x40] sm:$0xff]
        %v3124 = vld [vmem:[%s3114 + $0x48] sm:$0xff]
        %v3125 = vld [vmem:[%s3114 + $0x50] sm:$0xff]
        %v3126 = vld [vmem:[%s3114 + $0x58] sm:$0xff]
        %v3127 = vld [vmem:[%s3114 + $0x60] sm:$0xff]
        %v3128 = vld [vmem:[%s3114 + $0x68] sm:$0xff]
        %v3129 = vld [vmem:[%s3114 + $0x70] sm:$0xff]
        %v3130 = vld [vmem:[%s3114 + $0x78] sm:$0xff]
        %v3131 = vld [vmem:[%s3114 + $0x80] sm:$0xff]
        %v3132 = vld [vmem:[%s3114 + $0x88] sm:$0xff]
        %v3133 = vld [vmem:[%s3114 + $0x90] sm:$0xff]
        %v3134 = vld [vmem:[%s3114 + $0x98] sm:$0xff]
        %v3135 = vld [vmem:[%s3114 + $0xa0] sm:$0xff]
        %v3136 = vld [vmem:[%s3114 + $0xa8] sm:$0xff]
        %v3137 = vld [vmem:[%s3114 + $0xb0] sm:$0xff]
        %v3138 = vld [vmem:[%s3114 + $0xb8] sm:$0xff]
        %v3139 = vld [vmem:[%s3114 + $0xc0] sm:$0xff]
        %v3140 = vld [vmem:[%s3114 + $0xc8] sm:$0xff]
        %v3141 = vld [vmem:[%s3114 + $0xd0] sm:$0xff]
        %v3142 = vld [vmem:[%s3114 + $0xd8] sm:$0xff]
        %v3143 = vld [vmem:[%s3114 + $0xe0] sm:$0xff]
        %v3144 = vld [vmem:[%s3114 + $0xe8] sm:$0xff]
        %v3145 = vld [vmem:[%s3114 + $0xf0] sm:$0xff]
        %v3146 = vld [vmem:[%s3114 + $0xf8] sm:$0xff]
        %v3147 = vld [vmem:[%s3114 + $0x100] sm:$0xff]
        %v3148 = vld [vmem:[%s3114 + $0x108] sm:$0xff]
        %v3149 = vld [vmem:[%s3114 + $0x110] sm:$0xff]
        %v3150 = vld [vmem:[%s3114 + $0x118] sm:$0xff]
        %v3151 = vld [vmem:[%s3114 + $0x120] sm:$0xff]
        %v3152 = vld [vmem:[%s3114 + $0x128] sm:$0xff]
        %v3153 = vld [vmem:[%s3114 + $0x130] sm:$0xff]
        %v3154 = vld [vmem:[%s3114 + $0x138] sm:$0xff]
        %v3155 = vld [vmem:[%s3114 + $0x140] sm:$0xff]
        %v3156 = vld [vmem:[%s3114 + $0x148] sm:$0xff]
        %v3157 = vld [vmem:[%s3114 + $0x150] sm:$0xff]
        %v3158 = vld [vmem:[%s3114 + $0x158] sm:$0xff]
        %v3159 = vld [vmem:[%s3114 + $0x160] sm:$0xff]
        %v3160 = vld [vmem:[%s3114 + $0x168] sm:$0xff]
        %v3161 = vld [vmem:[%s3114 + $0x170] sm:$0xff]
        %v3162 = vld [vmem:[%s3114 + $0x178] sm:$0xff]
        %v3163 = vld [vmem:[%s3114 + $0x180] sm:$0xff]
        %v3164 = vld [vmem:[%s3114 + $0x188] sm:$0xff]
        %v3165 = vld [vmem:[%s3114 + $0x190] sm:$0xff]
        %v3166 = vld [vmem:[%s3114 + $0x198] sm:$0xff]
        %v3167 = vld [vmem:[%s3114 + $0x1a0] sm:$0xff]
        %v3168 = vld [vmem:[%s3114 + $0x1a8] sm:$0xff]
        %v3169 = vld [vmem:[%s3114 + $0x1b0] sm:$0xff]
        %v3170 = vld [vmem:[%s3114 + $0x1b8] sm:$0xff]
        %v3171 = vld [vmem:[%s3114 + $0x1c0] sm:$0xff]
        %v3172 = vld [vmem:[%s3114 + $0x1c8] sm:$0xff]
        %v3173 = vld [vmem:[%s3114 + $0x1d0] sm:$0xff]
        %v3174 = vld [vmem:[%s3114 + $0x1d8] sm:$0xff]
        %v3175 = vld [vmem:[%s3114 + $0x1e0] sm:$0xff]
        %v3176 = vld [vmem:[%s3114 + $0x1e8] sm:$0xff]
        %v3177 = vld [vmem:[%s3114 + $0x1f0] sm:$0xff]
        %v3178 = vld [vmem:[%s3114 + $0x1f8] sm:$0xff]
        %s3179 = scalar_lea.vmem %s4, 4
        %v3180 = vld [vmem:[%s3179] sm:$0x3]
        %v3182 = vlaneseq
        %v3183 = vshrl.u32 %v3182, 7
        %v3184 = vsub.s32 0, %v3183
        %v3185 = vrot.slane %v3180, %v3184
        %v3186 = vlaneseq
        %v3187 = vshrl.u32 %v3186, 7
        %v3188 = vsub.s32 1, %v3187
        %v3189 = vrot.slane %v3180, %v3188
        %3192 = vmatprep.subr.mxu0 %v3116
        %3193 = vmatpush1.msra.mxu0 %v3115
        %3194 = vmatprep.subr.mxu0 %v3118
        %3195 = vmatpush1.msra.mxu0 %v3117
        %3196 = vmatprep.subr.mxu0 %v3120
        %3197 = vmatpush1.msra.mxu0 %v3119
        %3198 = vmatprep.subr.mxu0 %v3122
        %3199 = vmatpush1.msra.mxu0 %v3121
        %3200 = vmatprep.subr.mxu0 %v3124
        %3201 = vmatpush1.msra.mxu0 %v3123
        %3202 = vmatprep.subr.mxu0 %v3126
        %3203 = vmatpush1.msra.mxu0 %v3125
        %3204 = vmatprep.subr.mxu0 %v3128
        %3205 = vmatpush1.msra.mxu0 %v3127
        %3206 = vmatprep.subr.mxu0 %v3130
        %3207 = vmatpush1.msra.mxu0 %v3129
        %3208 = vmatprep.subr.mxu0 %v3132
        %3209 = vmatpush1.msra.mxu0 %v3131
        %3210 = vmatprep.subr.mxu0 %v3134
        %3211 = vmatpush1.msra.mxu0 %v3133
        %3212 = vmatprep.subr.mxu0 %v3136
        %3213 = vmatpush1.msra.mxu0 %v3135
        %3214 = vmatprep.subr.mxu0 %v3138
        %3215 = vmatpush1.msra.mxu0 %v3137
        %3216 = vmatprep.subr.mxu0 %v3140
        %3217 = vmatpush1.msra.mxu0 %v3139
        %3218 = vmatprep.subr.mxu0 %v3142
        %3219 = vmatpush1.msra.mxu0 %v3141
        %3220 = vmatprep.subr.mxu0 %v3144
        %3221 = vmatpush1.msra.mxu0 %v3143
        %3222 = vmatprep.subr.mxu0 %v3146
        %3223 = vmatpush1.msra.mxu0 %v3145
        %3224 = vmatprep.subr.mxu0 %v3148
        %3225 = vmatpush1.msra.mxu0 %v3147
        %3226 = vmatprep.subr.mxu0 %v3150
        %3227 = vmatpush1.msra.mxu0 %v3149
        %3228 = vmatprep.subr.mxu0 %v3152
        %3229 = vmatpush1.msra.mxu0 %v3151
        %3230 = vmatprep.subr.mxu0 %v3154
        %3231 = vmatpush1.msra.mxu0 %v3153
        %3232 = vmatprep.subr.mxu0 %v3156
        %3233 = vmatpush1.msra.mxu0 %v3155
        %3234 = vmatprep.subr.mxu0 %v3158
        %3235 = vmatpush1.msra.mxu0 %v3157
        %3236 = vmatprep.subr.mxu0 %v3160
        %3237 = vmatpush1.msra.mxu0 %v3159
        %3238 = vmatprep.subr.mxu0 %v3162
        %3239 = vmatpush1.msra.mxu0 %v3161
        %3240 = vmatprep.subr.mxu0 %v3164
        %3241 = vmatpush1.msra.mxu0 %v3163
        %3242 = vmatprep.subr.mxu0 %v3166
        %3243 = vmatpush1.msra.mxu0 %v3165
        %3244 = vmatprep.subr.mxu0 %v3168
        %3245 = vmatpush1.msra.mxu0 %v3167
        %3246 = vmatprep.subr.mxu0 %v3170
        %3247 = vmatpush1.msra.mxu0 %v3169
        %3248 = vmatprep.subr.mxu0 %v3172
        %3249 = vmatpush1.msra.mxu0 %v3171
        %3250 = vmatprep.subr.mxu0 %v3174
        %3251 = vmatpush1.msra.mxu0 %v3173
        %3252 = vmatprep.subr.mxu0 %v3176
        %3253 = vmatpush1.msra.mxu0 %v3175
        %3254 = vmatprep.subr.mxu0 %v3178
        %3255 = vmatpush1.msra.mxu0 %v3177
        %3256 = vmatprep.mubr.f32.mxu0 %v3051
        %3257 = vmatmul.mubr.f32.gmra.mrb[0].mxu0 %v3050
        %v3258 = vpop.f32.mrb[0].mxu0
        %v3259 = vadd.f32 %v3185, %v3258
        %v3260 = vpop.f32.mrb[0].mxu0
        %v3261 = vadd.f32 %v3189, %v3260
        %3262 = vmatprep.mubr.f32.mxu0 %v3053
        %3263 = vmatmul.mubr.f32.gmra.mrb[0].mxu0 %v3052
        %v3264 = vpop.f32.mrb[0].mxu0
        %v3265 = vadd.f32 %v3185, %v3264
        %v3266 = vpop.f32.mrb[0].mxu0
        %v3267 = vadd.f32 %v3189, %v3266
        %3268 = vmatprep.mubr.f32.mxu0 %v3055
        %3269 = vmatmul.mubr.f32.gmra.mrb[0].mxu0 %v3054
        %v3270 = vpop.f32.mrb[0].mxu0
        %v3271 = vadd.f32 %v3185, %v3270
        %v3272 = vpop.f32.mrb[0].mxu0
        %v3273 = vadd.f32 %v3189, %v3272
        %3274 = vmatprep.mubr.f32.mxu0 %v3057
        %3275 = vmatmul.mubr.f32.gmra.mrb[0].mxu0 %v3056
        %v3276 = vpop.f32.mrb[0].mxu0
        %v3277 = vadd.f32 %v3185, %v3276
        %v3278 = vpop.f32.mrb[0].mxu0
        %v3279 = vadd.f32 %v3189, %v3278
        %3280 = vmatprep.mubr.f32.mxu0 %v3059
        %3281 = vmatmul.mubr.f32.gmra.mrb[0].mxu0 %v3058
        %v3282 = vpop.f32.mrb[0].mxu0
        %v3283 = vadd.f32 %v3185, %v3282
        %v3284 = vpop.f32.mrb[0].mxu0
        %v3285 = vadd.f32 %v3189, %v3284
        %3286 = vmatprep.mubr.f32.mxu0 %v3061
        %3287 = vmatmul.mubr.f32.gmra.mrb[0].mxu0 %v3060
        %v3288 = vpop.f32.mrb[0].mxu0
        %v3289 = vadd.f32 %v3185, %v3288
        %v3290 = vpop.f32.mrb[0].mxu0
        %v3291 = vadd.f32 %v3189, %v3290
        %3292 = vmatprep.mubr.f32.mxu0 %v3063
        %3293 = vmatmul.mubr.f32.gmra.mrb[0].mxu0 %v3062
        %v3294 = vpop.f32.mrb[0].mxu0
        %v3295 = vadd.f32 %v3185, %v3294
        %v3296 = vpop.f32.mrb[0].mxu0
        %v3297 = vadd.f32 %v3189, %v3296
        %3298 = vmatprep.mubr.f32.mxu0 %v3065
        %3299 = vmatmul.mubr.f32.gmra.mrb[0].mxu0 %v3064
        %v3300 = vpop.f32.mrb[0].mxu0
        %v3301 = vadd.f32 %v3185, %v3300
        %v3302 = vpop.f32.mrb[0].mxu0
        %v3303 = vadd.f32 %v3189, %v3302
        %3304 = vmatprep.mubr.f32.mxu0 %v3067
        %3305 = vmatmul.mubr.f32.gmra.mrb[0].mxu0 %v3066
        %v3306 = vpop.f32.mrb[0].mxu0
        %v3307 = vadd.f32 %v3185, %v3306
        %v3308 = vpop.f32.mrb[0].mxu0
        %v3309 = vadd.f32 %v3189, %v3308
        %3310 = vmatprep.mubr.f32.mxu0 %v3069
        %3311 = vmatmul.mubr.f32.gmra.mrb[0].mxu0 %v3068
        %v3312 = vpop.f32.mrb[0].mxu0
        %v3313 = vadd.f32 %v3185, %v3312
        %v3314 = vpop.f32.mrb[0].mxu0
        %v3315 = vadd.f32 %v3189, %v3314
        %3316 = vmatprep.mubr.f32.mxu0 %v3071
        %3317 = vmatmul.mubr.f32.gmra.mrb[0].mxu0 %v3070
        %v3318 = vpop.f32.mrb[0].mxu0
        %v3319 = vadd.f32 %v3185, %v3318
        %v3320 = vpop.f32.mrb[0].mxu0
        %v3321 = vadd.f32 %v3189, %v3320
        %3322 = vmatprep.mubr.f32.mxu0 %v3073
        %3323 = vmatmul.mubr.f32.gmra.mrb[0].mxu0 %v3072
        %v3324 = vpop.f32.mrb[0].mxu0
        %v3325 = vadd.f32 %v3185, %v3324
        %v3326 = vpop.f32.mrb[0].mxu0
        %v3327 = vadd.f32 %v3189, %v3326
        %3328 = vmatprep.mubr.f32.mxu0 %v3075
        %3329 = vmatmul.mubr.f32.gmra.mrb[0].mxu0 %v3074
        %v3330 = vpop.f32.mrb[0].mxu0
        %v3331 = vadd.f32 %v3185, %v3330
        %v3332 = vpop.f32.mrb[0].mxu0
        %v3333 = vadd.f32 %v3189, %v3332
        %3334 = vmatprep.mubr.f32.mxu0 %v3077
        %3335 = vmatmul.mubr.f32.gmra.mrb[0].mxu0 %v3076
        %v3336 = vpop.f32.mrb[0].mxu0
        %v3337 = vadd.f32 %v3185, %v3336
        %v3338 = vpop.f32.mrb[0].mxu0
        %v3339 = vadd.f32 %v3189, %v3338
        %3340 = vmatprep.mubr.f32.mxu0 %v3079
        %3341 = vmatmul.mubr.f32.gmra.mrb[0].mxu0 %v3078
        %v3342 = vpop.f32.mrb[0].mxu0
        %v3343 = vadd.f32 %v3185, %v3342
        %v3344 = vpop.f32.mrb[0].mxu0
        %v3345 = vadd.f32 %v3189, %v3344
        %3346 = vmatprep.mubr.f32.mxu0 %v3081
        %3347 = vmatmul.mubr.f32.gmra.mrb[0].mxu0 %v3080
        %v3348 = vpop.f32.mrb[0].mxu0
        %v3349 = vadd.f32 %v3185, %v3348
        %v3350 = vpop.f32.mrb[0].mxu0
        %v3351 = vadd.f32 %v3189, %v3350
        %3352 = vmatprep.mubr.f32.mxu0 %v3083
        %3353 = vmatmul.mubr.f32.gmra.mrb[0].mxu0 %v3082
        %v3354 = vpop.f32.mrb[0].mxu0
        %v3355 = vadd.f32 %v3185, %v3354
        %v3356 = vpop.f32.mrb[0].mxu0
        %v3357 = vadd.f32 %v3189, %v3356
        %3358 = vmatprep.mubr.f32.mxu0 %v3085
        %3359 = vmatmul.mubr.f32.gmra.mrb[0].mxu0 %v3084
        %v3360 = vpop.f32.mrb[0].mxu0
        %v3361 = vadd.f32 %v3185, %v3360
        %v3362 = vpop.f32.mrb[0].mxu0
        %v3363 = vadd.f32 %v3189, %v3362
        %3364 = vmatprep.mubr.f32.mxu0 %v3087
        %3365 = vmatmul.mubr.f32.gmra.mrb[0].mxu0 %v3086
        %v3366 = vpop.f32.mrb[0].mxu0
        %v3367 = vadd.f32 %v3185, %v3366
        %v3368 = vpop.f32.mrb[0].mxu0
        %v3369 = vadd.f32 %v3189, %v3368
        %3370 = vmatprep.mubr.f32.mxu0 %v3089
        %3371 = vmatmul.mubr.f32.gmra.mrb[0].mxu0 %v3088
        %v3372 = vpop.f32.mrb[0].mxu0
        %v3373 = vadd.f32 %v3185, %v3372
        %v3374 = vpop.f32.mrb[0].mxu0
        %v3375 = vadd.f32 %v3189, %v3374
        %3376 = vmatprep.mubr.f32.mxu0 %v3091
        %3377 = vmatmul.mubr.f32.gmra.mrb[0].mxu0 %v3090
        %v3378 = vpop.f32.mrb[0].mxu0
        %v3379 = vadd.f32 %v3185, %v3378
        %v3380 = vpop.f32.mrb[0].mxu0
        %v3381 = vadd.f32 %v3189, %v3380
        %3382 = vmatprep.mubr.f32.mxu0 %v3093
        %3383 = vmatmul.mubr.f32.gmra.mrb[0].mxu0 %v3092
        %v3384 = vpop.f32.mrb[0].mxu0
        %v3385 = vadd.f32 %v3185, %v3384
        %v3386 = vpop.f32.mrb[0].mxu0
        %v3387 = vadd.f32 %v3189, %v3386
        %3388 = vmatprep.mubr.f32.mxu0 %v3095
        %3389 = vmatmul.mubr.f32.gmra.mrb[0].mxu0 %v3094
        %v3390 = vpop.f32.mrb[0].mxu0
        %v3391 = vadd.f32 %v3185, %v3390
        %v3392 = vpop.f32.mrb[0].mxu0
        %v3393 = vadd.f32 %v3189, %v3392
        %3394 = vmatprep.mubr.f32.mxu0 %v3097
        %3395 = vmatmul.mubr.f32.gmra.mrb[0].mxu0 %v3096
        %v3396 = vpop.f32.mrb[0].mxu0
        %v3397 = vadd.f32 %v3185, %v3396
        %v3398 = vpop.f32.mrb[0].mxu0
        %v3399 = vadd.f32 %v3189, %v3398
        %3400 = vmatprep.mubr.f32.mxu0 %v3099
        %3401 = vmatmul.mubr.f32.gmra.mrb[0].mxu0 %v3098
        %v3402 = vpop.f32.mrb[0].mxu0
        %v3403 = vadd.f32 %v3185, %v3402
        %v3404 = vpop.f32.mrb[0].mxu0
        %v3405 = vadd.f32 %v3189, %v3404
        %3406 = vmatprep.mubr.f32.mxu0 %v3101
        %3407 = vmatmul.mubr.f32.gmra.mrb[0].mxu0 %v3100
        %v3408 = vpop.f32.mrb[0].mxu0
        %v3409 = vadd.f32 %v3185, %v3408
        %v3410 = vpop.f32.mrb[0].mxu0
        %v3411 = vadd.f32 %v3189, %v3410
        %3412 = vmatprep.mubr.f32.mxu0 %v3103
        %3413 = vmatmul.mubr.f32.gmra.mrb[0].mxu0 %v3102
        %v3414 = vpop.f32.mrb[0].mxu0
        %v3415 = vadd.f32 %v3185, %v3414
        %v3416 = vpop.f32.mrb[0].mxu0
        %v3417 = vadd.f32 %v3189, %v3416
        %3418 = vmatprep.mubr.f32.mxu0 %v3105
        %3419 = vmatmul.mubr.f32.gmra.mrb[0].mxu0 %v3104
        %v3420 = vpop.f32.mrb[0].mxu0
        %v3421 = vadd.f32 %v3185, %v3420
        %v3422 = vpop.f32.mrb[0].mxu0
        %v3423 = vadd.f32 %v3189, %v3422
        %3424 = vmatprep.mubr.f32.mxu0 %v3107
        %3425 = vmatmul.mubr.f32.gmra.mrb[0].mxu0 %v3106
        %v3426 = vpop.f32.mrb[0].mxu0
        %v3427 = vadd.f32 %v3185, %v3426
        %v3428 = vpop.f32.mrb[0].mxu0
        %v3429 = vadd.f32 %v3189, %v3428
        %3430 = vmatprep.mubr.f32.mxu0 %v3109
        %3431 = vmatmul.mubr.f32.gmra.mrb[0].mxu0 %v3108
        %v3432 = vpop.f32.mrb[0].mxu0
        %v3433 = vadd.f32 %v3185, %v3432
        %v3434 = vpop.f32.mrb[0].mxu0
        %v3435 = vadd.f32 %v3189, %v3434
        %3436 = vmatprep.mubr.f32.mxu0 %v3111
        %3437 = vmatmul.mubr.f32.gmra.mrb[0].mxu0 %v3110
        %v3438 = vpop.f32.mrb[0].mxu0
        %v3439 = vadd.f32 %v3185, %v3438
        %v3440 = vpop.f32.mrb[0].mxu0
        %v3441 = vadd.f32 %v3189, %v3440
        %3442 = vmatprep.mubr.f32.mxu0 %v3113
        %3443 = vmatmul.mubr.f32.gmra.mrb[0].mxu0 %v3112
        %v3444 = vpop.f32.mrb[0].mxu0
        %v3445 = vadd.f32 %v3185, %v3444
        %v3446 = vpop.f32.mrb[0].mxu0
        %v3447 = vadd.f32 %v3189, %v3446
        %3448 = vdwg.mxu0
        %v3449 = vmul.f32 %v3259, 100.0
        %v3450 = vmul.f32 %v3261, 100.0
        %v3451 = vmul.f32 %v3265, 100.0
        %v3452 = vmul.f32 %v3267, 100.0
        %v3453 = vmul.f32 %v3271, 100.0
        %v3454 = vmul.f32 %v3273, 100.0
        %v3455 = vmul.f32 %v3277, 100.0
        %v3456 = vmul.f32 %v3279, 100.0
        %v3457 = vmul.f32 %v3283, 100.0
        %v3458 = vmul.f32 %v3285, 100.0
        %v3459 = vmul.f32 %v3289, 100.0
        %v3460 = vmul.f32 %v3291, 100.0
        %v3461 = vmul.f32 %v3295, 100.0
        %v3462 = vmul.f32 %v3297, 100.0
        %v3463 = vmul.f32 %v3301, 100.0
        %v3464 = vmul.f32 %v3303, 100.0
        %v3465 = vmul.f32 %v3307, 100.0
        %v3466 = vmul.f32 %v3309, 100.0
        %v3467 = vmul.f32 %v3313, 100.0
        %v3468 = vmul.f32 %v3315, 100.0
        %v3469 = vmul.f32 %v3319, 100.0
        %v3470 = vmul.f32 %v3321, 100.0
        %v3471 = vmul.f32 %v3325, 100.0
        %v3472 = vmul.f32 %v3327, 100.0
        %v3473 = vmul.f32 %v3331, 100.0
        %v3474 = vmul.f32 %v3333, 100.0
        %v3475 = vmul.f32 %v3337, 100.0
        %v3476 = vmul.f32 %v3339, 100.0
        %v3477 = vmul.f32 %v3343, 100.0
        %v3478 = vmul.f32 %v3345, 100.0
        %v3479 = vmul.f32 %v3349, 100.0
        %v3480 = vmul.f32 %v3351, 100.0
        %v3481 = vmul.f32 %v3355, 100.0
        %v3482 = vmul.f32 %v3357, 100.0
        %v3483 = vmul.f32 %v3361, 100.0
        %v3484 = vmul.f32 %v3363, 100.0
        %v3485 = vmul.f32 %v3367, 100.0
        %v3486 = vmul.f32 %v3369, 100.0
        %v3487 = vmul.f32 %v3373, 100.0
        %v3488 = vmul.f32 %v3375, 100.0
        %v3489 = vmul.f32 %v3379, 100.0
        %v3490 = vmul.f32 %v3381, 100.0
        %v3491 = vmul.f32 %v3385, 100.0
        %v3492 = vmul.f32 %v3387, 100.0
        %v3493 = vmul.f32 %v3391, 100.0
        %v3494 = vmul.f32 %v3393, 100.0
        %v3495 = vmul.f32 %v3397, 100.0
        %v3496 = vmul.f32 %v3399, 100.0
        %v3497 = vmul.f32 %v3403, 100.0
        %v3498 = vmul.f32 %v3405, 100.0
        %v3499 = vmul.f32 %v3409, 100.0
        %v3500 = vmul.f32 %v3411, 100.0
        %v3501 = vmul.f32 %v3415, 100.0
        %v3502 = vmul.f32 %v3417, 100.0
        %v3503 = vmul.f32 %v3421, 100.0
        %v3504 = vmul.f32 %v3423, 100.0
        %v3505 = vmul.f32 %v3427, 100.0
        %v3506 = vmul.f32 %v3429, 100.0
        %v3507 = vmul.f32 %v3433, 100.0
        %v3508 = vmul.f32 %v3435, 100.0
        %v3509 = vmul.f32 %v3439, 100.0
        %v3510 = vmul.f32 %v3441, 100.0
        %v3511 = vmul.f32 %v3445, 100.0
        %v3512 = vmul.f32 %v3447, 100.0
        %v3513 = vmin.f32 %v3449, 20.0
        %v3514 = vmin.f32 %v3450, 20.0
        %v3515 = vmin.f32 %v3451, 20.0
        %v3516 = vmin.f32 %v3452, 20.0
        %v3517 = vmin.f32 %v3453, 20.0
        %v3518 = vmin.f32 %v3454, 20.0
        %v3519 = vmin.f32 %v3455, 20.0
        %v3520 = vmin.f32 %v3456, 20.0
        %v3521 = vmin.f32 %v3457, 20.0
        %v3522 = vmin.f32 %v3458, 20.0
        %v3523 = vmin.f32 %v3459, 20.0
        %v3524 = vmin.f32 %v3460, 20.0
        %v3525 = vmin.f32 %v3461, 20.0
        %v3526 = vmin.f32 %v3462, 20.0
        %v3527 = vmin.f32 %v3463, 20.0
        %v3528 = vmin.f32 %v3464, 20.0
        %v3529 = vmin.f32 %v3465, 20.0
        %v3530 = vmin.f32 %v3466, 20.0
        %v3531 = vmin.f32 %v3467, 20.0
        %v3532 = vmin.f32 %v3468, 20.0
        %v3533 = vmin.f32 %v3469, 20.0
        %v3534 = vmin.f32 %v3470, 20.0
        %v3535 = vmin.f32 %v3471, 20.0
        %v3536 = vmin.f32 %v3472, 20.0
        %v3537 = vmin.f32 %v3473, 20.0
        %v3538 = vmin.f32 %v3474, 20.0
        %v3539 = vmin.f32 %v3475, 20.0
        %v3540 = vmin.f32 %v3476, 20.0
        %v3541 = vmin.f32 %v3477, 20.0
        %v3542 = vmin.f32 %v3478, 20.0
        %v3543 = vmin.f32 %v3479, 20.0
        %v3544 = vmin.f32 %v3480, 20.0
        %v3545 = vmin.f32 %v3481, 20.0
        %v3546 = vmin.f32 %v3482, 20.0
        %v3547 = vmin.f32 %v3483, 20.0
        %v3548 = vmin.f32 %v3484, 20.0
        %v3549 = vmin.f32 %v3485, 20.0
        %v3550 = vmin.f32 %v3486, 20.0
        %v3551 = vmin.f32 %v3487, 20.0
        %v3552 = vmin.f32 %v3488, 20.0
        %v3553 = vmin.f32 %v3489, 20.0
        %v3554 = vmin.f32 %v3490, 20.0
        %v3555 = vmin.f32 %v3491, 20.0
        %v3556 = vmin.f32 %v3492, 20.0
        %v3557 = vmin.f32 %v3493, 20.0
        %v3558 = vmin.f32 %v3494, 20.0
        %v3559 = vmin.f32 %v3495, 20.0
        %v3560 = vmin.f32 %v3496, 20.0
        %v3561 = vmin.f32 %v3497, 20.0
        %v3562 = vmin.f32 %v3498, 20.0
        %v3563 = vmin.f32 %v3499, 20.0
        %v3564 = vmin.f32 %v3500, 20.0
        %v3565 = vmin.f32 %v3501, 20.0
        %v3566 = vmin.f32 %v3502, 20.0
        %v3567 = vmin.f32 %v3503, 20.0
        %v3568 = vmin.f32 %v3504, 20.0
        %v3569 = vmin.f32 %v3505, 20.0
        %v3570 = vmin.f32 %v3506, 20.0
        %v3571 = vmin.f32 %v3507, 20.0
        %v3572 = vmin.f32 %v3508, 20.0
        %v3573 = vmin.f32 %v3509, 20.0
        %v3574 = vmin.f32 %v3510, 20.0
        %v3575 = vmin.f32 %v3511, 20.0
        %v3576 = vmin.f32 %v3512, 20.0
        %vm3577 = vcmp.gt.f32.partialorder %v3449, 20.0
        %vm3578 = vcmp.gt.f32.partialorder %v3450, 20.0
        %vm3579 = vcmp.gt.f32.partialorder %v3451, 20.0
        %vm3580 = vcmp.gt.f32.partialorder %v3452, 20.0
        %vm3581 = vcmp.gt.f32.partialorder %v3453, 20.0
        %vm3582 = vcmp.gt.f32.partialorder %v3454, 20.0
        %vm3583 = vcmp.gt.f32.partialorder %v3455, 20.0
        %vm3584 = vcmp.gt.f32.partialorder %v3456, 20.0
        %vm3585 = vcmp.gt.f32.partialorder %v3457, 20.0
        %vm3586 = vcmp.gt.f32.partialorder %v3458, 20.0
        %vm3587 = vcmp.gt.f32.partialorder %v3459, 20.0
        %vm3588 = vcmp.gt.f32.partialorder %v3460, 20.0
        %vm3589 = vcmp.gt.f32.partialorder %v3461, 20.0
        %vm3590 = vcmp.gt.f32.partialorder %v3462, 20.0
        %vm3591 = vcmp.gt.f32.partialorder %v3463, 20.0
        %vm3592 = vcmp.gt.f32.partialorder %v3464, 20.0
        %vm3593 = vcmp.gt.f32.partialorder %v3465, 20.0
        %vm3594 = vcmp.gt.f32.partialorder %v3466, 20.0
        %vm3595 = vcmp.gt.f32.partialorder %v3467, 20.0
        %vm3596 = vcmp.gt.f32.partialorder %v3468, 20.0
        %vm3597 = vcmp.gt.f32.partialorder %v3469, 20.0
        %vm3598 = vcmp.gt.f32.partialorder %v3470, 20.0
        %vm3599 = vcmp.gt.f32.partialorder %v3471, 20.0
        %vm3600 = vcmp.gt.f32.partialorder %v3472, 20.0
        %vm3601 = vcmp.gt.f32.partialorder %v3473, 20.0
        %vm3602 = vcmp.gt.f32.partialorder %v3474, 20.0
        %vm3603 = vcmp.gt.f32.partialorder %v3475, 20.0
        %vm3604 = vcmp.gt.f32.partialorder %v3476, 20.0
        %vm3605 = vcmp.gt.f32.partialorder %v3477, 20.0
        %vm3606 = vcmp.gt.f32.partialorder %v3478, 20.0
        %vm3607 = vcmp.gt.f32.partialorder %v3479, 20.0
        %vm3608 = vcmp.gt.f32.partialorder %v3480, 20.0
        %vm3609 = vcmp.gt.f32.partialorder %v3481, 20.0
        %vm3610 = vcmp.gt.f32.partialorder %v3482, 20.0
        %vm3611 = vcmp.gt.f32.partialorder %v3483, 20.0
        %vm3612 = vcmp.gt.f32.partialorder %v3484, 20.0
        %vm3613 = vcmp.gt.f32.partialorder %v3485, 20.0
        %vm3614 = vcmp.gt.f32.partialorder %v3486, 20.0
        %vm3615 = vcmp.gt.f32.partialorder %v3487, 20.0
        %vm3616 = vcmp.gt.f32.partialorder %v3488, 20.0
        %vm3617 = vcmp.gt.f32.partialorder %v3489, 20.0
        %vm3618 = vcmp.gt.f32.partialorder %v3490, 20.0
        %vm3619 = vcmp.gt.f32.partialorder %v3491, 20.0
        %vm3620 = vcmp.gt.f32.partialorder %v3492, 20.0
        %vm3621 = vcmp.gt.f32.partialorder %v3493, 20.0
        %vm3622 = vcmp.gt.f32.partialorder %v3494, 20.0
        %vm3623 = vcmp.gt.f32.partialorder %v3495, 20.0
        %vm3624 = vcmp.gt.f32.partialorder %v3496, 20.0
        %vm3625 = vcmp.gt.f32.partialorder %v3497, 20.0
        %vm3626 = vcmp.gt.f32.partialorder %v3498, 20.0
        %vm3627 = vcmp.gt.f32.partialorder %v3499, 20.0
        %vm3628 = vcmp.gt.f32.partialorder %v3500, 20.0
        %vm3629 = vcmp.gt.f32.partialorder %v3501, 20.0
        %vm3630 = vcmp.gt.f32.partialorder %v3502, 20.0
        %vm3631 = vcmp.gt.f32.partialorder %v3503, 20.0
        %vm3632 = vcmp.gt.f32.partialorder %v3504, 20.0
        %vm3633 = vcmp.gt.f32.partialorder %v3505, 20.0
        %vm3634 = vcmp.gt.f32.partialorder %v3506, 20.0
        %vm3635 = vcmp.gt.f32.partialorder %v3507, 20.0
        %vm3636 = vcmp.gt.f32.partialorder %v3508, 20.0
        %vm3637 = vcmp.gt.f32.partialorder %v3509, 20.0
        %vm3638 = vcmp.gt.f32.partialorder %v3510, 20.0
        %vm3639 = vcmp.gt.f32.partialorder %v3511, 20.0
        %vm3640 = vcmp.gt.f32.partialorder %v3512, 20.0
        %v3641 = vmul.f32 %v3513, 1.442695
        %v3642 = vpow.pop %v3641
        %v3643 = vmul.f32 %v3514, 1.442695
        %v3644 = vpow.pop %v3643
        %v3645 = vmul.f32 %v3515, 1.442695
        %v3646 = vpow.pop %v3645
        %v3647 = vmul.f32 %v3516, 1.442695
        %v3648 = vpow.pop %v3647
        %v3649 = vmul.f32 %v3517, 1.442695
        %v3650 = vpow.pop %v3649
        %v3651 = vmul.f32 %v3518, 1.442695
        %v3652 = vpow.pop %v3651
        %v3653 = vmul.f32 %v3519, 1.442695
        %v3654 = vpow.pop %v3653
        %v3655 = vmul.f32 %v3520, 1.442695
        %v3656 = vpow.pop %v3655
        %v3657 = vmul.f32 %v3521, 1.442695
        %v3658 = vpow.pop %v3657
        %v3659 = vmul.f32 %v3522, 1.442695
        %v3660 = vpow.pop %v3659
        %v3661 = vmul.f32 %v3523, 1.442695
        %v3662 = vpow.pop %v3661
        %v3663 = vmul.f32 %v3524, 1.442695
        %v3664 = vpow.pop %v3663
        %v3665 = vmul.f32 %v3525, 1.442695
        %v3666 = vpow.pop %v3665
        %v3667 = vmul.f32 %v3526, 1.442695
        %v3668 = vpow.pop %v3667
        %v3669 = vmul.f32 %v3527, 1.442695
        %v3670 = vpow.pop %v3669
        %v3671 = vmul.f32 %v3528, 1.442695
        %v3672 = vpow.pop %v3671
        %v3673 = vmul.f32 %v3529, 1.442695
        %v3674 = vpow.pop %v3673
        %v3675 = vmul.f32 %v3530, 1.442695
        %v3676 = vpow.pop %v3675
        %v3677 = vmul.f32 %v3531, 1.442695
        %v3678 = vpow.pop %v3677
        %v3679 = vmul.f32 %v3532, 1.442695
        %v3680 = vpow.pop %v3679
        %v3681 = vmul.f32 %v3533, 1.442695
        %v3682 = vpow.pop %v3681
        %v3683 = vmul.f32 %v3534, 1.442695
        %v3684 = vpow.pop %v3683
        %v3685 = vmul.f32 %v3535, 1.442695
        %v3686 = vpow.pop %v3685
        %v3687 = vmul.f32 %v3536, 1.442695
        %v3688 = vpow.pop %v3687
        %v3689 = vmul.f32 %v3537, 1.442695
        %v3690 = vpow.pop %v3689
        %v3691 = vmul.f32 %v3538, 1.442695
        %v3692 = vpow.pop %v3691
        %v3693 = vmul.f32 %v3539, 1.442695
        %v3694 = vpow.pop %v3693
        %v3695 = vmul.f32 %v3540, 1.442695
        %v3696 = vpow.pop %v3695
        %v3697 = vmul.f32 %v3541, 1.442695
        %v3698 = vpow.pop %v3697
        %v3699 = vmul.f32 %v3542, 1.442695
        %v3700 = vpow.pop %v3699
        %v3701 = vmul.f32 %v3543, 1.442695
        %v3702 = vpow.pop %v3701
        %v3703 = vmul.f32 %v3544, 1.442695
        %v3704 = vpow.pop %v3703
        %v3705 = vmul.f32 %v3545, 1.442695
        %v3706 = vpow.pop %v3705
        %v3707 = vmul.f32 %v3546, 1.442695
        %v3708 = vpow.pop %v3707
        %v3709 = vmul.f32 %v3547, 1.442695
        %v3710 = vpow.pop %v3709
        %v3711 = vmul.f32 %v3548, 1.442695
        %v3712 = vpow.pop %v3711
        %v3713 = vmul.f32 %v3549, 1.442695
        %v3714 = vpow.pop %v3713
        %v3715 = vmul.f32 %v3550, 1.442695
        %v3716 = vpow.pop %v3715
        %v3717 = vmul.f32 %v3551, 1.442695
        %v3718 = vpow.pop %v3717
        %v3719 = vmul.f32 %v3552, 1.442695
        %v3720 = vpow.pop %v3719
        %v3721 = vmul.f32 %v3553, 1.442695
        %v3722 = vpow.pop %v3721
        %v3723 = vmul.f32 %v3554, 1.442695
        %v3724 = vpow.pop %v3723
        %v3725 = vmul.f32 %v3555, 1.442695
        %v3726 = vpow.pop %v3725
        %v3727 = vmul.f32 %v3556, 1.442695
        %v3728 = vpow.pop %v3727
        %v3729 = vmul.f32 %v3557, 1.442695
        %v3730 = vpow.pop %v3729
        %v3731 = vmul.f32 %v3558, 1.442695
        %v3732 = vpow.pop %v3731
        %v3733 = vmul.f32 %v3559, 1.442695
        %v3734 = vpow.pop %v3733
        %v3735 = vmul.f32 %v3560, 1.442695
        %v3736 = vpow.pop %v3735
        %v3737 = vmul.f32 %v3561, 1.442695
        %v3738 = vpow.pop %v3737
        %v3739 = vmul.f32 %v3562, 1.442695
        %v3740 = vpow.pop %v3739
        %v3741 = vmul.f32 %v3563, 1.442695
        %v3742 = vpow.pop %v3741
        %v3743 = vmul.f32 %v3564, 1.442695
        %v3744 = vpow.pop %v3743
        %v3745 = vmul.f32 %v3565, 1.442695
        %v3746 = vpow.pop %v3745
        %v3747 = vmul.f32 %v3566, 1.442695
        %v3748 = vpow.pop %v3747
        %v3749 = vmul.f32 %v3567, 1.442695
        %v3750 = vpow.pop %v3749
        %v3751 = vmul.f32 %v3568, 1.442695
        %v3752 = vpow.pop %v3751
        %v3753 = vmul.f32 %v3569, 1.442695
        %v3754 = vpow.pop %v3753
        %v3755 = vmul.f32 %v3570, 1.442695
        %v3756 = vpow.pop %v3755
        %v3757 = vmul.f32 %v3571, 1.442695
        %v3758 = vpow.pop %v3757
        %v3759 = vmul.f32 %v3572, 1.442695
        %v3760 = vpow.pop %v3759
        %v3761 = vmul.f32 %v3573, 1.442695
        %v3762 = vpow.pop %v3761
        %v3763 = vmul.f32 %v3574, 1.442695
        %v3764 = vpow.pop %v3763
        %v3765 = vmul.f32 %v3575, 1.442695
        %v3766 = vpow.pop %v3765
        %v3767 = vmul.f32 %v3576, 1.442695
        %v3768 = vpow.pop %v3767
        %v3769 = vadd.f32 %v3642, 1.0
        %v3770 = vlog2.pop %v3769
        %v3771 = vmul.f32 %v3770, 0.6931472
        %v3772 = vmul.f32 -0.5, %v3642
        %v3773 = vadd.f32 %v3772, 1.0
        %v3774 = vmul.f32 %v3773, %v3642
        %v3775 = vand.u32 2147483647, %v3642
        %vm3776 = vcmp.lt.f32.partialorder %v3775, 0.0004427343
        %v3777 = vsel %vm3776, %v3774, %v3771
        %v3778 = vadd.f32 %v3644, 1.0
        %v3779 = vlog2.pop %v3778
        %v3780 = vmul.f32 %v3779, 0.6931472
        %v3781 = vmul.f32 -0.5, %v3644
        %v3782 = vadd.f32 %v3781, 1.0
        %v3783 = vmul.f32 %v3782, %v3644
        %v3784 = vand.u32 2147483647, %v3644
        %vm3785 = vcmp.lt.f32.partialorder %v3784, 0.0004427343
        %v3786 = vsel %vm3785, %v3783, %v3780
        %v3787 = vadd.f32 %v3646, 1.0
        %v3788 = vlog2.pop %v3787
        %v3789 = vmul.f32 %v3788, 0.6931472
        %v3790 = vmul.f32 -0.5, %v3646
        %v3791 = vadd.f32 %v3790, 1.0
        %v3792 = vmul.f32 %v3791, %v3646
        %v3793 = vand.u32 2147483647, %v3646
        %vm3794 = vcmp.lt.f32.partialorder %v3793, 0.0004427343
        %v3795 = vsel %vm3794, %v3792, %v3789
        %v3796 = vadd.f32 %v3648, 1.0
        %v3797 = vlog2.pop %v3796
        %v3798 = vmul.f32 %v3797, 0.6931472
        %v3799 = vmul.f32 -0.5, %v3648
        %v3800 = vadd.f32 %v3799, 1.0
        %v3801 = vmul.f32 %v3800, %v3648
        %v3802 = vand.u32 2147483647, %v3648
        %vm3803 = vcmp.lt.f32.partialorder %v3802, 0.0004427343
        %v3804 = vsel %vm3803, %v3801, %v3798
        %v3805 = vadd.f32 %v3650, 1.0
        %v3806 = vlog2.pop %v3805
        %v3807 = vmul.f32 %v3806, 0.6931472
        %v3808 = vmul.f32 -0.5, %v3650
        %v3809 = vadd.f32 %v3808, 1.0
        %v3810 = vmul.f32 %v3809, %v3650
        %v3811 = vand.u32 2147483647, %v3650
        %vm3812 = vcmp.lt.f32.partialorder %v3811, 0.0004427343
        %v3813 = vsel %vm3812, %v3810, %v3807
        %v3814 = vadd.f32 %v3652, 1.0
        %v3815 = vlog2.pop %v3814
        %v3816 = vmul.f32 %v3815, 0.6931472
        %v3817 = vmul.f32 -0.5, %v3652
        %v3818 = vadd.f32 %v3817, 1.0
        %v3819 = vmul.f32 %v3818, %v3652
        %v3820 = vand.u32 2147483647, %v3652
        %vm3821 = vcmp.lt.f32.partialorder %v3820, 0.0004427343
        %v3822 = vsel %vm3821, %v3819, %v3816
        %v3823 = vadd.f32 %v3654, 1.0
        %v3824 = vlog2.pop %v3823
        %v3825 = vmul.f32 %v3824, 0.6931472
        %v3826 = vmul.f32 -0.5, %v3654
        %v3827 = vadd.f32 %v3826, 1.0
        %v3828 = vmul.f32 %v3827, %v3654
        %v3829 = vand.u32 2147483647, %v3654
        %vm3830 = vcmp.lt.f32.partialorder %v3829, 0.0004427343
        %v3831 = vsel %vm3830, %v3828, %v3825
        %v3832 = vadd.f32 %v3656, 1.0
        %v3833 = vlog2.pop %v3832
        %v3834 = vmul.f32 %v3833, 0.6931472
        %v3835 = vmul.f32 -0.5, %v3656
        %v3836 = vadd.f32 %v3835, 1.0
        %v3837 = vmul.f32 %v3836, %v3656
        %v3838 = vand.u32 2147483647, %v3656
        %vm3839 = vcmp.lt.f32.partialorder %v3838, 0.0004427343
        %v3840 = vsel %vm3839, %v3837, %v3834
        %v3841 = vadd.f32 %v3658, 1.0
        %v3842 = vlog2.pop %v3841
        %v3843 = vmul.f32 %v3842, 0.6931472
        %v3844 = vmul.f32 -0.5, %v3658
        %v3845 = vadd.f32 %v3844, 1.0
        %v3846 = vmul.f32 %v3845, %v3658
        %v3847 = vand.u32 2147483647, %v3658
        %vm3848 = vcmp.lt.f32.partialorder %v3847, 0.0004427343
        %v3849 = vsel %vm3848, %v3846, %v3843
        %v3850 = vadd.f32 %v3660, 1.0
        %v3851 = vlog2.pop %v3850
        %v3852 = vmul.f32 %v3851, 0.6931472
        %v3853 = vmul.f32 -0.5, %v3660
        %v3854 = vadd.f32 %v3853, 1.0
        %v3855 = vmul.f32 %v3854, %v3660
        %v3856 = vand.u32 2147483647, %v3660
        %vm3857 = vcmp.lt.f32.partialorder %v3856, 0.0004427343
        %v3858 = vsel %vm3857, %v3855, %v3852
        %v3859 = vadd.f32 %v3662, 1.0
        %v3860 = vlog2.pop %v3859
        %v3861 = vmul.f32 %v3860, 0.6931472
        %v3862 = vmul.f32 -0.5, %v3662
        %v3863 = vadd.f32 %v3862, 1.0
        %v3864 = vmul.f32 %v3863, %v3662
        %v3865 = vand.u32 2147483647, %v3662
        %vm3866 = vcmp.lt.f32.partialorder %v3865, 0.0004427343
        %v3867 = vsel %vm3866, %v3864, %v3861
        %v3868 = vadd.f32 %v3664, 1.0
        %v3869 = vlog2.pop %v3868
        %v3870 = vmul.f32 %v3869, 0.6931472
        %v3871 = vmul.f32 -0.5, %v3664
        %v3872 = vadd.f32 %v3871, 1.0
        %v3873 = vmul.f32 %v3872, %v3664
        %v3874 = vand.u32 2147483647, %v3664
        %vm3875 = vcmp.lt.f32.partialorder %v3874, 0.0004427343
        %v3876 = vsel %vm3875, %v3873, %v3870
        %v3877 = vadd.f32 %v3666, 1.0
        %v3878 = vlog2.pop %v3877
        %v3879 = vmul.f32 %v3878, 0.6931472
        %v3880 = vmul.f32 -0.5, %v3666
        %v3881 = vadd.f32 %v3880, 1.0
        %v3882 = vmul.f32 %v3881, %v3666
        %v3883 = vand.u32 2147483647, %v3666
        %vm3884 = vcmp.lt.f32.partialorder %v3883, 0.0004427343
        %v3885 = vsel %vm3884, %v3882, %v3879
        %v3886 = vadd.f32 %v3668, 1.0
        %v3887 = vlog2.pop %v3886
        %v3888 = vmul.f32 %v3887, 0.6931472
        %v3889 = vmul.f32 -0.5, %v3668
        %v3890 = vadd.f32 %v3889, 1.0
        %v3891 = vmul.f32 %v3890, %v3668
        %v3892 = vand.u32 2147483647, %v3668
        %vm3893 = vcmp.lt.f32.partialorder %v3892, 0.0004427343
        %v3894 = vsel %vm3893, %v3891, %v3888
        %v3895 = vadd.f32 %v3670, 1.0
        %v3896 = vlog2.pop %v3895
        %v3897 = vmul.f32 %v3896, 0.6931472
        %v3898 = vmul.f32 -0.5, %v3670
        %v3899 = vadd.f32 %v3898, 1.0
        %v3900 = vmul.f32 %v3899, %v3670
        %v3901 = vand.u32 2147483647, %v3670
        %vm3902 = vcmp.lt.f32.partialorder %v3901, 0.0004427343
        %v3903 = vsel %vm3902, %v3900, %v3897
        %v3904 = vadd.f32 %v3672, 1.0
        %v3905 = vlog2.pop %v3904
        %v3906 = vmul.f32 %v3905, 0.6931472
        %v3907 = vmul.f32 -0.5, %v3672
        %v3908 = vadd.f32 %v3907, 1.0
        %v3909 = vmul.f32 %v3908, %v3672
        %v3910 = vand.u32 2147483647, %v3672
        %vm3911 = vcmp.lt.f32.partialorder %v3910, 0.0004427343
        %v3912 = vsel %vm3911, %v3909, %v3906
        %v3913 = vadd.f32 %v3674, 1.0
        %v3914 = vlog2.pop %v3913
        %v3915 = vmul.f32 %v3914, 0.6931472
        %v3916 = vmul.f32 -0.5, %v3674
        %v3917 = vadd.f32 %v3916, 1.0
        %v3918 = vmul.f32 %v3917, %v3674
        %v3919 = vand.u32 2147483647, %v3674
        %vm3920 = vcmp.lt.f32.partialorder %v3919, 0.0004427343
        %v3921 = vsel %vm3920, %v3918, %v3915
        %v3922 = vadd.f32 %v3676, 1.0
        %v3923 = vlog2.pop %v3922
        %v3924 = vmul.f32 %v3923, 0.6931472
        %v3925 = vmul.f32 -0.5, %v3676
        %v3926 = vadd.f32 %v3925, 1.0
        %v3927 = vmul.f32 %v3926, %v3676
        %v3928 = vand.u32 2147483647, %v3676
        %vm3929 = vcmp.lt.f32.partialorder %v3928, 0.0004427343
        %v3930 = vsel %vm3929, %v3927, %v3924
        %v3931 = vadd.f32 %v3678, 1.0
        %v3932 = vlog2.pop %v3931
        %v3933 = vmul.f32 %v3932, 0.6931472
        %v3934 = vmul.f32 -0.5, %v3678
        %v3935 = vadd.f32 %v3934, 1.0
        %v3936 = vmul.f32 %v3935, %v3678
        %v3937 = vand.u32 2147483647, %v3678
        %vm3938 = vcmp.lt.f32.partialorder %v3937, 0.0004427343
        %v3939 = vsel %vm3938, %v3936, %v3933
        %v3940 = vadd.f32 %v3680, 1.0
        %v3941 = vlog2.pop %v3940
        %v3942 = vmul.f32 %v3941, 0.6931472
        %v3943 = vmul.f32 -0.5, %v3680
        %v3944 = vadd.f32 %v3943, 1.0
        %v3945 = vmul.f32 %v3944, %v3680
        %v3946 = vand.u32 2147483647, %v3680
        %vm3947 = vcmp.lt.f32.partialorder %v3946, 0.0004427343
        %v3948 = vsel %vm3947, %v3945, %v3942
        %v3949 = vadd.f32 %v3682, 1.0
        %v3950 = vlog2.pop %v3949
        %v3951 = vmul.f32 %v3950, 0.6931472
        %v3952 = vmul.f32 -0.5, %v3682
        %v3953 = vadd.f32 %v3952, 1.0
        %v3954 = vmul.f32 %v3953, %v3682
        %v3955 = vand.u32 2147483647, %v3682
        %vm3956 = vcmp.lt.f32.partialorder %v3955, 0.0004427343
        %v3957 = vsel %vm3956, %v3954, %v3951
        %v3958 = vadd.f32 %v3684, 1.0
        %v3959 = vlog2.pop %v3958
        %v3960 = vmul.f32 %v3959, 0.6931472
        %v3961 = vmul.f32 -0.5, %v3684
        %v3962 = vadd.f32 %v3961, 1.0
        %v3963 = vmul.f32 %v3962, %v3684
        %v3964 = vand.u32 2147483647, %v3684
        %vm3965 = vcmp.lt.f32.partialorder %v3964, 0.0004427343
        %v3966 = vsel %vm3965, %v3963, %v3960
        %v3967 = vadd.f32 %v3686, 1.0
        %v3968 = vlog2.pop %v3967
        %v3969 = vmul.f32 %v3968, 0.6931472
        %v3970 = vmul.f32 -0.5, %v3686
        %v3971 = vadd.f32 %v3970, 1.0
        %v3972 = vmul.f32 %v3971, %v3686
        %v3973 = vand.u32 2147483647, %v3686
        %vm3974 = vcmp.lt.f32.partialorder %v3973, 0.0004427343
        %v3975 = vsel %vm3974, %v3972, %v3969
        %v3976 = vadd.f32 %v3688, 1.0
        %v3977 = vlog2.pop %v3976
        %v3978 = vmul.f32 %v3977, 0.6931472
        %v3979 = vmul.f32 -0.5, %v3688
        %v3980 = vadd.f32 %v3979, 1.0
        %v3981 = vmul.f32 %v3980, %v3688
        %v3982 = vand.u32 2147483647, %v3688
        %vm3983 = vcmp.lt.f32.partialorder %v3982, 0.0004427343
        %v3984 = vsel %vm3983, %v3981, %v3978
        %v3985 = vadd.f32 %v3690, 1.0
        %v3986 = vlog2.pop %v3985
        %v3987 = vmul.f32 %v3986, 0.6931472
        %v3988 = vmul.f32 -0.5, %v3690
        %v3989 = vadd.f32 %v3988, 1.0
        %v3990 = vmul.f32 %v3989, %v3690
        %v3991 = vand.u32 2147483647, %v3690
        %vm3992 = vcmp.lt.f32.partialorder %v3991, 0.0004427343
        %v3993 = vsel %vm3992, %v3990, %v3987
        %v3994 = vadd.f32 %v3692, 1.0
        %v3995 = vlog2.pop %v3994
        %v3996 = vmul.f32 %v3995, 0.6931472
        %v3997 = vmul.f32 -0.5, %v3692
        %v3998 = vadd.f32 %v3997, 1.0
        %v3999 = vmul.f32 %v3998, %v3692
        %v4000 = vand.u32 2147483647, %v3692
        %vm4001 = vcmp.lt.f32.partialorder %v4000, 0.0004427343
        %v4002 = vsel %vm4001, %v3999, %v3996
        %v4003 = vadd.f32 %v3694, 1.0
        %v4004 = vlog2.pop %v4003
        %v4005 = vmul.f32 %v4004, 0.6931472
        %v4006 = vmul.f32 -0.5, %v3694
        %v4007 = vadd.f32 %v4006, 1.0
        %v4008 = vmul.f32 %v4007, %v3694
        %v4009 = vand.u32 2147483647, %v3694
        %vm4010 = vcmp.lt.f32.partialorder %v4009, 0.0004427343
        %v4011 = vsel %vm4010, %v4008, %v4005
        %v4012 = vadd.f32 %v3696, 1.0
        %v4013 = vlog2.pop %v4012
        %v4014 = vmul.f32 %v4013, 0.6931472
        %v4015 = vmul.f32 -0.5, %v3696
        %v4016 = vadd.f32 %v4015, 1.0
        %v4017 = vmul.f32 %v4016, %v3696
        %v4018 = vand.u32 2147483647, %v3696
        %vm4019 = vcmp.lt.f32.partialorder %v4018, 0.0004427343
        %v4020 = vsel %vm4019, %v4017, %v4014
        %v4021 = vadd.f32 %v3698, 1.0
        %v4022 = vlog2.pop %v4021
        %v4023 = vmul.f32 %v4022, 0.6931472
        %v4024 = vmul.f32 -0.5, %v3698
        %v4025 = vadd.f32 %v4024, 1.0
        %v4026 = vmul.f32 %v4025, %v3698
        %v4027 = vand.u32 2147483647, %v3698
        %vm4028 = vcmp.lt.f32.partialorder %v4027, 0.0004427343
        %v4029 = vsel %vm4028, %v4026, %v4023
        %v4030 = vadd.f32 %v3700, 1.0
        %v4031 = vlog2.pop %v4030
        %v4032 = vmul.f32 %v4031, 0.6931472
        %v4033 = vmul.f32 -0.5, %v3700
        %v4034 = vadd.f32 %v4033, 1.0
        %v4035 = vmul.f32 %v4034, %v3700
        %v4036 = vand.u32 2147483647, %v3700
        %vm4037 = vcmp.lt.f32.partialorder %v4036, 0.0004427343
        %v4038 = vsel %vm4037, %v4035, %v4032
        %v4039 = vadd.f32 %v3702, 1.0
        %v4040 = vlog2.pop %v4039
        %v4041 = vmul.f32 %v4040, 0.6931472
        %v4042 = vmul.f32 -0.5, %v3702
        %v4043 = vadd.f32 %v4042, 1.0
        %v4044 = vmul.f32 %v4043, %v3702
        %v4045 = vand.u32 2147483647, %v3702
        %vm4046 = vcmp.lt.f32.partialorder %v4045, 0.0004427343
        %v4047 = vsel %vm4046, %v4044, %v4041
        %v4048 = vadd.f32 %v3704, 1.0
        %v4049 = vlog2.pop %v4048
        %v4050 = vmul.f32 %v4049, 0.6931472
        %v4051 = vmul.f32 -0.5, %v3704
        %v4052 = vadd.f32 %v4051, 1.0
        %v4053 = vmul.f32 %v4052, %v3704
        %v4054 = vand.u32 2147483647, %v3704
        %vm4055 = vcmp.lt.f32.partialorder %v4054, 0.0004427343
        %v4056 = vsel %vm4055, %v4053, %v4050
        %v4057 = vadd.f32 %v3706, 1.0
        %v4058 = vlog2.pop %v4057
        %v4059 = vmul.f32 %v4058, 0.6931472
        %v4060 = vmul.f32 -0.5, %v3706
        %v4061 = vadd.f32 %v4060, 1.0
        %v4062 = vmul.f32 %v4061, %v3706
        %v4063 = vand.u32 2147483647, %v3706
        %vm4064 = vcmp.lt.f32.partialorder %v4063, 0.0004427343
        %v4065 = vsel %vm4064, %v4062, %v4059
        %v4066 = vadd.f32 %v3708, 1.0
        %v4067 = vlog2.pop %v4066
        %v4068 = vmul.f32 %v4067, 0.6931472
        %v4069 = vmul.f32 -0.5, %v3708
        %v4070 = vadd.f32 %v4069, 1.0
        %v4071 = vmul.f32 %v4070, %v3708
        %v4072 = vand.u32 2147483647, %v3708
        %vm4073 = vcmp.lt.f32.partialorder %v4072, 0.0004427343
        %v4074 = vsel %vm4073, %v4071, %v4068
        %v4075 = vadd.f32 %v3710, 1.0
        %v4076 = vlog2.pop %v4075
        %v4077 = vmul.f32 %v4076, 0.6931472
        %v4078 = vmul.f32 -0.5, %v3710
        %v4079 = vadd.f32 %v4078, 1.0
        %v4080 = vmul.f32 %v4079, %v3710
        %v4081 = vand.u32 2147483647, %v3710
        %vm4082 = vcmp.lt.f32.partialorder %v4081, 0.0004427343
        %v4083 = vsel %vm4082, %v4080, %v4077
        %v4084 = vadd.f32 %v3712, 1.0
        %v4085 = vlog2.pop %v4084
        %v4086 = vmul.f32 %v4085, 0.6931472
        %v4087 = vmul.f32 -0.5, %v3712
        %v4088 = vadd.f32 %v4087, 1.0
        %v4089 = vmul.f32 %v4088, %v3712
        %v4090 = vand.u32 2147483647, %v3712
        %vm4091 = vcmp.lt.f32.partialorder %v4090, 0.0004427343
        %v4092 = vsel %vm4091, %v4089, %v4086
        %v4093 = vadd.f32 %v3714, 1.0
        %v4094 = vlog2.pop %v4093
        %v4095 = vmul.f32 %v4094, 0.6931472
        %v4096 = vmul.f32 -0.5, %v3714
        %v4097 = vadd.f32 %v4096, 1.0
        %v4098 = vmul.f32 %v4097, %v3714
        %v4099 = vand.u32 2147483647, %v3714
        %vm4100 = vcmp.lt.f32.partialorder %v4099, 0.0004427343
        %v4101 = vsel %vm4100, %v4098, %v4095
        %v4102 = vadd.f32 %v3716, 1.0
        %v4103 = vlog2.pop %v4102
        %v4104 = vmul.f32 %v4103, 0.6931472
        %v4105 = vmul.f32 -0.5, %v3716
        %v4106 = vadd.f32 %v4105, 1.0
        %v4107 = vmul.f32 %v4106, %v3716
        %v4108 = vand.u32 2147483647, %v3716
        %vm4109 = vcmp.lt.f32.partialorder %v4108, 0.0004427343
        %v4110 = vsel %vm4109, %v4107, %v4104
        %v4111 = vadd.f32 %v3718, 1.0
        %v4112 = vlog2.pop %v4111
        %v4113 = vmul.f32 %v4112, 0.6931472
        %v4114 = vmul.f32 -0.5, %v3718
        %v4115 = vadd.f32 %v4114, 1.0
        %v4116 = vmul.f32 %v4115, %v3718
        %v4117 = vand.u32 2147483647, %v3718
        %vm4118 = vcmp.lt.f32.partialorder %v4117, 0.0004427343
        %v4119 = vsel %vm4118, %v4116, %v4113
        %v4120 = vadd.f32 %v3720, 1.0
        %v4121 = vlog2.pop %v4120
        %v4122 = vmul.f32 %v4121, 0.6931472
        %v4123 = vmul.f32 -0.5, %v3720
        %v4124 = vadd.f32 %v4123, 1.0
        %v4125 = vmul.f32 %v4124, %v3720
        %v4126 = vand.u32 2147483647, %v3720
        %vm4127 = vcmp.lt.f32.partialorder %v4126, 0.0004427343
        %v4128 = vsel %vm4127, %v4125, %v4122
        %v4129 = vadd.f32 %v3722, 1.0
        %v4130 = vlog2.pop %v4129
        %v4131 = vmul.f32 %v4130, 0.6931472
        %v4132 = vmul.f32 -0.5, %v3722
        %v4133 = vadd.f32 %v4132, 1.0
        %v4134 = vmul.f32 %v4133, %v3722
        %v4135 = vand.u32 2147483647, %v3722
        %vm4136 = vcmp.lt.f32.partialorder %v4135, 0.0004427343
        %v4137 = vsel %vm4136, %v4134, %v4131
        %v4138 = vadd.f32 %v3724, 1.0
        %v4139 = vlog2.pop %v4138
        %v4140 = vmul.f32 %v4139, 0.6931472
        %v4141 = vmul.f32 -0.5, %v3724
        %v4142 = vadd.f32 %v4141, 1.0
        %v4143 = vmul.f32 %v4142, %v3724
        %v4144 = vand.u32 2147483647, %v3724
        %vm4145 = vcmp.lt.f32.partialorder %v4144, 0.0004427343
        %v4146 = vsel %vm4145, %v4143, %v4140
        %v4147 = vadd.f32 %v3726, 1.0
        %v4148 = vlog2.pop %v4147
        %v4149 = vmul.f32 %v4148, 0.6931472
        %v4150 = vmul.f32 -0.5, %v3726
        %v4151 = vadd.f32 %v4150, 1.0
        %v4152 = vmul.f32 %v4151, %v3726
        %v4153 = vand.u32 2147483647, %v3726
        %vm4154 = vcmp.lt.f32.partialorder %v4153, 0.0004427343
        %v4155 = vsel %vm4154, %v4152, %v4149
        %v4156 = vadd.f32 %v3728, 1.0
        %v4157 = vlog2.pop %v4156
        %v4158 = vmul.f32 %v4157, 0.6931472
        %v4159 = vmul.f32 -0.5, %v3728
        %v4160 = vadd.f32 %v4159, 1.0
        %v4161 = vmul.f32 %v4160, %v3728
        %v4162 = vand.u32 2147483647, %v3728
        %vm4163 = vcmp.lt.f32.partialorder %v4162, 0.0004427343
        %v4164 = vsel %vm4163, %v4161, %v4158
        %v4165 = vadd.f32 %v3730, 1.0
        %v4166 = vlog2.pop %v4165
        %v4167 = vmul.f32 %v4166, 0.6931472
        %v4168 = vmul.f32 -0.5, %v3730
        %v4169 = vadd.f32 %v4168, 1.0
        %v4170 = vmul.f32 %v4169, %v3730
        %v4171 = vand.u32 2147483647, %v3730
        %vm4172 = vcmp.lt.f32.partialorder %v4171, 0.0004427343
        %v4173 = vsel %vm4172, %v4170, %v4167
        %v4174 = vadd.f32 %v3732, 1.0
        %v4175 = vlog2.pop %v4174
        %v4176 = vmul.f32 %v4175, 0.6931472
        %v4177 = vmul.f32 -0.5, %v3732
        %v4178 = vadd.f32 %v4177, 1.0
        %v4179 = vmul.f32 %v4178, %v3732
        %v4180 = vand.u32 2147483647, %v3732
        %vm4181 = vcmp.lt.f32.partialorder %v4180, 0.0004427343
        %v4182 = vsel %vm4181, %v4179, %v4176
        %v4183 = vadd.f32 %v3734, 1.0
        %v4184 = vlog2.pop %v4183
        %v4185 = vmul.f32 %v4184, 0.6931472
        %v4186 = vmul.f32 -0.5, %v3734
        %v4187 = vadd.f32 %v4186, 1.0
        %v4188 = vmul.f32 %v4187, %v3734
        %v4189 = vand.u32 2147483647, %v3734
        %vm4190 = vcmp.lt.f32.partialorder %v4189, 0.0004427343
        %v4191 = vsel %vm4190, %v4188, %v4185
        %v4192 = vadd.f32 %v3736, 1.0
        %v4193 = vlog2.pop %v4192
        %v4194 = vmul.f32 %v4193, 0.6931472
        %v4195 = vmul.f32 -0.5, %v3736
        %v4196 = vadd.f32 %v4195, 1.0
        %v4197 = vmul.f32 %v4196, %v3736
        %v4198 = vand.u32 2147483647, %v3736
        %vm4199 = vcmp.lt.f32.partialorder %v4198, 0.0004427343
        %v4200 = vsel %vm4199, %v4197, %v4194
        %v4201 = vadd.f32 %v3738, 1.0
        %v4202 = vlog2.pop %v4201
        %v4203 = vmul.f32 %v4202, 0.6931472
        %v4204 = vmul.f32 -0.5, %v3738
        %v4205 = vadd.f32 %v4204, 1.0
        %v4206 = vmul.f32 %v4205, %v3738
        %v4207 = vand.u32 2147483647, %v3738
        %vm4208 = vcmp.lt.f32.partialorder %v4207, 0.0004427343
        %v4209 = vsel %vm4208, %v4206, %v4203
        %v4210 = vadd.f32 %v3740, 1.0
        %v4211 = vlog2.pop %v4210
        %v4212 = vmul.f32 %v4211, 0.6931472
        %v4213 = vmul.f32 -0.5, %v3740
        %v4214 = vadd.f32 %v4213, 1.0
        %v4215 = vmul.f32 %v4214, %v3740
        %v4216 = vand.u32 2147483647, %v3740
        %vm4217 = vcmp.lt.f32.partialorder %v4216, 0.0004427343
        %v4218 = vsel %vm4217, %v4215, %v4212
        %v4219 = vadd.f32 %v3742, 1.0
        %v4220 = vlog2.pop %v4219
        %v4221 = vmul.f32 %v4220, 0.6931472
        %v4222 = vmul.f32 -0.5, %v3742
        %v4223 = vadd.f32 %v4222, 1.0
        %v4224 = vmul.f32 %v4223, %v3742
        %v4225 = vand.u32 2147483647, %v3742
        %vm4226 = vcmp.lt.f32.partialorder %v4225, 0.0004427343
        %v4227 = vsel %vm4226, %v4224, %v4221
        %v4228 = vadd.f32 %v3744, 1.0
        %v4229 = vlog2.pop %v4228
        %v4230 = vmul.f32 %v4229, 0.6931472
        %v4231 = vmul.f32 -0.5, %v3744
        %v4232 = vadd.f32 %v4231, 1.0
        %v4233 = vmul.f32 %v4232, %v3744
        %v4234 = vand.u32 2147483647, %v3744
        %vm4235 = vcmp.lt.f32.partialorder %v4234, 0.0004427343
        %v4236 = vsel %vm4235, %v4233, %v4230
        %v4237 = vadd.f32 %v3746, 1.0
        %v4238 = vlog2.pop %v4237
        %v4239 = vmul.f32 %v4238, 0.6931472
        %v4240 = vmul.f32 -0.5, %v3746
        %v4241 = vadd.f32 %v4240, 1.0
        %v4242 = vmul.f32 %v4241, %v3746
        %v4243 = vand.u32 2147483647, %v3746
        %vm4244 = vcmp.lt.f32.partialorder %v4243, 0.0004427343
        %v4245 = vsel %vm4244, %v4242, %v4239
        %v4246 = vadd.f32 %v3748, 1.0
        %v4247 = vlog2.pop %v4246
        %v4248 = vmul.f32 %v4247, 0.6931472
        %v4249 = vmul.f32 -0.5, %v3748
        %v4250 = vadd.f32 %v4249, 1.0
        %v4251 = vmul.f32 %v4250, %v3748
        %v4252 = vand.u32 2147483647, %v3748
        %vm4253 = vcmp.lt.f32.partialorder %v4252, 0.0004427343
        %v4254 = vsel %vm4253, %v4251, %v4248
        %v4255 = vadd.f32 %v3750, 1.0
        %v4256 = vlog2.pop %v4255
        %v4257 = vmul.f32 %v4256, 0.6931472
        %v4258 = vmul.f32 -0.5, %v3750
        %v4259 = vadd.f32 %v4258, 1.0
        %v4260 = vmul.f32 %v4259, %v3750
        %v4261 = vand.u32 2147483647, %v3750
        %vm4262 = vcmp.lt.f32.partialorder %v4261, 0.0004427343
        %v4263 = vsel %vm4262, %v4260, %v4257
        %v4264 = vadd.f32 %v3752, 1.0
        %v4265 = vlog2.pop %v4264
        %v4266 = vmul.f32 %v4265, 0.6931472
        %v4267 = vmul.f32 -0.5, %v3752
        %v4268 = vadd.f32 %v4267, 1.0
        %v4269 = vmul.f32 %v4268, %v3752
        %v4270 = vand.u32 2147483647, %v3752
        %vm4271 = vcmp.lt.f32.partialorder %v4270, 0.0004427343
        %v4272 = vsel %vm4271, %v4269, %v4266
        %v4273 = vadd.f32 %v3754, 1.0
        %v4274 = vlog2.pop %v4273
        %v4275 = vmul.f32 %v4274, 0.6931472
        %v4276 = vmul.f32 -0.5, %v3754
        %v4277 = vadd.f32 %v4276, 1.0
        %v4278 = vmul.f32 %v4277, %v3754
        %v4279 = vand.u32 2147483647, %v3754
        %vm4280 = vcmp.lt.f32.partialorder %v4279, 0.0004427343
        %v4281 = vsel %vm4280, %v4278, %v4275
        %v4282 = vadd.f32 %v3756, 1.0
        %v4283 = vlog2.pop %v4282
        %v4284 = vmul.f32 %v4283, 0.6931472
        %v4285 = vmul.f32 -0.5, %v3756
        %v4286 = vadd.f32 %v4285, 1.0
        %v4287 = vmul.f32 %v4286, %v3756
        %v4288 = vand.u32 2147483647, %v3756
        %vm4289 = vcmp.lt.f32.partialorder %v4288, 0.0004427343
        %v4290 = vsel %vm4289, %v4287, %v4284
        %v4291 = vadd.f32 %v3758, 1.0
        %v4292 = vlog2.pop %v4291
        %v4293 = vmul.f32 %v4292, 0.6931472
        %v4294 = vmul.f32 -0.5, %v3758
        %v4295 = vadd.f32 %v4294, 1.0
        %v4296 = vmul.f32 %v4295, %v3758
        %v4297 = vand.u32 2147483647, %v3758
        %vm4298 = vcmp.lt.f32.partialorder %v4297, 0.0004427343
        %v4299 = vsel %vm4298, %v4296, %v4293
        %v4300 = vadd.f32 %v3760, 1.0
        %v4301 = vlog2.pop %v4300
        %v4302 = vmul.f32 %v4301, 0.6931472
        %v4303 = vmul.f32 -0.5, %v3760
        %v4304 = vadd.f32 %v4303, 1.0
        %v4305 = vmul.f32 %v4304, %v3760
        %v4306 = vand.u32 2147483647, %v3760
        %vm4307 = vcmp.lt.f32.partialorder %v4306, 0.0004427343
        %v4308 = vsel %vm4307, %v4305, %v4302
        %v4309 = vadd.f32 %v3762, 1.0
        %v4310 = vlog2.pop %v4309
        %v4311 = vmul.f32 %v4310, 0.6931472
        %v4312 = vmul.f32 -0.5, %v3762
        %v4313 = vadd.f32 %v4312, 1.0
        %v4314 = vmul.f32 %v4313, %v3762
        %v4315 = vand.u32 2147483647, %v3762
        %vm4316 = vcmp.lt.f32.partialorder %v4315, 0.0004427343
        %v4317 = vsel %vm4316, %v4314, %v4311
        %v4318 = vadd.f32 %v3764, 1.0
        %v4319 = vlog2.pop %v4318
        %v4320 = vmul.f32 %v4319, 0.6931472
        %v4321 = vmul.f32 -0.5, %v3764
        %v4322 = vadd.f32 %v4321, 1.0
        %v4323 = vmul.f32 %v4322, %v3764
        %v4324 = vand.u32 2147483647, %v3764
        %vm4325 = vcmp.lt.f32.partialorder %v4324, 0.0004427343
        %v4326 = vsel %vm4325, %v4323, %v4320
        %v4327 = vadd.f32 %v3766, 1.0
        %v4328 = vlog2.pop %v4327
        %v4329 = vmul.f32 %v4328, 0.6931472
        %v4330 = vmul.f32 -0.5, %v3766
        %v4331 = vadd.f32 %v4330, 1.0
        %v4332 = vmul.f32 %v4331, %v3766
        %v4333 = vand.u32 2147483647, %v3766
        %vm4334 = vcmp.lt.f32.partialorder %v4333, 0.0004427343
        %v4335 = vsel %vm4334, %v4332, %v4329
        %v4336 = vadd.f32 %v3768, 1.0
        %v4337 = vlog2.pop %v4336
        %v4338 = vmul.f32 %v4337, 0.6931472
        %v4339 = vmul.f32 -0.5, %v3768
        %v4340 = vadd.f32 %v4339, 1.0
        %v4341 = vmul.f32 %v4340, %v3768
        %v4342 = vand.u32 2147483647, %v3768
        %vm4343 = vcmp.lt.f32.partialorder %v4342, 0.0004427343
        %v4344 = vsel %vm4343, %v4341, %v4338
        %v4345 = vmul.f32 %v3777, 0.01
        %v4346 = vmul.f32 %v3786, 0.01
        %v4347 = vmul.f32 %v3795, 0.01
        %v4348 = vmul.f32 %v3804, 0.01
        %v4349 = vmul.f32 %v3813, 0.01
        %v4350 = vmul.f32 %v3822, 0.01
        %v4351 = vmul.f32 %v3831, 0.01
        %v4352 = vmul.f32 %v3840, 0.01
        %v4353 = vmul.f32 %v3849, 0.01
        %v4354 = vmul.f32 %v3858, 0.01
        %v4355 = vmul.f32 %v3867, 0.01
        %v4356 = vmul.f32 %v3876, 0.01
        %v4357 = vmul.f32 %v3885, 0.01
        %v4358 = vmul.f32 %v3894, 0.01
        %v4359 = vmul.f32 %v3903, 0.01
        %v4360 = vmul.f32 %v3912, 0.01
        %v4361 = vmul.f32 %v3921, 0.01
        %v4362 = vmul.f32 %v3930, 0.01
        %v4363 = vmul.f32 %v3939, 0.01
        %v4364 = vmul.f32 %v3948, 0.01
        %v4365 = vmul.f32 %v3957, 0.01
        %v4366 = vmul.f32 %v3966, 0.01
        %v4367 = vmul.f32 %v3975, 0.01
        %v4368 = vmul.f32 %v3984, 0.01
        %v4369 = vmul.f32 %v3993, 0.01
        %v4370 = vmul.f32 %v4002, 0.01
        %v4371 = vmul.f32 %v4011, 0.01
        %v4372 = vmul.f32 %v4020, 0.01
        %v4373 = vmul.f32 %v4029, 0.01
        %v4374 = vmul.f32 %v4038, 0.01
        %v4375 = vmul.f32 %v4047, 0.01
        %v4376 = vmul.f32 %v4056, 0.01
        %v4377 = vmul.f32 %v4065, 0.01
        %v4378 = vmul.f32 %v4074, 0.01
        %v4379 = vmul.f32 %v4083, 0.01
        %v4380 = vmul.f32 %v4092, 0.01
        %v4381 = vmul.f32 %v4101, 0.01
        %v4382 = vmul.f32 %v4110, 0.01
        %v4383 = vmul.f32 %v4119, 0.01
        %v4384 = vmul.f32 %v4128, 0.01
        %v4385 = vmul.f32 %v4137, 0.01
        %v4386 = vmul.f32 %v4146, 0.01
        %v4387 = vmul.f32 %v4155, 0.01
        %v4388 = vmul.f32 %v4164, 0.01
        %v4389 = vmul.f32 %v4173, 0.01
        %v4390 = vmul.f32 %v4182, 0.01
        %v4391 = vmul.f32 %v4191, 0.01
        %v4392 = vmul.f32 %v4200, 0.01
        %v4393 = vmul.f32 %v4209, 0.01
        %v4394 = vmul.f32 %v4218, 0.01
        %v4395 = vmul.f32 %v4227, 0.01
        %v4396 = vmul.f32 %v4236, 0.01
        %v4397 = vmul.f32 %v4245, 0.01
        %v4398 = vmul.f32 %v4254, 0.01
        %v4399 = vmul.f32 %v4263, 0.01
        %v4400 = vmul.f32 %v4272, 0.01
        %v4401 = vmul.f32 %v4281, 0.01
        %v4402 = vmul.f32 %v4290, 0.01
        %v4403 = vmul.f32 %v4299, 0.01
        %v4404 = vmul.f32 %v4308, 0.01
        %v4405 = vmul.f32 %v4317, 0.01
        %v4406 = vmul.f32 %v4326, 0.01
        %v4407 = vmul.f32 %v4335, 0.01
        %v4408 = vmul.f32 %v4344, 0.01
        %v4409 = vsel %vm3577, %v3259, %v4345
        %v4410 = vsel %vm3578, %v3261, %v4346
        %v4411 = vsel %vm3579, %v3265, %v4347
        %v4412 = vsel %vm3580, %v3267, %v4348
        %v4413 = vsel %vm3581, %v3271, %v4349
        %v4414 = vsel %vm3582, %v3273, %v4350
        %v4415 = vsel %vm3583, %v3277, %v4351
        %v4416 = vsel %vm3584, %v3279, %v4352
        %v4417 = vsel %vm3585, %v3283, %v4353
        %v4418 = vsel %vm3586, %v3285, %v4354
        %v4419 = vsel %vm3587, %v3289, %v4355
        %v4420 = vsel %vm3588, %v3291, %v4356
        %v4421 = vsel %vm3589, %v3295, %v4357
        %v4422 = vsel %vm3590, %v3297, %v4358
        %v4423 = vsel %vm3591, %v3301, %v4359
        %v4424 = vsel %vm3592, %v3303, %v4360
        %v4425 = vsel %vm3593, %v3307, %v4361
        %v4426 = vsel %vm3594, %v3309, %v4362
        %v4427 = vsel %vm3595, %v3313, %v4363
        %v4428 = vsel %vm3596, %v3315, %v4364
        %v4429 = vsel %vm3597, %v3319, %v4365
        %v4430 = vsel %vm3598, %v3321, %v4366
        %v4431 = vsel %vm3599, %v3325, %v4367
        %v4432 = vsel %vm3600, %v3327, %v4368
        %v4433 = vsel %vm3601, %v3331, %v4369
        %v4434 = vsel %vm3602, %v3333, %v4370
        %v4435 = vsel %vm3603, %v3337, %v4371
        %v4436 = vsel %vm3604, %v3339, %v4372
        %v4437 = vsel %vm3605, %v3343, %v4373
        %v4438 = vsel %vm3606, %v3345, %v4374
        %v4439 = vsel %vm3607, %v3349, %v4375
        %v4440 = vsel %vm3608, %v3351, %v4376
        %v4441 = vsel %vm3609, %v3355, %v4377
        %v4442 = vsel %vm3610, %v3357, %v4378
        %v4443 = vsel %vm3611, %v3361, %v4379
        %v4444 = vsel %vm3612, %v3363, %v4380
        %v4445 = vsel %vm3613, %v3367, %v4381
        %v4446 = vsel %vm3614, %v3369, %v4382
        %v4447 = vsel %vm3615, %v3373, %v4383
        %v4448 = vsel %vm3616, %v3375, %v4384
        %v4449 = vsel %vm3617, %v3379, %v4385
        %v4450 = vsel %vm3618, %v3381, %v4386
        %v4451 = vsel %vm3619, %v3385, %v4387
        %v4452 = vsel %vm3620, %v3387, %v4388
        %v4453 = vsel %vm3621, %v3391, %v4389
        %v4454 = vsel %vm3622, %v3393, %v4390
        %v4455 = vsel %vm3623, %v3397, %v4391
        %v4456 = vsel %vm3624, %v3399, %v4392
        %v4457 = vsel %vm3625, %v3403, %v4393
        %v4458 = vsel %vm3626, %v3405, %v4394
        %v4459 = vsel %vm3627, %v3409, %v4395
        %v4460 = vsel %vm3628, %v3411, %v4396
        %v4461 = vsel %vm3629, %v3415, %v4397
        %v4462 = vsel %vm3630, %v3417, %v4398
        %v4463 = vsel %vm3631, %v3421, %v4399
        %v4464 = vsel %vm3632, %v3423, %v4400
        %v4465 = vsel %vm3633, %v3427, %v4401
        %v4466 = vsel %vm3634, %v3429, %v4402
        %v4467 = vsel %vm3635, %v3433, %v4403
        %v4468 = vsel %vm3636, %v3435, %v4404
        %v4469 = vsel %vm3637, %v3439, %v4405
        %v4470 = vsel %vm3638, %v3441, %v4406
        %v4471 = vsel %vm3639, %v3445, %v4407
        %v4472 = vsel %vm3640, %v3447, %v4408
        %s4473 = scalar_lea.vmem %s2, 1024
        %v4474 = vld [vmem:[%s4473] sm:$0xff]
        %v4475 = vld [vmem:[%s4473 + $0x8] sm:$0xff]
        %v4476 = vld [vmem:[%s4473 + $0x10] sm:$0xff]
        %v4477 = vld [vmem:[%s4473 + $0x18] sm:$0xff]
        %v4478 = vld [vmem:[%s4473 + $0x20] sm:$0xff]
        %v4479 = vld [vmem:[%s4473 + $0x28] sm:$0xff]
        %v4480 = vld [vmem:[%s4473 + $0x30] sm:$0xff]
        %v4481 = vld [vmem:[%s4473 + $0x38] sm:$0xff]
        %v4482 = vld [vmem:[%s4473 + $0x40] sm:$0xff]
        %v4483 = vld [vmem:[%s4473 + $0x48] sm:$0xff]
        %v4484 = vld [vmem:[%s4473 + $0x50] sm:$0xff]
        %v4485 = vld [vmem:[%s4473 + $0x58] sm:$0xff]
        %v4486 = vld [vmem:[%s4473 + $0x60] sm:$0xff]
        %v4487 = vld [vmem:[%s4473 + $0x68] sm:$0xff]
        %v4488 = vld [vmem:[%s4473 + $0x70] sm:$0xff]
        %v4489 = vld [vmem:[%s4473 + $0x78] sm:$0xff]
        %v4490 = vld [vmem:[%s4473 + $0x80] sm:$0xff]
        %v4491 = vld [vmem:[%s4473 + $0x88] sm:$0xff]
        %v4492 = vld [vmem:[%s4473 + $0x90] sm:$0xff]
        %v4493 = vld [vmem:[%s4473 + $0x98] sm:$0xff]
        %v4494 = vld [vmem:[%s4473 + $0xa0] sm:$0xff]
        %v4495 = vld [vmem:[%s4473 + $0xa8] sm:$0xff]
        %v4496 = vld [vmem:[%s4473 + $0xb0] sm:$0xff]
        %v4497 = vld [vmem:[%s4473 + $0xb8] sm:$0xff]
        %v4498 = vld [vmem:[%s4473 + $0xc0] sm:$0xff]
        %v4499 = vld [vmem:[%s4473 + $0xc8] sm:$0xff]
        %v4500 = vld [vmem:[%s4473 + $0xd0] sm:$0xff]
        %v4501 = vld [vmem:[%s4473 + $0xd8] sm:$0xff]
        %v4502 = vld [vmem:[%s4473 + $0xe0] sm:$0xff]
        %v4503 = vld [vmem:[%s4473 + $0xe8] sm:$0xff]
        %v4504 = vld [vmem:[%s4473 + $0xf0] sm:$0xff]
        %v4505 = vld [vmem:[%s4473 + $0xf8] sm:$0xff]
        %v4506 = vld [vmem:[%s4473 + $0x100] sm:$0xff]
        %v4507 = vld [vmem:[%s4473 + $0x108] sm:$0xff]
        %v4508 = vld [vmem:[%s4473 + $0x110] sm:$0xff]
        %v4509 = vld [vmem:[%s4473 + $0x118] sm:$0xff]
        %v4510 = vld [vmem:[%s4473 + $0x120] sm:$0xff]
        %v4511 = vld [vmem:[%s4473 + $0x128] sm:$0xff]
        %v4512 = vld [vmem:[%s4473 + $0x130] sm:$0xff]
        %v4513 = vld [vmem:[%s4473 + $0x138] sm:$0xff]
        %v4514 = vld [vmem:[%s4473 + $0x140] sm:$0xff]
        %v4515 = vld [vmem:[%s4473 + $0x148] sm:$0xff]
        %v4516 = vld [vmem:[%s4473 + $0x150] sm:$0xff]
        %v4517 = vld [vmem:[%s4473 + $0x158] sm:$0xff]
        %v4518 = vld [vmem:[%s4473 + $0x160] sm:$0xff]
        %v4519 = vld [vmem:[%s4473 + $0x168] sm:$0xff]
        %v4520 = vld [vmem:[%s4473 + $0x170] sm:$0xff]
        %v4521 = vld [vmem:[%s4473 + $0x178] sm:$0xff]
        %v4522 = vld [vmem:[%s4473 + $0x180] sm:$0xff]
        %v4523 = vld [vmem:[%s4473 + $0x188] sm:$0xff]
        %v4524 = vld [vmem:[%s4473 + $0x190] sm:$0xff]
        %v4525 = vld [vmem:[%s4473 + $0x198] sm:$0xff]
        %v4526 = vld [vmem:[%s4473 + $0x1a0] sm:$0xff]
        %v4527 = vld [vmem:[%s4473 + $0x1a8] sm:$0xff]
        %v4528 = vld [vmem:[%s4473 + $0x1b0] sm:$0xff]
        %v4529 = vld [vmem:[%s4473 + $0x1b8] sm:$0xff]
        %v4530 = vld [vmem:[%s4473 + $0x1c0] sm:$0xff]
        %v4531 = vld [vmem:[%s4473 + $0x1c8] sm:$0xff]
        %v4532 = vld [vmem:[%s4473 + $0x1d0] sm:$0xff]
        %v4533 = vld [vmem:[%s4473 + $0x1d8] sm:$0xff]
        %v4534 = vld [vmem:[%s4473 + $0x1e0] sm:$0xff]
        %v4535 = vld [vmem:[%s4473 + $0x1e8] sm:$0xff]
        %v4536 = vld [vmem:[%s4473 + $0x1f0] sm:$0xff]
        %v4537 = vld [vmem:[%s4473 + $0x1f8] sm:$0xff]
        %s4538 = scalar_lea.vmem %s4, 6
        %v4539 = vld [vmem:[%s4538] sm:$0x3]
        %v4541 = vlaneseq
        %v4542 = vshrl.u32 %v4541, 7
        %v4543 = vsub.s32 0, %v4542
        %v4544 = vrot.slane %v4539, %v4543
        %v4545 = vlaneseq
        %v4546 = vshrl.u32 %v4545, 7
        %v4547 = vsub.s32 1, %v4546
        %v4548 = vrot.slane %v4539, %v4547
        %4551 = vmatprep.subr.mxu0 %v4475
        %4552 = vmatpush1.msra.mxu0 %v4474
        %4553 = vmatprep.subr.mxu0 %v4477
        %4554 = vmatpush1.msra.mxu0 %v4476
        %4555 = vmatprep.subr.mxu0 %v4479
        %4556 = vmatpush1.msra.mxu0 %v4478
        %4557 = vmatprep.subr.mxu0 %v4481
        %4558 = vmatpush1.msra.mxu0 %v4480
        %4559 = vmatprep.subr.mxu0 %v4483
        %4560 = vmatpush1.msra.mxu0 %v4482
        %4561 = vmatprep.subr.mxu0 %v4485
        %4562 = vmatpush1.msra.mxu0 %v4484
        %4563 = vmatprep.subr.mxu0 %v4487
        %4564 = vmatpush1.msra.mxu0 %v4486
        %4565 = vmatprep.subr.mxu0 %v4489
        %4566 = vmatpush1.msra.mxu0 %v4488
        %4567 = vmatprep.subr.mxu0 %v4491
        %4568 = vmatpush1.msra.mxu0 %v4490
        %4569 = vmatprep.subr.mxu0 %v4493
        %4570 = vmatpush1.msra.mxu0 %v4492
        %4571 = vmatprep.subr.mxu0 %v4495
        %4572 = vmatpush1.msra.mxu0 %v4494
        %4573 = vmatprep.subr.mxu0 %v4497
        %4574 = vmatpush1.msra.mxu0 %v4496
        %4575 = vmatprep.subr.mxu0 %v4499
        %4576 = vmatpush1.msra.mxu0 %v4498
        %4577 = vmatprep.subr.mxu0 %v4501
        %4578 = vmatpush1.msra.mxu0 %v4500
        %4579 = vmatprep.subr.mxu0 %v4503
        %4580 = vmatpush1.msra.mxu0 %v4502
        %4581 = vmatprep.subr.mxu0 %v4505
        %4582 = vmatpush1.msra.mxu0 %v4504
        %4583 = vmatprep.subr.mxu0 %v4507
        %4584 = vmatpush1.msra.mxu0 %v4506
        %4585 = vmatprep.subr.mxu0 %v4509
        %4586 = vmatpush1.msra.mxu0 %v4508
        %4587 = vmatprep.subr.mxu0 %v4511
        %4588 = vmatpush1.msra.mxu0 %v4510
        %4589 = vmatprep.subr.mxu0 %v4513
        %4590 = vmatpush1.msra.mxu0 %v4512
        %4591 = vmatprep.subr.mxu0 %v4515
        %4592 = vmatpush1.msra.mxu0 %v4514
        %4593 = vmatprep.subr.mxu0 %v4517
        %4594 = vmatpush1.msra.mxu0 %v4516
        %4595 = vmatprep.subr.mxu0 %v4519
        %4596 = vmatpush1.msra.mxu0 %v4518
        %4597 = vmatprep.subr.mxu0 %v4521
        %4598 = vmatpush1.msra.mxu0 %v4520
        %4599 = vmatprep.subr.mxu0 %v4523
        %4600 = vmatpush1.msra.mxu0 %v4522
        %4601 = vmatprep.subr.mxu0 %v4525
        %4602 = vmatpush1.msra.mxu0 %v4524
        %4603 = vmatprep.subr.mxu0 %v4527
        %4604 = vmatpush1.msra.mxu0 %v4526
        %4605 = vmatprep.subr.mxu0 %v4529
        %4606 = vmatpush1.msra.mxu0 %v4528
        %4607 = vmatprep.subr.mxu0 %v4531
        %4608 = vmatpush1.msra.mxu0 %v4530
        %4609 = vmatprep.subr.mxu0 %v4533
        %4610 = vmatpush1.msra.mxu0 %v4532
        %4611 = vmatprep.subr.mxu0 %v4535
        %4612 = vmatpush1.msra.mxu0 %v4534
        %4613 = vmatprep.subr.mxu0 %v4537
        %4614 = vmatpush1.msra.mxu0 %v4536
        %4615 = vmatprep.mubr.f32.mxu0 %v4410
        %4616 = vmatmul.mubr.f32.gmra.mrb[0].mxu0 %v4409
        %v4617 = vpop.f32.mrb[0].mxu0
        %v4618 = vadd.f32 %v4544, %v4617
        %v4619 = vpop.f32.mrb[0].mxu0
        %v4620 = vadd.f32 %v4548, %v4619
        %4621 = vmatprep.mubr.f32.mxu0 %v4412
        %4622 = vmatmul.mubr.f32.gmra.mrb[0].mxu0 %v4411
        %v4623 = vpop.f32.mrb[0].mxu0
        %v4624 = vadd.f32 %v4544, %v4623
        %v4625 = vpop.f32.mrb[0].mxu0
        %v4626 = vadd.f32 %v4548, %v4625
        %4627 = vmatprep.mubr.f32.mxu0 %v4414
        %4628 = vmatmul.mubr.f32.gmra.mrb[0].mxu0 %v4413
        %v4629 = vpop.f32.mrb[0].mxu0
        %v4630 = vadd.f32 %v4544, %v4629
        %v4631 = vpop.f32.mrb[0].mxu0
        %v4632 = vadd.f32 %v4548, %v4631
        %4633 = vmatprep.mubr.f32.mxu0 %v4416
        %4634 = vmatmul.mubr.f32.gmra.mrb[0].mxu0 %v4415
        %v4635 = vpop.f32.mrb[0].mxu0
        %v4636 = vadd.f32 %v4544, %v4635
        %v4637 = vpop.f32.mrb[0].mxu0
        %v4638 = vadd.f32 %v4548, %v4637
        %4639 = vmatprep.mubr.f32.mxu0 %v4418
        %4640 = vmatmul.mubr.f32.gmra.mrb[0].mxu0 %v4417
        %v4641 = vpop.f32.mrb[0].mxu0
        %v4642 = vadd.f32 %v4544, %v4641
        %v4643 = vpop.f32.mrb[0].mxu0
        %v4644 = vadd.f32 %v4548, %v4643
        %4645 = vmatprep.mubr.f32.mxu0 %v4420
        %4646 = vmatmul.mubr.f32.gmra.mrb[0].mxu0 %v4419
        %v4647 = vpop.f32.mrb[0].mxu0
        %v4648 = vadd.f32 %v4544, %v4647
        %v4649 = vpop.f32.mrb[0].mxu0
        %v4650 = vadd.f32 %v4548, %v4649
        %4651 = vmatprep.mubr.f32.mxu0 %v4422
        %4652 = vmatmul.mubr.f32.gmra.mrb[0].mxu0 %v4421
        %v4653 = vpop.f32.mrb[0].mxu0
        %v4654 = vadd.f32 %v4544, %v4653
        %v4655 = vpop.f32.mrb[0].mxu0
        %v4656 = vadd.f32 %v4548, %v4655
        %4657 = vmatprep.mubr.f32.mxu0 %v4424
        %4658 = vmatmul.mubr.f32.gmra.mrb[0].mxu0 %v4423
        %v4659 = vpop.f32.mrb[0].mxu0
        %v4660 = vadd.f32 %v4544, %v4659
        %v4661 = vpop.f32.mrb[0].mxu0
        %v4662 = vadd.f32 %v4548, %v4661
        %4663 = vmatprep.mubr.f32.mxu0 %v4426
        %4664 = vmatmul.mubr.f32.gmra.mrb[0].mxu0 %v4425
        %v4665 = vpop.f32.mrb[0].mxu0
        %v4666 = vadd.f32 %v4544, %v4665
        %v4667 = vpop.f32.mrb[0].mxu0
        %v4668 = vadd.f32 %v4548, %v4667
        %4669 = vmatprep.mubr.f32.mxu0 %v4428
        %4670 = vmatmul.mubr.f32.gmra.mrb[0].mxu0 %v4427
        %v4671 = vpop.f32.mrb[0].mxu0
        %v4672 = vadd.f32 %v4544, %v4671
        %v4673 = vpop.f32.mrb[0].mxu0
        %v4674 = vadd.f32 %v4548, %v4673
        %4675 = vmatprep.mubr.f32.mxu0 %v4430
        %4676 = vmatmul.mubr.f32.gmra.mrb[0].mxu0 %v4429
        %v4677 = vpop.f32.mrb[0].mxu0
        %v4678 = vadd.f32 %v4544, %v4677
        %v4679 = vpop.f32.mrb[0].mxu0
        %v4680 = vadd.f32 %v4548, %v4679
        %4681 = vmatprep.mubr.f32.mxu0 %v4432
        %4682 = vmatmul.mubr.f32.gmra.mrb[0].mxu0 %v4431
        %v4683 = vpop.f32.mrb[0].mxu0
        %v4684 = vadd.f32 %v4544, %v4683
        %v4685 = vpop.f32.mrb[0].mxu0
        %v4686 = vadd.f32 %v4548, %v4685
        %4687 = vmatprep.mubr.f32.mxu0 %v4434
        %4688 = vmatmul.mubr.f32.gmra.mrb[0].mxu0 %v4433
        %v4689 = vpop.f32.mrb[0].mxu0
        %v4690 = vadd.f32 %v4544, %v4689
        %v4691 = vpop.f32.mrb[0].mxu0
        %v4692 = vadd.f32 %v4548, %v4691
        %4693 = vmatprep.mubr.f32.mxu0 %v4436
        %4694 = vmatmul.mubr.f32.gmra.mrb[0].mxu0 %v4435
        %v4695 = vpop.f32.mrb[0].mxu0
        %v4696 = vadd.f32 %v4544, %v4695
        %v4697 = vpop.f32.mrb[0].mxu0
        %v4698 = vadd.f32 %v4548, %v4697
        %4699 = vmatprep.mubr.f32.mxu0 %v4438
        %4700 = vmatmul.mubr.f32.gmra.mrb[0].mxu0 %v4437
        %v4701 = vpop.f32.mrb[0].mxu0
        %v4702 = vadd.f32 %v4544, %v4701
        %v4703 = vpop.f32.mrb[0].mxu0
        %v4704 = vadd.f32 %v4548, %v4703
        %4705 = vmatprep.mubr.f32.mxu0 %v4440
        %4706 = vmatmul.mubr.f32.gmra.mrb[0].mxu0 %v4439
        %v4707 = vpop.f32.mrb[0].mxu0
        %v4708 = vadd.f32 %v4544, %v4707
        %v4709 = vpop.f32.mrb[0].mxu0
        %v4710 = vadd.f32 %v4548, %v4709
        %4711 = vmatprep.mubr.f32.mxu0 %v4442
        %4712 = vmatmul.mubr.f32.gmra.mrb[0].mxu0 %v4441
        %v4713 = vpop.f32.mrb[0].mxu0
        %v4714 = vadd.f32 %v4544, %v4713
        %v4715 = vpop.f32.mrb[0].mxu0
        %v4716 = vadd.f32 %v4548, %v4715
        %4717 = vmatprep.mubr.f32.mxu0 %v4444
        %4718 = vmatmul.mubr.f32.gmra.mrb[0].mxu0 %v4443
        %v4719 = vpop.f32.mrb[0].mxu0
        %v4720 = vadd.f32 %v4544, %v4719
        %v4721 = vpop.f32.mrb[0].mxu0
        %v4722 = vadd.f32 %v4548, %v4721
        %4723 = vmatprep.mubr.f32.mxu0 %v4446
        %4724 = vmatmul.mubr.f32.gmra.mrb[0].mxu0 %v4445
        %v4725 = vpop.f32.mrb[0].mxu0
        %v4726 = vadd.f32 %v4544, %v4725
        %v4727 = vpop.f32.mrb[0].mxu0
        %v4728 = vadd.f32 %v4548, %v4727
        %4729 = vmatprep.mubr.f32.mxu0 %v4448
        %4730 = vmatmul.mubr.f32.gmra.mrb[0].mxu0 %v4447
        %v4731 = vpop.f32.mrb[0].mxu0
        %v4732 = vadd.f32 %v4544, %v4731
        %v4733 = vpop.f32.mrb[0].mxu0
        %v4734 = vadd.f32 %v4548, %v4733
        %4735 = vmatprep.mubr.f32.mxu0 %v4450
        %4736 = vmatmul.mubr.f32.gmra.mrb[0].mxu0 %v4449
        %v4737 = vpop.f32.mrb[0].mxu0
        %v4738 = vadd.f32 %v4544, %v4737
        %v4739 = vpop.f32.mrb[0].mxu0
        %v4740 = vadd.f32 %v4548, %v4739
        %4741 = vmatprep.mubr.f32.mxu0 %v4452
        %4742 = vmatmul.mubr.f32.gmra.mrb[0].mxu0 %v4451
        %v4743 = vpop.f32.mrb[0].mxu0
        %v4744 = vadd.f32 %v4544, %v4743
        %v4745 = vpop.f32.mrb[0].mxu0
        %v4746 = vadd.f32 %v4548, %v4745
        %4747 = vmatprep.mubr.f32.mxu0 %v4454
        %4748 = vmatmul.mubr.f32.gmra.mrb[0].mxu0 %v4453
        %v4749 = vpop.f32.mrb[0].mxu0
        %v4750 = vadd.f32 %v4544, %v4749
        %v4751 = vpop.f32.mrb[0].mxu0
        %v4752 = vadd.f32 %v4548, %v4751
        %4753 = vmatprep.mubr.f32.mxu0 %v4456
        %4754 = vmatmul.mubr.f32.gmra.mrb[0].mxu0 %v4455
        %v4755 = vpop.f32.mrb[0].mxu0
        %v4756 = vadd.f32 %v4544, %v4755
        %v4757 = vpop.f32.mrb[0].mxu0
        %v4758 = vadd.f32 %v4548, %v4757
        %4759 = vmatprep.mubr.f32.mxu0 %v4458
        %4760 = vmatmul.mubr.f32.gmra.mrb[0].mxu0 %v4457
        %v4761 = vpop.f32.mrb[0].mxu0
        %v4762 = vadd.f32 %v4544, %v4761
        %v4763 = vpop.f32.mrb[0].mxu0
        %v4764 = vadd.f32 %v4548, %v4763
        %4765 = vmatprep.mubr.f32.mxu0 %v4460
        %4766 = vmatmul.mubr.f32.gmra.mrb[0].mxu0 %v4459
        %v4767 = vpop.f32.mrb[0].mxu0
        %v4768 = vadd.f32 %v4544, %v4767
        %v4769 = vpop.f32.mrb[0].mxu0
        %v4770 = vadd.f32 %v4548, %v4769
        %4771 = vmatprep.mubr.f32.mxu0 %v4462
        %4772 = vmatmul.mubr.f32.gmra.mrb[0].mxu0 %v4461
        %v4773 = vpop.f32.mrb[0].mxu0
        %v4774 = vadd.f32 %v4544, %v4773
        %v4775 = vpop.f32.mrb[0].mxu0
        %v4776 = vadd.f32 %v4548, %v4775
        %4777 = vmatprep.mubr.f32.mxu0 %v4464
        %4778 = vmatmul.mubr.f32.gmra.mrb[0].mxu0 %v4463
        %v4779 = vpop.f32.mrb[0].mxu0
        %v4780 = vadd.f32 %v4544, %v4779
        %v4781 = vpop.f32.mrb[0].mxu0
        %v4782 = vadd.f32 %v4548, %v4781
        %4783 = vmatprep.mubr.f32.mxu0 %v4466
        %4784 = vmatmul.mubr.f32.gmra.mrb[0].mxu0 %v4465
        %v4785 = vpop.f32.mrb[0].mxu0
        %v4786 = vadd.f32 %v4544, %v4785
        %v4787 = vpop.f32.mrb[0].mxu0
        %v4788 = vadd.f32 %v4548, %v4787
        %4789 = vmatprep.mubr.f32.mxu0 %v4468
        %4790 = vmatmul.mubr.f32.gmra.mrb[0].mxu0 %v4467
        %v4791 = vpop.f32.mrb[0].mxu0
        %v4792 = vadd.f32 %v4544, %v4791
        %v4793 = vpop.f32.mrb[0].mxu0
        %v4794 = vadd.f32 %v4548, %v4793
        %4795 = vmatprep.mubr.f32.mxu0 %v4470
        %4796 = vmatmul.mubr.f32.gmra.mrb[0].mxu0 %v4469
        %v4797 = vpop.f32.mrb[0].mxu0
        %v4798 = vadd.f32 %v4544, %v4797
        %v4799 = vpop.f32.mrb[0].mxu0
        %v4800 = vadd.f32 %v4548, %v4799
        %4801 = vmatprep.mubr.f32.mxu0 %v4472
        %4802 = vmatmul.mubr.f32.gmra.mrb[0].mxu0 %v4471
        %v4803 = vpop.f32.mrb[0].mxu0
        %v4804 = vadd.f32 %v4544, %v4803
        %v4805 = vpop.f32.mrb[0].mxu0
        %v4806 = vadd.f32 %v4548, %v4805
        %4807 = vdwg.mxu0
        %v4808 = vmul.f32 %v4618, 100.0
        %v4809 = vmul.f32 %v4620, 100.0
        %v4810 = vmul.f32 %v4624, 100.0
        %v4811 = vmul.f32 %v4626, 100.0
        %v4812 = vmul.f32 %v4630, 100.0
        %v4813 = vmul.f32 %v4632, 100.0
        %v4814 = vmul.f32 %v4636, 100.0
        %v4815 = vmul.f32 %v4638, 100.0
        %v4816 = vmul.f32 %v4642, 100.0
        %v4817 = vmul.f32 %v4644, 100.0
        %v4818 = vmul.f32 %v4648, 100.0
        %v4819 = vmul.f32 %v4650, 100.0
        %v4820 = vmul.f32 %v4654, 100.0
        %v4821 = vmul.f32 %v4656, 100.0
        %v4822 = vmul.f32 %v4660, 100.0
        %v4823 = vmul.f32 %v4662, 100.0
        %v4824 = vmul.f32 %v4666, 100.0
        %v4825 = vmul.f32 %v4668, 100.0
        %v4826 = vmul.f32 %v4672, 100.0
        %v4827 = vmul.f32 %v4674, 100.0
        %v4828 = vmul.f32 %v4678, 100.0
        %v4829 = vmul.f32 %v4680, 100.0
        %v4830 = vmul.f32 %v4684, 100.0
        %v4831 = vmul.f32 %v4686, 100.0
        %v4832 = vmul.f32 %v4690, 100.0
        %v4833 = vmul.f32 %v4692, 100.0
        %v4834 = vmul.f32 %v4696, 100.0
        %v4835 = vmul.f32 %v4698, 100.0
        %v4836 = vmul.f32 %v4702, 100.0
        %v4837 = vmul.f32 %v4704, 100.0
        %v4838 = vmul.f32 %v4708, 100.0
        %v4839 = vmul.f32 %v4710, 100.0
        %v4840 = vmul.f32 %v4714, 100.0
        %v4841 = vmul.f32 %v4716, 100.0
        %v4842 = vmul.f32 %v4720, 100.0
        %v4843 = vmul.f32 %v4722, 100.0
        %v4844 = vmul.f32 %v4726, 100.0
        %v4845 = vmul.f32 %v4728, 100.0
        %v4846 = vmul.f32 %v4732, 100.0
        %v4847 = vmul.f32 %v4734, 100.0
        %v4848 = vmul.f32 %v4738, 100.0
        %v4849 = vmul.f32 %v4740, 100.0
        %v4850 = vmul.f32 %v4744, 100.0
        %v4851 = vmul.f32 %v4746, 100.0
        %v4852 = vmul.f32 %v4750, 100.0
        %v4853 = vmul.f32 %v4752, 100.0
        %v4854 = vmul.f32 %v4756, 100.0
        %v4855 = vmul.f32 %v4758, 100.0
        %v4856 = vmul.f32 %v4762, 100.0
        %v4857 = vmul.f32 %v4764, 100.0
        %v4858 = vmul.f32 %v4768, 100.0
        %v4859 = vmul.f32 %v4770, 100.0
        %v4860 = vmul.f32 %v4774, 100.0
        %v4861 = vmul.f32 %v4776, 100.0
        %v4862 = vmul.f32 %v4780, 100.0
        %v4863 = vmul.f32 %v4782, 100.0
        %v4864 = vmul.f32 %v4786, 100.0
        %v4865 = vmul.f32 %v4788, 100.0
        %v4866 = vmul.f32 %v4792, 100.0
        %v4867 = vmul.f32 %v4794, 100.0
        %v4868 = vmul.f32 %v4798, 100.0
        %v4869 = vmul.f32 %v4800, 100.0
        %v4870 = vmul.f32 %v4804, 100.0
        %v4871 = vmul.f32 %v4806, 100.0
        %v4872 = vmin.f32 %v4808, 20.0
        %v4873 = vmin.f32 %v4809, 20.0
        %v4874 = vmin.f32 %v4810, 20.0
        %v4875 = vmin.f32 %v4811, 20.0
        %v4876 = vmin.f32 %v4812, 20.0
        %v4877 = vmin.f32 %v4813, 20.0
        %v4878 = vmin.f32 %v4814, 20.0
        %v4879 = vmin.f32 %v4815, 20.0
        %v4880 = vmin.f32 %v4816, 20.0
        %v4881 = vmin.f32 %v4817, 20.0
        %v4882 = vmin.f32 %v4818, 20.0
        %v4883 = vmin.f32 %v4819, 20.0
        %v4884 = vmin.f32 %v4820, 20.0
        %v4885 = vmin.f32 %v4821, 20.0
        %v4886 = vmin.f32 %v4822, 20.0
        %v4887 = vmin.f32 %v4823, 20.0
        %v4888 = vmin.f32 %v4824, 20.0
        %v4889 = vmin.f32 %v4825, 20.0
        %v4890 = vmin.f32 %v4826, 20.0
        %v4891 = vmin.f32 %v4827, 20.0
        %v4892 = vmin.f32 %v4828, 20.0
        %v4893 = vmin.f32 %v4829, 20.0
        %v4894 = vmin.f32 %v4830, 20.0
        %v4895 = vmin.f32 %v4831, 20.0
        %v4896 = vmin.f32 %v4832, 20.0
        %v4897 = vmin.f32 %v4833, 20.0
        %v4898 = vmin.f32 %v4834, 20.0
        %v4899 = vmin.f32 %v4835, 20.0
        %v4900 = vmin.f32 %v4836, 20.0
        %v4901 = vmin.f32 %v4837, 20.0
        %v4902 = vmin.f32 %v4838, 20.0
        %v4903 = vmin.f32 %v4839, 20.0
        %v4904 = vmin.f32 %v4840, 20.0
        %v4905 = vmin.f32 %v4841, 20.0
        %v4906 = vmin.f32 %v4842, 20.0
        %v4907 = vmin.f32 %v4843, 20.0
        %v4908 = vmin.f32 %v4844, 20.0
        %v4909 = vmin.f32 %v4845, 20.0
        %v4910 = vmin.f32 %v4846, 20.0
        %v4911 = vmin.f32 %v4847, 20.0
        %v4912 = vmin.f32 %v4848, 20.0
        %v4913 = vmin.f32 %v4849, 20.0
        %v4914 = vmin.f32 %v4850, 20.0
        %v4915 = vmin.f32 %v4851, 20.0
        %v4916 = vmin.f32 %v4852, 20.0
        %v4917 = vmin.f32 %v4853, 20.0
        %v4918 = vmin.f32 %v4854, 20.0
        %v4919 = vmin.f32 %v4855, 20.0
        %v4920 = vmin.f32 %v4856, 20.0
        %v4921 = vmin.f32 %v4857, 20.0
        %v4922 = vmin.f32 %v4858, 20.0
        %v4923 = vmin.f32 %v4859, 20.0
        %v4924 = vmin.f32 %v4860, 20.0
        %v4925 = vmin.f32 %v4861, 20.0
        %v4926 = vmin.f32 %v4862, 20.0
        %v4927 = vmin.f32 %v4863, 20.0
        %v4928 = vmin.f32 %v4864, 20.0
        %v4929 = vmin.f32 %v4865, 20.0
        %v4930 = vmin.f32 %v4866, 20.0
        %v4931 = vmin.f32 %v4867, 20.0
        %v4932 = vmin.f32 %v4868, 20.0
        %v4933 = vmin.f32 %v4869, 20.0
        %v4934 = vmin.f32 %v4870, 20.0
        %v4935 = vmin.f32 %v4871, 20.0
        %vm4936 = vcmp.gt.f32.partialorder %v4808, 20.0
        %vm4937 = vcmp.gt.f32.partialorder %v4809, 20.0
        %vm4938 = vcmp.gt.f32.partialorder %v4810, 20.0
        %vm4939 = vcmp.gt.f32.partialorder %v4811, 20.0
        %vm4940 = vcmp.gt.f32.partialorder %v4812, 20.0
        %vm4941 = vcmp.gt.f32.partialorder %v4813, 20.0
        %vm4942 = vcmp.gt.f32.partialorder %v4814, 20.0
        %vm4943 = vcmp.gt.f32.partialorder %v4815, 20.0
        %vm4944 = vcmp.gt.f32.partialorder %v4816, 20.0
        %vm4945 = vcmp.gt.f32.partialorder %v4817, 20.0
        %vm4946 = vcmp.gt.f32.partialorder %v4818, 20.0
        %vm4947 = vcmp.gt.f32.partialorder %v4819, 20.0
        %vm4948 = vcmp.gt.f32.partialorder %v4820, 20.0
        %vm4949 = vcmp.gt.f32.partialorder %v4821, 20.0
        %vm4950 = vcmp.gt.f32.partialorder %v4822, 20.0
        %vm4951 = vcmp.gt.f32.partialorder %v4823, 20.0
        %vm4952 = vcmp.gt.f32.partialorder %v4824, 20.0
        %vm4953 = vcmp.gt.f32.partialorder %v4825, 20.0
        %vm4954 = vcmp.gt.f32.partialorder %v4826, 20.0
        %vm4955 = vcmp.gt.f32.partialorder %v4827, 20.0
        %vm4956 = vcmp.gt.f32.partialorder %v4828, 20.0
        %vm4957 = vcmp.gt.f32.partialorder %v4829, 20.0
        %vm4958 = vcmp.gt.f32.partialorder %v4830, 20.0
        %vm4959 = vcmp.gt.f32.partialorder %v4831, 20.0
        %vm4960 = vcmp.gt.f32.partialorder %v4832, 20.0
        %vm4961 = vcmp.gt.f32.partialorder %v4833, 20.0
        %vm4962 = vcmp.gt.f32.partialorder %v4834, 20.0
        %vm4963 = vcmp.gt.f32.partialorder %v4835, 20.0
        %vm4964 = vcmp.gt.f32.partialorder %v4836, 20.0
        %vm4965 = vcmp.gt.f32.partialorder %v4837, 20.0
        %vm4966 = vcmp.gt.f32.partialorder %v4838, 20.0
        %vm4967 = vcmp.gt.f32.partialorder %v4839, 20.0
        %vm4968 = vcmp.gt.f32.partialorder %v4840, 20.0
        %vm4969 = vcmp.gt.f32.partialorder %v4841, 20.0
        %vm4970 = vcmp.gt.f32.partialorder %v4842, 20.0
        %vm4971 = vcmp.gt.f32.partialorder %v4843, 20.0
        %vm4972 = vcmp.gt.f32.partialorder %v4844, 20.0
        %vm4973 = vcmp.gt.f32.partialorder %v4845, 20.0
        %vm4974 = vcmp.gt.f32.partialorder %v4846, 20.0
        %vm4975 = vcmp.gt.f32.partialorder %v4847, 20.0
        %vm4976 = vcmp.gt.f32.partialorder %v4848, 20.0
        %vm4977 = vcmp.gt.f32.partialorder %v4849, 20.0
        %vm4978 = vcmp.gt.f32.partialorder %v4850, 20.0
        %vm4979 = vcmp.gt.f32.partialorder %v4851, 20.0
        %vm4980 = vcmp.gt.f32.partialorder %v4852, 20.0
        %vm4981 = vcmp.gt.f32.partialorder %v4853, 20.0
        %vm4982 = vcmp.gt.f32.partialorder %v4854, 20.0
        %vm4983 = vcmp.gt.f32.partialorder %v4855, 20.0
        %vm4984 = vcmp.gt.f32.partialorder %v4856, 20.0
        %vm4985 = vcmp.gt.f32.partialorder %v4857, 20.0
        %vm4986 = vcmp.gt.f32.partialorder %v4858, 20.0
        %vm4987 = vcmp.gt.f32.partialorder %v4859, 20.0
        %vm4988 = vcmp.gt.f32.partialorder %v4860, 20.0
        %vm4989 = vcmp.gt.f32.partialorder %v4861, 20.0
        %vm4990 = vcmp.gt.f32.partialorder %v4862, 20.0
        %vm4991 = vcmp.gt.f32.partialorder %v4863, 20.0
        %vm4992 = vcmp.gt.f32.partialorder %v4864, 20.0
        %vm4993 = vcmp.gt.f32.partialorder %v4865, 20.0
        %vm4994 = vcmp.gt.f32.partialorder %v4866, 20.0
        %vm4995 = vcmp.gt.f32.partialorder %v4867, 20.0
        %vm4996 = vcmp.gt.f32.partialorder %v4868, 20.0
        %vm4997 = vcmp.gt.f32.partialorder %v4869, 20.0
        %vm4998 = vcmp.gt.f32.partialorder %v4870, 20.0
        %vm4999 = vcmp.gt.f32.partialorder %v4871, 20.0
        %v5000 = vmul.f32 %v4872, 1.442695
        %v5001 = vpow.pop %v5000
        %v5002 = vmul.f32 %v4873, 1.442695
        %v5003 = vpow.pop %v5002
        %v5004 = vmul.f32 %v4874, 1.442695
        %v5005 = vpow.pop %v5004
        %v5006 = vmul.f32 %v4875, 1.442695
        %v5007 = vpow.pop %v5006
        %v5008 = vmul.f32 %v4876, 1.442695
        %v5009 = vpow.pop %v5008
        %v5010 = vmul.f32 %v4877, 1.442695
        %v5011 = vpow.pop %v5010
        %v5012 = vmul.f32 %v4878, 1.442695
        %v5013 = vpow.pop %v5012
        %v5014 = vmul.f32 %v4879, 1.442695
        %v5015 = vpow.pop %v5014
        %v5016 = vmul.f32 %v4880, 1.442695
        %v5017 = vpow.pop %v5016
        %v5018 = vmul.f32 %v4881, 1.442695
        %v5019 = vpow.pop %v5018
        %v5020 = vmul.f32 %v4882, 1.442695
        %v5021 = vpow.pop %v5020
        %v5022 = vmul.f32 %v4883, 1.442695
        %v5023 = vpow.pop %v5022
        %v5024 = vmul.f32 %v4884, 1.442695
        %v5025 = vpow.pop %v5024
        %v5026 = vmul.f32 %v4885, 1.442695
        %v5027 = vpow.pop %v5026
        %v5028 = vmul.f32 %v4886, 1.442695
        %v5029 = vpow.pop %v5028
        %v5030 = vmul.f32 %v4887, 1.442695
        %v5031 = vpow.pop %v5030
        %v5032 = vmul.f32 %v4888, 1.442695
        %v5033 = vpow.pop %v5032
        %v5034 = vmul.f32 %v4889, 1.442695
        %v5035 = vpow.pop %v5034
        %v5036 = vmul.f32 %v4890, 1.442695
        %v5037 = vpow.pop %v5036
        %v5038 = vmul.f32 %v4891, 1.442695
        %v5039 = vpow.pop %v5038
        %v5040 = vmul.f32 %v4892, 1.442695
        %v5041 = vpow.pop %v5040
        %v5042 = vmul.f32 %v4893, 1.442695
        %v5043 = vpow.pop %v5042
        %v5044 = vmul.f32 %v4894, 1.442695
        %v5045 = vpow.pop %v5044
        %v5046 = vmul.f32 %v4895, 1.442695
        %v5047 = vpow.pop %v5046
        %v5048 = vmul.f32 %v4896, 1.442695
        %v5049 = vpow.pop %v5048
        %v5050 = vmul.f32 %v4897, 1.442695
        %v5051 = vpow.pop %v5050
        %v5052 = vmul.f32 %v4898, 1.442695
        %v5053 = vpow.pop %v5052
        %v5054 = vmul.f32 %v4899, 1.442695
        %v5055 = vpow.pop %v5054
        %v5056 = vmul.f32 %v4900, 1.442695
        %v5057 = vpow.pop %v5056
        %v5058 = vmul.f32 %v4901, 1.442695
        %v5059 = vpow.pop %v5058
        %v5060 = vmul.f32 %v4902, 1.442695
        %v5061 = vpow.pop %v5060
        %v5062 = vmul.f32 %v4903, 1.442695
        %v5063 = vpow.pop %v5062
        %v5064 = vmul.f32 %v4904, 1.442695
        %v5065 = vpow.pop %v5064
        %v5066 = vmul.f32 %v4905, 1.442695
        %v5067 = vpow.pop %v5066
        %v5068 = vmul.f32 %v4906, 1.442695
        %v5069 = vpow.pop %v5068
        %v5070 = vmul.f32 %v4907, 1.442695
        %v5071 = vpow.pop %v5070
        %v5072 = vmul.f32 %v4908, 1.442695
        %v5073 = vpow.pop %v5072
        %v5074 = vmul.f32 %v4909, 1.442695
        %v5075 = vpow.pop %v5074
        %v5076 = vmul.f32 %v4910, 1.442695
        %v5077 = vpow.pop %v5076
        %v5078 = vmul.f32 %v4911, 1.442695
        %v5079 = vpow.pop %v5078
        %v5080 = vmul.f32 %v4912, 1.442695
        %v5081 = vpow.pop %v5080
        %v5082 = vmul.f32 %v4913, 1.442695
        %v5083 = vpow.pop %v5082
        %v5084 = vmul.f32 %v4914, 1.442695
        %v5085 = vpow.pop %v5084
        %v5086 = vmul.f32 %v4915, 1.442695
        %v5087 = vpow.pop %v5086
        %v5088 = vmul.f32 %v4916, 1.442695
        %v5089 = vpow.pop %v5088
        %v5090 = vmul.f32 %v4917, 1.442695
        %v5091 = vpow.pop %v5090
        %v5092 = vmul.f32 %v4918, 1.442695
        %v5093 = vpow.pop %v5092
        %v5094 = vmul.f32 %v4919, 1.442695
        %v5095 = vpow.pop %v5094
        %v5096 = vmul.f32 %v4920, 1.442695
        %v5097 = vpow.pop %v5096
        %v5098 = vmul.f32 %v4921, 1.442695
        %v5099 = vpow.pop %v5098
        %v5100 = vmul.f32 %v4922, 1.442695
        %v5101 = vpow.pop %v5100
        %v5102 = vmul.f32 %v4923, 1.442695
        %v5103 = vpow.pop %v5102
        %v5104 = vmul.f32 %v4924, 1.442695
        %v5105 = vpow.pop %v5104
        %v5106 = vmul.f32 %v4925, 1.442695
        %v5107 = vpow.pop %v5106
        %v5108 = vmul.f32 %v4926, 1.442695
        %v5109 = vpow.pop %v5108
        %v5110 = vmul.f32 %v4927, 1.442695
        %v5111 = vpow.pop %v5110
        %v5112 = vmul.f32 %v4928, 1.442695
        %v5113 = vpow.pop %v5112
        %v5114 = vmul.f32 %v4929, 1.442695
        %v5115 = vpow.pop %v5114
        %v5116 = vmul.f32 %v4930, 1.442695
        %v5117 = vpow.pop %v5116
        %v5118 = vmul.f32 %v4931, 1.442695
        %v5119 = vpow.pop %v5118
        %v5120 = vmul.f32 %v4932, 1.442695
        %v5121 = vpow.pop %v5120
        %v5122 = vmul.f32 %v4933, 1.442695
        %v5123 = vpow.pop %v5122
        %v5124 = vmul.f32 %v4934, 1.442695
        %v5125 = vpow.pop %v5124
        %v5126 = vmul.f32 %v4935, 1.442695
        %v5127 = vpow.pop %v5126
        %v5128 = vadd.f32 %v5001, 1.0
        %v5129 = vlog2.pop %v5128
        %v5130 = vmul.f32 %v5129, 0.6931472
        %v5131 = vmul.f32 -0.5, %v5001
        %v5132 = vadd.f32 %v5131, 1.0
        %v5133 = vmul.f32 %v5132, %v5001
        %v5134 = vand.u32 2147483647, %v5001
        %vm5135 = vcmp.lt.f32.partialorder %v5134, 0.0004427343
        %v5136 = vsel %vm5135, %v5133, %v5130
        %v5137 = vadd.f32 %v5003, 1.0
        %v5138 = vlog2.pop %v5137
        %v5139 = vmul.f32 %v5138, 0.6931472
        %v5140 = vmul.f32 -0.5, %v5003
        %v5141 = vadd.f32 %v5140, 1.0
        %v5142 = vmul.f32 %v5141, %v5003
        %v5143 = vand.u32 2147483647, %v5003
        %vm5144 = vcmp.lt.f32.partialorder %v5143, 0.0004427343
        %v5145 = vsel %vm5144, %v5142, %v5139
        %v5146 = vadd.f32 %v5005, 1.0
        %v5147 = vlog2.pop %v5146
        %v5148 = vmul.f32 %v5147, 0.6931472
        %v5149 = vmul.f32 -0.5, %v5005
        %v5150 = vadd.f32 %v5149, 1.0
        %v5151 = vmul.f32 %v5150, %v5005
        %v5152 = vand.u32 2147483647, %v5005
        %vm5153 = vcmp.lt.f32.partialorder %v5152, 0.0004427343
        %v5154 = vsel %vm5153, %v5151, %v5148
        %v5155 = vadd.f32 %v5007, 1.0
        %v5156 = vlog2.pop %v5155
        %v5157 = vmul.f32 %v5156, 0.6931472
        %v5158 = vmul.f32 -0.5, %v5007
        %v5159 = vadd.f32 %v5158, 1.0
        %v5160 = vmul.f32 %v5159, %v5007
        %v5161 = vand.u32 2147483647, %v5007
        %vm5162 = vcmp.lt.f32.partialorder %v5161, 0.0004427343
        %v5163 = vsel %vm5162, %v5160, %v5157
        %v5164 = vadd.f32 %v5009, 1.0
        %v5165 = vlog2.pop %v5164
        %v5166 = vmul.f32 %v5165, 0.6931472
        %v5167 = vmul.f32 -0.5, %v5009
        %v5168 = vadd.f32 %v5167, 1.0
        %v5169 = vmul.f32 %v5168, %v5009
        %v5170 = vand.u32 2147483647, %v5009
        %vm5171 = vcmp.lt.f32.partialorder %v5170, 0.0004427343
        %v5172 = vsel %vm5171, %v5169, %v5166
        %v5173 = vadd.f32 %v5011, 1.0
        %v5174 = vlog2.pop %v5173
        %v5175 = vmul.f32 %v5174, 0.6931472
        %v5176 = vmul.f32 -0.5, %v5011
        %v5177 = vadd.f32 %v5176, 1.0
        %v5178 = vmul.f32 %v5177, %v5011
        %v5179 = vand.u32 2147483647, %v5011
        %vm5180 = vcmp.lt.f32.partialorder %v5179, 0.0004427343
        %v5181 = vsel %vm5180, %v5178, %v5175
        %v5182 = vadd.f32 %v5013, 1.0
        %v5183 = vlog2.pop %v5182
        %v5184 = vmul.f32 %v5183, 0.6931472
        %v5185 = vmul.f32 -0.5, %v5013
        %v5186 = vadd.f32 %v5185, 1.0
        %v5187 = vmul.f32 %v5186, %v5013
        %v5188 = vand.u32 2147483647, %v5013
        %vm5189 = vcmp.lt.f32.partialorder %v5188, 0.0004427343
        %v5190 = vsel %vm5189, %v5187, %v5184
        %v5191 = vadd.f32 %v5015, 1.0
        %v5192 = vlog2.pop %v5191
        %v5193 = vmul.f32 %v5192, 0.6931472
        %v5194 = vmul.f32 -0.5, %v5015
        %v5195 = vadd.f32 %v5194, 1.0
        %v5196 = vmul.f32 %v5195, %v5015
        %v5197 = vand.u32 2147483647, %v5015
        %vm5198 = vcmp.lt.f32.partialorder %v5197, 0.0004427343
        %v5199 = vsel %vm5198, %v5196, %v5193
        %v5200 = vadd.f32 %v5017, 1.0
        %v5201 = vlog2.pop %v5200
        %v5202 = vmul.f32 %v5201, 0.6931472
        %v5203 = vmul.f32 -0.5, %v5017
        %v5204 = vadd.f32 %v5203, 1.0
        %v5205 = vmul.f32 %v5204, %v5017
        %v5206 = vand.u32 2147483647, %v5017
        %vm5207 = vcmp.lt.f32.partialorder %v5206, 0.0004427343
        %v5208 = vsel %vm5207, %v5205, %v5202
        %v5209 = vadd.f32 %v5019, 1.0
        %v5210 = vlog2.pop %v5209
        %v5211 = vmul.f32 %v5210, 0.6931472
        %v5212 = vmul.f32 -0.5, %v5019
        %v5213 = vadd.f32 %v5212, 1.0
        %v5214 = vmul.f32 %v5213, %v5019
        %v5215 = vand.u32 2147483647, %v5019
        %vm5216 = vcmp.lt.f32.partialorder %v5215, 0.0004427343
        %v5217 = vsel %vm5216, %v5214, %v5211
        %v5218 = vadd.f32 %v5021, 1.0
        %v5219 = vlog2.pop %v5218
        %v5220 = vmul.f32 %v5219, 0.6931472
        %v5221 = vmul.f32 -0.5, %v5021
        %v5222 = vadd.f32 %v5221, 1.0
        %v5223 = vmul.f32 %v5222, %v5021
        %v5224 = vand.u32 2147483647, %v5021
        %vm5225 = vcmp.lt.f32.partialorder %v5224, 0.0004427343
        %v5226 = vsel %vm5225, %v5223, %v5220
        %v5227 = vadd.f32 %v5023, 1.0
        %v5228 = vlog2.pop %v5227
        %v5229 = vmul.f32 %v5228, 0.6931472
        %v5230 = vmul.f32 -0.5, %v5023
        %v5231 = vadd.f32 %v5230, 1.0
        %v5232 = vmul.f32 %v5231, %v5023
        %v5233 = vand.u32 2147483647, %v5023
        %vm5234 = vcmp.lt.f32.partialorder %v5233, 0.0004427343
        %v5235 = vsel %vm5234, %v5232, %v5229
        %v5236 = vadd.f32 %v5025, 1.0
        %v5237 = vlog2.pop %v5236
        %v5238 = vmul.f32 %v5237, 0.6931472
        %v5239 = vmul.f32 -0.5, %v5025
        %v5240 = vadd.f32 %v5239, 1.0
        %v5241 = vmul.f32 %v5240, %v5025
        %v5242 = vand.u32 2147483647, %v5025
        %vm5243 = vcmp.lt.f32.partialorder %v5242, 0.0004427343
        %v5244 = vsel %vm5243, %v5241, %v5238
        %v5245 = vadd.f32 %v5027, 1.0
        %v5246 = vlog2.pop %v5245
        %v5247 = vmul.f32 %v5246, 0.6931472
        %v5248 = vmul.f32 -0.5, %v5027
        %v5249 = vadd.f32 %v5248, 1.0
        %v5250 = vmul.f32 %v5249, %v5027
        %v5251 = vand.u32 2147483647, %v5027
        %vm5252 = vcmp.lt.f32.partialorder %v5251, 0.0004427343
        %v5253 = vsel %vm5252, %v5250, %v5247
        %v5254 = vadd.f32 %v5029, 1.0
        %v5255 = vlog2.pop %v5254
        %v5256 = vmul.f32 %v5255, 0.6931472
        %v5257 = vmul.f32 -0.5, %v5029
        %v5258 = vadd.f32 %v5257, 1.0
        %v5259 = vmul.f32 %v5258, %v5029
        %v5260 = vand.u32 2147483647, %v5029
        %vm5261 = vcmp.lt.f32.partialorder %v5260, 0.0004427343
        %v5262 = vsel %vm5261, %v5259, %v5256
        %v5263 = vadd.f32 %v5031, 1.0
        %v5264 = vlog2.pop %v5263
        %v5265 = vmul.f32 %v5264, 0.6931472
        %v5266 = vmul.f32 -0.5, %v5031
        %v5267 = vadd.f32 %v5266, 1.0
        %v5268 = vmul.f32 %v5267, %v5031
        %v5269 = vand.u32 2147483647, %v5031
        %vm5270 = vcmp.lt.f32.partialorder %v5269, 0.0004427343
        %v5271 = vsel %vm5270, %v5268, %v5265
        %v5272 = vadd.f32 %v5033, 1.0
        %v5273 = vlog2.pop %v5272
        %v5274 = vmul.f32 %v5273, 0.6931472
        %v5275 = vmul.f32 -0.5, %v5033
        %v5276 = vadd.f32 %v5275, 1.0
        %v5277 = vmul.f32 %v5276, %v5033
        %v5278 = vand.u32 2147483647, %v5033
        %vm5279 = vcmp.lt.f32.partialorder %v5278, 0.0004427343
        %v5280 = vsel %vm5279, %v5277, %v5274
        %v5281 = vadd.f32 %v5035, 1.0
        %v5282 = vlog2.pop %v5281
        %v5283 = vmul.f32 %v5282, 0.6931472
        %v5284 = vmul.f32 -0.5, %v5035
        %v5285 = vadd.f32 %v5284, 1.0
        %v5286 = vmul.f32 %v5285, %v5035
        %v5287 = vand.u32 2147483647, %v5035
        %vm5288 = vcmp.lt.f32.partialorder %v5287, 0.0004427343
        %v5289 = vsel %vm5288, %v5286, %v5283
        %v5290 = vadd.f32 %v5037, 1.0
        %v5291 = vlog2.pop %v5290
        %v5292 = vmul.f32 %v5291, 0.6931472
        %v5293 = vmul.f32 -0.5, %v5037
        %v5294 = vadd.f32 %v5293, 1.0
        %v5295 = vmul.f32 %v5294, %v5037
        %v5296 = vand.u32 2147483647, %v5037
        %vm5297 = vcmp.lt.f32.partialorder %v5296, 0.0004427343
        %v5298 = vsel %vm5297, %v5295, %v5292
        %v5299 = vadd.f32 %v5039, 1.0
        %v5300 = vlog2.pop %v5299
        %v5301 = vmul.f32 %v5300, 0.6931472
        %v5302 = vmul.f32 -0.5, %v5039
        %v5303 = vadd.f32 %v5302, 1.0
        %v5304 = vmul.f32 %v5303, %v5039
        %v5305 = vand.u32 2147483647, %v5039
        %vm5306 = vcmp.lt.f32.partialorder %v5305, 0.0004427343
        %v5307 = vsel %vm5306, %v5304, %v5301
        %v5308 = vadd.f32 %v5041, 1.0
        %v5309 = vlog2.pop %v5308
        %v5310 = vmul.f32 %v5309, 0.6931472
        %v5311 = vmul.f32 -0.5, %v5041
        %v5312 = vadd.f32 %v5311, 1.0
        %v5313 = vmul.f32 %v5312, %v5041
        %v5314 = vand.u32 2147483647, %v5041
        %vm5315 = vcmp.lt.f32.partialorder %v5314, 0.0004427343
        %v5316 = vsel %vm5315, %v5313, %v5310
        %v5317 = vadd.f32 %v5043, 1.0
        %v5318 = vlog2.pop %v5317
        %v5319 = vmul.f32 %v5318, 0.6931472
        %v5320 = vmul.f32 -0.5, %v5043
        %v5321 = vadd.f32 %v5320, 1.0
        %v5322 = vmul.f32 %v5321, %v5043
        %v5323 = vand.u32 2147483647, %v5043
        %vm5324 = vcmp.lt.f32.partialorder %v5323, 0.0004427343
        %v5325 = vsel %vm5324, %v5322, %v5319
        %v5326 = vadd.f32 %v5045, 1.0
        %v5327 = vlog2.pop %v5326
        %v5328 = vmul.f32 %v5327, 0.6931472
        %v5329 = vmul.f32 -0.5, %v5045
        %v5330 = vadd.f32 %v5329, 1.0
        %v5331 = vmul.f32 %v5330, %v5045
        %v5332 = vand.u32 2147483647, %v5045
        %vm5333 = vcmp.lt.f32.partialorder %v5332, 0.0004427343
        %v5334 = vsel %vm5333, %v5331, %v5328
        %v5335 = vadd.f32 %v5047, 1.0
        %v5336 = vlog2.pop %v5335
        %v5337 = vmul.f32 %v5336, 0.6931472
        %v5338 = vmul.f32 -0.5, %v5047
        %v5339 = vadd.f32 %v5338, 1.0
        %v5340 = vmul.f32 %v5339, %v5047
        %v5341 = vand.u32 2147483647, %v5047
        %vm5342 = vcmp.lt.f32.partialorder %v5341, 0.0004427343
        %v5343 = vsel %vm5342, %v5340, %v5337
        %v5344 = vadd.f32 %v5049, 1.0
        %v5345 = vlog2.pop %v5344
        %v5346 = vmul.f32 %v5345, 0.6931472
        %v5347 = vmul.f32 -0.5, %v5049
        %v5348 = vadd.f32 %v5347, 1.0
        %v5349 = vmul.f32 %v5348, %v5049
        %v5350 = vand.u32 2147483647, %v5049
        %vm5351 = vcmp.lt.f32.partialorder %v5350, 0.0004427343
        %v5352 = vsel %vm5351, %v5349, %v5346
        %v5353 = vadd.f32 %v5051, 1.0
        %v5354 = vlog2.pop %v5353
        %v5355 = vmul.f32 %v5354, 0.6931472
        %v5356 = vmul.f32 -0.5, %v5051
        %v5357 = vadd.f32 %v5356, 1.0
        %v5358 = vmul.f32 %v5357, %v5051
        %v5359 = vand.u32 2147483647, %v5051
        %vm5360 = vcmp.lt.f32.partialorder %v5359, 0.0004427343
        %v5361 = vsel %vm5360, %v5358, %v5355
        %v5362 = vadd.f32 %v5053, 1.0
        %v5363 = vlog2.pop %v5362
        %v5364 = vmul.f32 %v5363, 0.6931472
        %v5365 = vmul.f32 -0.5, %v5053
        %v5366 = vadd.f32 %v5365, 1.0
        %v5367 = vmul.f32 %v5366, %v5053
        %v5368 = vand.u32 2147483647, %v5053
        %vm5369 = vcmp.lt.f32.partialorder %v5368, 0.0004427343
        %v5370 = vsel %vm5369, %v5367, %v5364
        %v5371 = vadd.f32 %v5055, 1.0
        %v5372 = vlog2.pop %v5371
        %v5373 = vmul.f32 %v5372, 0.6931472
        %v5374 = vmul.f32 -0.5, %v5055
        %v5375 = vadd.f32 %v5374, 1.0
        %v5376 = vmul.f32 %v5375, %v5055
        %v5377 = vand.u32 2147483647, %v5055
        %vm5378 = vcmp.lt.f32.partialorder %v5377, 0.0004427343
        %v5379 = vsel %vm5378, %v5376, %v5373
        %v5380 = vadd.f32 %v5057, 1.0
        %v5381 = vlog2.pop %v5380
        %v5382 = vmul.f32 %v5381, 0.6931472
        %v5383 = vmul.f32 -0.5, %v5057
        %v5384 = vadd.f32 %v5383, 1.0
        %v5385 = vmul.f32 %v5384, %v5057
        %v5386 = vand.u32 2147483647, %v5057
        %vm5387 = vcmp.lt.f32.partialorder %v5386, 0.0004427343
        %v5388 = vsel %vm5387, %v5385, %v5382
        %v5389 = vadd.f32 %v5059, 1.0
        %v5390 = vlog2.pop %v5389
        %v5391 = vmul.f32 %v5390, 0.6931472
        %v5392 = vmul.f32 -0.5, %v5059
        %v5393 = vadd.f32 %v5392, 1.0
        %v5394 = vmul.f32 %v5393, %v5059
        %v5395 = vand.u32 2147483647, %v5059
        %vm5396 = vcmp.lt.f32.partialorder %v5395, 0.0004427343
        %v5397 = vsel %vm5396, %v5394, %v5391
        %v5398 = vadd.f32 %v5061, 1.0
        %v5399 = vlog2.pop %v5398
        %v5400 = vmul.f32 %v5399, 0.6931472
        %v5401 = vmul.f32 -0.5, %v5061
        %v5402 = vadd.f32 %v5401, 1.0
        %v5403 = vmul.f32 %v5402, %v5061
        %v5404 = vand.u32 2147483647, %v5061
        %vm5405 = vcmp.lt.f32.partialorder %v5404, 0.0004427343
        %v5406 = vsel %vm5405, %v5403, %v5400
        %v5407 = vadd.f32 %v5063, 1.0
        %v5408 = vlog2.pop %v5407
        %v5409 = vmul.f32 %v5408, 0.6931472
        %v5410 = vmul.f32 -0.5, %v5063
        %v5411 = vadd.f32 %v5410, 1.0
        %v5412 = vmul.f32 %v5411, %v5063
        %v5413 = vand.u32 2147483647, %v5063
        %vm5414 = vcmp.lt.f32.partialorder %v5413, 0.0004427343
        %v5415 = vsel %vm5414, %v5412, %v5409
        %v5416 = vadd.f32 %v5065, 1.0
        %v5417 = vlog2.pop %v5416
        %v5418 = vmul.f32 %v5417, 0.6931472
        %v5419 = vmul.f32 -0.5, %v5065
        %v5420 = vadd.f32 %v5419, 1.0
        %v5421 = vmul.f32 %v5420, %v5065
        %v5422 = vand.u32 2147483647, %v5065
        %vm5423 = vcmp.lt.f32.partialorder %v5422, 0.0004427343
        %v5424 = vsel %vm5423, %v5421, %v5418
        %v5425 = vadd.f32 %v5067, 1.0
        %v5426 = vlog2.pop %v5425
        %v5427 = vmul.f32 %v5426, 0.6931472
        %v5428 = vmul.f32 -0.5, %v5067
        %v5429 = vadd.f32 %v5428, 1.0
        %v5430 = vmul.f32 %v5429, %v5067
        %v5431 = vand.u32 2147483647, %v5067
        %vm5432 = vcmp.lt.f32.partialorder %v5431, 0.0004427343
        %v5433 = vsel %vm5432, %v5430, %v5427
        %v5434 = vadd.f32 %v5069, 1.0
        %v5435 = vlog2.pop %v5434
        %v5436 = vmul.f32 %v5435, 0.6931472
        %v5437 = vmul.f32 -0.5, %v5069
        %v5438 = vadd.f32 %v5437, 1.0
        %v5439 = vmul.f32 %v5438, %v5069
        %v5440 = vand.u32 2147483647, %v5069
        %vm5441 = vcmp.lt.f32.partialorder %v5440, 0.0004427343
        %v5442 = vsel %vm5441, %v5439, %v5436
        %v5443 = vadd.f32 %v5071, 1.0
        %v5444 = vlog2.pop %v5443
        %v5445 = vmul.f32 %v5444, 0.6931472
        %v5446 = vmul.f32 -0.5, %v5071
        %v5447 = vadd.f32 %v5446, 1.0
        %v5448 = vmul.f32 %v5447, %v5071
        %v5449 = vand.u32 2147483647, %v5071
        %vm5450 = vcmp.lt.f32.partialorder %v5449, 0.0004427343
        %v5451 = vsel %vm5450, %v5448, %v5445
        %v5452 = vadd.f32 %v5073, 1.0
        %v5453 = vlog2.pop %v5452
        %v5454 = vmul.f32 %v5453, 0.6931472
        %v5455 = vmul.f32 -0.5, %v5073
        %v5456 = vadd.f32 %v5455, 1.0
        %v5457 = vmul.f32 %v5456, %v5073
        %v5458 = vand.u32 2147483647, %v5073
        %vm5459 = vcmp.lt.f32.partialorder %v5458, 0.0004427343
        %v5460 = vsel %vm5459, %v5457, %v5454
        %v5461 = vadd.f32 %v5075, 1.0
        %v5462 = vlog2.pop %v5461
        %v5463 = vmul.f32 %v5462, 0.6931472
        %v5464 = vmul.f32 -0.5, %v5075
        %v5465 = vadd.f32 %v5464, 1.0
        %v5466 = vmul.f32 %v5465, %v5075
        %v5467 = vand.u32 2147483647, %v5075
        %vm5468 = vcmp.lt.f32.partialorder %v5467, 0.0004427343
        %v5469 = vsel %vm5468, %v5466, %v5463
        %v5470 = vadd.f32 %v5077, 1.0
        %v5471 = vlog2.pop %v5470
        %v5472 = vmul.f32 %v5471, 0.6931472
        %v5473 = vmul.f32 -0.5, %v5077
        %v5474 = vadd.f32 %v5473, 1.0
        %v5475 = vmul.f32 %v5474, %v5077
        %v5476 = vand.u32 2147483647, %v5077
        %vm5477 = vcmp.lt.f32.partialorder %v5476, 0.0004427343
        %v5478 = vsel %vm5477, %v5475, %v5472
        %v5479 = vadd.f32 %v5079, 1.0
        %v5480 = vlog2.pop %v5479
        %v5481 = vmul.f32 %v5480, 0.6931472
        %v5482 = vmul.f32 -0.5, %v5079
        %v5483 = vadd.f32 %v5482, 1.0
        %v5484 = vmul.f32 %v5483, %v5079
        %v5485 = vand.u32 2147483647, %v5079
        %vm5486 = vcmp.lt.f32.partialorder %v5485, 0.0004427343
        %v5487 = vsel %vm5486, %v5484, %v5481
        %v5488 = vadd.f32 %v5081, 1.0
        %v5489 = vlog2.pop %v5488
        %v5490 = vmul.f32 %v5489, 0.6931472
        %v5491 = vmul.f32 -0.5, %v5081
        %v5492 = vadd.f32 %v5491, 1.0
        %v5493 = vmul.f32 %v5492, %v5081
        %v5494 = vand.u32 2147483647, %v5081
        %vm5495 = vcmp.lt.f32.partialorder %v5494, 0.0004427343
        %v5496 = vsel %vm5495, %v5493, %v5490
        %v5497 = vadd.f32 %v5083, 1.0
        %v5498 = vlog2.pop %v5497
        %v5499 = vmul.f32 %v5498, 0.6931472
        %v5500 = vmul.f32 -0.5, %v5083
        %v5501 = vadd.f32 %v5500, 1.0
        %v5502 = vmul.f32 %v5501, %v5083
        %v5503 = vand.u32 2147483647, %v5083
        %vm5504 = vcmp.lt.f32.partialorder %v5503, 0.0004427343
        %v5505 = vsel %vm5504, %v5502, %v5499
        %v5506 = vadd.f32 %v5085, 1.0
        %v5507 = vlog2.pop %v5506
        %v5508 = vmul.f32 %v5507, 0.6931472
        %v5509 = vmul.f32 -0.5, %v5085
        %v5510 = vadd.f32 %v5509, 1.0
        %v5511 = vmul.f32 %v5510, %v5085
        %v5512 = vand.u32 2147483647, %v5085
        %vm5513 = vcmp.lt.f32.partialorder %v5512, 0.0004427343
        %v5514 = vsel %vm5513, %v5511, %v5508
        %v5515 = vadd.f32 %v5087, 1.0
        %v5516 = vlog2.pop %v5515
        %v5517 = vmul.f32 %v5516, 0.6931472
        %v5518 = vmul.f32 -0.5, %v5087
        %v5519 = vadd.f32 %v5518, 1.0
        %v5520 = vmul.f32 %v5519, %v5087
        %v5521 = vand.u32 2147483647, %v5087
        %vm5522 = vcmp.lt.f32.partialorder %v5521, 0.0004427343
        %v5523 = vsel %vm5522, %v5520, %v5517
        %v5524 = vadd.f32 %v5089, 1.0
        %v5525 = vlog2.pop %v5524
        %v5526 = vmul.f32 %v5525, 0.6931472
        %v5527 = vmul.f32 -0.5, %v5089
        %v5528 = vadd.f32 %v5527, 1.0
        %v5529 = vmul.f32 %v5528, %v5089
        %v5530 = vand.u32 2147483647, %v5089
        %vm5531 = vcmp.lt.f32.partialorder %v5530, 0.0004427343
        %v5532 = vsel %vm5531, %v5529, %v5526
        %v5533 = vadd.f32 %v5091, 1.0
        %v5534 = vlog2.pop %v5533
        %v5535 = vmul.f32 %v5534, 0.6931472
        %v5536 = vmul.f32 -0.5, %v5091
        %v5537 = vadd.f32 %v5536, 1.0
        %v5538 = vmul.f32 %v5537, %v5091
        %v5539 = vand.u32 2147483647, %v5091
        %vm5540 = vcmp.lt.f32.partialorder %v5539, 0.0004427343
        %v5541 = vsel %vm5540, %v5538, %v5535
        %v5542 = vadd.f32 %v5093, 1.0
        %v5543 = vlog2.pop %v5542
        %v5544 = vmul.f32 %v5543, 0.6931472
        %v5545 = vmul.f32 -0.5, %v5093
        %v5546 = vadd.f32 %v5545, 1.0
        %v5547 = vmul.f32 %v5546, %v5093
        %v5548 = vand.u32 2147483647, %v5093
        %vm5549 = vcmp.lt.f32.partialorder %v5548, 0.0004427343
        %v5550 = vsel %vm5549, %v5547, %v5544
        %v5551 = vadd.f32 %v5095, 1.0
        %v5552 = vlog2.pop %v5551
        %v5553 = vmul.f32 %v5552, 0.6931472
        %v5554 = vmul.f32 -0.5, %v5095
        %v5555 = vadd.f32 %v5554, 1.0
        %v5556 = vmul.f32 %v5555, %v5095
        %v5557 = vand.u32 2147483647, %v5095
        %vm5558 = vcmp.lt.f32.partialorder %v5557, 0.0004427343
        %v5559 = vsel %vm5558, %v5556, %v5553
        %v5560 = vadd.f32 %v5097, 1.0
        %v5561 = vlog2.pop %v5560
        %v5562 = vmul.f32 %v5561, 0.6931472
        %v5563 = vmul.f32 -0.5, %v5097
        %v5564 = vadd.f32 %v5563, 1.0
        %v5565 = vmul.f32 %v5564, %v5097
        %v5566 = vand.u32 2147483647, %v5097
        %vm5567 = vcmp.lt.f32.partialorder %v5566, 0.0004427343
        %v5568 = vsel %vm5567, %v5565, %v5562
        %v5569 = vadd.f32 %v5099, 1.0
        %v5570 = vlog2.pop %v5569
        %v5571 = vmul.f32 %v5570, 0.6931472
        %v5572 = vmul.f32 -0.5, %v5099
        %v5573 = vadd.f32 %v5572, 1.0
        %v5574 = vmul.f32 %v5573, %v5099
        %v5575 = vand.u32 2147483647, %v5099
        %vm5576 = vcmp.lt.f32.partialorder %v5575, 0.0004427343
        %v5577 = vsel %vm5576, %v5574, %v5571
        %v5578 = vadd.f32 %v5101, 1.0
        %v5579 = vlog2.pop %v5578
        %v5580 = vmul.f32 %v5579, 0.6931472
        %v5581 = vmul.f32 -0.5, %v5101
        %v5582 = vadd.f32 %v5581, 1.0
        %v5583 = vmul.f32 %v5582, %v5101
        %v5584 = vand.u32 2147483647, %v5101
        %vm5585 = vcmp.lt.f32.partialorder %v5584, 0.0004427343
        %v5586 = vsel %vm5585, %v5583, %v5580
        %v5587 = vadd.f32 %v5103, 1.0
        %v5588 = vlog2.pop %v5587
        %v5589 = vmul.f32 %v5588, 0.6931472
        %v5590 = vmul.f32 -0.5, %v5103
        %v5591 = vadd.f32 %v5590, 1.0
        %v5592 = vmul.f32 %v5591, %v5103
        %v5593 = vand.u32 2147483647, %v5103
        %vm5594 = vcmp.lt.f32.partialorder %v5593, 0.0004427343
        %v5595 = vsel %vm5594, %v5592, %v5589
        %v5596 = vadd.f32 %v5105, 1.0
        %v5597 = vlog2.pop %v5596
        %v5598 = vmul.f32 %v5597, 0.6931472
        %v5599 = vmul.f32 -0.5, %v5105
        %v5600 = vadd.f32 %v5599, 1.0
        %v5601 = vmul.f32 %v5600, %v5105
        %v5602 = vand.u32 2147483647, %v5105
        %vm5603 = vcmp.lt.f32.partialorder %v5602, 0.0004427343
        %v5604 = vsel %vm5603, %v5601, %v5598
        %v5605 = vadd.f32 %v5107, 1.0
        %v5606 = vlog2.pop %v5605
        %v5607 = vmul.f32 %v5606, 0.6931472
        %v5608 = vmul.f32 -0.5, %v5107
        %v5609 = vadd.f32 %v5608, 1.0
        %v5610 = vmul.f32 %v5609, %v5107
        %v5611 = vand.u32 2147483647, %v5107
        %vm5612 = vcmp.lt.f32.partialorder %v5611, 0.0004427343
        %v5613 = vsel %vm5612, %v5610, %v5607
        %v5614 = vadd.f32 %v5109, 1.0
        %v5615 = vlog2.pop %v5614
        %v5616 = vmul.f32 %v5615, 0.6931472
        %v5617 = vmul.f32 -0.5, %v5109
        %v5618 = vadd.f32 %v5617, 1.0
        %v5619 = vmul.f32 %v5618, %v5109
        %v5620 = vand.u32 2147483647, %v5109
        %vm5621 = vcmp.lt.f32.partialorder %v5620, 0.0004427343
        %v5622 = vsel %vm5621, %v5619, %v5616
        %v5623 = vadd.f32 %v5111, 1.0
        %v5624 = vlog2.pop %v5623
        %v5625 = vmul.f32 %v5624, 0.6931472
        %v5626 = vmul.f32 -0.5, %v5111
        %v5627 = vadd.f32 %v5626, 1.0
        %v5628 = vmul.f32 %v5627, %v5111
        %v5629 = vand.u32 2147483647, %v5111
        %vm5630 = vcmp.lt.f32.partialorder %v5629, 0.0004427343
        %v5631 = vsel %vm5630, %v5628, %v5625
        %v5632 = vadd.f32 %v5113, 1.0
        %v5633 = vlog2.pop %v5632
        %v5634 = vmul.f32 %v5633, 0.6931472
        %v5635 = vmul.f32 -0.5, %v5113
        %v5636 = vadd.f32 %v5635, 1.0
        %v5637 = vmul.f32 %v5636, %v5113
        %v5638 = vand.u32 2147483647, %v5113
        %vm5639 = vcmp.lt.f32.partialorder %v5638, 0.0004427343
        %v5640 = vsel %vm5639, %v5637, %v5634
        %v5641 = vadd.f32 %v5115, 1.0
        %v5642 = vlog2.pop %v5641
        %v5643 = vmul.f32 %v5642, 0.6931472
        %v5644 = vmul.f32 -0.5, %v5115
        %v5645 = vadd.f32 %v5644, 1.0
        %v5646 = vmul.f32 %v5645, %v5115
        %v5647 = vand.u32 2147483647, %v5115
        %vm5648 = vcmp.lt.f32.partialorder %v5647, 0.0004427343
        %v5649 = vsel %vm5648, %v5646, %v5643
        %v5650 = vadd.f32 %v5117, 1.0
        %v5651 = vlog2.pop %v5650
        %v5652 = vmul.f32 %v5651, 0.6931472
        %v5653 = vmul.f32 -0.5, %v5117
        %v5654 = vadd.f32 %v5653, 1.0
        %v5655 = vmul.f32 %v5654, %v5117
        %v5656 = vand.u32 2147483647, %v5117
        %vm5657 = vcmp.lt.f32.partialorder %v5656, 0.0004427343
        %v5658 = vsel %vm5657, %v5655, %v5652
        %v5659 = vadd.f32 %v5119, 1.0
        %v5660 = vlog2.pop %v5659
        %v5661 = vmul.f32 %v5660, 0.6931472
        %v5662 = vmul.f32 -0.5, %v5119
        %v5663 = vadd.f32 %v5662, 1.0
        %v5664 = vmul.f32 %v5663, %v5119
        %v5665 = vand.u32 2147483647, %v5119
        %vm5666 = vcmp.lt.f32.partialorder %v5665, 0.0004427343
        %v5667 = vsel %vm5666, %v5664, %v5661
        %v5668 = vadd.f32 %v5121, 1.0
        %v5669 = vlog2.pop %v5668
        %v5670 = vmul.f32 %v5669, 0.6931472
        %v5671 = vmul.f32 -0.5, %v5121
        %v5672 = vadd.f32 %v5671, 1.0
        %v5673 = vmul.f32 %v5672, %v5121
        %v5674 = vand.u32 2147483647, %v5121
        %vm5675 = vcmp.lt.f32.partialorder %v5674, 0.0004427343
        %v5676 = vsel %vm5675, %v5673, %v5670
        %v5677 = vadd.f32 %v5123, 1.0
        %v5678 = vlog2.pop %v5677
        %v5679 = vmul.f32 %v5678, 0.6931472
        %v5680 = vmul.f32 -0.5, %v5123
        %v5681 = vadd.f32 %v5680, 1.0
        %v5682 = vmul.f32 %v5681, %v5123
        %v5683 = vand.u32 2147483647, %v5123
        %vm5684 = vcmp.lt.f32.partialorder %v5683, 0.0004427343
        %v5685 = vsel %vm5684, %v5682, %v5679
        %v5686 = vadd.f32 %v5125, 1.0
        %v5687 = vlog2.pop %v5686
        %v5688 = vmul.f32 %v5687, 0.6931472
        %v5689 = vmul.f32 -0.5, %v5125
        %v5690 = vadd.f32 %v5689, 1.0
        %v5691 = vmul.f32 %v5690, %v5125
        %v5692 = vand.u32 2147483647, %v5125
        %vm5693 = vcmp.lt.f32.partialorder %v5692, 0.0004427343
        %v5694 = vsel %vm5693, %v5691, %v5688
        %v5695 = vadd.f32 %v5127, 1.0
        %v5696 = vlog2.pop %v5695
        %v5697 = vmul.f32 %v5696, 0.6931472
        %v5698 = vmul.f32 -0.5, %v5127
        %v5699 = vadd.f32 %v5698, 1.0
        %v5700 = vmul.f32 %v5699, %v5127
        %v5701 = vand.u32 2147483647, %v5127
        %vm5702 = vcmp.lt.f32.partialorder %v5701, 0.0004427343
        %v5703 = vsel %vm5702, %v5700, %v5697
        %v5704 = vmul.f32 %v5136, 0.01
        %v5705 = vmul.f32 %v5145, 0.01
        %v5706 = vmul.f32 %v5154, 0.01
        %v5707 = vmul.f32 %v5163, 0.01
        %v5708 = vmul.f32 %v5172, 0.01
        %v5709 = vmul.f32 %v5181, 0.01
        %v5710 = vmul.f32 %v5190, 0.01
        %v5711 = vmul.f32 %v5199, 0.01
        %v5712 = vmul.f32 %v5208, 0.01
        %v5713 = vmul.f32 %v5217, 0.01
        %v5714 = vmul.f32 %v5226, 0.01
        %v5715 = vmul.f32 %v5235, 0.01
        %v5716 = vmul.f32 %v5244, 0.01
        %v5717 = vmul.f32 %v5253, 0.01
        %v5718 = vmul.f32 %v5262, 0.01
        %v5719 = vmul.f32 %v5271, 0.01
        %v5720 = vmul.f32 %v5280, 0.01
        %v5721 = vmul.f32 %v5289, 0.01
        %v5722 = vmul.f32 %v5298, 0.01
        %v5723 = vmul.f32 %v5307, 0.01
        %v5724 = vmul.f32 %v5316, 0.01
        %v5725 = vmul.f32 %v5325, 0.01
        %v5726 = vmul.f32 %v5334, 0.01
        %v5727 = vmul.f32 %v5343, 0.01
        %v5728 = vmul.f32 %v5352, 0.01
        %v5729 = vmul.f32 %v5361, 0.01
        %v5730 = vmul.f32 %v5370, 0.01
        %v5731 = vmul.f32 %v5379, 0.01
        %v5732 = vmul.f32 %v5388, 0.01
        %v5733 = vmul.f32 %v5397, 0.01
        %v5734 = vmul.f32 %v5406, 0.01
        %v5735 = vmul.f32 %v5415, 0.01
        %v5736 = vmul.f32 %v5424, 0.01
        %v5737 = vmul.f32 %v5433, 0.01
        %v5738 = vmul.f32 %v5442, 0.01
        %v5739 = vmul.f32 %v5451, 0.01
        %v5740 = vmul.f32 %v5460, 0.01
        %v5741 = vmul.f32 %v5469, 0.01
        %v5742 = vmul.f32 %v5478, 0.01
        %v5743 = vmul.f32 %v5487, 0.01
        %v5744 = vmul.f32 %v5496, 0.01
        %v5745 = vmul.f32 %v5505, 0.01
        %v5746 = vmul.f32 %v5514, 0.01
        %v5747 = vmul.f32 %v5523, 0.01
        %v5748 = vmul.f32 %v5532, 0.01
        %v5749 = vmul.f32 %v5541, 0.01
        %v5750 = vmul.f32 %v5550, 0.01
        %v5751 = vmul.f32 %v5559, 0.01
        %v5752 = vmul.f32 %v5568, 0.01
        %v5753 = vmul.f32 %v5577, 0.01
        %v5754 = vmul.f32 %v5586, 0.01
        %v5755 = vmul.f32 %v5595, 0.01
        %v5756 = vmul.f32 %v5604, 0.01
        %v5757 = vmul.f32 %v5613, 0.01
        %v5758 = vmul.f32 %v5622, 0.01
        %v5759 = vmul.f32 %v5631, 0.01
        %v5760 = vmul.f32 %v5640, 0.01
        %v5761 = vmul.f32 %v5649, 0.01
        %v5762 = vmul.f32 %v5658, 0.01
        %v5763 = vmul.f32 %v5667, 0.01
        %v5764 = vmul.f32 %v5676, 0.01
        %v5765 = vmul.f32 %v5685, 0.01
        %v5766 = vmul.f32 %v5694, 0.01
        %v5767 = vmul.f32 %v5703, 0.01
        %v5768 = vsel %vm4936, %v4618, %v5704
        %v5769 = vsel %vm4937, %v4620, %v5705
        %v5770 = vsel %vm4938, %v4624, %v5706
        %v5771 = vsel %vm4939, %v4626, %v5707
        %v5772 = vsel %vm4940, %v4630, %v5708
        %v5773 = vsel %vm4941, %v4632, %v5709
        %v5774 = vsel %vm4942, %v4636, %v5710
        %v5775 = vsel %vm4943, %v4638, %v5711
        %v5776 = vsel %vm4944, %v4642, %v5712
        %v5777 = vsel %vm4945, %v4644, %v5713
        %v5778 = vsel %vm4946, %v4648, %v5714
        %v5779 = vsel %vm4947, %v4650, %v5715
        %v5780 = vsel %vm4948, %v4654, %v5716
        %v5781 = vsel %vm4949, %v4656, %v5717
        %v5782 = vsel %vm4950, %v4660, %v5718
        %v5783 = vsel %vm4951, %v4662, %v5719
        %v5784 = vsel %vm4952, %v4666, %v5720
        %v5785 = vsel %vm4953, %v4668, %v5721
        %v5786 = vsel %vm4954, %v4672, %v5722
        %v5787 = vsel %vm4955, %v4674, %v5723
        %v5788 = vsel %vm4956, %v4678, %v5724
        %v5789 = vsel %vm4957, %v4680, %v5725
        %v5790 = vsel %vm4958, %v4684, %v5726
        %v5791 = vsel %vm4959, %v4686, %v5727
        %v5792 = vsel %vm4960, %v4690, %v5728
        %v5793 = vsel %vm4961, %v4692, %v5729
        %v5794 = vsel %vm4962, %v4696, %v5730
        %v5795 = vsel %vm4963, %v4698, %v5731
        %v5796 = vsel %vm4964, %v4702, %v5732
        %v5797 = vsel %vm4965, %v4704, %v5733
        %v5798 = vsel %vm4966, %v4708, %v5734
        %v5799 = vsel %vm4967, %v4710, %v5735
        %v5800 = vsel %vm4968, %v4714, %v5736
        %v5801 = vsel %vm4969, %v4716, %v5737
        %v5802 = vsel %vm4970, %v4720, %v5738
        %v5803 = vsel %vm4971, %v4722, %v5739
        %v5804 = vsel %vm4972, %v4726, %v5740
        %v5805 = vsel %vm4973, %v4728, %v5741
        %v5806 = vsel %vm4974, %v4732, %v5742
        %v5807 = vsel %vm4975, %v4734, %v5743
        %v5808 = vsel %vm4976, %v4738, %v5744
        %v5809 = vsel %vm4977, %v4740, %v5745
        %v5810 = vsel %vm4978, %v4744, %v5746
        %v5811 = vsel %vm4979, %v4746, %v5747
        %v5812 = vsel %vm4980, %v4750, %v5748
        %v5813 = vsel %vm4981, %v4752, %v5749
        %v5814 = vsel %vm4982, %v4756, %v5750
        %v5815 = vsel %vm4983, %v4758, %v5751
        %v5816 = vsel %vm4984, %v4762, %v5752
        %v5817 = vsel %vm4985, %v4764, %v5753
        %v5818 = vsel %vm4986, %v4768, %v5754
        %v5819 = vsel %vm4987, %v4770, %v5755
        %v5820 = vsel %vm4988, %v4774, %v5756
        %v5821 = vsel %vm4989, %v4776, %v5757
        %v5822 = vsel %vm4990, %v4780, %v5758
        %v5823 = vsel %vm4991, %v4782, %v5759
        %v5824 = vsel %vm4992, %v4786, %v5760
        %v5825 = vsel %vm4993, %v4788, %v5761
        %v5826 = vsel %vm4994, %v4792, %v5762
        %v5827 = vsel %vm4995, %v4794, %v5763
        %v5828 = vsel %vm4996, %v4798, %v5764
        %v5829 = vsel %vm4997, %v4800, %v5765
        %v5830 = vsel %vm4998, %v4804, %v5766
        %v5831 = vsel %vm4999, %v4806, %v5767
        %s5832 = scalar_lea.vmem %s2, 1536
        %v5833 = vld [vmem:[%s5832] sm:$0xff]
        %v5834 = vld [vmem:[%s5832 + $0x8] sm:$0xff]
        %v5835 = vld [vmem:[%s5832 + $0x10] sm:$0xff]
        %v5836 = vld [vmem:[%s5832 + $0x18] sm:$0xff]
        %v5837 = vld [vmem:[%s5832 + $0x20] sm:$0xff]
        %v5838 = vld [vmem:[%s5832 + $0x28] sm:$0xff]
        %v5839 = vld [vmem:[%s5832 + $0x30] sm:$0xff]
        %v5840 = vld [vmem:[%s5832 + $0x38] sm:$0xff]
        %v5841 = vld [vmem:[%s5832 + $0x40] sm:$0xff]
        %v5842 = vld [vmem:[%s5832 + $0x48] sm:$0xff]
        %v5843 = vld [vmem:[%s5832 + $0x50] sm:$0xff]
        %v5844 = vld [vmem:[%s5832 + $0x58] sm:$0xff]
        %v5845 = vld [vmem:[%s5832 + $0x60] sm:$0xff]
        %v5846 = vld [vmem:[%s5832 + $0x68] sm:$0xff]
        %v5847 = vld [vmem:[%s5832 + $0x70] sm:$0xff]
        %v5848 = vld [vmem:[%s5832 + $0x78] sm:$0xff]
        %v5849 = vld [vmem:[%s5832 + $0x80] sm:$0xff]
        %v5850 = vld [vmem:[%s5832 + $0x88] sm:$0xff]
        %v5851 = vld [vmem:[%s5832 + $0x90] sm:$0xff]
        %v5852 = vld [vmem:[%s5832 + $0x98] sm:$0xff]
        %v5853 = vld [vmem:[%s5832 + $0xa0] sm:$0xff]
        %v5854 = vld [vmem:[%s5832 + $0xa8] sm:$0xff]
        %v5855 = vld [vmem:[%s5832 + $0xb0] sm:$0xff]
        %v5856 = vld [vmem:[%s5832 + $0xb8] sm:$0xff]
        %v5857 = vld [vmem:[%s5832 + $0xc0] sm:$0xff]
        %v5858 = vld [vmem:[%s5832 + $0xc8] sm:$0xff]
        %v5859 = vld [vmem:[%s5832 + $0xd0] sm:$0xff]
        %v5860 = vld [vmem:[%s5832 + $0xd8] sm:$0xff]
        %v5861 = vld [vmem:[%s5832 + $0xe0] sm:$0xff]
        %v5862 = vld [vmem:[%s5832 + $0xe8] sm:$0xff]
        %v5863 = vld [vmem:[%s5832 + $0xf0] sm:$0xff]
        %v5864 = vld [vmem:[%s5832 + $0xf8] sm:$0xff]
        %v5865 = vld [vmem:[%s5832 + $0x100] sm:$0xff]
        %v5866 = vld [vmem:[%s5832 + $0x108] sm:$0xff]
        %v5867 = vld [vmem:[%s5832 + $0x110] sm:$0xff]
        %v5868 = vld [vmem:[%s5832 + $0x118] sm:$0xff]
        %v5869 = vld [vmem:[%s5832 + $0x120] sm:$0xff]
        %v5870 = vld [vmem:[%s5832 + $0x128] sm:$0xff]
        %v5871 = vld [vmem:[%s5832 + $0x130] sm:$0xff]
        %v5872 = vld [vmem:[%s5832 + $0x138] sm:$0xff]
        %v5873 = vld [vmem:[%s5832 + $0x140] sm:$0xff]
        %v5874 = vld [vmem:[%s5832 + $0x148] sm:$0xff]
        %v5875 = vld [vmem:[%s5832 + $0x150] sm:$0xff]
        %v5876 = vld [vmem:[%s5832 + $0x158] sm:$0xff]
        %v5877 = vld [vmem:[%s5832 + $0x160] sm:$0xff]
        %v5878 = vld [vmem:[%s5832 + $0x168] sm:$0xff]
        %v5879 = vld [vmem:[%s5832 + $0x170] sm:$0xff]
        %v5880 = vld [vmem:[%s5832 + $0x178] sm:$0xff]
        %v5881 = vld [vmem:[%s5832 + $0x180] sm:$0xff]
        %v5882 = vld [vmem:[%s5832 + $0x188] sm:$0xff]
        %v5883 = vld [vmem:[%s5832 + $0x190] sm:$0xff]
        %v5884 = vld [vmem:[%s5832 + $0x198] sm:$0xff]
        %v5885 = vld [vmem:[%s5832 + $0x1a0] sm:$0xff]
        %v5886 = vld [vmem:[%s5832 + $0x1a8] sm:$0xff]
        %v5887 = vld [vmem:[%s5832 + $0x1b0] sm:$0xff]
        %v5888 = vld [vmem:[%s5832 + $0x1b8] sm:$0xff]
        %v5889 = vld [vmem:[%s5832 + $0x1c0] sm:$0xff]
        %v5890 = vld [vmem:[%s5832 + $0x1c8] sm:$0xff]
        %v5891 = vld [vmem:[%s5832 + $0x1d0] sm:$0xff]
        %v5892 = vld [vmem:[%s5832 + $0x1d8] sm:$0xff]
        %v5893 = vld [vmem:[%s5832 + $0x1e0] sm:$0xff]
        %v5894 = vld [vmem:[%s5832 + $0x1e8] sm:$0xff]
        %v5895 = vld [vmem:[%s5832 + $0x1f0] sm:$0xff]
        %v5896 = vld [vmem:[%s5832 + $0x1f8] sm:$0xff]
        %s5897 = scalar_lea.vmem [#allocation2], 64
        %v5898 = vld [vmem:[%s5897] sm:$0xff]
        %v5899 = vld [vmem:[%s5897 + $0x8] sm:$0xff]
        %v5900 = vld [vmem:[%s5897 + $0x10] sm:$0xff]
        %v5901 = vld [vmem:[%s5897 + $0x18] sm:$0xff]
        %v5902 = vld [vmem:[%s5897 + $0x20] sm:$0xff]
        %v5903 = vld [vmem:[%s5897 + $0x28] sm:$0xff]
        %v5904 = vld [vmem:[%s5897 + $0x30] sm:$0xff]
        %v5905 = vld [vmem:[%s5897 + $0x38] sm:$0xff]
        %5906 = vmatprep.subr.mxu0 %v5899
        %5907 = vmatpush1.msra.mxu0 %v5898
        %5908 = vmatprep.subr.mxu0 %v5901
        %5909 = vmatpush1.msra.mxu0 %v5900
        %5910 = vmatprep.subr.mxu0 %v5903
        %5911 = vmatpush1.msra.mxu0 %v5902
        %5912 = vmatprep.subr.mxu0 %v5905
        %5913 = vmatpush1.msra.mxu0 %v5904
        %5914 = vmatprep.subr.mxu0 0.0
        %5915 = vmatpush1.msra.mxu0 0.0
        %5916 = vmatprep.subr.mxu0 0.0
        %5917 = vmatpush1.msra.mxu0 0.0
        %5918 = vmatprep.subr.mxu0 0.0
        %5919 = vmatpush1.msra.mxu0 0.0
        %5920 = vmatprep.subr.mxu0 0.0
        %5921 = vmatpush1.msra.mxu0 0.0
        %5922 = vmatprep.subr.mxu0 0.0
        %5923 = vmatpush1.msra.mxu0 0.0
        %5924 = vmatprep.subr.mxu0 0.0
        %5925 = vmatpush1.msra.mxu0 0.0
        %5926 = vmatprep.subr.mxu0 0.0
        %5927 = vmatpush1.msra.mxu0 0.0
        %5928 = vmatprep.subr.mxu0 0.0
        %5929 = vmatpush1.msra.mxu0 0.0
        %5930 = vmatprep.subr.mxu0 0.0
        %5931 = vmatpush1.msra.mxu0 0.0
        %5932 = vmatprep.subr.mxu0 0.0
        %5933 = vmatpush1.msra.mxu0 0.0
        %5934 = vmatprep.subr.mxu0 0.0
        %5935 = vmatpush1.msra.mxu0 0.0
        %5936 = vmatprep.subr.mxu0 0.0
        %5937 = vmatpush1.msra.mxu0 0.0
        %5938 = vmatprep.subr.mxu0 0.0
        %5939 = vmatpush1.msra.mxu0 0.0
        %5940 = vmatprep.subr.mxu0 0.0
        %5941 = vmatpush1.msra.mxu0 0.0
        %5942 = vmatprep.subr.mxu0 0.0
        %5943 = vmatpush1.msra.mxu0 0.0
        %5944 = vmatprep.subr.mxu0 0.0
        %5945 = vmatpush1.msra.mxu0 0.0
        %5946 = vmatprep.subr.mxu0 0.0
        %5947 = vmatpush1.msra.mxu0 0.0
        %5948 = vmatprep.subr.mxu0 0.0
        %5949 = vmatpush1.msra.mxu0 0.0
        %5950 = vmatprep.subr.mxu0 0.0
        %5951 = vmatpush1.msra.mxu0 0.0
        %5952 = vmatprep.subr.mxu0 0.0
        %5953 = vmatpush1.msra.mxu0 0.0
        %5954 = vmatprep.subr.mxu0 0.0
        %5955 = vmatpush1.msra.mxu0 0.0
        %5956 = vmatprep.subr.mxu0 0.0
        %5957 = vmatpush1.msra.mxu0 0.0
        %5958 = vmatprep.subr.mxu0 0.0
        %5959 = vmatpush1.msra.mxu0 0.0
        %5960 = vmatprep.subr.mxu0 0.0
        %5961 = vmatpush1.msra.mxu0 0.0
        %5962 = vmatprep.subr.mxu0 0.0
        %5963 = vmatpush1.msra.mxu0 0.0
        %5964 = vmatprep.subr.mxu0 0.0
        %5965 = vmatpush1.msra.mxu0 0.0
        %5966 = vmatprep.subr.mxu0 0.0
        %5967 = vmatpush1.msra.mxu0 0.0
        %5968 = vmatprep.subr.mxu0 0.0
        %5969 = vmatpush1.msra.mxu0 0.0
        %5970 = vmatprep.mubr.f32.mxu0 0.0
        %5971 = vmatmul.mubr.f32.gmra.mrb[0].mxu0 %v380
        %v5972 = vpop.f32.mrb[0].mxu0
        %v5973 = vadd.f32 0.0, %v5972
        %v5974 = vpop.f32.mrb[0].mxu0
        %v5975 = vadd.f32 0.0, %v5974
        %5976 = vmatprep.mubr.f32.mxu0 0.0
        %5977 = vmatmul.mubr.f32.gmra.mrb[0].mxu0 %v383
        %v5978 = vpop.f32.mrb[0].mxu0
        %v5979 = vadd.f32 0.0, %v5978
        %v5980 = vpop.f32.mrb[0].mxu0
        %v5981 = vadd.f32 0.0, %v5980
        %5982 = vmatprep.mubr.f32.mxu0 0.0
        %5983 = vmatmul.mubr.f32.gmra.mrb[0].mxu0 %v386
        %v5984 = vpop.f32.mrb[0].mxu0
        %v5985 = vadd.f32 0.0, %v5984
        %v5986 = vpop.f32.mrb[0].mxu0
        %v5987 = vadd.f32 0.0, %v5986
        %5988 = vmatprep.mubr.f32.mxu0 0.0
        %5989 = vmatmul.mubr.f32.gmra.mrb[0].mxu0 %v389
        %v5990 = vpop.f32.mrb[0].mxu0
        %v5991 = vadd.f32 0.0, %v5990
        %v5992 = vpop.f32.mrb[0].mxu0
        %v5993 = vadd.f32 0.0, %v5992
        %5994 = vmatprep.mubr.f32.mxu0 0.0
        %5995 = vmatmul.mubr.f32.gmra.mrb[0].mxu0 %v392
        %v5996 = vpop.f32.mrb[0].mxu0
        %v5997 = vadd.f32 0.0, %v5996
        %v5998 = vpop.f32.mrb[0].mxu0
        %v5999 = vadd.f32 0.0, %v5998
        %6000 = vmatprep.mubr.f32.mxu0 0.0
        %6001 = vmatmul.mubr.f32.gmra.mrb[0].mxu0 %v395
        %v6002 = vpop.f32.mrb[0].mxu0
        %v6003 = vadd.f32 0.0, %v6002
        %v6004 = vpop.f32.mrb[0].mxu0
        %v6005 = vadd.f32 0.0, %v6004
        %6006 = vmatprep.mubr.f32.mxu0 0.0
        %6007 = vmatmul.mubr.f32.gmra.mrb[0].mxu0 %v398
        %v6008 = vpop.f32.mrb[0].mxu0
        %v6009 = vadd.f32 0.0, %v6008
        %v6010 = vpop.f32.mrb[0].mxu0
        %v6011 = vadd.f32 0.0, %v6010
        %6012 = vmatprep.mubr.f32.mxu0 0.0
        %6013 = vmatmul.mubr.f32.gmra.mrb[0].mxu0 %v401
        %v6014 = vpop.f32.mrb[0].mxu0
        %v6015 = vadd.f32 0.0, %v6014
        %v6016 = vpop.f32.mrb[0].mxu0
        %v6017 = vadd.f32 0.0, %v6016
        %6018 = vmatprep.mubr.f32.mxu0 0.0
        %6019 = vmatmul.mubr.f32.gmra.mrb[0].mxu0 %v404
        %v6020 = vpop.f32.mrb[0].mxu0
        %v6021 = vadd.f32 0.0, %v6020
        %v6022 = vpop.f32.mrb[0].mxu0
        %v6023 = vadd.f32 0.0, %v6022
        %6024 = vmatprep.mubr.f32.mxu0 0.0
        %6025 = vmatmul.mubr.f32.gmra.mrb[0].mxu0 %v407
        %v6026 = vpop.f32.mrb[0].mxu0
        %v6027 = vadd.f32 0.0, %v6026
        %v6028 = vpop.f32.mrb[0].mxu0
        %v6029 = vadd.f32 0.0, %v6028
        %6030 = vmatprep.mubr.f32.mxu0 0.0
        %6031 = vmatmul.mubr.f32.gmra.mrb[0].mxu0 %v410
        %v6032 = vpop.f32.mrb[0].mxu0
        %v6033 = vadd.f32 0.0, %v6032
        %v6034 = vpop.f32.mrb[0].mxu0
        %v6035 = vadd.f32 0.0, %v6034
        %6036 = vmatprep.mubr.f32.mxu0 0.0
        %6037 = vmatmul.mubr.f32.gmra.mrb[0].mxu0 %v413
        %v6038 = vpop.f32.mrb[0].mxu0
        %v6039 = vadd.f32 0.0, %v6038
        %v6040 = vpop.f32.mrb[0].mxu0
        %v6041 = vadd.f32 0.0, %v6040
        %6042 = vmatprep.mubr.f32.mxu0 0.0
        %6043 = vmatmul.mubr.f32.gmra.mrb[0].mxu0 %v416
        %v6044 = vpop.f32.mrb[0].mxu0
        %v6045 = vadd.f32 0.0, %v6044
        %v6046 = vpop.f32.mrb[0].mxu0
        %v6047 = vadd.f32 0.0, %v6046
        %6048 = vmatprep.mubr.f32.mxu0 0.0
        %6049 = vmatmul.mubr.f32.gmra.mrb[0].mxu0 %v419
        %v6050 = vpop.f32.mrb[0].mxu0
        %v6051 = vadd.f32 0.0, %v6050
        %v6052 = vpop.f32.mrb[0].mxu0
        %v6053 = vadd.f32 0.0, %v6052
        %6054 = vmatprep.mubr.f32.mxu0 0.0
        %6055 = vmatmul.mubr.f32.gmra.mrb[0].mxu0 %v422
        %v6056 = vpop.f32.mrb[0].mxu0
        %v6057 = vadd.f32 0.0, %v6056
        %v6058 = vpop.f32.mrb[0].mxu0
        %v6059 = vadd.f32 0.0, %v6058
        %6060 = vmatprep.mubr.f32.mxu0 0.0
        %6061 = vmatmul.mubr.f32.gmra.mrb[0].mxu0 %v425
        %v6062 = vpop.f32.mrb[0].mxu0
        %v6063 = vadd.f32 0.0, %v6062
        %v6064 = vpop.f32.mrb[0].mxu0
        %v6065 = vadd.f32 0.0, %v6064
        %6066 = vmatprep.mubr.f32.mxu0 0.0
        %6067 = vmatmul.mubr.f32.gmra.mrb[0].mxu0 %v428
        %v6068 = vpop.f32.mrb[0].mxu0
        %v6069 = vadd.f32 0.0, %v6068
        %v6070 = vpop.f32.mrb[0].mxu0
        %v6071 = vadd.f32 0.0, %v6070
        %6072 = vmatprep.mubr.f32.mxu0 0.0
        %6073 = vmatmul.mubr.f32.gmra.mrb[0].mxu0 %v431
        %v6074 = vpop.f32.mrb[0].mxu0
        %v6075 = vadd.f32 0.0, %v6074
        %v6076 = vpop.f32.mrb[0].mxu0
        %v6077 = vadd.f32 0.0, %v6076
        %6078 = vmatprep.mubr.f32.mxu0 0.0
        %6079 = vmatmul.mubr.f32.gmra.mrb[0].mxu0 %v434
        %v6080 = vpop.f32.mrb[0].mxu0
        %v6081 = vadd.f32 0.0, %v6080
        %v6082 = vpop.f32.mrb[0].mxu0
        %v6083 = vadd.f32 0.0, %v6082
        %6084 = vmatprep.mubr.f32.mxu0 0.0
        %6085 = vmatmul.mubr.f32.gmra.mrb[0].mxu0 %v437
        %v6086 = vpop.f32.mrb[0].mxu0
        %v6087 = vadd.f32 0.0, %v6086
        %v6088 = vpop.f32.mrb[0].mxu0
        %v6089 = vadd.f32 0.0, %v6088
        %6090 = vmatprep.mubr.f32.mxu0 0.0
        %6091 = vmatmul.mubr.f32.gmra.mrb[0].mxu0 %v440
        %v6092 = vpop.f32.mrb[0].mxu0
        %v6093 = vadd.f32 0.0, %v6092
        %v6094 = vpop.f32.mrb[0].mxu0
        %v6095 = vadd.f32 0.0, %v6094
        %6096 = vmatprep.mubr.f32.mxu0 0.0
        %6097 = vmatmul.mubr.f32.gmra.mrb[0].mxu0 %v443
        %v6098 = vpop.f32.mrb[0].mxu0
        %v6099 = vadd.f32 0.0, %v6098
        %v6100 = vpop.f32.mrb[0].mxu0
        %v6101 = vadd.f32 0.0, %v6100
        %6102 = vmatprep.mubr.f32.mxu0 0.0
        %6103 = vmatmul.mubr.f32.gmra.mrb[0].mxu0 %v446
        %v6104 = vpop.f32.mrb[0].mxu0
        %v6105 = vadd.f32 0.0, %v6104
        %v6106 = vpop.f32.mrb[0].mxu0
        %v6107 = vadd.f32 0.0, %v6106
        %6108 = vmatprep.mubr.f32.mxu0 0.0
        %6109 = vmatmul.mubr.f32.gmra.mrb[0].mxu0 %v449
        %v6110 = vpop.f32.mrb[0].mxu0
        %v6111 = vadd.f32 0.0, %v6110
        %v6112 = vpop.f32.mrb[0].mxu0
        %v6113 = vadd.f32 0.0, %v6112
        %6114 = vmatprep.mubr.f32.mxu0 0.0
        %6115 = vmatmul.mubr.f32.gmra.mrb[0].mxu0 %v452
        %v6116 = vpop.f32.mrb[0].mxu0
        %v6117 = vadd.f32 0.0, %v6116
        %v6118 = vpop.f32.mrb[0].mxu0
        %v6119 = vadd.f32 0.0, %v6118
        %6120 = vmatprep.mubr.f32.mxu0 0.0
        %6121 = vmatmul.mubr.f32.gmra.mrb[0].mxu0 %v455
        %v6122 = vpop.f32.mrb[0].mxu0
        %v6123 = vadd.f32 0.0, %v6122
        %v6124 = vpop.f32.mrb[0].mxu0
        %v6125 = vadd.f32 0.0, %v6124
        %6126 = vmatprep.mubr.f32.mxu0 0.0
        %6127 = vmatmul.mubr.f32.gmra.mrb[0].mxu0 %v458
        %v6128 = vpop.f32.mrb[0].mxu0
        %v6129 = vadd.f32 0.0, %v6128
        %v6130 = vpop.f32.mrb[0].mxu0
        %v6131 = vadd.f32 0.0, %v6130
        %6132 = vmatprep.mubr.f32.mxu0 0.0
        %6133 = vmatmul.mubr.f32.gmra.mrb[0].mxu0 %v461
        %v6134 = vpop.f32.mrb[0].mxu0
        %v6135 = vadd.f32 0.0, %v6134
        %v6136 = vpop.f32.mrb[0].mxu0
        %v6137 = vadd.f32 0.0, %v6136
        %6138 = vmatprep.mubr.f32.mxu0 0.0
        %6139 = vmatmul.mubr.f32.gmra.mrb[0].mxu0 %v464
        %v6140 = vpop.f32.mrb[0].mxu0
        %v6141 = vadd.f32 0.0, %v6140
        %v6142 = vpop.f32.mrb[0].mxu0
        %v6143 = vadd.f32 0.0, %v6142
        %6144 = vmatprep.mubr.f32.mxu0 0.0
        %6145 = vmatmul.mubr.f32.gmra.mrb[0].mxu0 %v467
        %v6146 = vpop.f32.mrb[0].mxu0
        %v6147 = vadd.f32 0.0, %v6146
        %v6148 = vpop.f32.mrb[0].mxu0
        %v6149 = vadd.f32 0.0, %v6148
        %6150 = vmatprep.mubr.f32.mxu0 0.0
        %6151 = vmatmul.mubr.f32.gmra.mrb[0].mxu0 %v470
        %v6152 = vpop.f32.mrb[0].mxu0
        %v6153 = vadd.f32 0.0, %v6152
        %v6154 = vpop.f32.mrb[0].mxu0
        %v6155 = vadd.f32 0.0, %v6154
        %6156 = vmatprep.mubr.f32.mxu0 0.0
        %6157 = vmatmul.mubr.f32.gmra.mrb[0].mxu0 %v473
        %v6158 = vpop.f32.mrb[0].mxu0
        %v6159 = vadd.f32 0.0, %v6158
        %v6160 = vpop.f32.mrb[0].mxu0
        %v6161 = vadd.f32 0.0, %v6160
        %6162 = vdwg.mxu0
        %6163 = vmatprep.subr.mxu0 %v5834
        %6164 = vmatpush1.msra.mxu0 %v5833
        %6165 = vmatprep.subr.mxu0 %v5836
        %6166 = vmatpush1.msra.mxu0 %v5835
        %6167 = vmatprep.subr.mxu0 %v5838
        %6168 = vmatpush1.msra.mxu0 %v5837
        %6169 = vmatprep.subr.mxu0 %v5840
        %6170 = vmatpush1.msra.mxu0 %v5839
        %6171 = vmatprep.subr.mxu0 %v5842
        %6172 = vmatpush1.msra.mxu0 %v5841
        %6173 = vmatprep.subr.mxu0 %v5844
        %6174 = vmatpush1.msra.mxu0 %v5843
        %6175 = vmatprep.subr.mxu0 %v5846
        %6176 = vmatpush1.msra.mxu0 %v5845
        %6177 = vmatprep.subr.mxu0 %v5848
        %6178 = vmatpush1.msra.mxu0 %v5847
        %6179 = vmatprep.subr.mxu0 %v5850
        %6180 = vmatpush1.msra.mxu0 %v5849
        %6181 = vmatprep.subr.mxu0 %v5852
        %6182 = vmatpush1.msra.mxu0 %v5851
        %6183 = vmatprep.subr.mxu0 %v5854
        %6184 = vmatpush1.msra.mxu0 %v5853
        %6185 = vmatprep.subr.mxu0 %v5856
        %6186 = vmatpush1.msra.mxu0 %v5855
        %6187 = vmatprep.subr.mxu0 %v5858
        %6188 = vmatpush1.msra.mxu0 %v5857
        %6189 = vmatprep.subr.mxu0 %v5860
        %6190 = vmatpush1.msra.mxu0 %v5859
        %6191 = vmatprep.subr.mxu0 %v5862
        %6192 = vmatpush1.msra.mxu0 %v5861
        %6193 = vmatprep.subr.mxu0 %v5864
        %6194 = vmatpush1.msra.mxu0 %v5863
        %6195 = vmatprep.subr.mxu0 %v5866
        %6196 = vmatpush1.msra.mxu0 %v5865
        %6197 = vmatprep.subr.mxu0 %v5868
        %6198 = vmatpush1.msra.mxu0 %v5867
        %6199 = vmatprep.subr.mxu0 %v5870
        %6200 = vmatpush1.msra.mxu0 %v5869
        %6201 = vmatprep.subr.mxu0 %v5872
        %6202 = vmatpush1.msra.mxu0 %v5871
        %6203 = vmatprep.subr.mxu0 %v5874
        %6204 = vmatpush1.msra.mxu0 %v5873
        %6205 = vmatprep.subr.mxu0 %v5876
        %6206 = vmatpush1.msra.mxu0 %v5875
        %6207 = vmatprep.subr.mxu0 %v5878
        %6208 = vmatpush1.msra.mxu0 %v5877
        %6209 = vmatprep.subr.mxu0 %v5880
        %6210 = vmatpush1.msra.mxu0 %v5879
        %6211 = vmatprep.subr.mxu0 %v5882
        %6212 = vmatpush1.msra.mxu0 %v5881
        %6213 = vmatprep.subr.mxu0 %v5884
        %6214 = vmatpush1.msra.mxu0 %v5883
        %6215 = vmatprep.subr.mxu0 %v5886
        %6216 = vmatpush1.msra.mxu0 %v5885
        %6217 = vmatprep.subr.mxu0 %v5888
        %6218 = vmatpush1.msra.mxu0 %v5887
        %6219 = vmatprep.subr.mxu0 %v5890
        %6220 = vmatpush1.msra.mxu0 %v5889
        %6221 = vmatprep.subr.mxu0 %v5892
        %6222 = vmatpush1.msra.mxu0 %v5891
        %6223 = vmatprep.subr.mxu0 %v5894
        %6224 = vmatpush1.msra.mxu0 %v5893
        %6225 = vmatprep.subr.mxu0 %v5896
        %6226 = vmatpush1.msra.mxu0 %v5895
        %6227 = vmatprep.mubr.f32.mxu0 %v5769
        %6228 = vmatmul.mubr.f32.gmra.mrb[0].mxu0 %v5768
        %v6229 = vpop.f32.mrb[0].mxu0
        %v6230 = vadd.f32 %v5973, %v6229
        %v6231 = vpop.f32.mrb[0].mxu0
        %v6232 = vadd.f32 %v5975, %v6231
        %6233 = vmatprep.mubr.f32.mxu0 %v5771
        %6234 = vmatmul.mubr.f32.gmra.mrb[0].mxu0 %v5770
        %v6235 = vpop.f32.mrb[0].mxu0
        %v6236 = vadd.f32 %v5979, %v6235
        %v6237 = vpop.f32.mrb[0].mxu0
        %v6238 = vadd.f32 %v5981, %v6237
        %6239 = vmatprep.mubr.f32.mxu0 %v5773
        %6240 = vmatmul.mubr.f32.gmra.mrb[0].mxu0 %v5772
        %v6241 = vpop.f32.mrb[0].mxu0
        %v6242 = vadd.f32 %v5985, %v6241
        %v6243 = vpop.f32.mrb[0].mxu0
        %v6244 = vadd.f32 %v5987, %v6243
        %6245 = vmatprep.mubr.f32.mxu0 %v5775
        %6246 = vmatmul.mubr.f32.gmra.mrb[0].mxu0 %v5774
        %v6247 = vpop.f32.mrb[0].mxu0
        %v6248 = vadd.f32 %v5991, %v6247
        %v6249 = vpop.f32.mrb[0].mxu0
        %v6250 = vadd.f32 %v5993, %v6249
        %6251 = vmatprep.mubr.f32.mxu0 %v5777
        %6252 = vmatmul.mubr.f32.gmra.mrb[0].mxu0 %v5776
        %v6253 = vpop.f32.mrb[0].mxu0
        %v6254 = vadd.f32 %v5997, %v6253
        %v6255 = vpop.f32.mrb[0].mxu0
        %v6256 = vadd.f32 %v5999, %v6255
        %6257 = vmatprep.mubr.f32.mxu0 %v5779
        %6258 = vmatmul.mubr.f32.gmra.mrb[0].mxu0 %v5778
        %v6259 = vpop.f32.mrb[0].mxu0
        %v6260 = vadd.f32 %v6003, %v6259
        %v6261 = vpop.f32.mrb[0].mxu0
        %v6262 = vadd.f32 %v6005, %v6261
        %6263 = vmatprep.mubr.f32.mxu0 %v5781
        %6264 = vmatmul.mubr.f32.gmra.mrb[0].mxu0 %v5780
        %v6265 = vpop.f32.mrb[0].mxu0
        %v6266 = vadd.f32 %v6009, %v6265
        %v6267 = vpop.f32.mrb[0].mxu0
        %v6268 = vadd.f32 %v6011, %v6267
        %6269 = vmatprep.mubr.f32.mxu0 %v5783
        %6270 = vmatmul.mubr.f32.gmra.mrb[0].mxu0 %v5782
        %v6271 = vpop.f32.mrb[0].mxu0
        %v6272 = vadd.f32 %v6015, %v6271
        %v6273 = vpop.f32.mrb[0].mxu0
        %v6274 = vadd.f32 %v6017, %v6273
        %6275 = vmatprep.mubr.f32.mxu0 %v5785
        %6276 = vmatmul.mubr.f32.gmra.mrb[0].mxu0 %v5784
        %v6277 = vpop.f32.mrb[0].mxu0
        %v6278 = vadd.f32 %v6021, %v6277
        %v6279 = vpop.f32.mrb[0].mxu0
        %v6280 = vadd.f32 %v6023, %v6279
        %6281 = vmatprep.mubr.f32.mxu0 %v5787
        %6282 = vmatmul.mubr.f32.gmra.mrb[0].mxu0 %v5786
        %v6283 = vpop.f32.mrb[0].mxu0
        %v6284 = vadd.f32 %v6027, %v6283
        %v6285 = vpop.f32.mrb[0].mxu0
        %v6286 = vadd.f32 %v6029, %v6285
        %6287 = vmatprep.mubr.f32.mxu0 %v5789
        %6288 = vmatmul.mubr.f32.gmra.mrb[0].mxu0 %v5788
        %v6289 = vpop.f32.mrb[0].mxu0
        %v6290 = vadd.f32 %v6033, %v6289
        %v6291 = vpop.f32.mrb[0].mxu0
        %v6292 = vadd.f32 %v6035, %v6291
        %6293 = vmatprep.mubr.f32.mxu0 %v5791
        %6294 = vmatmul.mubr.f32.gmra.mrb[0].mxu0 %v5790
        %v6295 = vpop.f32.mrb[0].mxu0
        %v6296 = vadd.f32 %v6039, %v6295
        %v6297 = vpop.f32.mrb[0].mxu0
        %v6298 = vadd.f32 %v6041, %v6297
        %6299 = vmatprep.mubr.f32.mxu0 %v5793
        %6300 = vmatmul.mubr.f32.gmra.mrb[0].mxu0 %v5792
        %v6301 = vpop.f32.mrb[0].mxu0
        %v6302 = vadd.f32 %v6045, %v6301
        %v6303 = vpop.f32.mrb[0].mxu0
        %v6304 = vadd.f32 %v6047, %v6303
        %6305 = vmatprep.mubr.f32.mxu0 %v5795
        %6306 = vmatmul.mubr.f32.gmra.mrb[0].mxu0 %v5794
        %v6307 = vpop.f32.mrb[0].mxu0
        %v6308 = vadd.f32 %v6051, %v6307
        %v6309 = vpop.f32.mrb[0].mxu0
        %v6310 = vadd.f32 %v6053, %v6309
        %6311 = vmatprep.mubr.f32.mxu0 %v5797
        %6312 = vmatmul.mubr.f32.gmra.mrb[0].mxu0 %v5796
        %v6313 = vpop.f32.mrb[0].mxu0
        %v6314 = vadd.f32 %v6057, %v6313
        %v6315 = vpop.f32.mrb[0].mxu0
        %v6316 = vadd.f32 %v6059, %v6315
        %6317 = vmatprep.mubr.f32.mxu0 %v5799
        %6318 = vmatmul.mubr.f32.gmra.mrb[0].mxu0 %v5798
        %v6319 = vpop.f32.mrb[0].mxu0
        %v6320 = vadd.f32 %v6063, %v6319
        %v6321 = vpop.f32.mrb[0].mxu0
        %v6322 = vadd.f32 %v6065, %v6321
        %6323 = vmatprep.mubr.f32.mxu0 %v5801
        %6324 = vmatmul.mubr.f32.gmra.mrb[0].mxu0 %v5800
        %v6325 = vpop.f32.mrb[0].mxu0
        %v6326 = vadd.f32 %v6069, %v6325
        %v6327 = vpop.f32.mrb[0].mxu0
        %v6328 = vadd.f32 %v6071, %v6327
        %6329 = vmatprep.mubr.f32.mxu0 %v5803
        %6330 = vmatmul.mubr.f32.gmra.mrb[0].mxu0 %v5802
        %v6331 = vpop.f32.mrb[0].mxu0
        %v6332 = vadd.f32 %v6075, %v6331
        %v6333 = vpop.f32.mrb[0].mxu0
        %v6334 = vadd.f32 %v6077, %v6333
        %6335 = vmatprep.mubr.f32.mxu0 %v5805
        %6336 = vmatmul.mubr.f32.gmra.mrb[0].mxu0 %v5804
        %v6337 = vpop.f32.mrb[0].mxu0
        %v6338 = vadd.f32 %v6081, %v6337
        %v6339 = vpop.f32.mrb[0].mxu0
        %v6340 = vadd.f32 %v6083, %v6339
        %6341 = vmatprep.mubr.f32.mxu0 %v5807
        %6342 = vmatmul.mubr.f32.gmra.mrb[0].mxu0 %v5806
        %v6343 = vpop.f32.mrb[0].mxu0
        %v6344 = vadd.f32 %v6087, %v6343
        %v6345 = vpop.f32.mrb[0].mxu0
        %v6346 = vadd.f32 %v6089, %v6345
        %6347 = vmatprep.mubr.f32.mxu0 %v5809
        %6348 = vmatmul.mubr.f32.gmra.mrb[0].mxu0 %v5808
        %v6349 = vpop.f32.mrb[0].mxu0
        %v6350 = vadd.f32 %v6093, %v6349
        %v6351 = vpop.f32.mrb[0].mxu0
        %v6352 = vadd.f32 %v6095, %v6351
        %6353 = vmatprep.mubr.f32.mxu0 %v5811
        %6354 = vmatmul.mubr.f32.gmra.mrb[0].mxu0 %v5810
        %v6355 = vpop.f32.mrb[0].mxu0
        %v6356 = vadd.f32 %v6099, %v6355
        %v6357 = vpop.f32.mrb[0].mxu0
        %v6358 = vadd.f32 %v6101, %v6357
        %6359 = vmatprep.mubr.f32.mxu0 %v5813
        %6360 = vmatmul.mubr.f32.gmra.mrb[0].mxu0 %v5812
        %v6361 = vpop.f32.mrb[0].mxu0
        %v6362 = vadd.f32 %v6105, %v6361
        %v6363 = vpop.f32.mrb[0].mxu0
        %v6364 = vadd.f32 %v6107, %v6363
        %6365 = vmatprep.mubr.f32.mxu0 %v5815
        %6366 = vmatmul.mubr.f32.gmra.mrb[0].mxu0 %v5814
        %v6367 = vpop.f32.mrb[0].mxu0
        %v6368 = vadd.f32 %v6111, %v6367
        %v6369 = vpop.f32.mrb[0].mxu0
        %v6370 = vadd.f32 %v6113, %v6369
        %6371 = vmatprep.mubr.f32.mxu0 %v5817
        %6372 = vmatmul.mubr.f32.gmra.mrb[0].mxu0 %v5816
        %v6373 = vpop.f32.mrb[0].mxu0
        %v6374 = vadd.f32 %v6117, %v6373
        %v6375 = vpop.f32.mrb[0].mxu0
        %v6376 = vadd.f32 %v6119, %v6375
        %6377 = vmatprep.mubr.f32.mxu0 %v5819
        %6378 = vmatmul.mubr.f32.gmra.mrb[0].mxu0 %v5818
        %v6379 = vpop.f32.mrb[0].mxu0
        %v6380 = vadd.f32 %v6123, %v6379
        %v6381 = vpop.f32.mrb[0].mxu0
        %v6382 = vadd.f32 %v6125, %v6381
        %6383 = vmatprep.mubr.f32.mxu0 %v5821
        %6384 = vmatmul.mubr.f32.gmra.mrb[0].mxu0 %v5820
        %v6385 = vpop.f32.mrb[0].mxu0
        %v6386 = vadd.f32 %v6129, %v6385
        %v6387 = vpop.f32.mrb[0].mxu0
        %v6388 = vadd.f32 %v6131, %v6387
        %6389 = vmatprep.mubr.f32.mxu0 %v5823
        %6390 = vmatmul.mubr.f32.gmra.mrb[0].mxu0 %v5822
        %v6391 = vpop.f32.mrb[0].mxu0
        %v6392 = vadd.f32 %v6135, %v6391
        %v6393 = vpop.f32.mrb[0].mxu0
        %v6394 = vadd.f32 %v6137, %v6393
        %6395 = vmatprep.mubr.f32.mxu0 %v5825
        %6396 = vmatmul.mubr.f32.gmra.mrb[0].mxu0 %v5824
        %v6397 = vpop.f32.mrb[0].mxu0
        %v6398 = vadd.f32 %v6141, %v6397
        %v6399 = vpop.f32.mrb[0].mxu0
        %v6400 = vadd.f32 %v6143, %v6399
        %6401 = vmatprep.mubr.f32.mxu0 %v5827
        %6402 = vmatmul.mubr.f32.gmra.mrb[0].mxu0 %v5826
        %v6403 = vpop.f32.mrb[0].mxu0
        %v6404 = vadd.f32 %v6147, %v6403
        %v6405 = vpop.f32.mrb[0].mxu0
        %v6406 = vadd.f32 %v6149, %v6405
        %6407 = vmatprep.mubr.f32.mxu0 %v5829
        %6408 = vmatmul.mubr.f32.gmra.mrb[0].mxu0 %v5828
        %v6409 = vpop.f32.mrb[0].mxu0
        %v6410 = vadd.f32 %v6153, %v6409
        %v6411 = vpop.f32.mrb[0].mxu0
        %v6412 = vadd.f32 %v6155, %v6411
        %6413 = vmatprep.mubr.f32.mxu0 %v5831
        %6414 = vmatmul.mubr.f32.gmra.mrb[0].mxu0 %v5830
        %v6415 = vpop.f32.mrb[0].mxu0
        %v6416 = vadd.f32 %v6159, %v6415
        %v6417 = vpop.f32.mrb[0].mxu0
        %v6418 = vadd.f32 %v6161, %v6417
        %6419 = vdwg.mxu0
        %s6420 = scalar_lea.vmem %s4, 8
        %v6421 = vld [vmem:[%s6420] sm:$0x3]
        %v6423 = vlaneseq
        %v6424 = vshrl.u32 %v6423, 7
        %v6425 = vsub.s32 0, %v6424
        %v6426 = vrot.slane %v6421, %v6425
        %v6427 = vlaneseq
        %v6428 = vshrl.u32 %v6427, 7
        %v6429 = vsub.s32 1, %v6428
        %v6430 = vrot.slane %v6421, %v6429
        %v6433 = vadd.f32 %v6230, %v6426
        %v6434 = vadd.f32 %v6232, %v6430
        %v6435 = vadd.f32 %v6236, %v6426
        %v6436 = vadd.f32 %v6238, %v6430
        %v6437 = vadd.f32 %v6242, %v6426
        %v6438 = vadd.f32 %v6244, %v6430
        %v6439 = vadd.f32 %v6248, %v6426
        %v6440 = vadd.f32 %v6250, %v6430
        %v6441 = vadd.f32 %v6254, %v6426
        %v6442 = vadd.f32 %v6256, %v6430
        %v6443 = vadd.f32 %v6260, %v6426
        %v6444 = vadd.f32 %v6262, %v6430
        %v6445 = vadd.f32 %v6266, %v6426
        %v6446 = vadd.f32 %v6268, %v6430
        %v6447 = vadd.f32 %v6272, %v6426
        %v6448 = vadd.f32 %v6274, %v6430
        %v6449 = vadd.f32 %v6278, %v6426
        %v6450 = vadd.f32 %v6280, %v6430
        %v6451 = vadd.f32 %v6284, %v6426
        %v6452 = vadd.f32 %v6286, %v6430
        %v6453 = vadd.f32 %v6290, %v6426
        %v6454 = vadd.f32 %v6292, %v6430
        %v6455 = vadd.f32 %v6296, %v6426
        %v6456 = vadd.f32 %v6298, %v6430
        %v6457 = vadd.f32 %v6302, %v6426
        %v6458 = vadd.f32 %v6304, %v6430
        %v6459 = vadd.f32 %v6308, %v6426
        %v6460 = vadd.f32 %v6310, %v6430
        %v6461 = vadd.f32 %v6314, %v6426
        %v6462 = vadd.f32 %v6316, %v6430
        %v6463 = vadd.f32 %v6320, %v6426
        %v6464 = vadd.f32 %v6322, %v6430
        %v6465 = vadd.f32 %v6326, %v6426
        %v6466 = vadd.f32 %v6328, %v6430
        %v6467 = vadd.f32 %v6332, %v6426
        %v6468 = vadd.f32 %v6334, %v6430
        %v6469 = vadd.f32 %v6338, %v6426
        %v6470 = vadd.f32 %v6340, %v6430
        %v6471 = vadd.f32 %v6344, %v6426
        %v6472 = vadd.f32 %v6346, %v6430
        %v6473 = vadd.f32 %v6350, %v6426
        %v6474 = vadd.f32 %v6352, %v6430
        %v6475 = vadd.f32 %v6356, %v6426
        %v6476 = vadd.f32 %v6358, %v6430
        %v6477 = vadd.f32 %v6362, %v6426
        %v6478 = vadd.f32 %v6364, %v6430
        %v6479 = vadd.f32 %v6368, %v6426
        %v6480 = vadd.f32 %v6370, %v6430
        %v6481 = vadd.f32 %v6374, %v6426
        %v6482 = vadd.f32 %v6376, %v6430
        %v6483 = vadd.f32 %v6380, %v6426
        %v6484 = vadd.f32 %v6382, %v6430
        %v6485 = vadd.f32 %v6386, %v6426
        %v6486 = vadd.f32 %v6388, %v6430
        %v6487 = vadd.f32 %v6392, %v6426
        %v6488 = vadd.f32 %v6394, %v6430
        %v6489 = vadd.f32 %v6398, %v6426
        %v6490 = vadd.f32 %v6400, %v6430
        %v6491 = vadd.f32 %v6404, %v6426
        %v6492 = vadd.f32 %v6406, %v6430
        %v6493 = vadd.f32 %v6410, %v6426
        %v6494 = vadd.f32 %v6412, %v6430
        %v6495 = vadd.f32 %v6416, %v6426
        %v6496 = vadd.f32 %v6418, %v6430
        %v6497 = vmul.f32 %v6433, 100.0
        %v6498 = vmul.f32 %v6434, 100.0
        %v6499 = vmul.f32 %v6435, 100.0
        %v6500 = vmul.f32 %v6436, 100.0
        %v6501 = vmul.f32 %v6437, 100.0
        %v6502 = vmul.f32 %v6438, 100.0
        %v6503 = vmul.f32 %v6439, 100.0
        %v6504 = vmul.f32 %v6440, 100.0
        %v6505 = vmul.f32 %v6441, 100.0
        %v6506 = vmul.f32 %v6442, 100.0
        %v6507 = vmul.f32 %v6443, 100.0
        %v6508 = vmul.f32 %v6444, 100.0
        %v6509 = vmul.f32 %v6445, 100.0
        %v6510 = vmul.f32 %v6446, 100.0
        %v6511 = vmul.f32 %v6447, 100.0
        %v6512 = vmul.f32 %v6448, 100.0
        %v6513 = vmul.f32 %v6449, 100.0
        %v6514 = vmul.f32 %v6450, 100.0
        %v6515 = vmul.f32 %v6451, 100.0
        %v6516 = vmul.f32 %v6452, 100.0
        %v6517 = vmul.f32 %v6453, 100.0
        %v6518 = vmul.f32 %v6454, 100.0
        %v6519 = vmul.f32 %v6455, 100.0
        %v6520 = vmul.f32 %v6456, 100.0
        %v6521 = vmul.f32 %v6457, 100.0
        %v6522 = vmul.f32 %v6458, 100.0
        %v6523 = vmul.f32 %v6459, 100.0
        %v6524 = vmul.f32 %v6460, 100.0
        %v6525 = vmul.f32 %v6461, 100.0
        %v6526 = vmul.f32 %v6462, 100.0
        %v6527 = vmul.f32 %v6463, 100.0
        %v6528 = vmul.f32 %v6464, 100.0
        %v6529 = vmul.f32 %v6465, 100.0
        %v6530 = vmul.f32 %v6466, 100.0
        %v6531 = vmul.f32 %v6467, 100.0
        %v6532 = vmul.f32 %v6468, 100.0
        %v6533 = vmul.f32 %v6469, 100.0
        %v6534 = vmul.f32 %v6470, 100.0
        %v6535 = vmul.f32 %v6471, 100.0
        %v6536 = vmul.f32 %v6472, 100.0
        %v6537 = vmul.f32 %v6473, 100.0
        %v6538 = vmul.f32 %v6474, 100.0
        %v6539 = vmul.f32 %v6475, 100.0
        %v6540 = vmul.f32 %v6476, 100.0
        %v6541 = vmul.f32 %v6477, 100.0
        %v6542 = vmul.f32 %v6478, 100.0
        %v6543 = vmul.f32 %v6479, 100.0
        %v6544 = vmul.f32 %v6480, 100.0
        %v6545 = vmul.f32 %v6481, 100.0
        %v6546 = vmul.f32 %v6482, 100.0
        %v6547 = vmul.f32 %v6483, 100.0
        %v6548 = vmul.f32 %v6484, 100.0
        %v6549 = vmul.f32 %v6485, 100.0
        %v6550 = vmul.f32 %v6486, 100.0
        %v6551 = vmul.f32 %v6487, 100.0
        %v6552 = vmul.f32 %v6488, 100.0
        %v6553 = vmul.f32 %v6489, 100.0
        %v6554 = vmul.f32 %v6490, 100.0
        %v6555 = vmul.f32 %v6491, 100.0
        %v6556 = vmul.f32 %v6492, 100.0
        %v6557 = vmul.f32 %v6493, 100.0
        %v6558 = vmul.f32 %v6494, 100.0
        %v6559 = vmul.f32 %v6495, 100.0
        %v6560 = vmul.f32 %v6496, 100.0
        %v6561 = vmin.f32 %v6497, 20.0
        %v6562 = vmin.f32 %v6498, 20.0
        %v6563 = vmin.f32 %v6499, 20.0
        %v6564 = vmin.f32 %v6500, 20.0
        %v6565 = vmin.f32 %v6501, 20.0
        %v6566 = vmin.f32 %v6502, 20.0
        %v6567 = vmin.f32 %v6503, 20.0
        %v6568 = vmin.f32 %v6504, 20.0
        %v6569 = vmin.f32 %v6505, 20.0
        %v6570 = vmin.f32 %v6506, 20.0
        %v6571 = vmin.f32 %v6507, 20.0
        %v6572 = vmin.f32 %v6508, 20.0
        %v6573 = vmin.f32 %v6509, 20.0
        %v6574 = vmin.f32 %v6510, 20.0
        %v6575 = vmin.f32 %v6511, 20.0
        %v6576 = vmin.f32 %v6512, 20.0
        %v6577 = vmin.f32 %v6513, 20.0
        %v6578 = vmin.f32 %v6514, 20.0
        %v6579 = vmin.f32 %v6515, 20.0
        %v6580 = vmin.f32 %v6516, 20.0
        %v6581 = vmin.f32 %v6517, 20.0
        %v6582 = vmin.f32 %v6518, 20.0
        %v6583 = vmin.f32 %v6519, 20.0
        %v6584 = vmin.f32 %v6520, 20.0
        %v6585 = vmin.f32 %v6521, 20.0
        %v6586 = vmin.f32 %v6522, 20.0
        %v6587 = vmin.f32 %v6523, 20.0
        %v6588 = vmin.f32 %v6524, 20.0
        %v6589 = vmin.f32 %v6525, 20.0
        %v6590 = vmin.f32 %v6526, 20.0
        %v6591 = vmin.f32 %v6527, 20.0
        %v6592 = vmin.f32 %v6528, 20.0
        %v6593 = vmin.f32 %v6529, 20.0
        %v6594 = vmin.f32 %v6530, 20.0
        %v6595 = vmin.f32 %v6531, 20.0
        %v6596 = vmin.f32 %v6532, 20.0
        %v6597 = vmin.f32 %v6533, 20.0
        %v6598 = vmin.f32 %v6534, 20.0
        %v6599 = vmin.f32 %v6535, 20.0
        %v6600 = vmin.f32 %v6536, 20.0
        %v6601 = vmin.f32 %v6537, 20.0
        %v6602 = vmin.f32 %v6538, 20.0
        %v6603 = vmin.f32 %v6539, 20.0
        %v6604 = vmin.f32 %v6540, 20.0
        %v6605 = vmin.f32 %v6541, 20.0
        %v6606 = vmin.f32 %v6542, 20.0
        %v6607 = vmin.f32 %v6543, 20.0
        %v6608 = vmin.f32 %v6544, 20.0
        %v6609 = vmin.f32 %v6545, 20.0
        %v6610 = vmin.f32 %v6546, 20.0
        %v6611 = vmin.f32 %v6547, 20.0
        %v6612 = vmin.f32 %v6548, 20.0
        %v6613 = vmin.f32 %v6549, 20.0
        %v6614 = vmin.f32 %v6550, 20.0
        %v6615 = vmin.f32 %v6551, 20.0
        %v6616 = vmin.f32 %v6552, 20.0
        %v6617 = vmin.f32 %v6553, 20.0
        %v6618 = vmin.f32 %v6554, 20.0
        %v6619 = vmin.f32 %v6555, 20.0
        %v6620 = vmin.f32 %v6556, 20.0
        %v6621 = vmin.f32 %v6557, 20.0
        %v6622 = vmin.f32 %v6558, 20.0
        %v6623 = vmin.f32 %v6559, 20.0
        %v6624 = vmin.f32 %v6560, 20.0
        %vm6625 = vcmp.gt.f32.partialorder %v6497, 20.0
        %vm6626 = vcmp.gt.f32.partialorder %v6498, 20.0
        %vm6627 = vcmp.gt.f32.partialorder %v6499, 20.0
        %vm6628 = vcmp.gt.f32.partialorder %v6500, 20.0
        %vm6629 = vcmp.gt.f32.partialorder %v6501, 20.0
        %vm6630 = vcmp.gt.f32.partialorder %v6502, 20.0
        %vm6631 = vcmp.gt.f32.partialorder %v6503, 20.0
        %vm6632 = vcmp.gt.f32.partialorder %v6504, 20.0
        %vm6633 = vcmp.gt.f32.partialorder %v6505, 20.0
        %vm6634 = vcmp.gt.f32.partialorder %v6506, 20.0
        %vm6635 = vcmp.gt.f32.partialorder %v6507, 20.0
        %vm6636 = vcmp.gt.f32.partialorder %v6508, 20.0
        %vm6637 = vcmp.gt.f32.partialorder %v6509, 20.0
        %vm6638 = vcmp.gt.f32.partialorder %v6510, 20.0
        %vm6639 = vcmp.gt.f32.partialorder %v6511, 20.0
        %vm6640 = vcmp.gt.f32.partialorder %v6512, 20.0
        %vm6641 = vcmp.gt.f32.partialorder %v6513, 20.0
        %vm6642 = vcmp.gt.f32.partialorder %v6514, 20.0
        %vm6643 = vcmp.gt.f32.partialorder %v6515, 20.0
        %vm6644 = vcmp.gt.f32.partialorder %v6516, 20.0
        %vm6645 = vcmp.gt.f32.partialorder %v6517, 20.0
        %vm6646 = vcmp.gt.f32.partialorder %v6518, 20.0
        %vm6647 = vcmp.gt.f32.partialorder %v6519, 20.0
        %vm6648 = vcmp.gt.f32.partialorder %v6520, 20.0
        %vm6649 = vcmp.gt.f32.partialorder %v6521, 20.0
        %vm6650 = vcmp.gt.f32.partialorder %v6522, 20.0
        %vm6651 = vcmp.gt.f32.partialorder %v6523, 20.0
        %vm6652 = vcmp.gt.f32.partialorder %v6524, 20.0
        %vm6653 = vcmp.gt.f32.partialorder %v6525, 20.0
        %vm6654 = vcmp.gt.f32.partialorder %v6526, 20.0
        %vm6655 = vcmp.gt.f32.partialorder %v6527, 20.0
        %vm6656 = vcmp.gt.f32.partialorder %v6528, 20.0
        %vm6657 = vcmp.gt.f32.partialorder %v6529, 20.0
        %vm6658 = vcmp.gt.f32.partialorder %v6530, 20.0
        %vm6659 = vcmp.gt.f32.partialorder %v6531, 20.0
        %vm6660 = vcmp.gt.f32.partialorder %v6532, 20.0
        %vm6661 = vcmp.gt.f32.partialorder %v6533, 20.0
        %vm6662 = vcmp.gt.f32.partialorder %v6534, 20.0
        %vm6663 = vcmp.gt.f32.partialorder %v6535, 20.0
        %vm6664 = vcmp.gt.f32.partialorder %v6536, 20.0
        %vm6665 = vcmp.gt.f32.partialorder %v6537, 20.0
        %vm6666 = vcmp.gt.f32.partialorder %v6538, 20.0
        %vm6667 = vcmp.gt.f32.partialorder %v6539, 20.0
        %vm6668 = vcmp.gt.f32.partialorder %v6540, 20.0
        %vm6669 = vcmp.gt.f32.partialorder %v6541, 20.0
        %vm6670 = vcmp.gt.f32.partialorder %v6542, 20.0
        %vm6671 = vcmp.gt.f32.partialorder %v6543, 20.0
        %vm6672 = vcmp.gt.f32.partialorder %v6544, 20.0
        %vm6673 = vcmp.gt.f32.partialorder %v6545, 20.0
        %vm6674 = vcmp.gt.f32.partialorder %v6546, 20.0
        %vm6675 = vcmp.gt.f32.partialorder %v6547, 20.0
        %vm6676 = vcmp.gt.f32.partialorder %v6548, 20.0
        %vm6677 = vcmp.gt.f32.partialorder %v6549, 20.0
        %vm6678 = vcmp.gt.f32.partialorder %v6550, 20.0
        %vm6679 = vcmp.gt.f32.partialorder %v6551, 20.0
        %vm6680 = vcmp.gt.f32.partialorder %v6552, 20.0
        %vm6681 = vcmp.gt.f32.partialorder %v6553, 20.0
        %vm6682 = vcmp.gt.f32.partialorder %v6554, 20.0
        %vm6683 = vcmp.gt.f32.partialorder %v6555, 20.0
        %vm6684 = vcmp.gt.f32.partialorder %v6556, 20.0
        %vm6685 = vcmp.gt.f32.partialorder %v6557, 20.0
        %vm6686 = vcmp.gt.f32.partialorder %v6558, 20.0
        %vm6687 = vcmp.gt.f32.partialorder %v6559, 20.0
        %vm6688 = vcmp.gt.f32.partialorder %v6560, 20.0
        %v6689 = vmul.f32 %v6561, 1.442695
        %v6690 = vpow.pop %v6689
        %v6691 = vmul.f32 %v6562, 1.442695
        %v6692 = vpow.pop %v6691
        %v6693 = vmul.f32 %v6563, 1.442695
        %v6694 = vpow.pop %v6693
        %v6695 = vmul.f32 %v6564, 1.442695
        %v6696 = vpow.pop %v6695
        %v6697 = vmul.f32 %v6565, 1.442695
        %v6698 = vpow.pop %v6697
        %v6699 = vmul.f32 %v6566, 1.442695
        %v6700 = vpow.pop %v6699
        %v6701 = vmul.f32 %v6567, 1.442695
        %v6702 = vpow.pop %v6701
        %v6703 = vmul.f32 %v6568, 1.442695
        %v6704 = vpow.pop %v6703
        %v6705 = vmul.f32 %v6569, 1.442695
        %v6706 = vpow.pop %v6705
        %v6707 = vmul.f32 %v6570, 1.442695
        %v6708 = vpow.pop %v6707
        %v6709 = vmul.f32 %v6571, 1.442695
        %v6710 = vpow.pop %v6709
        %v6711 = vmul.f32 %v6572, 1.442695
        %v6712 = vpow.pop %v6711
        %v6713 = vmul.f32 %v6573, 1.442695
        %v6714 = vpow.pop %v6713
        %v6715 = vmul.f32 %v6574, 1.442695
        %v6716 = vpow.pop %v6715
        %v6717 = vmul.f32 %v6575, 1.442695
        %v6718 = vpow.pop %v6717
        %v6719 = vmul.f32 %v6576, 1.442695
        %v6720 = vpow.pop %v6719
        %v6721 = vmul.f32 %v6577, 1.442695
        %v6722 = vpow.pop %v6721
        %v6723 = vmul.f32 %v6578, 1.442695
        %v6724 = vpow.pop %v6723
        %v6725 = vmul.f32 %v6579, 1.442695
        %v6726 = vpow.pop %v6725
        %v6727 = vmul.f32 %v6580, 1.442695
        %v6728 = vpow.pop %v6727
        %v6729 = vmul.f32 %v6581, 1.442695
        %v6730 = vpow.pop %v6729
        %v6731 = vmul.f32 %v6582, 1.442695
        %v6732 = vpow.pop %v6731
        %v6733 = vmul.f32 %v6583, 1.442695
        %v6734 = vpow.pop %v6733
        %v6735 = vmul.f32 %v6584, 1.442695
        %v6736 = vpow.pop %v6735
        %v6737 = vmul.f32 %v6585, 1.442695
        %v6738 = vpow.pop %v6737
        %v6739 = vmul.f32 %v6586, 1.442695
        %v6740 = vpow.pop %v6739
        %v6741 = vmul.f32 %v6587, 1.442695
        %v6742 = vpow.pop %v6741
        %v6743 = vmul.f32 %v6588, 1.442695
        %v6744 = vpow.pop %v6743
        %v6745 = vmul.f32 %v6589, 1.442695
        %v6746 = vpow.pop %v6745
        %v6747 = vmul.f32 %v6590, 1.442695
        %v6748 = vpow.pop %v6747
        %v6749 = vmul.f32 %v6591, 1.442695
        %v6750 = vpow.pop %v6749
        %v6751 = vmul.f32 %v6592, 1.442695
        %v6752 = vpow.pop %v6751
        %v6753 = vmul.f32 %v6593, 1.442695
        %v6754 = vpow.pop %v6753
        %v6755 = vmul.f32 %v6594, 1.442695
        %v6756 = vpow.pop %v6755
        %v6757 = vmul.f32 %v6595, 1.442695
        %v6758 = vpow.pop %v6757
        %v6759 = vmul.f32 %v6596, 1.442695
        %v6760 = vpow.pop %v6759
        %v6761 = vmul.f32 %v6597, 1.442695
        %v6762 = vpow.pop %v6761
        %v6763 = vmul.f32 %v6598, 1.442695
        %v6764 = vpow.pop %v6763
        %v6765 = vmul.f32 %v6599, 1.442695
        %v6766 = vpow.pop %v6765
        %v6767 = vmul.f32 %v6600, 1.442695
        %v6768 = vpow.pop %v6767
        %v6769 = vmul.f32 %v6601, 1.442695
        %v6770 = vpow.pop %v6769
        %v6771 = vmul.f32 %v6602, 1.442695
        %v6772 = vpow.pop %v6771
        %v6773 = vmul.f32 %v6603, 1.442695
        %v6774 = vpow.pop %v6773
        %v6775 = vmul.f32 %v6604, 1.442695
        %v6776 = vpow.pop %v6775
        %v6777 = vmul.f32 %v6605, 1.442695
        %v6778 = vpow.pop %v6777
        %v6779 = vmul.f32 %v6606, 1.442695
        %v6780 = vpow.pop %v6779
        %v6781 = vmul.f32 %v6607, 1.442695
        %v6782 = vpow.pop %v6781
        %v6783 = vmul.f32 %v6608, 1.442695
        %v6784 = vpow.pop %v6783
        %v6785 = vmul.f32 %v6609, 1.442695
        %v6786 = vpow.pop %v6785
        %v6787 = vmul.f32 %v6610, 1.442695
        %v6788 = vpow.pop %v6787
        %v6789 = vmul.f32 %v6611, 1.442695
        %v6790 = vpow.pop %v6789
        %v6791 = vmul.f32 %v6612, 1.442695
        %v6792 = vpow.pop %v6791
        %v6793 = vmul.f32 %v6613, 1.442695
        %v6794 = vpow.pop %v6793
        %v6795 = vmul.f32 %v6614, 1.442695
        %v6796 = vpow.pop %v6795
        %v6797 = vmul.f32 %v6615, 1.442695
        %v6798 = vpow.pop %v6797
        %v6799 = vmul.f32 %v6616, 1.442695
        %v6800 = vpow.pop %v6799
        %v6801 = vmul.f32 %v6617, 1.442695
        %v6802 = vpow.pop %v6801
        %v6803 = vmul.f32 %v6618, 1.442695
        %v6804 = vpow.pop %v6803
        %v6805 = vmul.f32 %v6619, 1.442695
        %v6806 = vpow.pop %v6805
        %v6807 = vmul.f32 %v6620, 1.442695
        %v6808 = vpow.pop %v6807
        %v6809 = vmul.f32 %v6621, 1.442695
        %v6810 = vpow.pop %v6809
        %v6811 = vmul.f32 %v6622, 1.442695
        %v6812 = vpow.pop %v6811
        %v6813 = vmul.f32 %v6623, 1.442695
        %v6814 = vpow.pop %v6813
        %v6815 = vmul.f32 %v6624, 1.442695
        %v6816 = vpow.pop %v6815
        %v6817 = vadd.f32 %v6690, 1.0
        %v6818 = vlog2.pop %v6817
        %v6819 = vmul.f32 %v6818, 0.6931472
        %v6820 = vmul.f32 -0.5, %v6690
        %v6821 = vadd.f32 %v6820, 1.0
        %v6822 = vmul.f32 %v6821, %v6690
        %v6823 = vand.u32 2147483647, %v6690
        %vm6824 = vcmp.lt.f32.partialorder %v6823, 0.0004427343
        %v6825 = vsel %vm6824, %v6822, %v6819
        %v6826 = vadd.f32 %v6692, 1.0
        %v6827 = vlog2.pop %v6826
        %v6828 = vmul.f32 %v6827, 0.6931472
        %v6829 = vmul.f32 -0.5, %v6692
        %v6830 = vadd.f32 %v6829, 1.0
        %v6831 = vmul.f32 %v6830, %v6692
        %v6832 = vand.u32 2147483647, %v6692
        %vm6833 = vcmp.lt.f32.partialorder %v6832, 0.0004427343
        %v6834 = vsel %vm6833, %v6831, %v6828
        %v6835 = vadd.f32 %v6694, 1.0
        %v6836 = vlog2.pop %v6835
        %v6837 = vmul.f32 %v6836, 0.6931472
        %v6838 = vmul.f32 -0.5, %v6694
        %v6839 = vadd.f32 %v6838, 1.0
        %v6840 = vmul.f32 %v6839, %v6694
        %v6841 = vand.u32 2147483647, %v6694
        %vm6842 = vcmp.lt.f32.partialorder %v6841, 0.0004427343
        %v6843 = vsel %vm6842, %v6840, %v6837
        %v6844 = vadd.f32 %v6696, 1.0
        %v6845 = vlog2.pop %v6844
        %v6846 = vmul.f32 %v6845, 0.6931472
        %v6847 = vmul.f32 -0.5, %v6696
        %v6848 = vadd.f32 %v6847, 1.0
        %v6849 = vmul.f32 %v6848, %v6696
        %v6850 = vand.u32 2147483647, %v6696
        %vm6851 = vcmp.lt.f32.partialorder %v6850, 0.0004427343
        %v6852 = vsel %vm6851, %v6849, %v6846
        %v6853 = vadd.f32 %v6698, 1.0
        %v6854 = vlog2.pop %v6853
        %v6855 = vmul.f32 %v6854, 0.6931472
        %v6856 = vmul.f32 -0.5, %v6698
        %v6857 = vadd.f32 %v6856, 1.0
        %v6858 = vmul.f32 %v6857, %v6698
        %v6859 = vand.u32 2147483647, %v6698
        %vm6860 = vcmp.lt.f32.partialorder %v6859, 0.0004427343
        %v6861 = vsel %vm6860, %v6858, %v6855
        %v6862 = vadd.f32 %v6700, 1.0
        %v6863 = vlog2.pop %v6862
        %v6864 = vmul.f32 %v6863, 0.6931472
        %v6865 = vmul.f32 -0.5, %v6700
        %v6866 = vadd.f32 %v6865, 1.0
        %v6867 = vmul.f32 %v6866, %v6700
        %v6868 = vand.u32 2147483647, %v6700
        %vm6869 = vcmp.lt.f32.partialorder %v6868, 0.0004427343
        %v6870 = vsel %vm6869, %v6867, %v6864
        %v6871 = vadd.f32 %v6702, 1.0
        %v6872 = vlog2.pop %v6871
        %v6873 = vmul.f32 %v6872, 0.6931472
        %v6874 = vmul.f32 -0.5, %v6702
        %v6875 = vadd.f32 %v6874, 1.0
        %v6876 = vmul.f32 %v6875, %v6702
        %v6877 = vand.u32 2147483647, %v6702
        %vm6878 = vcmp.lt.f32.partialorder %v6877, 0.0004427343
        %v6879 = vsel %vm6878, %v6876, %v6873
        %v6880 = vadd.f32 %v6704, 1.0
        %v6881 = vlog2.pop %v6880
        %v6882 = vmul.f32 %v6881, 0.6931472
        %v6883 = vmul.f32 -0.5, %v6704
        %v6884 = vadd.f32 %v6883, 1.0
        %v6885 = vmul.f32 %v6884, %v6704
        %v6886 = vand.u32 2147483647, %v6704
        %vm6887 = vcmp.lt.f32.partialorder %v6886, 0.0004427343
        %v6888 = vsel %vm6887, %v6885, %v6882
        %v6889 = vadd.f32 %v6706, 1.0
        %v6890 = vlog2.pop %v6889
        %v6891 = vmul.f32 %v6890, 0.6931472
        %v6892 = vmul.f32 -0.5, %v6706
        %v6893 = vadd.f32 %v6892, 1.0
        %v6894 = vmul.f32 %v6893, %v6706
        %v6895 = vand.u32 2147483647, %v6706
        %vm6896 = vcmp.lt.f32.partialorder %v6895, 0.0004427343
        %v6897 = vsel %vm6896, %v6894, %v6891
        %v6898 = vadd.f32 %v6708, 1.0
        %v6899 = vlog2.pop %v6898
        %v6900 = vmul.f32 %v6899, 0.6931472
        %v6901 = vmul.f32 -0.5, %v6708
        %v6902 = vadd.f32 %v6901, 1.0
        %v6903 = vmul.f32 %v6902, %v6708
        %v6904 = vand.u32 2147483647, %v6708
        %vm6905 = vcmp.lt.f32.partialorder %v6904, 0.0004427343
        %v6906 = vsel %vm6905, %v6903, %v6900
        %v6907 = vadd.f32 %v6710, 1.0
        %v6908 = vlog2.pop %v6907
        %v6909 = vmul.f32 %v6908, 0.6931472
        %v6910 = vmul.f32 -0.5, %v6710
        %v6911 = vadd.f32 %v6910, 1.0
        %v6912 = vmul.f32 %v6911, %v6710
        %v6913 = vand.u32 2147483647, %v6710
        %vm6914 = vcmp.lt.f32.partialorder %v6913, 0.0004427343
        %v6915 = vsel %vm6914, %v6912, %v6909
        %v6916 = vadd.f32 %v6712, 1.0
        %v6917 = vlog2.pop %v6916
        %v6918 = vmul.f32 %v6917, 0.6931472
        %v6919 = vmul.f32 -0.5, %v6712
        %v6920 = vadd.f32 %v6919, 1.0
        %v6921 = vmul.f32 %v6920, %v6712
        %v6922 = vand.u32 2147483647, %v6712
        %vm6923 = vcmp.lt.f32.partialorder %v6922, 0.0004427343
        %v6924 = vsel %vm6923, %v6921, %v6918
        %v6925 = vadd.f32 %v6714, 1.0
        %v6926 = vlog2.pop %v6925
        %v6927 = vmul.f32 %v6926, 0.6931472
        %v6928 = vmul.f32 -0.5, %v6714
        %v6929 = vadd.f32 %v6928, 1.0
        %v6930 = vmul.f32 %v6929, %v6714
        %v6931 = vand.u32 2147483647, %v6714
        %vm6932 = vcmp.lt.f32.partialorder %v6931, 0.0004427343
        %v6933 = vsel %vm6932, %v6930, %v6927
        %v6934 = vadd.f32 %v6716, 1.0
        %v6935 = vlog2.pop %v6934
        %v6936 = vmul.f32 %v6935, 0.6931472
        %v6937 = vmul.f32 -0.5, %v6716
        %v6938 = vadd.f32 %v6937, 1.0
        %v6939 = vmul.f32 %v6938, %v6716
        %v6940 = vand.u32 2147483647, %v6716
        %vm6941 = vcmp.lt.f32.partialorder %v6940, 0.0004427343
        %v6942 = vsel %vm6941, %v6939, %v6936
        %v6943 = vadd.f32 %v6718, 1.0
        %v6944 = vlog2.pop %v6943
        %v6945 = vmul.f32 %v6944, 0.6931472
        %v6946 = vmul.f32 -0.5, %v6718
        %v6947 = vadd.f32 %v6946, 1.0
        %v6948 = vmul.f32 %v6947, %v6718
        %v6949 = vand.u32 2147483647, %v6718
        %vm6950 = vcmp.lt.f32.partialorder %v6949, 0.0004427343
        %v6951 = vsel %vm6950, %v6948, %v6945
        %v6952 = vadd.f32 %v6720, 1.0
        %v6953 = vlog2.pop %v6952
        %v6954 = vmul.f32 %v6953, 0.6931472
        %v6955 = vmul.f32 -0.5, %v6720
        %v6956 = vadd.f32 %v6955, 1.0
        %v6957 = vmul.f32 %v6956, %v6720
        %v6958 = vand.u32 2147483647, %v6720
        %vm6959 = vcmp.lt.f32.partialorder %v6958, 0.0004427343
        %v6960 = vsel %vm6959, %v6957, %v6954
        %v6961 = vadd.f32 %v6722, 1.0
        %v6962 = vlog2.pop %v6961
        %v6963 = vmul.f32 %v6962, 0.6931472
        %v6964 = vmul.f32 -0.5, %v6722
        %v6965 = vadd.f32 %v6964, 1.0
        %v6966 = vmul.f32 %v6965, %v6722
        %v6967 = vand.u32 2147483647, %v6722
        %vm6968 = vcmp.lt.f32.partialorder %v6967, 0.0004427343
        %v6969 = vsel %vm6968, %v6966, %v6963
        %v6970 = vadd.f32 %v6724, 1.0
        %v6971 = vlog2.pop %v6970
        %v6972 = vmul.f32 %v6971, 0.6931472
        %v6973 = vmul.f32 -0.5, %v6724
        %v6974 = vadd.f32 %v6973, 1.0
        %v6975 = vmul.f32 %v6974, %v6724
        %v6976 = vand.u32 2147483647, %v6724
        %vm6977 = vcmp.lt.f32.partialorder %v6976, 0.0004427343
        %v6978 = vsel %vm6977, %v6975, %v6972
        %v6979 = vadd.f32 %v6726, 1.0
        %v6980 = vlog2.pop %v6979
        %v6981 = vmul.f32 %v6980, 0.6931472
        %v6982 = vmul.f32 -0.5, %v6726
        %v6983 = vadd.f32 %v6982, 1.0
        %v6984 = vmul.f32 %v6983, %v6726
        %v6985 = vand.u32 2147483647, %v6726
        %vm6986 = vcmp.lt.f32.partialorder %v6985, 0.0004427343
        %v6987 = vsel %vm6986, %v6984, %v6981
        %v6988 = vadd.f32 %v6728, 1.0
        %v6989 = vlog2.pop %v6988
        %v6990 = vmul.f32 %v6989, 0.6931472
        %v6991 = vmul.f32 -0.5, %v6728
        %v6992 = vadd.f32 %v6991, 1.0
        %v6993 = vmul.f32 %v6992, %v6728
        %v6994 = vand.u32 2147483647, %v6728
        %vm6995 = vcmp.lt.f32.partialorder %v6994, 0.0004427343
        %v6996 = vsel %vm6995, %v6993, %v6990
        %v6997 = vadd.f32 %v6730, 1.0
        %v6998 = vlog2.pop %v6997
        %v6999 = vmul.f32 %v6998, 0.6931472
        %v7000 = vmul.f32 -0.5, %v6730
        %v7001 = vadd.f32 %v7000, 1.0
        %v7002 = vmul.f32 %v7001, %v6730
        %v7003 = vand.u32 2147483647, %v6730
        %vm7004 = vcmp.lt.f32.partialorder %v7003, 0.0004427343
        %v7005 = vsel %vm7004, %v7002, %v6999
        %v7006 = vadd.f32 %v6732, 1.0
        %v7007 = vlog2.pop %v7006
        %v7008 = vmul.f32 %v7007, 0.6931472
        %v7009 = vmul.f32 -0.5, %v6732
        %v7010 = vadd.f32 %v7009, 1.0
        %v7011 = vmul.f32 %v7010, %v6732
        %v7012 = vand.u32 2147483647, %v6732
        %vm7013 = vcmp.lt.f32.partialorder %v7012, 0.0004427343
        %v7014 = vsel %vm7013, %v7011, %v7008
        %v7015 = vadd.f32 %v6734, 1.0
        %v7016 = vlog2.pop %v7015
        %v7017 = vmul.f32 %v7016, 0.6931472
        %v7018 = vmul.f32 -0.5, %v6734
        %v7019 = vadd.f32 %v7018, 1.0
        %v7020 = vmul.f32 %v7019, %v6734
        %v7021 = vand.u32 2147483647, %v6734
        %vm7022 = vcmp.lt.f32.partialorder %v7021, 0.0004427343
        %v7023 = vsel %vm7022, %v7020, %v7017
        %v7024 = vadd.f32 %v6736, 1.0
        %v7025 = vlog2.pop %v7024
        %v7026 = vmul.f32 %v7025, 0.6931472
        %v7027 = vmul.f32 -0.5, %v6736
        %v7028 = vadd.f32 %v7027, 1.0
        %v7029 = vmul.f32 %v7028, %v6736
        %v7030 = vand.u32 2147483647, %v6736
        %vm7031 = vcmp.lt.f32.partialorder %v7030, 0.0004427343
        %v7032 = vsel %vm7031, %v7029, %v7026
        %v7033 = vadd.f32 %v6738, 1.0
        %v7034 = vlog2.pop %v7033
        %v7035 = vmul.f32 %v7034, 0.6931472
        %v7036 = vmul.f32 -0.5, %v6738
        %v7037 = vadd.f32 %v7036, 1.0
        %v7038 = vmul.f32 %v7037, %v6738
        %v7039 = vand.u32 2147483647, %v6738
        %vm7040 = vcmp.lt.f32.partialorder %v7039, 0.0004427343
        %v7041 = vsel %vm7040, %v7038, %v7035
        %v7042 = vadd.f32 %v6740, 1.0
        %v7043 = vlog2.pop %v7042
        %v7044 = vmul.f32 %v7043, 0.6931472
        %v7045 = vmul.f32 -0.5, %v6740
        %v7046 = vadd.f32 %v7045, 1.0
        %v7047 = vmul.f32 %v7046, %v6740
        %v7048 = vand.u32 2147483647, %v6740
        %vm7049 = vcmp.lt.f32.partialorder %v7048, 0.0004427343
        %v7050 = vsel %vm7049, %v7047, %v7044
        %v7051 = vadd.f32 %v6742, 1.0
        %v7052 = vlog2.pop %v7051
        %v7053 = vmul.f32 %v7052, 0.6931472
        %v7054 = vmul.f32 -0.5, %v6742
        %v7055 = vadd.f32 %v7054, 1.0
        %v7056 = vmul.f32 %v7055, %v6742
        %v7057 = vand.u32 2147483647, %v6742
        %vm7058 = vcmp.lt.f32.partialorder %v7057, 0.0004427343
        %v7059 = vsel %vm7058, %v7056, %v7053
        %v7060 = vadd.f32 %v6744, 1.0
        %v7061 = vlog2.pop %v7060
        %v7062 = vmul.f32 %v7061, 0.6931472
        %v7063 = vmul.f32 -0.5, %v6744
        %v7064 = vadd.f32 %v7063, 1.0
        %v7065 = vmul.f32 %v7064, %v6744
        %v7066 = vand.u32 2147483647, %v6744
        %vm7067 = vcmp.lt.f32.partialorder %v7066, 0.0004427343
        %v7068 = vsel %vm7067, %v7065, %v7062
        %v7069 = vadd.f32 %v6746, 1.0
        %v7070 = vlog2.pop %v7069
        %v7071 = vmul.f32 %v7070, 0.6931472
        %v7072 = vmul.f32 -0.5, %v6746
        %v7073 = vadd.f32 %v7072, 1.0
        %v7074 = vmul.f32 %v7073, %v6746
        %v7075 = vand.u32 2147483647, %v6746
        %vm7076 = vcmp.lt.f32.partialorder %v7075, 0.0004427343
        %v7077 = vsel %vm7076, %v7074, %v7071
        %v7078 = vadd.f32 %v6748, 1.0
        %v7079 = vlog2.pop %v7078
        %v7080 = vmul.f32 %v7079, 0.6931472
        %v7081 = vmul.f32 -0.5, %v6748
        %v7082 = vadd.f32 %v7081, 1.0
        %v7083 = vmul.f32 %v7082, %v6748
        %v7084 = vand.u32 2147483647, %v6748
        %vm7085 = vcmp.lt.f32.partialorder %v7084, 0.0004427343
        %v7086 = vsel %vm7085, %v7083, %v7080
        %v7087 = vadd.f32 %v6750, 1.0
        %v7088 = vlog2.pop %v7087
        %v7089 = vmul.f32 %v7088, 0.6931472
        %v7090 = vmul.f32 -0.5, %v6750
        %v7091 = vadd.f32 %v7090, 1.0
        %v7092 = vmul.f32 %v7091, %v6750
        %v7093 = vand.u32 2147483647, %v6750
        %vm7094 = vcmp.lt.f32.partialorder %v7093, 0.0004427343
        %v7095 = vsel %vm7094, %v7092, %v7089
        %v7096 = vadd.f32 %v6752, 1.0
        %v7097 = vlog2.pop %v7096
        %v7098 = vmul.f32 %v7097, 0.6931472
        %v7099 = vmul.f32 -0.5, %v6752
        %v7100 = vadd.f32 %v7099, 1.0
        %v7101 = vmul.f32 %v7100, %v6752
        %v7102 = vand.u32 2147483647, %v6752
        %vm7103 = vcmp.lt.f32.partialorder %v7102, 0.0004427343
        %v7104 = vsel %vm7103, %v7101, %v7098
        %v7105 = vadd.f32 %v6754, 1.0
        %v7106 = vlog2.pop %v7105
        %v7107 = vmul.f32 %v7106, 0.6931472
        %v7108 = vmul.f32 -0.5, %v6754
        %v7109 = vadd.f32 %v7108, 1.0
        %v7110 = vmul.f32 %v7109, %v6754
        %v7111 = vand.u32 2147483647, %v6754
        %vm7112 = vcmp.lt.f32.partialorder %v7111, 0.0004427343
        %v7113 = vsel %vm7112, %v7110, %v7107
        %v7114 = vadd.f32 %v6756, 1.0
        %v7115 = vlog2.pop %v7114
        %v7116 = vmul.f32 %v7115, 0.6931472
        %v7117 = vmul.f32 -0.5, %v6756
        %v7118 = vadd.f32 %v7117, 1.0
        %v7119 = vmul.f32 %v7118, %v6756
        %v7120 = vand.u32 2147483647, %v6756
        %vm7121 = vcmp.lt.f32.partialorder %v7120, 0.0004427343
        %v7122 = vsel %vm7121, %v7119, %v7116
        %v7123 = vadd.f32 %v6758, 1.0
        %v7124 = vlog2.pop %v7123
        %v7125 = vmul.f32 %v7124, 0.6931472
        %v7126 = vmul.f32 -0.5, %v6758
        %v7127 = vadd.f32 %v7126, 1.0
        %v7128 = vmul.f32 %v7127, %v6758
        %v7129 = vand.u32 2147483647, %v6758
        %vm7130 = vcmp.lt.f32.partialorder %v7129, 0.0004427343
        %v7131 = vsel %vm7130, %v7128, %v7125
        %v7132 = vadd.f32 %v6760, 1.0
        %v7133 = vlog2.pop %v7132
        %v7134 = vmul.f32 %v7133, 0.6931472
        %v7135 = vmul.f32 -0.5, %v6760
        %v7136 = vadd.f32 %v7135, 1.0
        %v7137 = vmul.f32 %v7136, %v6760
        %v7138 = vand.u32 2147483647, %v6760
        %vm7139 = vcmp.lt.f32.partialorder %v7138, 0.0004427343
        %v7140 = vsel %vm7139, %v7137, %v7134
        %v7141 = vadd.f32 %v6762, 1.0
        %v7142 = vlog2.pop %v7141
        %v7143 = vmul.f32 %v7142, 0.6931472
        %v7144 = vmul.f32 -0.5, %v6762
        %v7145 = vadd.f32 %v7144, 1.0
        %v7146 = vmul.f32 %v7145, %v6762
        %v7147 = vand.u32 2147483647, %v6762
        %vm7148 = vcmp.lt.f32.partialorder %v7147, 0.0004427343
        %v7149 = vsel %vm7148, %v7146, %v7143
        %v7150 = vadd.f32 %v6764, 1.0
        %v7151 = vlog2.pop %v7150
        %v7152 = vmul.f32 %v7151, 0.6931472
        %v7153 = vmul.f32 -0.5, %v6764
        %v7154 = vadd.f32 %v7153, 1.0
        %v7155 = vmul.f32 %v7154, %v6764
        %v7156 = vand.u32 2147483647, %v6764
        %vm7157 = vcmp.lt.f32.partialorder %v7156, 0.0004427343
        %v7158 = vsel %vm7157, %v7155, %v7152
        %v7159 = vadd.f32 %v6766, 1.0
        %v7160 = vlog2.pop %v7159
        %v7161 = vmul.f32 %v7160, 0.6931472
        %v7162 = vmul.f32 -0.5, %v6766
        %v7163 = vadd.f32 %v7162, 1.0
        %v7164 = vmul.f32 %v7163, %v6766
        %v7165 = vand.u32 2147483647, %v6766
        %vm7166 = vcmp.lt.f32.partialorder %v7165, 0.0004427343
        %v7167 = vsel %vm7166, %v7164, %v7161
        %v7168 = vadd.f32 %v6768, 1.0
        %v7169 = vlog2.pop %v7168
        %v7170 = vmul.f32 %v7169, 0.6931472
        %v7171 = vmul.f32 -0.5, %v6768
        %v7172 = vadd.f32 %v7171, 1.0
        %v7173 = vmul.f32 %v7172, %v6768
        %v7174 = vand.u32 2147483647, %v6768
        %vm7175 = vcmp.lt.f32.partialorder %v7174, 0.0004427343
        %v7176 = vsel %vm7175, %v7173, %v7170
        %v7177 = vadd.f32 %v6770, 1.0
        %v7178 = vlog2.pop %v7177
        %v7179 = vmul.f32 %v7178, 0.6931472
        %v7180 = vmul.f32 -0.5, %v6770
        %v7181 = vadd.f32 %v7180, 1.0
        %v7182 = vmul.f32 %v7181, %v6770
        %v7183 = vand.u32 2147483647, %v6770
        %vm7184 = vcmp.lt.f32.partialorder %v7183, 0.0004427343
        %v7185 = vsel %vm7184, %v7182, %v7179
        %v7186 = vadd.f32 %v6772, 1.0
        %v7187 = vlog2.pop %v7186
        %v7188 = vmul.f32 %v7187, 0.6931472
        %v7189 = vmul.f32 -0.5, %v6772
        %v7190 = vadd.f32 %v7189, 1.0
        %v7191 = vmul.f32 %v7190, %v6772
        %v7192 = vand.u32 2147483647, %v6772
        %vm7193 = vcmp.lt.f32.partialorder %v7192, 0.0004427343
        %v7194 = vsel %vm7193, %v7191, %v7188
        %v7195 = vadd.f32 %v6774, 1.0
        %v7196 = vlog2.pop %v7195
        %v7197 = vmul.f32 %v7196, 0.6931472
        %v7198 = vmul.f32 -0.5, %v6774
        %v7199 = vadd.f32 %v7198, 1.0
        %v7200 = vmul.f32 %v7199, %v6774
        %v7201 = vand.u32 2147483647, %v6774
        %vm7202 = vcmp.lt.f32.partialorder %v7201, 0.0004427343
        %v7203 = vsel %vm7202, %v7200, %v7197
        %v7204 = vadd.f32 %v6776, 1.0
        %v7205 = vlog2.pop %v7204
        %v7206 = vmul.f32 %v7205, 0.6931472
        %v7207 = vmul.f32 -0.5, %v6776
        %v7208 = vadd.f32 %v7207, 1.0
        %v7209 = vmul.f32 %v7208, %v6776
        %v7210 = vand.u32 2147483647, %v6776
        %vm7211 = vcmp.lt.f32.partialorder %v7210, 0.0004427343
        %v7212 = vsel %vm7211, %v7209, %v7206
        %v7213 = vadd.f32 %v6778, 1.0
        %v7214 = vlog2.pop %v7213
        %v7215 = vmul.f32 %v7214, 0.6931472
        %v7216 = vmul.f32 -0.5, %v6778
        %v7217 = vadd.f32 %v7216, 1.0
        %v7218 = vmul.f32 %v7217, %v6778
        %v7219 = vand.u32 2147483647, %v6778
        %vm7220 = vcmp.lt.f32.partialorder %v7219, 0.0004427343
        %v7221 = vsel %vm7220, %v7218, %v7215
        %v7222 = vadd.f32 %v6780, 1.0
        %v7223 = vlog2.pop %v7222
        %v7224 = vmul.f32 %v7223, 0.6931472
        %v7225 = vmul.f32 -0.5, %v6780
        %v7226 = vadd.f32 %v7225, 1.0
        %v7227 = vmul.f32 %v7226, %v6780
        %v7228 = vand.u32 2147483647, %v6780
        %vm7229 = vcmp.lt.f32.partialorder %v7228, 0.0004427343
        %v7230 = vsel %vm7229, %v7227, %v7224
        %v7231 = vadd.f32 %v6782, 1.0
        %v7232 = vlog2.pop %v7231
        %v7233 = vmul.f32 %v7232, 0.6931472
        %v7234 = vmul.f32 -0.5, %v6782
        %v7235 = vadd.f32 %v7234, 1.0
        %v7236 = vmul.f32 %v7235, %v6782
        %v7237 = vand.u32 2147483647, %v6782
        %vm7238 = vcmp.lt.f32.partialorder %v7237, 0.0004427343
        %v7239 = vsel %vm7238, %v7236, %v7233
        %v7240 = vadd.f32 %v6784, 1.0
        %v7241 = vlog2.pop %v7240
        %v7242 = vmul.f32 %v7241, 0.6931472
        %v7243 = vmul.f32 -0.5, %v6784
        %v7244 = vadd.f32 %v7243, 1.0
        %v7245 = vmul.f32 %v7244, %v6784
        %v7246 = vand.u32 2147483647, %v6784
        %vm7247 = vcmp.lt.f32.partialorder %v7246, 0.0004427343
        %v7248 = vsel %vm7247, %v7245, %v7242
        %v7249 = vadd.f32 %v6786, 1.0
        %v7250 = vlog2.pop %v7249
        %v7251 = vmul.f32 %v7250, 0.6931472
        %v7252 = vmul.f32 -0.5, %v6786
        %v7253 = vadd.f32 %v7252, 1.0
        %v7254 = vmul.f32 %v7253, %v6786
        %v7255 = vand.u32 2147483647, %v6786
        %vm7256 = vcmp.lt.f32.partialorder %v7255, 0.0004427343
        %v7257 = vsel %vm7256, %v7254, %v7251
        %v7258 = vadd.f32 %v6788, 1.0
        %v7259 = vlog2.pop %v7258
        %v7260 = vmul.f32 %v7259, 0.6931472
        %v7261 = vmul.f32 -0.5, %v6788
        %v7262 = vadd.f32 %v7261, 1.0
        %v7263 = vmul.f32 %v7262, %v6788
        %v7264 = vand.u32 2147483647, %v6788
        %vm7265 = vcmp.lt.f32.partialorder %v7264, 0.0004427343
        %v7266 = vsel %vm7265, %v7263, %v7260
        %v7267 = vadd.f32 %v6790, 1.0
        %v7268 = vlog2.pop %v7267
        %v7269 = vmul.f32 %v7268, 0.6931472
        %v7270 = vmul.f32 -0.5, %v6790
        %v7271 = vadd.f32 %v7270, 1.0
        %v7272 = vmul.f32 %v7271, %v6790
        %v7273 = vand.u32 2147483647, %v6790
        %vm7274 = vcmp.lt.f32.partialorder %v7273, 0.0004427343
        %v7275 = vsel %vm7274, %v7272, %v7269
        %v7276 = vadd.f32 %v6792, 1.0
        %v7277 = vlog2.pop %v7276
        %v7278 = vmul.f32 %v7277, 0.6931472
        %v7279 = vmul.f32 -0.5, %v6792
        %v7280 = vadd.f32 %v7279, 1.0
        %v7281 = vmul.f32 %v7280, %v6792
        %v7282 = vand.u32 2147483647, %v6792
        %vm7283 = vcmp.lt.f32.partialorder %v7282, 0.0004427343
        %v7284 = vsel %vm7283, %v7281, %v7278
        %v7285 = vadd.f32 %v6794, 1.0
        %v7286 = vlog2.pop %v7285
        %v7287 = vmul.f32 %v7286, 0.6931472
        %v7288 = vmul.f32 -0.5, %v6794
        %v7289 = vadd.f32 %v7288, 1.0
        %v7290 = vmul.f32 %v7289, %v6794
        %v7291 = vand.u32 2147483647, %v6794
        %vm7292 = vcmp.lt.f32.partialorder %v7291, 0.0004427343
        %v7293 = vsel %vm7292, %v7290, %v7287
        %v7294 = vadd.f32 %v6796, 1.0
        %v7295 = vlog2.pop %v7294
        %v7296 = vmul.f32 %v7295, 0.6931472
        %v7297 = vmul.f32 -0.5, %v6796
        %v7298 = vadd.f32 %v7297, 1.0
        %v7299 = vmul.f32 %v7298, %v6796
        %v7300 = vand.u32 2147483647, %v6796
        %vm7301 = vcmp.lt.f32.partialorder %v7300, 0.0004427343
        %v7302 = vsel %vm7301, %v7299, %v7296
        %v7303 = vadd.f32 %v6798, 1.0
        %v7304 = vlog2.pop %v7303
        %v7305 = vmul.f32 %v7304, 0.6931472
        %v7306 = vmul.f32 -0.5, %v6798
        %v7307 = vadd.f32 %v7306, 1.0
        %v7308 = vmul.f32 %v7307, %v6798
        %v7309 = vand.u32 2147483647, %v6798
        %vm7310 = vcmp.lt.f32.partialorder %v7309, 0.0004427343
        %v7311 = vsel %vm7310, %v7308, %v7305
        %v7312 = vadd.f32 %v6800, 1.0
        %v7313 = vlog2.pop %v7312
        %v7314 = vmul.f32 %v7313, 0.6931472
        %v7315 = vmul.f32 -0.5, %v6800
        %v7316 = vadd.f32 %v7315, 1.0
        %v7317 = vmul.f32 %v7316, %v6800
        %v7318 = vand.u32 2147483647, %v6800
        %vm7319 = vcmp.lt.f32.partialorder %v7318, 0.0004427343
        %v7320 = vsel %vm7319, %v7317, %v7314
        %v7321 = vadd.f32 %v6802, 1.0
        %v7322 = vlog2.pop %v7321
        %v7323 = vmul.f32 %v7322, 0.6931472
        %v7324 = vmul.f32 -0.5, %v6802
        %v7325 = vadd.f32 %v7324, 1.0
        %v7326 = vmul.f32 %v7325, %v6802
        %v7327 = vand.u32 2147483647, %v6802
        %vm7328 = vcmp.lt.f32.partialorder %v7327, 0.0004427343
        %v7329 = vsel %vm7328, %v7326, %v7323
        %v7330 = vadd.f32 %v6804, 1.0
        %v7331 = vlog2.pop %v7330
        %v7332 = vmul.f32 %v7331, 0.6931472
        %v7333 = vmul.f32 -0.5, %v6804
        %v7334 = vadd.f32 %v7333, 1.0
        %v7335 = vmul.f32 %v7334, %v6804
        %v7336 = vand.u32 2147483647, %v6804
        %vm7337 = vcmp.lt.f32.partialorder %v7336, 0.0004427343
        %v7338 = vsel %vm7337, %v7335, %v7332
        %v7339 = vadd.f32 %v6806, 1.0
        %v7340 = vlog2.pop %v7339
        %v7341 = vmul.f32 %v7340, 0.6931472
        %v7342 = vmul.f32 -0.5, %v6806
        %v7343 = vadd.f32 %v7342, 1.0
        %v7344 = vmul.f32 %v7343, %v6806
        %v7345 = vand.u32 2147483647, %v6806
        %vm7346 = vcmp.lt.f32.partialorder %v7345, 0.0004427343
        %v7347 = vsel %vm7346, %v7344, %v7341
        %v7348 = vadd.f32 %v6808, 1.0
        %v7349 = vlog2.pop %v7348
        %v7350 = vmul.f32 %v7349, 0.6931472
        %v7351 = vmul.f32 -0.5, %v6808
        %v7352 = vadd.f32 %v7351, 1.0
        %v7353 = vmul.f32 %v7352, %v6808
        %v7354 = vand.u32 2147483647, %v6808
        %vm7355 = vcmp.lt.f32.partialorder %v7354, 0.0004427343
        %v7356 = vsel %vm7355, %v7353, %v7350
        %v7357 = vadd.f32 %v6810, 1.0
        %v7358 = vlog2.pop %v7357
        %v7359 = vmul.f32 %v7358, 0.6931472
        %v7360 = vmul.f32 -0.5, %v6810
        %v7361 = vadd.f32 %v7360, 1.0
        %v7362 = vmul.f32 %v7361, %v6810
        %v7363 = vand.u32 2147483647, %v6810
        %vm7364 = vcmp.lt.f32.partialorder %v7363, 0.0004427343
        %v7365 = vsel %vm7364, %v7362, %v7359
        %v7366 = vadd.f32 %v6812, 1.0
        %v7367 = vlog2.pop %v7366
        %v7368 = vmul.f32 %v7367, 0.6931472
        %v7369 = vmul.f32 -0.5, %v6812
        %v7370 = vadd.f32 %v7369, 1.0
        %v7371 = vmul.f32 %v7370, %v6812
        %v7372 = vand.u32 2147483647, %v6812
        %vm7373 = vcmp.lt.f32.partialorder %v7372, 0.0004427343
        %v7374 = vsel %vm7373, %v7371, %v7368
        %v7375 = vadd.f32 %v6814, 1.0
        %v7376 = vlog2.pop %v7375
        %v7377 = vmul.f32 %v7376, 0.6931472
        %v7378 = vmul.f32 -0.5, %v6814
        %v7379 = vadd.f32 %v7378, 1.0
        %v7380 = vmul.f32 %v7379, %v6814
        %v7381 = vand.u32 2147483647, %v6814
        %vm7382 = vcmp.lt.f32.partialorder %v7381, 0.0004427343
        %v7383 = vsel %vm7382, %v7380, %v7377
        %v7384 = vadd.f32 %v6816, 1.0
        %v7385 = vlog2.pop %v7384
        %v7386 = vmul.f32 %v7385, 0.6931472
        %v7387 = vmul.f32 -0.5, %v6816
        %v7388 = vadd.f32 %v7387, 1.0
        %v7389 = vmul.f32 %v7388, %v6816
        %v7390 = vand.u32 2147483647, %v6816
        %vm7391 = vcmp.lt.f32.partialorder %v7390, 0.0004427343
        %v7392 = vsel %vm7391, %v7389, %v7386
        %v7393 = vmul.f32 %v6825, 0.01
        %v7394 = vmul.f32 %v6834, 0.01
        %v7395 = vmul.f32 %v6843, 0.01
        %v7396 = vmul.f32 %v6852, 0.01
        %v7397 = vmul.f32 %v6861, 0.01
        %v7398 = vmul.f32 %v6870, 0.01
        %v7399 = vmul.f32 %v6879, 0.01
        %v7400 = vmul.f32 %v6888, 0.01
        %v7401 = vmul.f32 %v6897, 0.01
        %v7402 = vmul.f32 %v6906, 0.01
        %v7403 = vmul.f32 %v6915, 0.01
        %v7404 = vmul.f32 %v6924, 0.01
        %v7405 = vmul.f32 %v6933, 0.01
        %v7406 = vmul.f32 %v6942, 0.01
        %v7407 = vmul.f32 %v6951, 0.01
        %v7408 = vmul.f32 %v6960, 0.01
        %v7409 = vmul.f32 %v6969, 0.01
        %v7410 = vmul.f32 %v6978, 0.01
        %v7411 = vmul.f32 %v6987, 0.01
        %v7412 = vmul.f32 %v6996, 0.01
        %v7413 = vmul.f32 %v7005, 0.01
        %v7414 = vmul.f32 %v7014, 0.01
        %v7415 = vmul.f32 %v7023, 0.01
        %v7416 = vmul.f32 %v7032, 0.01
        %v7417 = vmul.f32 %v7041, 0.01
        %v7418 = vmul.f32 %v7050, 0.01
        %v7419 = vmul.f32 %v7059, 0.01
        %v7420 = vmul.f32 %v7068, 0.01
        %v7421 = vmul.f32 %v7077, 0.01
        %v7422 = vmul.f32 %v7086, 0.01
        %v7423 = vmul.f32 %v7095, 0.01
        %v7424 = vmul.f32 %v7104, 0.01
        %v7425 = vmul.f32 %v7113, 0.01
        %v7426 = vmul.f32 %v7122, 0.01
        %v7427 = vmul.f32 %v7131, 0.01
        %v7428 = vmul.f32 %v7140, 0.01
        %v7429 = vmul.f32 %v7149, 0.01
        %v7430 = vmul.f32 %v7158, 0.01
        %v7431 = vmul.f32 %v7167, 0.01
        %v7432 = vmul.f32 %v7176, 0.01
        %v7433 = vmul.f32 %v7185, 0.01
        %v7434 = vmul.f32 %v7194, 0.01
        %v7435 = vmul.f32 %v7203, 0.01
        %v7436 = vmul.f32 %v7212, 0.01
        %v7437 = vmul.f32 %v7221, 0.01
        %v7438 = vmul.f32 %v7230, 0.01
        %v7439 = vmul.f32 %v7239, 0.01
        %v7440 = vmul.f32 %v7248, 0.01
        %v7441 = vmul.f32 %v7257, 0.01
        %v7442 = vmul.f32 %v7266, 0.01
        %v7443 = vmul.f32 %v7275, 0.01
        %v7444 = vmul.f32 %v7284, 0.01
        %v7445 = vmul.f32 %v7293, 0.01
        %v7446 = vmul.f32 %v7302, 0.01
        %v7447 = vmul.f32 %v7311, 0.01
        %v7448 = vmul.f32 %v7320, 0.01
        %v7449 = vmul.f32 %v7329, 0.01
        %v7450 = vmul.f32 %v7338, 0.01
        %v7451 = vmul.f32 %v7347, 0.01
        %v7452 = vmul.f32 %v7356, 0.01
        %v7453 = vmul.f32 %v7365, 0.01
        %v7454 = vmul.f32 %v7374, 0.01
        %v7455 = vmul.f32 %v7383, 0.01
        %v7456 = vmul.f32 %v7392, 0.01
        %v7457 = vsel %vm6625, %v6433, %v7393
        %v7458 = vsel %vm6626, %v6434, %v7394
        %v7459 = vsel %vm6627, %v6435, %v7395
        %v7460 = vsel %vm6628, %v6436, %v7396
        %v7461 = vsel %vm6629, %v6437, %v7397
        %v7462 = vsel %vm6630, %v6438, %v7398
        %v7463 = vsel %vm6631, %v6439, %v7399
        %v7464 = vsel %vm6632, %v6440, %v7400
        %v7465 = vsel %vm6633, %v6441, %v7401
        %v7466 = vsel %vm6634, %v6442, %v7402
        %v7467 = vsel %vm6635, %v6443, %v7403
        %v7468 = vsel %vm6636, %v6444, %v7404
        %v7469 = vsel %vm6637, %v6445, %v7405
        %v7470 = vsel %vm6638, %v6446, %v7406
        %v7471 = vsel %vm6639, %v6447, %v7407
        %v7472 = vsel %vm6640, %v6448, %v7408
        %v7473 = vsel %vm6641, %v6449, %v7409
        %v7474 = vsel %vm6642, %v6450, %v7410
        %v7475 = vsel %vm6643, %v6451, %v7411
        %v7476 = vsel %vm6644, %v6452, %v7412
        %v7477 = vsel %vm6645, %v6453, %v7413
        %v7478 = vsel %vm6646, %v6454, %v7414
        %v7479 = vsel %vm6647, %v6455, %v7415
        %v7480 = vsel %vm6648, %v6456, %v7416
        %v7481 = vsel %vm6649, %v6457, %v7417
        %v7482 = vsel %vm6650, %v6458, %v7418
        %v7483 = vsel %vm6651, %v6459, %v7419
        %v7484 = vsel %vm6652, %v6460, %v7420
        %v7485 = vsel %vm6653, %v6461, %v7421
        %v7486 = vsel %vm6654, %v6462, %v7422
        %v7487 = vsel %vm6655, %v6463, %v7423
        %v7488 = vsel %vm6656, %v6464, %v7424
        %v7489 = vsel %vm6657, %v6465, %v7425
        %v7490 = vsel %vm6658, %v6466, %v7426
        %v7491 = vsel %vm6659, %v6467, %v7427
        %v7492 = vsel %vm6660, %v6468, %v7428
        %v7493 = vsel %vm6661, %v6469, %v7429
        %v7494 = vsel %vm6662, %v6470, %v7430
        %v7495 = vsel %vm6663, %v6471, %v7431
        %v7496 = vsel %vm6664, %v6472, %v7432
        %v7497 = vsel %vm6665, %v6473, %v7433
        %v7498 = vsel %vm6666, %v6474, %v7434
        %v7499 = vsel %vm6667, %v6475, %v7435
        %v7500 = vsel %vm6668, %v6476, %v7436
        %v7501 = vsel %vm6669, %v6477, %v7437
        %v7502 = vsel %vm6670, %v6478, %v7438
        %v7503 = vsel %vm6671, %v6479, %v7439
        %v7504 = vsel %vm6672, %v6480, %v7440
        %v7505 = vsel %vm6673, %v6481, %v7441
        %v7506 = vsel %vm6674, %v6482, %v7442
        %v7507 = vsel %vm6675, %v6483, %v7443
        %v7508 = vsel %vm6676, %v6484, %v7444
        %v7509 = vsel %vm6677, %v6485, %v7445
        %v7510 = vsel %vm6678, %v6486, %v7446
        %v7511 = vsel %vm6679, %v6487, %v7447
        %v7512 = vsel %vm6680, %v6488, %v7448
        %v7513 = vsel %vm6681, %v6489, %v7449
        %v7514 = vsel %vm6682, %v6490, %v7450
        %v7515 = vsel %vm6683, %v6491, %v7451
        %v7516 = vsel %vm6684, %v6492, %v7452
        %v7517 = vsel %vm6685, %v6493, %v7453
        %v7518 = vsel %vm6686, %v6494, %v7454
        %v7519 = vsel %vm6687, %v6495, %v7455
        %v7520 = vsel %vm6688, %v6496, %v7456
        %v7521 = vld [vmem:[#allocation4] sm:$0xff]
        %v7522 = vld [vmem:[#allocation4 + $0x8] sm:$0xff]
        %v7523 = vld [vmem:[#allocation4 + $0x10] sm:$0xff]
        %v7524 = vld [vmem:[#allocation4 + $0x18] sm:$0xff]
        %v7525 = vld [vmem:[#allocation4 + $0x20] sm:$0xff]
        %v7526 = vld [vmem:[#allocation4 + $0x28] sm:$0xff]
        %v7527 = vld [vmem:[#allocation4 + $0x30] sm:$0xff]
        %v7528 = vld [vmem:[#allocation4 + $0x38] sm:$0xff]
        %v7529 = vld [vmem:[#allocation4 + $0x40] sm:$0xff]
        %v7530 = vld [vmem:[#allocation4 + $0x48] sm:$0xff]
        %v7531 = vld [vmem:[#allocation4 + $0x50] sm:$0xff]
        %v7532 = vld [vmem:[#allocation4 + $0x58] sm:$0xff]
        %v7533 = vld [vmem:[#allocation4 + $0x60] sm:$0xff]
        %v7534 = vld [vmem:[#allocation4 + $0x68] sm:$0xff]
        %v7535 = vld [vmem:[#allocation4 + $0x70] sm:$0xff]
        %v7536 = vld [vmem:[#allocation4 + $0x78] sm:$0xff]
        %v7537 = vld [vmem:[#allocation4 + $0x80] sm:$0xff]
        %v7538 = vld [vmem:[#allocation4 + $0x88] sm:$0xff]
        %v7539 = vld [vmem:[#allocation4 + $0x90] sm:$0xff]
        %v7540 = vld [vmem:[#allocation4 + $0x98] sm:$0xff]
        %v7541 = vld [vmem:[#allocation4 + $0xa0] sm:$0xff]
        %v7542 = vld [vmem:[#allocation4 + $0xa8] sm:$0xff]
        %v7543 = vld [vmem:[#allocation4 + $0xb0] sm:$0xff]
        %v7544 = vld [vmem:[#allocation4 + $0xb8] sm:$0xff]
        %v7545 = vld [vmem:[#allocation4 + $0xc0] sm:$0xff]
        %v7546 = vld [vmem:[#allocation4 + $0xc8] sm:$0xff]
        %v7547 = vld [vmem:[#allocation4 + $0xd0] sm:$0xff]
        %v7548 = vld [vmem:[#allocation4 + $0xd8] sm:$0xff]
        %v7549 = vld [vmem:[#allocation4 + $0xe0] sm:$0xff]
        %v7550 = vld [vmem:[#allocation4 + $0xe8] sm:$0xff]
        %v7551 = vld [vmem:[#allocation4 + $0xf0] sm:$0xff]
        %v7552 = vld [vmem:[#allocation4 + $0xf8] sm:$0xff]
        %v7553 = vld [vmem:[%s5] sm:$0x1]
        %v7555 = vlaneseq
        %v7556 = vshrl.u32 %v7555, 7
        %v7557 = vsub.s32 0, %v7556
        %v7558 = vrot.slane %v7553, %v7557
        %7560 = vmatprep.subr.mxu0 0.0
        %7561 = vmatpush1.msra.mxu0 %v7521
        %7562 = vmatprep.subr.mxu0 0.0
        %7563 = vmatpush1.msra.mxu0 %v7522
        %7564 = vmatprep.subr.mxu0 0.0
        %7565 = vmatpush1.msra.mxu0 %v7523
        %7566 = vmatprep.subr.mxu0 0.0
        %7567 = vmatpush1.msra.mxu0 %v7524
        %7568 = vmatprep.subr.mxu0 0.0
        %7569 = vmatpush1.msra.mxu0 %v7525
        %7570 = vmatprep.subr.mxu0 0.0
        %7571 = vmatpush1.msra.mxu0 %v7526
        %7572 = vmatprep.subr.mxu0 0.0
        %7573 = vmatpush1.msra.mxu0 %v7527
        %7574 = vmatprep.subr.mxu0 0.0
        %7575 = vmatpush1.msra.mxu0 %v7528
        %7576 = vmatprep.subr.mxu0 0.0
        %7577 = vmatpush1.msra.mxu0 %v7529
        %7578 = vmatprep.subr.mxu0 0.0
        %7579 = vmatpush1.msra.mxu0 %v7530
        %7580 = vmatprep.subr.mxu0 0.0
        %7581 = vmatpush1.msra.mxu0 %v7531
        %7582 = vmatprep.subr.mxu0 0.0
        %7583 = vmatpush1.msra.mxu0 %v7532
        %7584 = vmatprep.subr.mxu0 0.0
        %7585 = vmatpush1.msra.mxu0 %v7533
        %7586 = vmatprep.subr.mxu0 0.0
        %7587 = vmatpush1.msra.mxu0 %v7534
        %7588 = vmatprep.subr.mxu0 0.0
        %7589 = vmatpush1.msra.mxu0 %v7535
        %7590 = vmatprep.subr.mxu0 0.0
        %7591 = vmatpush1.msra.mxu0 %v7536
        %7592 = vmatprep.subr.mxu0 0.0
        %7593 = vmatpush1.msra.mxu0 %v7537
        %7594 = vmatprep.subr.mxu0 0.0
        %7595 = vmatpush1.msra.mxu0 %v7538
        %7596 = vmatprep.subr.mxu0 0.0
        %7597 = vmatpush1.msra.mxu0 %v7539
        %7598 = vmatprep.subr.mxu0 0.0
        %7599 = vmatpush1.msra.mxu0 %v7540
        %7600 = vmatprep.subr.mxu0 0.0
        %7601 = vmatpush1.msra.mxu0 %v7541
        %7602 = vmatprep.subr.mxu0 0.0
        %7603 = vmatpush1.msra.mxu0 %v7542
        %7604 = vmatprep.subr.mxu0 0.0
        %7605 = vmatpush1.msra.mxu0 %v7543
        %7606 = vmatprep.subr.mxu0 0.0
        %7607 = vmatpush1.msra.mxu0 %v7544
        %7608 = vmatprep.subr.mxu0 0.0
        %7609 = vmatpush1.msra.mxu0 %v7545
        %7610 = vmatprep.subr.mxu0 0.0
        %7611 = vmatpush1.msra.mxu0 %v7546
        %7612 = vmatprep.subr.mxu0 0.0
        %7613 = vmatpush1.msra.mxu0 %v7547
        %7614 = vmatprep.subr.mxu0 0.0
        %7615 = vmatpush1.msra.mxu0 %v7548
        %7616 = vmatprep.subr.mxu0 0.0
        %7617 = vmatpush1.msra.mxu0 %v7549
        %7618 = vmatprep.subr.mxu0 0.0
        %7619 = vmatpush1.msra.mxu0 %v7550
        %7620 = vmatprep.subr.mxu0 0.0
        %7621 = vmatpush1.msra.mxu0 %v7551
        %7622 = vmatprep.subr.mxu0 0.0
        %7623 = vmatpush1.msra.mxu0 %v7552
        %7624 = vmatprep.mubr.f32.mxu0 %v7458
        %7625 = vmatmul.mubr.f32.gmra.mrb[0].mxu0 %v7457
        %v7626 = vpop.f32.mrb[0].mxu0
        %v7627 = vadd.f32 %v7558, %v7626
        %v7628 = vpop.f32.mrb[0].mxu0
        %7629 = vmatprep.mubr.f32.mxu0 %v7460
        %7630 = vmatmul.mubr.f32.gmra.mrb[0].mxu0 %v7459
        %v7631 = vpop.f32.mrb[0].mxu0
        %v7632 = vadd.f32 %v7558, %v7631
        %v7633 = vpop.f32.mrb[0].mxu0
        %7634 = vmatprep.mubr.f32.mxu0 %v7462
        %7635 = vmatmul.mubr.f32.gmra.mrb[0].mxu0 %v7461
        %v7636 = vpop.f32.mrb[0].mxu0
        %v7637 = vadd.f32 %v7558, %v7636
        %v7638 = vpop.f32.mrb[0].mxu0
        %7639 = vmatprep.mubr.f32.mxu0 %v7464
        %7640 = vmatmul.mubr.f32.gmra.mrb[0].mxu0 %v7463
        %v7641 = vpop.f32.mrb[0].mxu0
        %v7642 = vadd.f32 %v7558, %v7641
        %v7643 = vpop.f32.mrb[0].mxu0
        %7644 = vmatprep.mubr.f32.mxu0 %v7466
        %7645 = vmatmul.mubr.f32.gmra.mrb[0].mxu0 %v7465
        %v7646 = vpop.f32.mrb[0].mxu0
        %v7647 = vadd.f32 %v7558, %v7646
        %v7648 = vpop.f32.mrb[0].mxu0
        %7649 = vmatprep.mubr.f32.mxu0 %v7468
        %7650 = vmatmul.mubr.f32.gmra.mrb[0].mxu0 %v7467
        %v7651 = vpop.f32.mrb[0].mxu0
        %v7652 = vadd.f32 %v7558, %v7651
        %v7653 = vpop.f32.mrb[0].mxu0
        %7654 = vmatprep.mubr.f32.mxu0 %v7470
        %7655 = vmatmul.mubr.f32.gmra.mrb[0].mxu0 %v7469
        %v7656 = vpop.f32.mrb[0].mxu0
        %v7657 = vadd.f32 %v7558, %v7656
        %v7658 = vpop.f32.mrb[0].mxu0
        %7659 = vmatprep.mubr.f32.mxu0 %v7472
        %7660 = vmatmul.mubr.f32.gmra.mrb[0].mxu0 %v7471
        %v7661 = vpop.f32.mrb[0].mxu0
        %v7662 = vadd.f32 %v7558, %v7661
        %v7663 = vpop.f32.mrb[0].mxu0
        %7664 = vmatprep.mubr.f32.mxu0 %v7474
        %7665 = vmatmul.mubr.f32.gmra.mrb[0].mxu0 %v7473
        %v7666 = vpop.f32.mrb[0].mxu0
        %v7667 = vadd.f32 %v7558, %v7666
        %v7668 = vpop.f32.mrb[0].mxu0
        %7669 = vmatprep.mubr.f32.mxu0 %v7476
        %7670 = vmatmul.mubr.f32.gmra.mrb[0].mxu0 %v7475
        %v7671 = vpop.f32.mrb[0].mxu0
        %v7672 = vadd.f32 %v7558, %v7671
        %v7673 = vpop.f32.mrb[0].mxu0
        %7674 = vmatprep.mubr.f32.mxu0 %v7478
        %7675 = vmatmul.mubr.f32.gmra.mrb[0].mxu0 %v7477
        %v7676 = vpop.f32.mrb[0].mxu0
        %v7677 = vadd.f32 %v7558, %v7676
        %v7678 = vpop.f32.mrb[0].mxu0
        %7679 = vmatprep.mubr.f32.mxu0 %v7480
        %7680 = vmatmul.mubr.f32.gmra.mrb[0].mxu0 %v7479
        %v7681 = vpop.f32.mrb[0].mxu0
        %v7682 = vadd.f32 %v7558, %v7681
        %v7683 = vpop.f32.mrb[0].mxu0
        %7684 = vmatprep.mubr.f32.mxu0 %v7482
        %7685 = vmatmul.mubr.f32.gmra.mrb[0].mxu0 %v7481
        %v7686 = vpop.f32.mrb[0].mxu0
        %v7687 = vadd.f32 %v7558, %v7686
        %v7688 = vpop.f32.mrb[0].mxu0
        %7689 = vmatprep.mubr.f32.mxu0 %v7484
        %7690 = vmatmul.mubr.f32.gmra.mrb[0].mxu0 %v7483
        %v7691 = vpop.f32.mrb[0].mxu0
        %v7692 = vadd.f32 %v7558, %v7691
        %v7693 = vpop.f32.mrb[0].mxu0
        %7694 = vmatprep.mubr.f32.mxu0 %v7486
        %7695 = vmatmul.mubr.f32.gmra.mrb[0].mxu0 %v7485
        %v7696 = vpop.f32.mrb[0].mxu0
        %v7697 = vadd.f32 %v7558, %v7696
        %v7698 = vpop.f32.mrb[0].mxu0
        %7699 = vmatprep.mubr.f32.mxu0 %v7488
        %7700 = vmatmul.mubr.f32.gmra.mrb[0].mxu0 %v7487
        %v7701 = vpop.f32.mrb[0].mxu0
        %v7702 = vadd.f32 %v7558, %v7701
        %v7703 = vpop.f32.mrb[0].mxu0
        %7704 = vmatprep.mubr.f32.mxu0 %v7490
        %7705 = vmatmul.mubr.f32.gmra.mrb[0].mxu0 %v7489
        %v7706 = vpop.f32.mrb[0].mxu0
        %v7707 = vadd.f32 %v7558, %v7706
        %v7708 = vpop.f32.mrb[0].mxu0
        %7709 = vmatprep.mubr.f32.mxu0 %v7492
        %7710 = vmatmul.mubr.f32.gmra.mrb[0].mxu0 %v7491
        %v7711 = vpop.f32.mrb[0].mxu0
        %v7712 = vadd.f32 %v7558, %v7711
        %v7713 = vpop.f32.mrb[0].mxu0
        %7714 = vmatprep.mubr.f32.mxu0 %v7494
        %7715 = vmatmul.mubr.f32.gmra.mrb[0].mxu0 %v7493
        %v7716 = vpop.f32.mrb[0].mxu0
        %v7717 = vadd.f32 %v7558, %v7716
        %v7718 = vpop.f32.mrb[0].mxu0
        %7719 = vmatprep.mubr.f32.mxu0 %v7496
        %7720 = vmatmul.mubr.f32.gmra.mrb[0].mxu0 %v7495
        %v7721 = vpop.f32.mrb[0].mxu0
        %v7722 = vadd.f32 %v7558, %v7721
        %v7723 = vpop.f32.mrb[0].mxu0
        %7724 = vmatprep.mubr.f32.mxu0 %v7498
        %7725 = vmatmul.mubr.f32.gmra.mrb[0].mxu0 %v7497
        %v7726 = vpop.f32.mrb[0].mxu0
        %v7727 = vadd.f32 %v7558, %v7726
        %v7728 = vpop.f32.mrb[0].mxu0
        %7729 = vmatprep.mubr.f32.mxu0 %v7500
        %7730 = vmatmul.mubr.f32.gmra.mrb[0].mxu0 %v7499
        %v7731 = vpop.f32.mrb[0].mxu0
        %v7732 = vadd.f32 %v7558, %v7731
        %v7733 = vpop.f32.mrb[0].mxu0
        %7734 = vmatprep.mubr.f32.mxu0 %v7502
        %7735 = vmatmul.mubr.f32.gmra.mrb[0].mxu0 %v7501
        %v7736 = vpop.f32.mrb[0].mxu0
        %v7737 = vadd.f32 %v7558, %v7736
        %v7738 = vpop.f32.mrb[0].mxu0
        %7739 = vmatprep.mubr.f32.mxu0 %v7504
        %7740 = vmatmul.mubr.f32.gmra.mrb[0].mxu0 %v7503
        %v7741 = vpop.f32.mrb[0].mxu0
        %v7742 = vadd.f32 %v7558, %v7741
        %v7743 = vpop.f32.mrb[0].mxu0
        %7744 = vmatprep.mubr.f32.mxu0 %v7506
        %7745 = vmatmul.mubr.f32.gmra.mrb[0].mxu0 %v7505
        %v7746 = vpop.f32.mrb[0].mxu0
        %v7747 = vadd.f32 %v7558, %v7746
        %v7748 = vpop.f32.mrb[0].mxu0
        %7749 = vmatprep.mubr.f32.mxu0 %v7508
        %7750 = vmatmul.mubr.f32.gmra.mrb[0].mxu0 %v7507
        %v7751 = vpop.f32.mrb[0].mxu0
        %v7752 = vadd.f32 %v7558, %v7751
        %v7753 = vpop.f32.mrb[0].mxu0
        %7754 = vmatprep.mubr.f32.mxu0 %v7510
        %7755 = vmatmul.mubr.f32.gmra.mrb[0].mxu0 %v7509
        %v7756 = vpop.f32.mrb[0].mxu0
        %v7757 = vadd.f32 %v7558, %v7756
        %v7758 = vpop.f32.mrb[0].mxu0
        %7759 = vmatprep.mubr.f32.mxu0 %v7512
        %7760 = vmatmul.mubr.f32.gmra.mrb[0].mxu0 %v7511
        %v7761 = vpop.f32.mrb[0].mxu0
        %v7762 = vadd.f32 %v7558, %v7761
        %v7763 = vpop.f32.mrb[0].mxu0
        %7764 = vmatprep.mubr.f32.mxu0 %v7514
        %7765 = vmatmul.mubr.f32.gmra.mrb[0].mxu0 %v7513
        %v7766 = vpop.f32.mrb[0].mxu0
        %v7767 = vadd.f32 %v7558, %v7766
        %v7768 = vpop.f32.mrb[0].mxu0
        %7769 = vmatprep.mubr.f32.mxu0 %v7516
        %7770 = vmatmul.mubr.f32.gmra.mrb[0].mxu0 %v7515
        %v7771 = vpop.f32.mrb[0].mxu0
        %v7772 = vadd.f32 %v7558, %v7771
        %v7773 = vpop.f32.mrb[0].mxu0
        %7774 = vmatprep.mubr.f32.mxu0 %v7518
        %7775 = vmatmul.mubr.f32.gmra.mrb[0].mxu0 %v7517
        %v7776 = vpop.f32.mrb[0].mxu0
        %v7777 = vadd.f32 %v7558, %v7776
        %v7778 = vpop.f32.mrb[0].mxu0
        %7779 = vmatprep.mubr.f32.mxu0 %v7520
        %7780 = vmatmul.mubr.f32.gmra.mrb[0].mxu0 %v7519
        %v7781 = vpop.f32.mrb[0].mxu0
        %v7782 = vadd.f32 %v7558, %v7781
        %v7783 = vpop.f32.mrb[0].mxu0
        %7784 = vdwg.mxu0
        %v7785 = vlaneseq
        %v7786 = vand.u32 %v7785, 127
        %v7787 = vand.u32 %v7786, 31
        %vm7788 = vcmp.eq.s32.totalorder %v7787, 0
        %vm7789 = vcmp.ge.s32.totalorder %v7787, 1
        %vm7790 = vcmp.lt.s32.totalorder %v7787, 4
        %vm7791 = vmand %vm7789, %vm7790
        %v7792 = vmul.f32 %v7627, %v7627
        %v7793 = vmul.f32 %v7632, %v7632
        %v7794 = vmul.f32 %v7637, %v7637
        %v7795 = vmul.f32 %v7642, %v7642
        %v7796 = vmul.f32 %v7647, %v7647
        %v7797 = vmul.f32 %v7652, %v7652
        %v7798 = vmul.f32 %v7657, %v7657
        %v7799 = vmul.f32 %v7662, %v7662
        %v7800 = vmul.f32 %v7667, %v7667
        %v7801 = vmul.f32 %v7672, %v7672
        %v7802 = vmul.f32 %v7677, %v7677
        %v7803 = vmul.f32 %v7682, %v7682
        %v7804 = vmul.f32 %v7687, %v7687
        %v7805 = vmul.f32 %v7692, %v7692
        %v7806 = vmul.f32 %v7697, %v7697
        %v7807 = vmul.f32 %v7702, %v7702
        %v7808 = vmul.f32 %v7707, %v7707
        %v7809 = vmul.f32 %v7712, %v7712
        %v7810 = vmul.f32 %v7717, %v7717
        %v7811 = vmul.f32 %v7722, %v7722
        %v7812 = vmul.f32 %v7727, %v7727
        %v7813 = vmul.f32 %v7732, %v7732
        %v7814 = vmul.f32 %v7737, %v7737
        %v7815 = vmul.f32 %v7742, %v7742
        %v7816 = vmul.f32 %v7747, %v7747
        %v7817 = vmul.f32 %v7752, %v7752
        %v7818 = vmul.f32 %v7757, %v7757
        %v7819 = vmul.f32 %v7762, %v7762
        %v7820 = vmul.f32 %v7767, %v7767
        %v7821 = vmul.f32 %v7772, %v7772
        %v7822 = vmul.f32 %v7777, %v7777
        %v7823 = vmul.f32 %v7782, %v7782
        %v7824 = vsel %vm7791, %v7792, 0.0
        %v7825 = vsel %vm7791, %v7793, 0.0
        %v7826 = vsel %vm7791, %v7794, 0.0
        %v7827 = vsel %vm7791, %v7795, 0.0
        %v7828 = vsel %vm7791, %v7796, 0.0
        %v7829 = vsel %vm7791, %v7797, 0.0
        %v7830 = vsel %vm7791, %v7798, 0.0
        %v7831 = vsel %vm7791, %v7799, 0.0
        %v7832 = vsel %vm7791, %v7800, 0.0
        %v7833 = vsel %vm7791, %v7801, 0.0
        %v7834 = vsel %vm7791, %v7802, 0.0
        %v7835 = vsel %vm7791, %v7803, 0.0
        %v7836 = vsel %vm7791, %v7804, 0.0
        %v7837 = vsel %vm7791, %v7805, 0.0
        %v7838 = vsel %vm7791, %v7806, 0.0
        %v7839 = vsel %vm7791, %v7807, 0.0
        %v7840 = vsel %vm7791, %v7808, 0.0
        %v7841 = vsel %vm7791, %v7809, 0.0
        %v7842 = vsel %vm7791, %v7810, 0.0
        %v7843 = vsel %vm7791, %v7811, 0.0
        %v7844 = vsel %vm7791, %v7812, 0.0
        %v7845 = vsel %vm7791, %v7813, 0.0
        %v7846 = vsel %vm7791, %v7814, 0.0
        %v7847 = vsel %vm7791, %v7815, 0.0
        %v7848 = vsel %vm7791, %v7816, 0.0
        %v7849 = vsel %vm7791, %v7817, 0.0
        %v7850 = vsel %vm7791, %v7818, 0.0
        %v7851 = vsel %vm7791, %v7819, 0.0
        %v7852 = vsel %vm7791, %v7820, 0.0
        %v7853 = vsel %vm7791, %v7821, 0.0
        %v7854 = vsel %vm7791, %v7822, 0.0
        %v7855 = vsel %vm7791, %v7823, 0.0
        %v7856 = vld [vmem:[#allocation6] sm:$0xff]
        %v7857 = vld [vmem:[#allocation6 + $0x8] sm:$0xff]
        %v7858 = vld [vmem:[#allocation6 + $0x10] sm:$0xff]
        %v7859 = vld [vmem:[#allocation6 + $0x18] sm:$0xff]
        %v7860 = vld [vmem:[#allocation6 + $0x20] sm:$0xff]
        %v7861 = vld [vmem:[#allocation6 + $0x28] sm:$0xff]
        %v7862 = vld [vmem:[#allocation6 + $0x30] sm:$0xff]
        %v7863 = vld [vmem:[#allocation6 + $0x38] sm:$0xff]
        %v7864 = vld [vmem:[#allocation6 + $0x40] sm:$0xff]
        %v7865 = vld [vmem:[#allocation6 + $0x48] sm:$0xff]
        %v7866 = vld [vmem:[#allocation6 + $0x50] sm:$0xff]
        %v7867 = vld [vmem:[#allocation6 + $0x58] sm:$0xff]
        %v7868 = vld [vmem:[#allocation6 + $0x60] sm:$0xff]
        %v7869 = vld [vmem:[#allocation6 + $0x68] sm:$0xff]
        %v7870 = vld [vmem:[#allocation6 + $0x70] sm:$0xff]
        %v7871 = vld [vmem:[#allocation6 + $0x78] sm:$0xff]
        %7872 = vmatprep.subr.mxu0 0.0
        %7873 = vmatpush1.msra.mxu0 %v7856
        %7874 = vmatprep.subr.mxu0 0.0
        %7875 = vmatpush1.msra.mxu0 %v7857
        %7876 = vmatprep.subr.mxu0 0.0
        %7877 = vmatpush1.msra.mxu0 %v7858
        %7878 = vmatprep.subr.mxu0 0.0
        %7879 = vmatpush1.msra.mxu0 %v7859
        %7880 = vmatprep.subr.mxu0 0.0
        %7881 = vmatpush1.msra.mxu0 %v7860
        %7882 = vmatprep.subr.mxu0 0.0
        %7883 = vmatpush1.msra.mxu0 %v7861
        %7884 = vmatprep.subr.mxu0 0.0
        %7885 = vmatpush1.msra.mxu0 %v7862
        %7886 = vmatprep.subr.mxu0 0.0
        %7887 = vmatpush1.msra.mxu0 %v7863
        %7888 = vmatprep.subr.mxu0 0.0
        %7889 = vmatpush1.msra.mxu0 %v7864
        %7890 = vmatprep.subr.mxu0 0.0
        %7891 = vmatpush1.msra.mxu0 %v7865
        %7892 = vmatprep.subr.mxu0 0.0
        %7893 = vmatpush1.msra.mxu0 %v7866
        %7894 = vmatprep.subr.mxu0 0.0
        %7895 = vmatpush1.msra.mxu0 %v7867
        %7896 = vmatprep.subr.mxu0 0.0
        %7897 = vmatpush1.msra.mxu0 %v7868
        %7898 = vmatprep.subr.mxu0 0.0
        %7899 = vmatpush1.msra.mxu0 %v7869
        %7900 = vmatprep.subr.mxu0 0.0
        %7901 = vmatpush1.msra.mxu0 %v7870
        %7902 = vmatprep.subr.mxu0 0.0
        %7903 = vmatpush1.msra.mxu0 %v7871
        %7904 = vmatprep.subr.mxu0 0.0
        %7905 = vmatpush1.msra.mxu0 0.0
        %7906 = vmatprep.subr.mxu0 0.0
        %7907 = vmatpush1.msra.mxu0 0.0
        %7908 = vmatprep.subr.mxu0 0.0
        %7909 = vmatpush1.msra.mxu0 0.0
        %7910 = vmatprep.subr.mxu0 0.0
        %7911 = vmatpush1.msra.mxu0 0.0
        %7912 = vmatprep.subr.mxu0 0.0
        %7913 = vmatpush1.msra.mxu0 0.0
        %7914 = vmatprep.subr.mxu0 0.0
        %7915 = vmatpush1.msra.mxu0 0.0
        %7916 = vmatprep.subr.mxu0 0.0
        %7917 = vmatpush1.msra.mxu0 0.0
        %7918 = vmatprep.subr.mxu0 0.0
        %7919 = vmatpush1.msra.mxu0 0.0
        %7920 = vmatprep.subr.mxu0 0.0
        %7921 = vmatpush1.msra.mxu0 0.0
        %7922 = vmatprep.subr.mxu0 0.0
        %7923 = vmatpush1.msra.mxu0 0.0
        %7924 = vmatprep.subr.mxu0 0.0
        %7925 = vmatpush1.msra.mxu0 0.0
        %7926 = vmatprep.subr.mxu0 0.0
        %7927 = vmatpush1.msra.mxu0 0.0
        %7928 = vmatprep.subr.mxu0 0.0
        %7929 = vmatpush1.msra.mxu0 0.0
        %7930 = vmatprep.subr.mxu0 0.0
        %7931 = vmatpush1.msra.mxu0 0.0
        %7932 = vmatprep.subr.mxu0 0.0
        %7933 = vmatpush1.msra.mxu0 0.0
        %7934 = vmatprep.subr.mxu0 0.0
        %7935 = vmatpush1.msra.mxu0 0.0
        %7936 = vmatprep.mubr.f32.mxu0 0.0
        %7937 = vmatmul.mubr.f32.gmra.mrb[0].mxu0 %v7824
        %v7938 = vpop.f32.mrb[0].mxu0
        %v7939 = vadd.f32 1e-12, %v7938
        %v7940 = vpop.f32.mrb[0].mxu0
        %7941 = vmatprep.mubr.f32.mxu0 0.0
        %7942 = vmatmul.mubr.f32.gmra.mrb[0].mxu0 %v7825
        %v7943 = vpop.f32.mrb[0].mxu0
        %v7944 = vadd.f32 1e-12, %v7943
        %v7945 = vpop.f32.mrb[0].mxu0
        %7946 = vmatprep.mubr.f32.mxu0 0.0
        %7947 = vmatmul.mubr.f32.gmra.mrb[0].mxu0 %v7826
        %v7948 = vpop.f32.mrb[0].mxu0
        %v7949 = vadd.f32 1e-12, %v7948
        %v7950 = vpop.f32.mrb[0].mxu0
        %7951 = vmatprep.mubr.f32.mxu0 0.0
        %7952 = vmatmul.mubr.f32.gmra.mrb[0].mxu0 %v7827
        %v7953 = vpop.f32.mrb[0].mxu0
        %v7954 = vadd.f32 1e-12, %v7953
        %v7955 = vpop.f32.mrb[0].mxu0
        %7956 = vmatprep.mubr.f32.mxu0 0.0
        %7957 = vmatmul.mubr.f32.gmra.mrb[0].mxu0 %v7828
        %v7958 = vpop.f32.mrb[0].mxu0
        %v7959 = vadd.f32 1e-12, %v7958
        %v7960 = vpop.f32.mrb[0].mxu0
        %7961 = vmatprep.mubr.f32.mxu0 0.0
        %7962 = vmatmul.mubr.f32.gmra.mrb[0].mxu0 %v7829
        %v7963 = vpop.f32.mrb[0].mxu0
        %v7964 = vadd.f32 1e-12, %v7963
        %v7965 = vpop.f32.mrb[0].mxu0
        %7966 = vmatprep.mubr.f32.mxu0 0.0
        %7967 = vmatmul.mubr.f32.gmra.mrb[0].mxu0 %v7830
        %v7968 = vpop.f32.mrb[0].mxu0
        %v7969 = vadd.f32 1e-12, %v7968
        %v7970 = vpop.f32.mrb[0].mxu0
        %7971 = vmatprep.mubr.f32.mxu0 0.0
        %7972 = vmatmul.mubr.f32.gmra.mrb[0].mxu0 %v7831
        %v7973 = vpop.f32.mrb[0].mxu0
        %v7974 = vadd.f32 1e-12, %v7973
        %v7975 = vpop.f32.mrb[0].mxu0
        %7976 = vmatprep.mubr.f32.mxu0 0.0
        %7977 = vmatmul.mubr.f32.gmra.mrb[0].mxu0 %v7832
        %v7978 = vpop.f32.mrb[0].mxu0
        %v7979 = vadd.f32 1e-12, %v7978
        %v7980 = vpop.f32.mrb[0].mxu0
        %7981 = vmatprep.mubr.f32.mxu0 0.0
        %7982 = vmatmul.mubr.f32.gmra.mrb[0].mxu0 %v7833
        %v7983 = vpop.f32.mrb[0].mxu0
        %v7984 = vadd.f32 1e-12, %v7983
        %v7985 = vpop.f32.mrb[0].mxu0
        %7986 = vmatprep.mubr.f32.mxu0 0.0
        %7987 = vmatmul.mubr.f32.gmra.mrb[0].mxu0 %v7834
        %v7988 = vpop.f32.mrb[0].mxu0
        %v7989 = vadd.f32 1e-12, %v7988
        %v7990 = vpop.f32.mrb[0].mxu0
        %7991 = vmatprep.mubr.f32.mxu0 0.0
        %7992 = vmatmul.mubr.f32.gmra.mrb[0].mxu0 %v7835
        %v7993 = vpop.f32.mrb[0].mxu0
        %v7994 = vadd.f32 1e-12, %v7993
        %v7995 = vpop.f32.mrb[0].mxu0
        %7996 = vmatprep.mubr.f32.mxu0 0.0
        %7997 = vmatmul.mubr.f32.gmra.mrb[0].mxu0 %v7836
        %v7998 = vpop.f32.mrb[0].mxu0
        %v7999 = vadd.f32 1e-12, %v7998
        %v8000 = vpop.f32.mrb[0].mxu0
        %8001 = vmatprep.mubr.f32.mxu0 0.0
        %8002 = vmatmul.mubr.f32.gmra.mrb[0].mxu0 %v7837
        %v8003 = vpop.f32.mrb[0].mxu0
        %v8004 = vadd.f32 1e-12, %v8003
        %v8005 = vpop.f32.mrb[0].mxu0
        %8006 = vmatprep.mubr.f32.mxu0 0.0
        %8007 = vmatmul.mubr.f32.gmra.mrb[0].mxu0 %v7838
        %v8008 = vpop.f32.mrb[0].mxu0
        %v8009 = vadd.f32 1e-12, %v8008
        %v8010 = vpop.f32.mrb[0].mxu0
        %8011 = vmatprep.mubr.f32.mxu0 0.0
        %8012 = vmatmul.mubr.f32.gmra.mrb[0].mxu0 %v7839
        %v8013 = vpop.f32.mrb[0].mxu0
        %v8014 = vadd.f32 1e-12, %v8013
        %v8015 = vpop.f32.mrb[0].mxu0
        %8016 = vmatprep.mubr.f32.mxu0 0.0
        %8017 = vmatmul.mubr.f32.gmra.mrb[0].mxu0 %v7840
        %v8018 = vpop.f32.mrb[0].mxu0
        %v8019 = vadd.f32 1e-12, %v8018
        %v8020 = vpop.f32.mrb[0].mxu0
        %8021 = vmatprep.mubr.f32.mxu0 0.0
        %8022 = vmatmul.mubr.f32.gmra.mrb[0].mxu0 %v7841
        %v8023 = vpop.f32.mrb[0].mxu0
        %v8024 = vadd.f32 1e-12, %v8023
        %v8025 = vpop.f32.mrb[0].mxu0
        %8026 = vmatprep.mubr.f32.mxu0 0.0
        %8027 = vmatmul.mubr.f32.gmra.mrb[0].mxu0 %v7842
        %v8028 = vpop.f32.mrb[0].mxu0
        %v8029 = vadd.f32 1e-12, %v8028
        %v8030 = vpop.f32.mrb[0].mxu0
        %8031 = vmatprep.mubr.f32.mxu0 0.0
        %8032 = vmatmul.mubr.f32.gmra.mrb[0].mxu0 %v7843
        %v8033 = vpop.f32.mrb[0].mxu0
        %v8034 = vadd.f32 1e-12, %v8033
        %v8035 = vpop.f32.mrb[0].mxu0
        %8036 = vmatprep.mubr.f32.mxu0 0.0
        %8037 = vmatmul.mubr.f32.gmra.mrb[0].mxu0 %v7844
        %v8038 = vpop.f32.mrb[0].mxu0
        %v8039 = vadd.f32 1e-12, %v8038
        %v8040 = vpop.f32.mrb[0].mxu0
        %8041 = vmatprep.mubr.f32.mxu0 0.0
        %8042 = vmatmul.mubr.f32.gmra.mrb[0].mxu0 %v7845
        %v8043 = vpop.f32.mrb[0].mxu0
        %v8044 = vadd.f32 1e-12, %v8043
        %v8045 = vpop.f32.mrb[0].mxu0
        %8046 = vmatprep.mubr.f32.mxu0 0.0
        %8047 = vmatmul.mubr.f32.gmra.mrb[0].mxu0 %v7846
        %v8048 = vpop.f32.mrb[0].mxu0
        %v8049 = vadd.f32 1e-12, %v8048
        %v8050 = vpop.f32.mrb[0].mxu0
        %8051 = vmatprep.mubr.f32.mxu0 0.0
        %8052 = vmatmul.mubr.f32.gmra.mrb[0].mxu0 %v7847
        %v8053 = vpop.f32.mrb[0].mxu0
        %v8054 = vadd.f32 1e-12, %v8053
        %v8055 = vpop.f32.mrb[0].mxu0
        %8056 = vmatprep.mubr.f32.mxu0 0.0
        %8057 = vmatmul.mubr.f32.gmra.mrb[0].mxu0 %v7848
        %v8058 = vpop.f32.mrb[0].mxu0
        %v8059 = vadd.f32 1e-12, %v8058
        %v8060 = vpop.f32.mrb[0].mxu0
        %8061 = vmatprep.mubr.f32.mxu0 0.0
        %8062 = vmatmul.mubr.f32.gmra.mrb[0].mxu0 %v7849
        %v8063 = vpop.f32.mrb[0].mxu0
        %v8064 = vadd.f32 1e-12, %v8063
        %v8065 = vpop.f32.mrb[0].mxu0
        %8066 = vmatprep.mubr.f32.mxu0 0.0
        %8067 = vmatmul.mubr.f32.gmra.mrb[0].mxu0 %v7850
        %v8068 = vpop.f32.mrb[0].mxu0
        %v8069 = vadd.f32 1e-12, %v8068
        %v8070 = vpop.f32.mrb[0].mxu0
        %8071 = vmatprep.mubr.f32.mxu0 0.0
        %8072 = vmatmul.mubr.f32.gmra.mrb[0].mxu0 %v7851
        %v8073 = vpop.f32.mrb[0].mxu0
        %v8074 = vadd.f32 1e-12, %v8073
        %v8075 = vpop.f32.mrb[0].mxu0
        %8076 = vmatprep.mubr.f32.mxu0 0.0
        %8077 = vmatmul.mubr.f32.gmra.mrb[0].mxu0 %v7852
        %v8078 = vpop.f32.mrb[0].mxu0
        %v8079 = vadd.f32 1e-12, %v8078
        %v8080 = vpop.f32.mrb[0].mxu0
        %8081 = vmatprep.mubr.f32.mxu0 0.0
        %8082 = vmatmul.mubr.f32.gmra.mrb[0].mxu0 %v7853
        %v8083 = vpop.f32.mrb[0].mxu0
        %v8084 = vadd.f32 1e-12, %v8083
        %v8085 = vpop.f32.mrb[0].mxu0
        %8086 = vmatprep.mubr.f32.mxu0 0.0
        %8087 = vmatmul.mubr.f32.gmra.mrb[0].mxu0 %v7854
        %v8088 = vpop.f32.mrb[0].mxu0
        %v8089 = vadd.f32 1e-12, %v8088
        %v8090 = vpop.f32.mrb[0].mxu0
        %8091 = vmatprep.mubr.f32.mxu0 0.0
        %8092 = vmatmul.mubr.f32.gmra.mrb[0].mxu0 %v7855
        %v8093 = vpop.f32.mrb[0].mxu0
        %v8094 = vadd.f32 1e-12, %v8093
        %v8095 = vpop.f32.mrb[0].mxu0
        %8096 = vdwg.mxu0
        %v8097 = vrsqrt.pop %v7939
        %v8098 = vrsqrt.pop %v7944
        %v8099 = vrsqrt.pop %v7949
        %v8100 = vrsqrt.pop %v7954
        %v8101 = vrsqrt.pop %v7959
        %v8102 = vrsqrt.pop %v7964
        %v8103 = vrsqrt.pop %v7969
        %v8104 = vrsqrt.pop %v7974
        %v8105 = vrsqrt.pop %v7979
        %v8106 = vrsqrt.pop %v7984
        %v8107 = vrsqrt.pop %v7989
        %v8108 = vrsqrt.pop %v7994
        %v8109 = vrsqrt.pop %v7999
        %v8110 = vrsqrt.pop %v8004
        %v8111 = vrsqrt.pop %v8009
        %v8112 = vrsqrt.pop %v8014
        %v8113 = vrsqrt.pop %v8019
        %v8114 = vrsqrt.pop %v8024
        %v8115 = vrsqrt.pop %v8029
        %v8116 = vrsqrt.pop %v8034
        %v8117 = vrsqrt.pop %v8039
        %v8118 = vrsqrt.pop %v8044
        %v8119 = vrsqrt.pop %v8049
        %v8120 = vrsqrt.pop %v8054
        %v8121 = vrsqrt.pop %v8059
        %v8122 = vrsqrt.pop %v8064
        %v8123 = vrsqrt.pop %v8069
        %v8124 = vrsqrt.pop %v8074
        %v8125 = vrsqrt.pop %v8079
        %v8126 = vrsqrt.pop %v8084
        %v8127 = vrsqrt.pop %v8089
        %v8128 = vrsqrt.pop %v8094
        %v8129 = vmul.f32 %v7627, %v8097
        %v8130 = vmul.f32 %v7632, %v8098
        %v8131 = vmul.f32 %v7637, %v8099
        %v8132 = vmul.f32 %v7642, %v8100
        %v8133 = vmul.f32 %v7647, %v8101
        %v8134 = vmul.f32 %v7652, %v8102
        %v8135 = vmul.f32 %v7657, %v8103
        %v8136 = vmul.f32 %v7662, %v8104
        %v8137 = vmul.f32 %v7667, %v8105
        %v8138 = vmul.f32 %v7672, %v8106
        %v8139 = vmul.f32 %v7677, %v8107
        %v8140 = vmul.f32 %v7682, %v8108
        %v8141 = vmul.f32 %v7687, %v8109
        %v8142 = vmul.f32 %v7692, %v8110
        %v8143 = vmul.f32 %v7697, %v8111
        %v8144 = vmul.f32 %v7702, %v8112
        %v8145 = vmul.f32 %v7707, %v8113
        %v8146 = vmul.f32 %v7712, %v8114
        %v8147 = vmul.f32 %v7717, %v8115
        %v8148 = vmul.f32 %v7722, %v8116
        %v8149 = vmul.f32 %v7727, %v8117
        %v8150 = vmul.f32 %v7732, %v8118
        %v8151 = vmul.f32 %v7737, %v8119
        %v8152 = vmul.f32 %v7742, %v8120
        %v8153 = vmul.f32 %v7747, %v8121
        %v8154 = vmul.f32 %v7752, %v8122
        %v8155 = vmul.f32 %v7757, %v8123
        %v8156 = vmul.f32 %v7762, %v8124
        %v8157 = vmul.f32 %v7767, %v8125
        %v8158 = vmul.f32 %v7772, %v8126
        %v8159 = vmul.f32 %v7777, %v8127
        %v8160 = vmul.f32 %v7782, %v8128
        %v8161 = vsel %vm7791, %v8129, %v7627
        %v8162 = vsel %vm7791, %v8130, %v7632
        %v8163 = vsel %vm7791, %v8131, %v7637
        %v8164 = vsel %vm7791, %v8132, %v7642
        %v8165 = vsel %vm7791, %v8133, %v7647
        %v8166 = vsel %vm7791, %v8134, %v7652
        %v8167 = vsel %vm7791, %v8135, %v7657
        %v8168 = vsel %vm7791, %v8136, %v7662
        %v8169 = vsel %vm7791, %v8137, %v7667
        %v8170 = vsel %vm7791, %v8138, %v7672
        %v8171 = vsel %vm7791, %v8139, %v7677
        %v8172 = vsel %vm7791, %v8140, %v7682
        %v8173 = vsel %vm7791, %v8141, %v7687
        %v8174 = vsel %vm7791, %v8142, %v7692
        %v8175 = vsel %vm7791, %v8143, %v7697
        %v8176 = vsel %vm7791, %v8144, %v7702
        %v8177 = vsel %vm7791, %v8145, %v7707
        %v8178 = vsel %vm7791, %v8146, %v7712
        %v8179 = vsel %vm7791, %v8147, %v7717
        %v8180 = vsel %vm7791, %v8148, %v7722
        %v8181 = vsel %vm7791, %v8149, %v7727
        %v8182 = vsel %vm7791, %v8150, %v7732
        %v8183 = vsel %vm7791, %v8151, %v7737
        %v8184 = vsel %vm7791, %v8152, %v7742
        %v8185 = vsel %vm7791, %v8153, %v7747
        %v8186 = vsel %vm7791, %v8154, %v7752
        %v8187 = vsel %vm7791, %v8155, %v7757
        %v8188 = vsel %vm7791, %v8156, %v7762
        %v8189 = vsel %vm7791, %v8157, %v7767
        %v8190 = vsel %vm7791, %v8158, %v7772
        %v8191 = vsel %vm7791, %v8159, %v7777
        %v8192 = vsel %vm7791, %v8160, %v7782
        %v8193 = vsel %vm7788, %v7627, %v8161
        %v8194 = vsel %vm7788, %v7632, %v8162
        %v8195 = vsel %vm7788, %v7637, %v8163
        %v8196 = vsel %vm7788, %v7642, %v8164
        %v8197 = vsel %vm7788, %v7647, %v8165
        %v8198 = vsel %vm7788, %v7652, %v8166
        %v8199 = vsel %vm7788, %v7657, %v8167
        %v8200 = vsel %vm7788, %v7662, %v8168
        %v8201 = vsel %vm7788, %v7667, %v8169
        %v8202 = vsel %vm7788, %v7672, %v8170
        %v8203 = vsel %vm7788, %v7677, %v8171
        %v8204 = vsel %vm7788, %v7682, %v8172
        %v8205 = vsel %vm7788, %v7687, %v8173
        %v8206 = vsel %vm7788, %v7692, %v8174
        %v8207 = vsel %vm7788, %v7697, %v8175
        %v8208 = vsel %vm7788, %v7702, %v8176
        %v8209 = vsel %vm7788, %v7707, %v8177
        %v8210 = vsel %vm7788, %v7712, %v8178
        %v8211 = vsel %vm7788, %v7717, %v8179
        %v8212 = vsel %vm7788, %v7722, %v8180
        %v8213 = vsel %vm7788, %v7727, %v8181
        %v8214 = vsel %vm7788, %v7732, %v8182
        %v8215 = vsel %vm7788, %v7737, %v8183
        %v8216 = vsel %vm7788, %v7742, %v8184
        %v8217 = vsel %vm7788, %v7747, %v8185
        %v8218 = vsel %vm7788, %v7752, %v8186
        %v8219 = vsel %vm7788, %v7757, %v8187
        %v8220 = vsel %vm7788, %v7762, %v8188
        %v8221 = vsel %vm7788, %v7767, %v8189
        %v8222 = vsel %vm7788, %v7772, %v8190
        %v8223 = vsel %vm7788, %v7777, %v8191
        %v8224 = vsel %vm7788, %v7782, %v8192
        %8225 = vst [vmem:[%s324] sm:$0xff] %v8193
        %8226 = vst [vmem:[%s324 + $0x8] sm:$0xff] %v8194
        %8227 = vst [vmem:[%s324 + $0x10] sm:$0xff] %v8195
        %8228 = vst [vmem:[%s324 + $0x18] sm:$0xff] %v8196
        %8229 = vst [vmem:[%s324 + $0x20] sm:$0xff] %v8197
        %8230 = vst [vmem:[%s324 + $0x28] sm:$0xff] %v8198
        %8231 = vst [vmem:[%s324 + $0x30] sm:$0xff] %v8199
        %8232 = vst [vmem:[%s324 + $0x38] sm:$0xff] %v8200
        %8233 = vst [vmem:[%s324 + $0x40] sm:$0xff] %v8201
        %8234 = vst [vmem:[%s324 + $0x48] sm:$0xff] %v8202
        %8235 = vst [vmem:[%s324 + $0x50] sm:$0xff] %v8203
        %8236 = vst [vmem:[%s324 + $0x58] sm:$0xff] %v8204
        %8237 = vst [vmem:[%s324 + $0x60] sm:$0xff] %v8205
        %8238 = vst [vmem:[%s324 + $0x68] sm:$0xff] %v8206
        %8239 = vst [vmem:[%s324 + $0x70] sm:$0xff] %v8207
        %8240 = vst [vmem:[%s324 + $0x78] sm:$0xff] %v8208
        %8241 = vst [vmem:[%s324 + $0x80] sm:$0xff] %v8209
        %8242 = vst [vmem:[%s324 + $0x88] sm:$0xff] %v8210
        %8243 = vst [vmem:[%s324 + $0x90] sm:$0xff] %v8211
        %8244 = vst [vmem:[%s324 + $0x98] sm:$0xff] %v8212
        %8245 = vst [vmem:[%s324 + $0xa0] sm:$0xff] %v8213
        %8246 = vst [vmem:[%s324 + $0xa8] sm:$0xff] %v8214
        %8247 = vst [vmem:[%s324 + $0xb0] sm:$0xff] %v8215
        %8248 = vst [vmem:[%s324 + $0xb8] sm:$0xff] %v8216
        %8249 = vst [vmem:[%s324 + $0xc0] sm:$0xff] %v8217
        %8250 = vst [vmem:[%s324 + $0xc8] sm:$0xff] %v8218
        %8251 = vst [vmem:[%s324 + $0xd0] sm:$0xff] %v8219
        %8252 = vst [vmem:[%s324 + $0xd8] sm:$0xff] %v8220
        %8253 = vst [vmem:[%s324 + $0xe0] sm:$0xff] %v8221
        %8254 = vst [vmem:[%s324 + $0xe8] sm:$0xff] %v8222
        %8255 = vst [vmem:[%s324 + $0xf0] sm:$0xff] %v8223
        %8256 = vst [vmem:[%s324 + $0xf8] sm:$0xff] %v8224
        %s8257 = smul.u32 32, %s20
        %p8258 = scmp.lt.s32.totalorder %s8257, 95
        %s8259 = scalar_select %p8258, %s8257, 95
        %s8260 = smul.addr %s8259, 8
        %s8261 = scalar_lea.vmem %s7, %s8260
        // Predicated region
        $region61: #{sdf_forward.1} parent=47 // pred_check
          %p8262 = pneg %p190
        $region62: #{sdf_forward.1} parent=47 // pred_check_branch
          %8264 = sbr.rel (%p8262) target = $region64
        $region63: #{sdf_forward.1} parent=47 // pred_region
          %s8265 = smul.u32 32, %s20
        $region64: #{sdf_forward.1} parent=47 // pred_fallthru
          _
      $region48: #{sdf_forward.1} parent=5 // pred_fallthru
        _
      %p8266 = scmp.le.s32.totalorder 2, %s15
      // Predicated region
      $region65: #{sdf_forward.1} parent=5 // pred_check
        %p8267 = pneg %p8266
      $region66: #{sdf_forward.1} parent=5 // pred_check_branch
        %8269 = sbr.rel (%p8267) target = $region68
      $region67: #{sdf_forward.1} parent=5 // pred_region
        %s8270 = ssub.s32 %s15, 2
        // Predicated region
        $region69: #{sdf_forward.1} parent=67 // pred_check
          %p8271 = pneg %p196
        $region70: #{sdf_forward.1} parent=67 // pred_check_branch
          %8273 = sbr.rel (%p8271) target = $region72
        $region71: #{sdf_forward.1} parent=67 // pred_region
          %s8274 = smul.u32 32, %s21
          %p8275 = scmp.lt.s32.totalorder %s8274, 95
          %s8276 = scalar_select %p8275, %s8274, 95
          %s8277 = smul.addr %s8276, 8
          %s8278 = scalar_lea.vmem %s7, %s8277
        $region72: #{sdf_forward.1} parent=67 // pred_fallthru
          _
      $region68: #{sdf_forward.1} parent=5 // pred_fallthru
        _
    $region6: #{sdf_forward.1} parent=1 // loop_footer
      %s19 = sadd.s32 1, %s15
    $region7: #{sdf_forward.1} parent=1 // loop_footer_branch
      %14 = sbr.rel target = $region3
    $region8: #{sdf_forward.1} parent=1 // loop_exit
      _
    %8279 = vsyncpa [#allocation3], 1
    %s8280 = scalar_lea.sflag [#allocation3], 1
    %8281 = vsyncpa %s8280, 1
    %8282 = vsyncpa [#allocation5], 1

</llo_original>
